<compile_context>
chip_gen: v6e
topology: v6e:2x2x1
jax: 0.10.0
libtpu: 0.0.40
codegen_flags: <defaults>
</compile_context>

<pallas_src>
import functools

import numpy as np
import jax
import jax.numpy as jnp
from jax.experimental import pallas as pl
from jax.experimental.pallas import tpu as pltpu


# ----------------------------------------------------------------------------
# Static FusionLayer configuration
# ----------------------------------------------------------------------------
def fusion_cfg(input_channels=3):
    # (type, cin, cout, kernel, stride, pad, output_padding, relu)
    return [
        ("conv",  input_channels, 16, 5, 2, 3, 0, True),
        ("conv",  16,             8,  3, 2, 2, 0, True),
        ("convt", 8,              8,  3, 2, 2, 1, True),
        ("convt", 8,              16, 5, 2, 3, 1, True),
        ("conv",  16,             1,  2, 1, 0, 0, False),
    ]


def fusion_dims(S, input_channels=3):
    """Per-layer static geometry (square feature maps)."""
    dims = []
    n = S
    for (typ, cin, cout, k, s, p, op, relu) in fusion_cfg(input_channels):
        if typ == "conv":
            m = (n + 2 * p - k) // s + 1
        else:  # ConvTranspose2d
            m = (n - 1) * s - 2 * p + k + op
        dims.append(dict(typ=typ, cin=cin, cout=cout, k=k, s=s, p=p, op=op,
                         relu=relu, hin=n, hout=m))
        n = m
    return dims


# ----------------------------------------------------------------------------
# Parameter construction (banded weight matrices, built once at init time)
# ----------------------------------------------------------------------------
def _interp_matrix(out_size, in_size):
    """Row-interpolation matrix for F.interpolate(mode='bilinear', align_corners=True)."""
    R = np.zeros((out_size, in_size), dtype=np.float32)
    if out_size == 1:
        src = np.zeros((1,), dtype=np.float64)
    else:
        src = np.arange(out_size, dtype=np.float64) * (in_size - 1) / (out_size - 1)
    i0 = np.clip(np.floor(src).astype(np.int64), 0, in_size - 1)
    i1 = np.clip(i0 + 1, 0, in_size - 1)
    frac = (src - i0).astype(np.float32)
    for o in range(out_size):
        R[o, i0[o]] += 1.0 - frac[o]
        R[o, i1[o]] += frac[o]
    return R


def _band_weights(w_np, d):
    """Fold the kw taps / stride / W-padding / dilation of one (transposed) conv into
    per-kh banded matrices of shape (Cin*Win, Cout*OW), acting on the channel-major
    flattened activation (H, C*W)."""
    typ, k, s, p = d["typ"], d["k"], d["s"], d["p"]
    cin, cout = d["cin"], d["cout"]
    win, ow_n = d["hin"], d["hout"]
    wb = np.zeros((k, cin * win, cout * ow_n), np.float32)
    ci_rows = np.arange(cin) * win
    co_cols = np.arange(cout) * ow_n
    for kh in range(k):
        for kw in range(k):
            if typ == "conv":
                blk = w_np[:, :, kh, kw].T          # (cin, cout); torch (cout,cin,k,k)
                for ow in range(ow_n):
                    iw = s * ow + kw - p
                    if 0 <= iw < win:
                        wb[kh][np.ix_(ci_rows + iw, co_cols + ow)] = blk
            else:
                blk = w_np[:, :, kh, kw]            # (cin, cout); torch (cin,cout,k,k)
                for iw in range(win):
                    ow = s * iw + kw - p
                    if 0 <= ow < ow_n:
                        wb[kh][np.ix_(ci_rows + iw, co_cols + ow)] = blk
    return wb


def _xavier_uniform(key, shape):
    fan_out = shape[0] * shape[2] * shape[3]
    fan_in = shape[1] * shape[2] * shape[3]
    a = float(np.sqrt(6.0 / (fan_in + fan_out)))
    return np.asarray(jax.random.uniform(key, shape, jnp.float32, -a, a))


def init_fusion_branch(key, S, input_channels=3):
    """Returns ([(Wband (k,Cin*Win,Cout*OW), bias_row (1,Cout*OW))...],
                [(w4 torch-layout, bias)...])  (band params, raw params)."""
    dims = fusion_dims(S, input_channels)
    keys = jax.random.split(key, 2 * len(dims))
    band_params, raw_params = [], []
    for idx, d in enumerate(dims):
        cin, cout, k = d["cin"], d["cout"], d["k"]
        wkey, bkey = keys[2 * idx], keys[2 * idx + 1]
        shape = (cout, cin, k, k) if d["typ"] == "conv" else (cin, cout, k, k)
        w = _xavier_uniform(wkey, shape)
        bound = 1.0 / float(np.sqrt(shape[1] * k * k))   # torch default bias init
        b = np.asarray(jax.random.uniform(bkey, (cout,), jnp.float32, -bound, bound))
        band_params.append((
            _band_weights(w, d),
            np.repeat(b, d["hout"]).reshape(1, cout * d["hout"]).astype(np.float32),
        ))
        raw_params.append((w, b))
    return band_params, raw_params


def init_model_params(key, S, input_channels=3):
    kp, kw = jax.random.split(key)
    pos_band, pos_raw = init_fusion_branch(kp, S, input_channels)
    width_band, width_raw = init_fusion_branch(kw, S, input_channels)
    stacked = []
    for (wp, bp), (ww, bw) in zip(pos_band, width_band):
        stacked.append((jnp.asarray(np.stack([wp, ww], axis=0)),    # (2, k, R, C)
                        jnp.asarray(np.stack([bp, bw], axis=0))))   # (2, 1, C)
    return stacked, pos_raw, width_raw


# ----------------------------------------------------------------------------
# The fused Pallas kernel: softmax + bilinear resize + full FusionLayer branch
# ----------------------------------------------------------------------------
def _fused_head_kernel(prim_ref, aux_ref, fs_ref, rh_ref, rwt_ref, *rest, B, dims):
    nl = len(dims)
    w_refs = [rest[2 * i] for i in range(nl)]
    b_refs = [rest[2 * i + 1] for i in range(nl)]
    fus_ref = rest[2 * nl]
    auxo_ref = rest[2 * nl + 1]

    rh = rh_ref[...]                      # (S, Hp)
    rwt = rwt_ref[...]                    # (Wp, S)

    # Constant 0/1 row-selection matrices (hoisted out of the batch loop).
    sels = []
    for d in dims:
        hin, hout, k, s, p = d["hin"], d["hout"], d["k"], d["s"], d["p"]
        io = jax.lax.broadcasted_iota(jnp.int32, (hout, hin), 0)
        ii = jax.lax.broadcasted_iota(jnp.int32, (hout, hin), 1)
        taps = []
        for kh in range(k):
            if d["typ"] == "conv":
                cond = (s * io + (kh - p)) == ii          # ih = s*oh + kh - p
            else:
                cond = (io + (p - kh)) == (s * ii)        # oh = s*ih + kh - p
            taps.append(cond.astype(jnp.float32))
        sels.append(taps)

    for b in range(B):
        # Bilinear resize (align_corners=True) as Rh @ X @ Rw^T.
        aux_up = jnp.dot(
            jnp.dot(rh, aux_ref[0, b], preferred_element_type=jnp.float32),
            rwt, preferred_element_type=jnp.float32)
        auxo_ref[0, b] = aux_up                           # cos (branch 0) / sin (branch 1)
        prim_up = jnp.dot(
            jnp.dot(rh, prim_ref[0, b], preferred_element_type=jnp.float32),
            rwt, preferred_element_type=jnp.float32)

        # normalize_fs_out: channel softmax with C == 2 -> logistic closed form.
        x0 = fs_ref[b, 0]
        x1 = fs_ref[b, 1]
        s0 = 1.0 / (1.0 + jnp.exp(x1 - x0))
        s1 = 1.0 / (1.0 + jnp.exp(x0 - x1))

        # Channel-major flattened activation: (H, C*W), cols [c*W, (c+1)*W).
        x = jnp.concatenate([prim_up, s0, s1], axis=1)

        # FusionLayer: 5 conv / conv-transpose layers, fully VMEM resident.
        for li, d in enumerate(dims):
            acc = None
            for kh in range(d["k"]):
                rows = jnp.dot(sels[li][kh], x, preferred_element_type=jnp.float32)
                term = jnp.dot(rows, w_refs[li][0, kh],
                               preferred_element_type=jnp.float32)
                acc = term if acc is None else acc + term
            acc = acc + b_refs[li][0]
            x = jnp.maximum(acc, 0.0) if d["relu"] else acc
            # Dropout2d(p=0.1): identity in eval/inference mode.

        fus_ref[0, b] = x                                  # (out_sz, out_sz), Cout == 1


# ----------------------------------------------------------------------------
# GGCNN_ASGNET forward (fusion part)
# ----------------------------------------------------------------------------
def ggcnn_asgnet_forward(params, pos, cos, sin, width, fs_out):
    B = int(pos.shape[0])
    Hp, Wp = int(pos.shape[2]), int(pos.shape[3])
    # Reference uses size=(fs_out[0].shape[2], fs_out.shape[3]) == (W, W) of fs_out.
    S = int(fs_out.shape[3])
    in_ch = 1 + int(fs_out.shape[1])
    dims = fusion_dims(S, in_ch)
    out_sz = dims[-1]["hout"]

    prim = jnp.stack([pos[:, 0], width[:, 0]], axis=0)     # (2, B, Hp, Wp)
    aux = jnp.stack([cos[:, 0], sin[:, 0]], axis=0)        # (2, B, Hp, Wp)
    rh = jnp.asarray(_interp_matrix(S, Hp))                # (S, Hp)
    rwt = jnp.asarray(_interp_matrix(S, Wp).T)             # (Wp, S)

    flat = []
    in_specs = [
        pl.BlockSpec((1, B, Hp, Wp), lambda i: (i, 0, 0, 0)),
        pl.BlockSpec((1, B, Hp, Wp), lambda i: (i, 0, 0, 0)),
        pl.BlockSpec(tuple(fs_out.shape), lambda i: (0, 0, 0, 0)),
        pl.BlockSpec((S, Hp), lambda i: (0, 0)),
        pl.BlockSpec((Wp, S), lambda i: (0, 0)),
    ]
    for (w, brow) in params:
        flat += [w, brow]
        in_specs.append(pl.BlockSpec((1,) + tuple(w.shape[1:]), lambda i: (i, 0, 0, 0)))
        in_specs.append(pl.BlockSpec((1,) + tuple(brow.shape[1:]), lambda i: (i, 0, 0)))

    kernel = functools.partial(_fused_head_kernel, B=B, dims=dims)
    fus, auxo = pl.pallas_call(
        kernel,
        grid=(2,),                                         # one step per fusion branch
        in_specs=in_specs,
        out_specs=[
            pl.BlockSpec((1, B, out_sz, out_sz), lambda i: (i, 0, 0, 0)),
            pl.BlockSpec((1, B, S, S), lambda i: (i, 0, 0, 0)),
        ],
        out_shape=(
            jax.ShapeDtypeStruct((2, B, out_sz, out_sz), jnp.float32),
            jax.ShapeDtypeStruct((2, B, S, S), jnp.float32),
        ),
        compiler_params=pltpu.CompilerParams(dimension_semantics=("parallel",)),
    )(prim, aux, fs_out, rh, rwt, *flat)

    pos_out = fus[0][:, None]                              # (B, 1, out_sz, out_sz)
    width_out = fus[1][:, None]
    cos_out = auxo[0][:, None]                             # (B, 1, S, S)
    sin_out = auxo[1][:, None]
    return pos_out, cos_out, sin_out, width_out


# ----------------------------------------------------------------------------
# Pure-JAX (XLA) reference for numerical verification
# ----------------------------------------------------------------------------
def reference_forward(pos_raw, width_raw, pos, cos, sin, width, fs_out):
    S = int(fs_out.shape[3])
    Hp, Wp = int(pos.shape[2]), int(pos.shape[3])
    in_ch = 1 + int(fs_out.shape[1])
    rh = jnp.asarray(_interp_matrix(S, Hp))
    rwt = jnp.asarray(_interp_matrix(S, Wp).T)
    hi = jax.lax.Precision.HIGHEST

    def resize(x):
        t = jnp.einsum("oh,bchw->bcow", rh, x, precision=hi)
        return jnp.einsum("bcow,wq->bcoq", t, rwt, precision=hi)

    fs_soft = jax.nn.softmax(fs_out, axis=1)
    pos_up, cos_out, sin_out, width_up = resize(pos), resize(cos), resize(sin), resize(width)

    def fusion(raw, x):
        for (typ, cin, cout, k, s, p, op, relu), (w, b) in zip(fusion_cfg(in_ch), raw):
            w = jnp.asarray(w)
            b = jnp.asarray(b)
            if typ == "conv":
                y = jax.lax.conv_general_dilated(
                    x, w, window_strides=(s, s), padding=((p, p), (p, p)),
                    dimension_numbers=("NCHW", "OIHW", "NCHW"), precision=hi)
            else:
                wf = jnp.transpose(w[:, :, ::-1, ::-1], (1, 0, 2, 3))
                lo = k - 1 - p
                y = jax.lax.conv_general_dilated(
                    x, wf, window_strides=(1, 1),
                    padding=((lo, lo + op), (lo, lo + op)), lhs_dilation=(s, s),
                    dimension_numbers=("NCHW", "OIHW", "NCHW"), precision=hi)
            y = y + b.reshape(1, -1, 1, 1)
            x = jnp.maximum(y, 0.0) if relu else y
        return x

    pos_out = fusion(pos_raw, jnp.concatenate([pos_up, fs_soft], axis=1))
    width_out = fusion(width_raw, jnp.concatenate([width_up, fs_soft], axis=1))
    return pos_out, cos_out, sin_out, width_out


# ----------------------------------------------------------------------------
if __name__ == "__main__":
    key = jax.random.PRNGKey(0)
    k1, k2, k3, k4, k5, kparams = jax.random.split(key, 6)

    B, Hp, Wp, S = 2, 8, 8, 16
    # Synthetic frozen-backbone outputs (see TODO at top of file).
    pos = jax.random.normal(k1, (B, 1, Hp, Wp), jnp.float32)
    cos = jax.random.normal(k2, (B, 1, Hp, Wp), jnp.float32)
    sin = jax.random.normal(k3, (B, 1, Hp, Wp), jnp.float32)
    width = jax.random.normal(k4, (B, 1, Hp, Wp), jnp.float32)
    fs_out = jax.random.normal(k5, (B, 2, S, S), jnp.float32)

    params, pos_raw, width_raw = init_model_params(kparams, S, input_channels=3)

    fwd = jax.jit(ggcnn_asgnet_forward)
    outs = fwd(params, pos, cos, sin, width, fs_out)
    jax.block_until_ready(outs)
    pos_out, cos_out, sin_out, width_out = outs

    out_sz = fusion_dims(S)[-1]["hout"]                    # 17 for S=16
    assert pos_out.shape == (B, 1, out_sz, out_sz), pos_out.shape
    assert width_out.shape == (B, 1, out_sz, out_sz), width_out.shape
    assert cos_out.shape == (B, 1, S, S), cos_out.shape
    assert sin_out.shape == (B, 1, S, S), sin_out.shape

    # Numerical check against a pure-JAX (XLA conv) reference of the same module.
    refs = reference_forward(pos_raw, width_raw, pos, cos, sin, width, fs_out)
    for got, ref in zip(outs, refs):
        np.testing.assert_allclose(np.asarray(got), np.asarray(ref),
                                   rtol=2e-2, atol=2e-2)

    print("KERNEL_OK")
</pallas_src>

<mosaic_0001>
module attributes {stable_mosaic.version = 11 : i64} {
  func.func @_fused_head_kernel(%arg0: i32, %arg1: memref<1x2x8x8xf32, #tpu.memory_space<vmem>>, %arg2: memref<1x2x8x8xf32, #tpu.memory_space<vmem>>, %arg3: memref<2x2x16x16xf32, #tpu.memory_space<vmem>>, %arg4: memref<16x8xf32, #tpu.memory_space<vmem>>, %arg5: memref<8x16xf32, #tpu.memory_space<vmem>>, %arg6: memref<1x5x48x144xf32, #tpu.memory_space<vmem>>, %arg7: memref<1x1x144xf32, #tpu.memory_space<vmem>>, %arg8: memref<1x3x144x48xf32, #tpu.memory_space<vmem>>, %arg9: memref<1x1x48xf32, #tpu.memory_space<vmem>>, %arg10: memref<1x3x48x80xf32, #tpu.memory_space<vmem>>, %arg11: memref<1x1x80xf32, #tpu.memory_space<vmem>>, %arg12: memref<1x5x80x288xf32, #tpu.memory_space<vmem>>, %arg13: memref<1x1x288xf32, #tpu.memory_space<vmem>>, %arg14: memref<1x2x288x17xf32, #tpu.memory_space<vmem>>, %arg15: memref<1x1x17xf32, #tpu.memory_space<vmem>>, %arg16: memref<1x2x17x17xf32, #tpu.memory_space<vmem>>, %arg17: memref<1x2x16x16xf32, #tpu.memory_space<vmem>>) attributes {dimension_semantics = [#tpu.dimension_semantics<parallel>], iteration_bounds = array<i64: 2>, scalar_prefetch = 0 : i64, scratch_operands = 0 : i64, tpu.core_type = #tpu.core_type<tc>, window_params = [{transform_indices = @transform_0, window_bounds = array<i64: 1, 2, 8, 8>}, {transform_indices = @transform_1, window_bounds = array<i64: 1, 2, 8, 8>}, {pipeline_mode = #tpu.pipeline_mode<synchronous>, transform_indices = @transform_2, window_bounds = array<i64: 2, 2, 16, 16>}, {pipeline_mode = #tpu.pipeline_mode<synchronous>, transform_indices = @transform_3, window_bounds = array<i64: 16, 8>}, {pipeline_mode = #tpu.pipeline_mode<synchronous>, transform_indices = @transform_4, window_bounds = array<i64: 8, 16>}, {transform_indices = @transform_5, window_bounds = array<i64: 1, 5, 48, 144>}, {transform_indices = @transform_6, window_bounds = array<i64: 1, 1, 144>}, {transform_indices = @transform_7, window_bounds = array<i64: 1, 3, 144, 48>}, {transform_indices = @transform_8, window_bounds = array<i64: 1, 1, 48>}, {transform_indices = @transform_9, window_bounds = array<i64: 1, 3, 48, 80>}, {transform_indices = @transform_10, window_bounds = array<i64: 1, 1, 80>}, {transform_indices = @transform_11, window_bounds = array<i64: 1, 5, 80, 288>}, {transform_indices = @transform_12, window_bounds = array<i64: 1, 1, 288>}, {transform_indices = @transform_13, window_bounds = array<i64: 1, 2, 288, 17>}, {transform_indices = @transform_14, window_bounds = array<i64: 1, 1, 17>}, {transform_indices = @transform_15, window_bounds = array<i64: 1, 2, 17, 17>}, {transform_indices = @transform_16, window_bounds = array<i64: 1, 2, 16, 16>}]} {
    %c0 = arith.constant 0 : index
    %c0_0 = arith.constant 0 : index
    %0 = vector.load %arg4[%c0, %c0_0] : memref<16x8xf32, #tpu.memory_space<vmem>>, vector<16x8xf32>
    %c0_1 = arith.constant 0 : index
    %c0_2 = arith.constant 0 : index
    %1 = vector.load %arg5[%c0_1, %c0_2] : memref<8x16xf32, #tpu.memory_space<vmem>>, vector<8x16xf32>
    %2 = tpu.iota {dimensions = array<i32: 0>} : vector<9x16xi32>
    %3 = tpu.iota {dimensions = array<i32: 1>} : vector<9x16xi32>
    %c2_i32 = arith.constant 2 : i32
    %4 = vector.broadcast %c2_i32 : i32 to vector<9x16xi32>
    %5 = arith.muli %4, %2 : vector<9x16xi32>
    %c-3_i32 = arith.constant -3 : i32
    %6 = vector.broadcast %c-3_i32 : i32 to vector<9x16xi32>
    %7 = arith.addi %5, %6 : vector<9x16xi32>
    %8 = arith.cmpi eq, %7, %3 : vector<9x16xi32>
    %9 = arith.extui %8 : vector<9x16xi1> to vector<9x16xi32>
    %10 = arith.sitofp %9 : vector<9x16xi32> to vector<9x16xf32>
    %c2_i32_3 = arith.constant 2 : i32
    %11 = vector.broadcast %c2_i32_3 : i32 to vector<9x16xi32>
    %12 = arith.muli %11, %2 : vector<9x16xi32>
    %c-2_i32 = arith.constant -2 : i32
    %13 = vector.broadcast %c-2_i32 : i32 to vector<9x16xi32>
    %14 = arith.addi %12, %13 : vector<9x16xi32>
    %15 = arith.cmpi eq, %14, %3 : vector<9x16xi32>
    %16 = arith.extui %15 : vector<9x16xi1> to vector<9x16xi32>
    %17 = arith.sitofp %16 : vector<9x16xi32> to vector<9x16xf32>
    %c2_i32_4 = arith.constant 2 : i32
    %18 = vector.broadcast %c2_i32_4 : i32 to vector<9x16xi32>
    %19 = arith.muli %18, %2 : vector<9x16xi32>
    %c-1_i32 = arith.constant -1 : i32
    %20 = vector.broadcast %c-1_i32 : i32 to vector<9x16xi32>
    %21 = arith.addi %19, %20 : vector<9x16xi32>
    %22 = arith.cmpi eq, %21, %3 : vector<9x16xi32>
    %23 = arith.extui %22 : vector<9x16xi1> to vector<9x16xi32>
    %24 = arith.sitofp %23 : vector<9x16xi32> to vector<9x16xf32>
    %c2_i32_5 = arith.constant 2 : i32
    %25 = vector.broadcast %c2_i32_5 : i32 to vector<9x16xi32>
    %26 = arith.muli %25, %2 : vector<9x16xi32>
    %c0_i32 = arith.constant 0 : i32
    %27 = vector.broadcast %c0_i32 : i32 to vector<9x16xi32>
    %28 = arith.addi %26, %27 : vector<9x16xi32>
    %29 = arith.cmpi eq, %28, %3 : vector<9x16xi32>
    %30 = arith.extui %29 : vector<9x16xi1> to vector<9x16xi32>
    %31 = arith.sitofp %30 : vector<9x16xi32> to vector<9x16xf32>
    %c2_i32_6 = arith.constant 2 : i32
    %32 = vector.broadcast %c2_i32_6 : i32 to vector<9x16xi32>
    %33 = arith.muli %32, %2 : vector<9x16xi32>
    %c1_i32 = arith.constant 1 : i32
    %34 = vector.broadcast %c1_i32 : i32 to vector<9x16xi32>
    %35 = arith.addi %33, %34 : vector<9x16xi32>
    %36 = arith.cmpi eq, %35, %3 : vector<9x16xi32>
    %37 = arith.extui %36 : vector<9x16xi1> to vector<9x16xi32>
    %38 = arith.sitofp %37 : vector<9x16xi32> to vector<9x16xf32>
    %39 = tpu.iota {dimensions = array<i32: 0>} : vector<6x9xi32>
    %40 = tpu.iota {dimensions = array<i32: 1>} : vector<6x9xi32>
    %c2_i32_7 = arith.constant 2 : i32
    %41 = vector.broadcast %c2_i32_7 : i32 to vector<6x9xi32>
    %42 = arith.muli %41, %39 : vector<6x9xi32>
    %c-2_i32_8 = arith.constant -2 : i32
    %43 = vector.broadcast %c-2_i32_8 : i32 to vector<6x9xi32>
    %44 = arith.addi %42, %43 : vector<6x9xi32>
    %45 = arith.cmpi eq, %44, %40 : vector<6x9xi32>
    %46 = arith.extui %45 : vector<6x9xi1> to vector<6x9xi32>
    %47 = arith.sitofp %46 : vector<6x9xi32> to vector<6x9xf32>
    %c2_i32_9 = arith.constant 2 : i32
    %48 = vector.broadcast %c2_i32_9 : i32 to vector<6x9xi32>
    %49 = arith.muli %48, %39 : vector<6x9xi32>
    %c-1_i32_10 = arith.constant -1 : i32
    %50 = vector.broadcast %c-1_i32_10 : i32 to vector<6x9xi32>
    %51 = arith.addi %49, %50 : vector<6x9xi32>
    %52 = arith.cmpi eq, %51, %40 : vector<6x9xi32>
    %53 = arith.extui %52 : vector<6x9xi1> to vector<6x9xi32>
    %54 = arith.sitofp %53 : vector<6x9xi32> to vector<6x9xf32>
    %c2_i32_11 = arith.constant 2 : i32
    %55 = vector.broadcast %c2_i32_11 : i32 to vector<6x9xi32>
    %56 = arith.muli %55, %39 : vector<6x9xi32>
    %c0_i32_12 = arith.constant 0 : i32
    %57 = vector.broadcast %c0_i32_12 : i32 to vector<6x9xi32>
    %58 = arith.addi %56, %57 : vector<6x9xi32>
    %59 = arith.cmpi eq, %58, %40 : vector<6x9xi32>
    %60 = arith.extui %59 : vector<6x9xi1> to vector<6x9xi32>
    %61 = arith.sitofp %60 : vector<6x9xi32> to vector<6x9xf32>
    %62 = tpu.iota {dimensions = array<i32: 0>} : vector<10x6xi32>
    %63 = tpu.iota {dimensions = array<i32: 1>} : vector<10x6xi32>
    %c2_i32_13 = arith.constant 2 : i32
    %64 = vector.broadcast %c2_i32_13 : i32 to vector<10x6xi32>
    %65 = arith.addi %62, %64 : vector<10x6xi32>
    %c2_i32_14 = arith.constant 2 : i32
    %66 = vector.broadcast %c2_i32_14 : i32 to vector<10x6xi32>
    %67 = arith.muli %66, %63 : vector<10x6xi32>
    %68 = arith.cmpi eq, %65, %67 : vector<10x6xi32>
    %69 = arith.extui %68 : vector<10x6xi1> to vector<10x6xi32>
    %70 = arith.sitofp %69 : vector<10x6xi32> to vector<10x6xf32>
    %c1_i32_15 = arith.constant 1 : i32
    %71 = vector.broadcast %c1_i32_15 : i32 to vector<10x6xi32>
    %72 = arith.addi %62, %71 : vector<10x6xi32>
    %c2_i32_16 = arith.constant 2 : i32
    %73 = vector.broadcast %c2_i32_16 : i32 to vector<10x6xi32>
    %74 = arith.muli %73, %63 : vector<10x6xi32>
    %75 = arith.cmpi eq, %72, %74 : vector<10x6xi32>
    %76 = arith.extui %75 : vector<10x6xi1> to vector<10x6xi32>
    %77 = arith.sitofp %76 : vector<10x6xi32> to vector<10x6xf32>
    %c0_i32_17 = arith.constant 0 : i32
    %78 = vector.broadcast %c0_i32_17 : i32 to vector<10x6xi32>
    %79 = arith.addi %62, %78 : vector<10x6xi32>
    %c2_i32_18 = arith.constant 2 : i32
    %80 = vector.broadcast %c2_i32_18 : i32 to vector<10x6xi32>
    %81 = arith.muli %80, %63 : vector<10x6xi32>
    %82 = arith.cmpi eq, %79, %81 : vector<10x6xi32>
    %83 = arith.extui %82 : vector<10x6xi1> to vector<10x6xi32>
    %84 = arith.sitofp %83 : vector<10x6xi32> to vector<10x6xf32>
    %85 = tpu.iota {dimensions = array<i32: 0>} : vector<18x10xi32>
    %86 = tpu.iota {dimensions = array<i32: 1>} : vector<18x10xi32>
    %c3_i32 = arith.constant 3 : i32
    %87 = vector.broadcast %c3_i32 : i32 to vector<18x10xi32>
    %88 = arith.addi %85, %87 : vector<18x10xi32>
    %c2_i32_19 = arith.constant 2 : i32
    %89 = vector.broadcast %c2_i32_19 : i32 to vector<18x10xi32>
    %90 = arith.muli %89, %86 : vector<18x10xi32>
    %91 = arith.cmpi eq, %88, %90 : vector<18x10xi32>
    %92 = arith.extui %91 : vector<18x10xi1> to vector<18x10xi32>
    %93 = arith.sitofp %92 : vector<18x10xi32> to vector<18x10xf32>
    %c2_i32_20 = arith.constant 2 : i32
    %94 = vector.broadcast %c2_i32_20 : i32 to vector<18x10xi32>
    %95 = arith.addi %85, %94 : vector<18x10xi32>
    %c2_i32_21 = arith.constant 2 : i32
    %96 = vector.broadcast %c2_i32_21 : i32 to vector<18x10xi32>
    %97 = arith.muli %96, %86 : vector<18x10xi32>
    %98 = arith.cmpi eq, %95, %97 : vector<18x10xi32>
    %99 = arith.extui %98 : vector<18x10xi1> to vector<18x10xi32>
    %100 = arith.sitofp %99 : vector<18x10xi32> to vector<18x10xf32>
    %c1_i32_22 = arith.constant 1 : i32
    %101 = vector.broadcast %c1_i32_22 : i32 to vector<18x10xi32>
    %102 = arith.addi %85, %101 : vector<18x10xi32>
    %c2_i32_23 = arith.constant 2 : i32
    %103 = vector.broadcast %c2_i32_23 : i32 to vector<18x10xi32>
    %104 = arith.muli %103, %86 : vector<18x10xi32>
    %105 = arith.cmpi eq, %102, %104 : vector<18x10xi32>
    %106 = arith.extui %105 : vector<18x10xi1> to vector<18x10xi32>
    %107 = arith.sitofp %106 : vector<18x10xi32> to vector<18x10xf32>
    %c0_i32_24 = arith.constant 0 : i32
    %108 = vector.broadcast %c0_i32_24 : i32 to vector<18x10xi32>
    %109 = arith.addi %85, %108 : vector<18x10xi32>
    %c2_i32_25 = arith.constant 2 : i32
    %110 = vector.broadcast %c2_i32_25 : i32 to vector<18x10xi32>
    %111 = arith.muli %110, %86 : vector<18x10xi32>
    %112 = arith.cmpi eq, %109, %111 : vector<18x10xi32>
    %113 = arith.extui %112 : vector<18x10xi1> to vector<18x10xi32>
    %114 = arith.sitofp %113 : vector<18x10xi32> to vector<18x10xf32>
    %c-1_i32_26 = arith.constant -1 : i32
    %115 = vector.broadcast %c-1_i32_26 : i32 to vector<18x10xi32>
    %116 = arith.addi %85, %115 : vector<18x10xi32>
    %c2_i32_27 = arith.constant 2 : i32
    %117 = vector.broadcast %c2_i32_27 : i32 to vector<18x10xi32>
    %118 = arith.muli %117, %86 : vector<18x10xi32>
    %119 = arith.cmpi eq, %116, %118 : vector<18x10xi32>
    %120 = arith.extui %119 : vector<18x10xi1> to vector<18x10xi32>
    %121 = arith.sitofp %120 : vector<18x10xi32> to vector<18x10xf32>
    %122 = tpu.iota {dimensions = array<i32: 0>} : vector<17x18xi32>
    %123 = tpu.iota {dimensions = array<i32: 1>} : vector<17x18xi32>
    %c1_i32_28 = arith.constant 1 : i32
    %124 = vector.broadcast %c1_i32_28 : i32 to vector<17x18xi32>
    %125 = arith.muli %124, %122 : vector<17x18xi32>
    %c0_i32_29 = arith.constant 0 : i32
    %126 = vector.broadcast %c0_i32_29 : i32 to vector<17x18xi32>
    %127 = arith.addi %125, %126 : vector<17x18xi32>
    %128 = arith.cmpi eq, %127, %123 : vector<17x18xi32>
    %129 = arith.extui %128 : vector<17x18xi1> to vector<17x18xi32>
    %130 = arith.sitofp %129 : vector<17x18xi32> to vector<17x18xf32>
    %c1_i32_30 = arith.constant 1 : i32
    %131 = vector.broadcast %c1_i32_30 : i32 to vector<17x18xi32>
    %132 = arith.muli %131, %122 : vector<17x18xi32>
    %c1_i32_31 = arith.constant 1 : i32
    %133 = vector.broadcast %c1_i32_31 : i32 to vector<17x18xi32>
    %134 = arith.addi %132, %133 : vector<17x18xi32>
    %135 = arith.cmpi eq, %134, %123 : vector<17x18xi32>
    %136 = arith.extui %135 : vector<17x18xi1> to vector<17x18xi32>
    %137 = arith.sitofp %136 : vector<17x18xi32> to vector<17x18xf32>
    %c0_32 = arith.constant 0 : index
    %c0_33 = arith.constant 0 : index
    %c0_34 = arith.constant 0 : index
    %c0_35 = arith.constant 0 : index
    %138 = vector.load %arg2[%c0_32, %c0_33, %c0_34, %c0_35] : memref<1x2x8x8xf32, #tpu.memory_space<vmem>>, vector<1x1x8x8xf32>
    %139 = vector.shape_cast %138 : vector<1x1x8x8xf32> to vector<8x8xf32>
    %cst = arith.constant dense<0.000000e+00> : vector<16x8xf32>
    %140 = tpu.matmul %0, %139, %cst {dimension_numbers = #tpu.dot_dimension_numbers<[1], [0], [0], [1], [0, 0, 1, 1], [], []>} : vector<16x8xf32>, vector<8x8xf32>, vector<16x8xf32> -> vector<16x8xf32>
    %cst_36 = arith.constant dense<0.000000e+00> : vector<16x16xf32>
    %141 = tpu.matmul %140, %1, %cst_36 {dimension_numbers = #tpu.dot_dimension_numbers<[1], [0], [0], [1], [0, 0, 1, 1], [], []>} : vector<16x8xf32>, vector<8x16xf32>, vector<16x16xf32> -> vector<16x16xf32>
    %c0_37 = arith.constant 0 : index
    %c0_38 = arith.constant 0 : index
    %c0_39 = arith.constant 0 : index
    %c0_40 = arith.constant 0 : index
    %142 = vector.load %arg17[%c0_37, %c0_38, %c0_39, %c0_40] : memref<1x2x16x16xf32, #tpu.memory_space<vmem>>, vector<1x1x16x16xf32>
    %143 = vector.shape_cast %142 : vector<1x1x16x16xf32> to vector<16x16xf32>
    %144 = vector.shape_cast %141 : vector<16x16xf32> to vector<1x1x16x16xf32>
    tpu.vector_store %arg17[%c0_37, %c0_38, %c0_39, %c0_40], %144 {strides = array<i32>} : memref<1x2x16x16xf32, #tpu.memory_space<vmem>>, vector<1x1x16x16xf32>,
    %c0_41 = arith.constant 0 : index
    %c0_42 = arith.constant 0 : index
    %c0_43 = arith.constant 0 : index
    %c0_44 = arith.constant 0 : index
    %145 = vector.load %arg1[%c0_41, %c0_42, %c0_43, %c0_44] : memref<1x2x8x8xf32, #tpu.memory_space<vmem>>, vector<1x1x8x8xf32>
    %146 = vector.shape_cast %145 : vector<1x1x8x8xf32> to vector<8x8xf32>
    %cst_45 = arith.constant dense<0.000000e+00> : vector<16x8xf32>
    %147 = tpu.matmul %0, %146, %cst_45 {dimension_numbers = #tpu.dot_dimension_numbers<[1], [0], [0], [1], [0, 0, 1, 1], [], []>} : vector<16x8xf32>, vector<8x8xf32>, vector<16x8xf32> -> vector<16x8xf32>
    %cst_46 = arith.constant dense<0.000000e+00> : vector<16x16xf32>
    %148 = tpu.matmul %147, %1, %cst_46 {dimension_numbers = #tpu.dot_dimension_numbers<[1], [0], [0], [1], [0, 0, 1, 1], [], []>} : vector<16x8xf32>, vector<8x16xf32>, vector<16x16xf32> -> vector<16x16xf32>
    %c0_47 = arith.constant 0 : index
    %c0_48 = arith.constant 0 : index
    %c0_49 = arith.constant 0 : index
    %c0_50 = arith.constant 0 : index
    %149 = vector.load %arg3[%c0_47, %c0_48, %c0_49, %c0_50] : memref<2x2x16x16xf32, #tpu.memory_space<vmem>>, vector<1x1x16x16xf32>
    %150 = vector.shape_cast %149 : vector<1x1x16x16xf32> to vector<16x16xf32>
    %c0_51 = arith.constant 0 : index
    %c1 = arith.constant 1 : index
    %c0_52 = arith.constant 0 : index
    %c0_53 = arith.constant 0 : index
    %151 = vector.load %arg3[%c0_51, %c1, %c0_52, %c0_53] : memref<2x2x16x16xf32, #tpu.memory_space<vmem>>, vector<1x1x16x16xf32>
    %152 = vector.shape_cast %151 : vector<1x1x16x16xf32> to vector<16x16xf32>
    %153 = arith.subf %152, %150 : vector<16x16xf32>
    %154 = math.exp %153 : vector<16x16xf32>
    %cst_54 = arith.constant 1.000000e+00 : f32
    %155 = vector.broadcast %cst_54 : f32 to vector<16x16xf32>
    %156 = arith.addf %155, %154 : vector<16x16xf32>
    %cst_55 = arith.constant 1.000000e+00 : f32
    %157 = vector.broadcast %cst_55 : f32 to vector<16x16xf32>
    %158 = arith.divf %157, %156 : vector<16x16xf32>
    %159 = arith.subf %150, %152 : vector<16x16xf32>
    %160 = math.exp %159 : vector<16x16xf32>
    %cst_56 = arith.constant 1.000000e+00 : f32
    %161 = vector.broadcast %cst_56 : f32 to vector<16x16xf32>
    %162 = arith.addf %161, %160 : vector<16x16xf32>
    %cst_57 = arith.constant 1.000000e+00 : f32
    %163 = vector.broadcast %cst_57 : f32 to vector<16x16xf32>
    %164 = arith.divf %163, %162 : vector<16x16xf32>
    %165 = tpu.concatenate %148, %158, %164 in 1 : vector<16x16xf32>, vector<16x16xf32>, vector<16x16xf32> -> vector<16x48xf32>
    %cst_58 = arith.constant dense<0.000000e+00> : vector<9x48xf32>
    %166 = tpu.matmul %10, %165, %cst_58 {dimension_numbers = #tpu.dot_dimension_numbers<[1], [0], [0], [1], [0, 0, 1, 1], [], []>} : vector<9x16xf32>, vector<16x48xf32>, vector<9x48xf32> -> vector<9x48xf32>
    %c0_59 = arith.constant 0 : index
    %c0_60 = arith.constant 0 : index
    %c0_61 = arith.constant 0 : index
    %c0_62 = arith.constant 0 : index
    %167 = vector.load %arg6[%c0_59, %c0_60, %c0_61, %c0_62] : memref<1x5x48x144xf32, #tpu.memory_space<vmem>>, vector<1x1x48x144xf32>
    %168 = vector.shape_cast %167 : vector<1x1x48x144xf32> to vector<48x144xf32>
    %cst_63 = arith.constant dense<0.000000e+00> : vector<9x144xf32>
    %169 = tpu.matmul %166, %168, %cst_63 {dimension_numbers = #tpu.dot_dimension_numbers<[1], [0], [0], [1], [0, 0, 1, 1], [], []>} : vector<9x48xf32>, vector<48x144xf32>, vector<9x144xf32> -> vector<9x144xf32>
    %cst_64 = arith.constant dense<0.000000e+00> : vector<9x48xf32>
    %170 = tpu.matmul %17, %165, %cst_64 {dimension_numbers = #tpu.dot_dimension_numbers<[1], [0], [0], [1], [0, 0, 1, 1], [], []>} : vector<9x16xf32>, vector<16x48xf32>, vector<9x48xf32> -> vector<9x48xf32>
    %c0_65 = arith.constant 0 : index
    %c1_66 = arith.constant 1 : index
    %c0_67 = arith.constant 0 : index
    %c0_68 = arith.constant 0 : index
    %171 = vector.load %arg6[%c0_65, %c1_66, %c0_67, %c0_68] : memref<1x5x48x144xf32, #tpu.memory_space<vmem>>, vector<1x1x48x144xf32>
    %172 = vector.shape_cast %171 : vector<1x1x48x144xf32> to vector<48x144xf32>
    %cst_69 = arith.constant dense<0.000000e+00> : vector<9x144xf32>
    %173 = tpu.matmul %170, %172, %cst_69 {dimension_numbers = #tpu.dot_dimension_numbers<[1], [0], [0], [1], [0, 0, 1, 1], [], []>} : vector<9x48xf32>, vector<48x144xf32>, vector<9x144xf32> -> vector<9x144xf32>
    %174 = arith.addf %169, %173 : vector<9x144xf32>
    %cst_70 = arith.constant dense<0.000000e+00> : vector<9x48xf32>
    %175 = tpu.matmul %24, %165, %cst_70 {dimension_numbers = #tpu.dot_dimension_numbers<[1], [0], [0], [1], [0, 0, 1, 1], [], []>} : vector<9x16xf32>, vector<16x48xf32>, vector<9x48xf32> -> vector<9x48xf32>
    %c0_71 = arith.constant 0 : index
    %c2 = arith.constant 2 : index
    %c0_72 = arith.constant 0 : index
    %c0_73 = arith.constant 0 : index
    %176 = vector.load %arg6[%c0_71, %c2, %c0_72, %c0_73] : memref<1x5x48x144xf32, #tpu.memory_space<vmem>>, vector<1x1x48x144xf32>
    %177 = vector.shape_cast %176 : vector<1x1x48x144xf32> to vector<48x144xf32>
    %cst_74 = arith.constant dense<0.000000e+00> : vector<9x144xf32>
    %178 = tpu.matmul %175, %177, %cst_74 {dimension_numbers = #tpu.dot_dimension_numbers<[1], [0], [0], [1], [0, 0, 1, 1], [], []>} : vector<9x48xf32>, vector<48x144xf32>, vector<9x144xf32> -> vector<9x144xf32>
    %179 = arith.addf %174, %178 : vector<9x144xf32>
    %cst_75 = arith.constant dense<0.000000e+00> : vector<9x48xf32>
    %180 = tpu.matmul %31, %165, %cst_75 {dimension_numbers = #tpu.dot_dimension_numbers<[1], [0], [0], [1], [0, 0, 1, 1], [], []>} : vector<9x16xf32>, vector<16x48xf32>, vector<9x48xf32> -> vector<9x48xf32>
    %c0_76 = arith.constant 0 : index
    %c3 = arith.constant 3 : index
    %c0_77 = arith.constant 0 : index
    %c0_78 = arith.constant 0 : index
    %181 = vector.load %arg6[%c0_76, %c3, %c0_77, %c0_78] : memref<1x5x48x144xf32, #tpu.memory_space<vmem>>, vector<1x1x48x144xf32>
    %182 = vector.shape_cast %181 : vector<1x1x48x144xf32> to vector<48x144xf32>
    %cst_79 = arith.constant dense<0.000000e+00> : vector<9x144xf32>
    %183 = tpu.matmul %180, %182, %cst_79 {dimension_numbers = #tpu.dot_dimension_numbers<[1], [0], [0], [1], [0, 0, 1, 1], [], []>} : vector<9x48xf32>, vector<48x144xf32>, vector<9x144xf32> -> vector<9x144xf32>
    %184 = arith.addf %179, %183 : vector<9x144xf32>
    %cst_80 = arith.constant dense<0.000000e+00> : vector<9x48xf32>
    %185 = tpu.matmul %38, %165, %cst_80 {dimension_numbers = #tpu.dot_dimension_numbers<[1], [0], [0], [1], [0, 0, 1, 1], [], []>} : vector<9x16xf32>, vector<16x48xf32>, vector<9x48xf32> -> vector<9x48xf32>
    %c0_81 = arith.constant 0 : index
    %c4 = arith.constant 4 : index
    %c0_82 = arith.constant 0 : index
    %c0_83 = arith.constant 0 : index
    %186 = vector.load %arg6[%c0_81, %c4, %c0_82, %c0_83] : memref<1x5x48x144xf32, #tpu.memory_space<vmem>>, vector<1x1x48x144xf32>
    %187 = vector.shape_cast %186 : vector<1x1x48x144xf32> to vector<48x144xf32>
    %cst_84 = arith.constant dense<0.000000e+00> : vector<9x144xf32>
    %188 = tpu.matmul %185, %187, %cst_84 {dimension_numbers = #tpu.dot_dimension_numbers<[1], [0], [0], [1], [0, 0, 1, 1], [], []>} : vector<9x48xf32>, vector<48x144xf32>, vector<9x144xf32> -> vector<9x144xf32>
    %189 = arith.addf %184, %188 : vector<9x144xf32>
    %c0_85 = arith.constant 0 : index
    %c0_86 = arith.constant 0 : index
    %c0_87 = arith.constant 0 : index
    %190 = vector.load %arg7[%c0_85, %c0_86, %c0_87] : memref<1x1x144xf32, #tpu.memory_space<vmem>>, vector<1x1x144xf32>
    %191 = vector.shape_cast %190 : vector<1x1x144xf32> to vector<1x144xf32>
    %192 = vector.broadcast %191 : vector<1x144xf32> to vector<9x144xf32>
    %193 = arith.addf %189, %192 : vector<9x144xf32>
    %cst_88 = arith.constant 0.000000e+00 : f32
    %194 = vector.broadcast %cst_88 : f32 to vector<9x144xf32>
    %195 = arith.maximumf %193, %194 : vector<9x144xf32>
    %cst_89 = arith.constant dense<0.000000e+00> : vector<6x144xf32>
    %196 = tpu.matmul %47, %195, %cst_89 {dimension_numbers = #tpu.dot_dimension_numbers<[1], [0], [0], [1], [0, 0, 1, 1], [], []>} : vector<6x9xf32>, vector<9x144xf32>, vector<6x144xf32> -> vector<6x144xf32>
    %c0_90 = arith.constant 0 : index
    %c0_91 = arith.constant 0 : index
    %c0_92 = arith.constant 0 : index
    %c0_93 = arith.constant 0 : index
    %197 = vector.load %arg8[%c0_90, %c0_91, %c0_92, %c0_93] : memref<1x3x144x48xf32, #tpu.memory_space<vmem>>, vector<1x1x144x48xf32>
    %198 = vector.shape_cast %197 : vector<1x1x144x48xf32> to vector<144x48xf32>
    %cst_94 = arith.constant dense<0.000000e+00> : vector<6x48xf32>
    %199 = tpu.matmul %196, %198, %cst_94 {dimension_numbers = #tpu.dot_dimension_numbers<[1], [0], [0], [1], [0, 0, 1, 1], [], []>} : vector<6x144xf32>, vector<144x48xf32>, vector<6x48xf32> -> vector<6x48xf32>
    %cst_95 = arith.constant dense<0.000000e+00> : vector<6x144xf32>
    %200 = tpu.matmul %54, %195, %cst_95 {dimension_numbers = #tpu.dot_dimension_numbers<[1], [0], [0], [1], [0, 0, 1, 1], [], []>} : vector<6x9xf32>, vector<9x144xf32>, vector<6x144xf32> -> vector<6x144xf32>
    %c0_96 = arith.constant 0 : index
    %c1_97 = arith.constant 1 : index
    %c0_98 = arith.constant 0 : index
    %c0_99 = arith.constant 0 : index
    %201 = vector.load %arg8[%c0_96, %c1_97, %c0_98, %c0_99] : memref<1x3x144x48xf32, #tpu.memory_space<vmem>>, vector<1x1x144x48xf32>
    %202 = vector.shape_cast %201 : vector<1x1x144x48xf32> to vector<144x48xf32>
    %cst_100 = arith.constant dense<0.000000e+00> : vector<6x48xf32>
    %203 = tpu.matmul %200, %202, %cst_100 {dimension_numbers = #tpu.dot_dimension_numbers<[1], [0], [0], [1], [0, 0, 1, 1], [], []>} : vector<6x144xf32>, vector<144x48xf32>, vector<6x48xf32> -> vector<6x48xf32>
    %204 = arith.addf %199, %203 : vector<6x48xf32>
    %cst_101 = arith.constant dense<0.000000e+00> : vector<6x144xf32>
    %205 = tpu.matmul %61, %195, %cst_101 {dimension_numbers = #tpu.dot_dimension_numbers<[1], [0], [0], [1], [0, 0, 1, 1], [], []>} : vector<6x9xf32>, vector<9x144xf32>, vector<6x144xf32> -> vector<6x144xf32>
    %c0_102 = arith.constant 0 : index
    %c2_103 = arith.constant 2 : index
    %c0_104 = arith.constant 0 : index
    %c0_105 = arith.constant 0 : index
    %206 = vector.load %arg8[%c0_102, %c2_103, %c0_104, %c0_105] : memref<1x3x144x48xf32, #tpu.memory_space<vmem>>, vector<1x1x144x48xf32>
    %207 = vector.shape_cast %206 : vector<1x1x144x48xf32> to vector<144x48xf32>
    %cst_106 = arith.constant dense<0.000000e+00> : vector<6x48xf32>
    %208 = tpu.matmul %205, %207, %cst_106 {dimension_numbers = #tpu.dot_dimension_numbers<[1], [0], [0], [1], [0, 0, 1, 1], [], []>} : vector<6x144xf32>, vector<144x48xf32>, vector<6x48xf32> -> vector<6x48xf32>
    %209 = arith.addf %204, %208 : vector<6x48xf32>
    %c0_107 = arith.constant 0 : index
    %c0_108 = arith.constant 0 : index
    %c0_109 = arith.constant 0 : index
    %210 = vector.load %arg9[%c0_107, %c0_108, %c0_109] : memref<1x1x48xf32, #tpu.memory_space<vmem>>, vector<1x1x48xf32>
    %211 = vector.shape_cast %210 : vector<1x1x48xf32> to vector<1x48xf32>
    %212 = vector.broadcast %211 : vector<1x48xf32> to vector<6x48xf32>
    %213 = arith.addf %209, %212 : vector<6x48xf32>
    %cst_110 = arith.constant 0.000000e+00 : f32
    %214 = vector.broadcast %cst_110 : f32 to vector<6x48xf32>
    %215 = arith.maximumf %213, %214 : vector<6x48xf32>
    %cst_111 = arith.constant dense<0.000000e+00> : vector<10x48xf32>
    %216 = tpu.matmul %70, %215, %cst_111 {dimension_numbers = #tpu.dot_dimension_numbers<[1], [0], [0], [1], [0, 0, 1, 1], [], []>} : vector<10x6xf32>, vector<6x48xf32>, vector<10x48xf32> -> vector<10x48xf32>
    %c0_112 = arith.constant 0 : index
    %c0_113 = arith.constant 0 : index
    %c0_114 = arith.constant 0 : index
    %c0_115 = arith.constant 0 : index
    %217 = vector.load %arg10[%c0_112, %c0_113, %c0_114, %c0_115] : memref<1x3x48x80xf32, #tpu.memory_space<vmem>>, vector<1x1x48x80xf32>
    %218 = vector.shape_cast %217 : vector<1x1x48x80xf32> to vector<48x80xf32>
    %cst_116 = arith.constant dense<0.000000e+00> : vector<10x80xf32>
    %219 = tpu.matmul %216, %218, %cst_116 {dimension_numbers = #tpu.dot_dimension_numbers<[1], [0], [0], [1], [0, 0, 1, 1], [], []>} : vector<10x48xf32>, vector<48x80xf32>, vector<10x80xf32> -> vector<10x80xf32>
    %cst_117 = arith.constant dense<0.000000e+00> : vector<10x48xf32>
    %220 = tpu.matmul %77, %215, %cst_117 {dimension_numbers = #tpu.dot_dimension_numbers<[1], [0], [0], [1], [0, 0, 1, 1], [], []>} : vector<10x6xf32>, vector<6x48xf32>, vector<10x48xf32> -> vector<10x48xf32>
    %c0_118 = arith.constant 0 : index
    %c1_119 = arith.constant 1 : index
    %c0_120 = arith.constant 0 : index
    %c0_121 = arith.constant 0 : index
    %221 = vector.load %arg10[%c0_118, %c1_119, %c0_120, %c0_121] : memref<1x3x48x80xf32, #tpu.memory_space<vmem>>, vector<1x1x48x80xf32>
    %222 = vector.shape_cast %221 : vector<1x1x48x80xf32> to vector<48x80xf32>
    %cst_122 = arith.constant dense<0.000000e+00> : vector<10x80xf32>
    %223 = tpu.matmul %220, %222, %cst_122 {dimension_numbers = #tpu.dot_dimension_numbers<[1], [0], [0], [1], [0, 0, 1, 1], [], []>} : vector<10x48xf32>, vector<48x80xf32>, vector<10x80xf32> -> vector<10x80xf32>
    %224 = arith.addf %219, %223 : vector<10x80xf32>
    %cst_123 = arith.constant dense<0.000000e+00> : vector<10x48xf32>
    %225 = tpu.matmul %84, %215, %cst_123 {dimension_numbers = #tpu.dot_dimension_numbers<[1], [0], [0], [1], [0, 0, 1, 1], [], []>} : vector<10x6xf32>, vector<6x48xf32>, vector<10x48xf32> -> vector<10x48xf32>
    %c0_124 = arith.constant 0 : index
    %c2_125 = arith.constant 2 : index
    %c0_126 = arith.constant 0 : index
    %c0_127 = arith.constant 0 : index
    %226 = vector.load %arg10[%c0_124, %c2_125, %c0_126, %c0_127] : memref<1x3x48x80xf32, #tpu.memory_space<vmem>>, vector<1x1x48x80xf32>
    %227 = vector.shape_cast %226 : vector<1x1x48x80xf32> to vector<48x80xf32>
    %cst_128 = arith.constant dense<0.000000e+00> : vector<10x80xf32>
    %228 = tpu.matmul %225, %227, %cst_128 {dimension_numbers = #tpu.dot_dimension_numbers<[1], [0], [0], [1], [0, 0, 1, 1], [], []>} : vector<10x48xf32>, vector<48x80xf32>, vector<10x80xf32> -> vector<10x80xf32>
    %229 = arith.addf %224, %228 : vector<10x80xf32>
    %c0_129 = arith.constant 0 : index
    %c0_130 = arith.constant 0 : index
    %c0_131 = arith.constant 0 : index
    %230 = vector.load %arg11[%c0_129, %c0_130, %c0_131] : memref<1x1x80xf32, #tpu.memory_space<vmem>>, vector<1x1x80xf32>
    %231 = vector.shape_cast %230 : vector<1x1x80xf32> to vector<1x80xf32>
    %232 = vector.broadcast %231 : vector<1x80xf32> to vector<10x80xf32>
    %233 = arith.addf %229, %232 : vector<10x80xf32>
    %cst_132 = arith.constant 0.000000e+00 : f32
    %234 = vector.broadcast %cst_132 : f32 to vector<10x80xf32>
    %235 = arith.maximumf %233, %234 : vector<10x80xf32>
    %cst_133 = arith.constant dense<0.000000e+00> : vector<18x80xf32>
    %236 = tpu.matmul %93, %235, %cst_133 {dimension_numbers = #tpu.dot_dimension_numbers<[1], [0], [0], [1], [0, 0, 1, 1], [], []>} : vector<18x10xf32>, vector<10x80xf32>, vector<18x80xf32> -> vector<18x80xf32>
    %c0_134 = arith.constant 0 : index
    %c0_135 = arith.constant 0 : index
    %c0_136 = arith.constant 0 : index
    %c0_137 = arith.constant 0 : index
    %237 = vector.load %arg12[%c0_134, %c0_135, %c0_136, %c0_137] : memref<1x5x80x288xf32, #tpu.memory_space<vmem>>, vector<1x1x80x288xf32>
    %238 = vector.shape_cast %237 : vector<1x1x80x288xf32> to vector<80x288xf32>
    %cst_138 = arith.constant dense<0.000000e+00> : vector<18x288xf32>
    %239 = tpu.matmul %236, %238, %cst_138 {dimension_numbers = #tpu.dot_dimension_numbers<[1], [0], [0], [1], [0, 0, 1, 1], [], []>} : vector<18x80xf32>, vector<80x288xf32>, vector<18x288xf32> -> vector<18x288xf32>
    %cst_139 = arith.constant dense<0.000000e+00> : vector<18x80xf32>
    %240 = tpu.matmul %100, %235, %cst_139 {dimension_numbers = #tpu.dot_dimension_numbers<[1], [0], [0], [1], [0, 0, 1, 1], [], []>} : vector<18x10xf32>, vector<10x80xf32>, vector<18x80xf32> -> vector<18x80xf32>
    %c0_140 = arith.constant 0 : index
    %c1_141 = arith.constant 1 : index
    %c0_142 = arith.constant 0 : index
    %c0_143 = arith.constant 0 : index
    %241 = vector.load %arg12[%c0_140, %c1_141, %c0_142, %c0_143] : memref<1x5x80x288xf32, #tpu.memory_space<vmem>>, vector<1x1x80x288xf32>
    %242 = vector.shape_cast %241 : vector<1x1x80x288xf32> to vector<80x288xf32>
    %cst_144 = arith.constant dense<0.000000e+00> : vector<18x288xf32>
    %243 = tpu.matmul %240, %242, %cst_144 {dimension_numbers = #tpu.dot_dimension_numbers<[1], [0], [0], [1], [0, 0, 1, 1], [], []>} : vector<18x80xf32>, vector<80x288xf32>, vector<18x288xf32> -> vector<18x288xf32>
    %244 = arith.addf %239, %243 : vector<18x288xf32>
    %cst_145 = arith.constant dense<0.000000e+00> : vector<18x80xf32>
    %245 = tpu.matmul %107, %235, %cst_145 {dimension_numbers = #tpu.dot_dimension_numbers<[1], [0], [0], [1], [0, 0, 1, 1], [], []>} : vector<18x10xf32>, vector<10x80xf32>, vector<18x80xf32> -> vector<18x80xf32>
    %c0_146 = arith.constant 0 : index
    %c2_147 = arith.constant 2 : index
    %c0_148 = arith.constant 0 : index
    %c0_149 = arith.constant 0 : index
    %246 = vector.load %arg12[%c0_146, %c2_147, %c0_148, %c0_149] : memref<1x5x80x288xf32, #tpu.memory_space<vmem>>, vector<1x1x80x288xf32>
    %247 = vector.shape_cast %246 : vector<1x1x80x288xf32> to vector<80x288xf32>
    %cst_150 = arith.constant dense<0.000000e+00> : vector<18x288xf32>
    %248 = tpu.matmul %245, %247, %cst_150 {dimension_numbers = #tpu.dot_dimension_numbers<[1], [0], [0], [1], [0, 0, 1, 1], [], []>} : vector<18x80xf32>, vector<80x288xf32>, vector<18x288xf32> -> vector<18x288xf32>
    %249 = arith.addf %244, %248 : vector<18x288xf32>
    %cst_151 = arith.constant dense<0.000000e+00> : vector<18x80xf32>
    %250 = tpu.matmul %114, %235, %cst_151 {dimension_numbers = #tpu.dot_dimension_numbers<[1], [0], [0], [1], [0, 0, 1, 1], [], []>} : vector<18x10xf32>, vector<10x80xf32>, vector<18x80xf32> -> vector<18x80xf32>
    %c0_152 = arith.constant 0 : index
    %c3_153 = arith.constant 3 : index
    %c0_154 = arith.constant 0 : index
    %c0_155 = arith.constant 0 : index
    %251 = vector.load %arg12[%c0_152, %c3_153, %c0_154, %c0_155] : memref<1x5x80x288xf32, #tpu.memory_space<vmem>>, vector<1x1x80x288xf32>
    %252 = vector.shape_cast %251 : vector<1x1x80x288xf32> to vector<80x288xf32>
    %cst_156 = arith.constant dense<0.000000e+00> : vector<18x288xf32>
    %253 = tpu.matmul %250, %252, %cst_156 {dimension_numbers = #tpu.dot_dimension_numbers<[1], [0], [0], [1], [0, 0, 1, 1], [], []>} : vector<18x80xf32>, vector<80x288xf32>, vector<18x288xf32> -> vector<18x288xf32>
    %254 = arith.addf %249, %253 : vector<18x288xf32>
    %cst_157 = arith.constant dense<0.000000e+00> : vector<18x80xf32>
    %255 = tpu.matmul %121, %235, %cst_157 {dimension_numbers = #tpu.dot_dimension_numbers<[1], [0], [0], [1], [0, 0, 1, 1], [], []>} : vector<18x10xf32>, vector<10x80xf32>, vector<18x80xf32> -> vector<18x80xf32>
    %c0_158 = arith.constant 0 : index
    %c4_159 = arith.constant 4 : index
    %c0_160 = arith.constant 0 : index
    %c0_161 = arith.constant 0 : index
    %256 = vector.load %arg12[%c0_158, %c4_159, %c0_160, %c0_161] : memref<1x5x80x288xf32, #tpu.memory_space<vmem>>, vector<1x1x80x288xf32>
    %257 = vector.shape_cast %256 : vector<1x1x80x288xf32> to vector<80x288xf32>
    %cst_162 = arith.constant dense<0.000000e+00> : vector<18x288xf32>
    %258 = tpu.matmul %255, %257, %cst_162 {dimension_numbers = #tpu.dot_dimension_numbers<[1], [0], [0], [1], [0, 0, 1, 1], [], []>} : vector<18x80xf32>, vector<80x288xf32>, vector<18x288xf32> -> vector<18x288xf32>
    %259 = arith.addf %254, %258 : vector<18x288xf32>
    %c0_163 = arith.constant 0 : index
    %c0_164 = arith.constant 0 : index
    %c0_165 = arith.constant 0 : index
    %260 = vector.load %arg13[%c0_163, %c0_164, %c0_165] : memref<1x1x288xf32, #tpu.memory_space<vmem>>, vector<1x1x288xf32>
    %261 = vector.shape_cast %260 : vector<1x1x288xf32> to vector<1x288xf32>
    %262 = vector.broadcast %261 : vector<1x288xf32> to vector<18x288xf32>
    %263 = arith.addf %259, %262 : vector<18x288xf32>
    %cst_166 = arith.constant 0.000000e+00 : f32
    %264 = vector.broadcast %cst_166 : f32 to vector<18x288xf32>
    %265 = arith.maximumf %263, %264 : vector<18x288xf32>
    %cst_167 = arith.constant dense<0.000000e+00> : vector<17x288xf32>
    %266 = tpu.matmul %130, %265, %cst_167 {dimension_numbers = #tpu.dot_dimension_numbers<[1], [0], [0], [1], [0, 0, 1, 1], [], []>} : vector<17x18xf32>, vector<18x288xf32>, vector<17x288xf32> -> vector<17x288xf32>
    %c0_168 = arith.constant 0 : index
    %c0_169 = arith.constant 0 : index
    %c0_170 = arith.constant 0 : index
    %c0_171 = arith.constant 0 : index
    %267 = vector.load %arg14[%c0_168, %c0_169, %c0_170, %c0_171] : memref<1x2x288x17xf32, #tpu.memory_space<vmem>>, vector<1x1x288x17xf32>
    %268 = vector.shape_cast %267 : vector<1x1x288x17xf32> to vector<288x17xf32>
    %cst_172 = arith.constant dense<0.000000e+00> : vector<17x17xf32>
    %269 = tpu.matmul %266, %268, %cst_172 {dimension_numbers = #tpu.dot_dimension_numbers<[1], [0], [0], [1], [0, 0, 1, 1], [], []>} : vector<17x288xf32>, vector<288x17xf32>, vector<17x17xf32> -> vector<17x17xf32>
    %cst_173 = arith.constant dense<0.000000e+00> : vector<17x288xf32>
    %270 = tpu.matmul %137, %265, %cst_173 {dimension_numbers = #tpu.dot_dimension_numbers<[1], [0], [0], [1], [0, 0, 1, 1], [], []>} : vector<17x18xf32>, vector<18x288xf32>, vector<17x288xf32> -> vector<17x288xf32>
    %c0_174 = arith.constant 0 : index
    %c1_175 = arith.constant 1 : index
    %c0_176 = arith.constant 0 : index
    %c0_177 = arith.constant 0 : index
    %271 = vector.load %arg14[%c0_174, %c1_175, %c0_176, %c0_177] : memref<1x2x288x17xf32, #tpu.memory_space<vmem>>, vector<1x1x288x17xf32>
    %272 = vector.shape_cast %271 : vector<1x1x288x17xf32> to vector<288x17xf32>
    %cst_178 = arith.constant dense<0.000000e+00> : vector<17x17xf32>
    %273 = tpu.matmul %270, %272, %cst_178 {dimension_numbers = #tpu.dot_dimension_numbers<[1], [0], [0], [1], [0, 0, 1, 1], [], []>} : vector<17x288xf32>, vector<288x17xf32>, vector<17x17xf32> -> vector<17x17xf32>
    %274 = arith.addf %269, %273 : vector<17x17xf32>
    %c0_179 = arith.constant 0 : index
    %c0_180 = arith.constant 0 : index
    %c0_181 = arith.constant 0 : index
    %275 = vector.load %arg15[%c0_179, %c0_180, %c0_181] : memref<1x1x17xf32, #tpu.memory_space<vmem>>, vector<1x1x17xf32>
    %276 = vector.shape_cast %275 : vector<1x1x17xf32> to vector<1x17xf32>
    %277 = vector.broadcast %276 : vector<1x17xf32> to vector<17x17xf32>
    %278 = arith.addf %274, %277 : vector<17x17xf32>
    %c0_182 = arith.constant 0 : index
    %c0_183 = arith.constant 0 : index
    %c0_184 = arith.constant 0 : index
    %c0_185 = arith.constant 0 : index
    %279 = vector.load %arg16[%c0_182, %c0_183, %c0_184, %c0_185] : memref<1x2x17x17xf32, #tpu.memory_space<vmem>>, vector<1x1x17x17xf32>
    %280 = vector.shape_cast %279 : vector<1x1x17x17xf32> to vector<17x17xf32>
    %281 = vector.shape_cast %278 : vector<17x17xf32> to vector<1x1x17x17xf32>
    tpu.vector_store %arg16[%c0_182, %c0_183, %c0_184, %c0_185], %281 {strides = array<i32>} : memref<1x2x17x17xf32, #tpu.memory_space<vmem>>, vector<1x1x17x17xf32>,
    %c0_186 = arith.constant 0 : index
    %c1_187 = arith.constant 1 : index
    %c0_188 = arith.constant 0 : index
    %c0_189 = arith.constant 0 : index
    %282 = vector.load %arg2[%c0_186, %c1_187, %c0_188, %c0_189] : memref<1x2x8x8xf32, #tpu.memory_space<vmem>>, vector<1x1x8x8xf32>
    %283 = vector.shape_cast %282 : vector<1x1x8x8xf32> to vector<8x8xf32>
    %cst_190 = arith.constant dense<0.000000e+00> : vector<16x8xf32>
    %284 = tpu.matmul %0, %283, %cst_190 {dimension_numbers = #tpu.dot_dimension_numbers<[1], [0], [0], [1], [0, 0, 1, 1], [], []>} : vector<16x8xf32>, vector<8x8xf32>, vector<16x8xf32> -> vector<16x8xf32>
    %cst_191 = arith.constant dense<0.000000e+00> : vector<16x16xf32>
    %285 = tpu.matmul %284, %1, %cst_191 {dimension_numbers = #tpu.dot_dimension_numbers<[1], [0], [0], [1], [0, 0, 1, 1], [], []>} : vector<16x8xf32>, vector<8x16xf32>, vector<16x16xf32> -> vector<16x16xf32>
    %c0_192 = arith.constant 0 : index
    %c1_193 = arith.constant 1 : index
    %c0_194 = arith.constant 0 : index
    %c0_195 = arith.constant 0 : index
    %286 = vector.load %arg17[%c0_192, %c1_193, %c0_194, %c0_195] : memref<1x2x16x16xf32, #tpu.memory_space<vmem>>, vector<1x1x16x16xf32>
    %287 = vector.shape_cast %286 : vector<1x1x16x16xf32> to vector<16x16xf32>
    %288 = vector.shape_cast %285 : vector<16x16xf32> to vector<1x1x16x16xf32>
    tpu.vector_store %arg17[%c0_192, %c1_193, %c0_194, %c0_195], %288 {strides = array<i32>} : memref<1x2x16x16xf32, #tpu.memory_space<vmem>>, vector<1x1x16x16xf32>,
    %c0_196 = arith.constant 0 : index
    %c1_197 = arith.constant 1 : index
    %c0_198 = arith.constant 0 : index
    %c0_199 = arith.constant 0 : index
    %289 = vector.load %arg1[%c0_196, %c1_197, %c0_198, %c0_199] : memref<1x2x8x8xf32, #tpu.memory_space<vmem>>, vector<1x1x8x8xf32>
    %290 = vector.shape_cast %289 : vector<1x1x8x8xf32> to vector<8x8xf32>
    %cst_200 = arith.constant dense<0.000000e+00> : vector<16x8xf32>
    %291 = tpu.matmul %0, %290, %cst_200 {dimension_numbers = #tpu.dot_dimension_numbers<[1], [0], [0], [1], [0, 0, 1, 1], [], []>} : vector<16x8xf32>, vector<8x8xf32>, vector<16x8xf32> -> vector<16x8xf32>
    %cst_201 = arith.constant dense<0.000000e+00> : vector<16x16xf32>
    %292 = tpu.matmul %291, %1, %cst_201 {dimension_numbers = #tpu.dot_dimension_numbers<[1], [0], [0], [1], [0, 0, 1, 1], [], []>} : vector<16x8xf32>, vector<8x16xf32>, vector<16x16xf32> -> vector<16x16xf32>
    %c1_202 = arith.constant 1 : index
    %c0_203 = arith.constant 0 : index
    %c0_204 = arith.constant 0 : index
    %c0_205 = arith.constant 0 : index
    %293 = vector.load %arg3[%c1_202, %c0_203, %c0_204, %c0_205] : memref<2x2x16x16xf32, #tpu.memory_space<vmem>>, vector<1x1x16x16xf32>
    %294 = vector.shape_cast %293 : vector<1x1x16x16xf32> to vector<16x16xf32>
    %c1_206 = arith.constant 1 : index
    %c1_207 = arith.constant 1 : index
    %c0_208 = arith.constant 0 : index
    %c0_209 = arith.constant 0 : index
    %295 = vector.load %arg3[%c1_206, %c1_207, %c0_208, %c0_209] : memref<2x2x16x16xf32, #tpu.memory_space<vmem>>, vector<1x1x16x16xf32>
    %296 = vector.shape_cast %295 : vector<1x1x16x16xf32> to vector<16x16xf32>
    %297 = arith.subf %296, %294 : vector<16x16xf32>
    %298 = math.exp %297 : vector<16x16xf32>
    %cst_210 = arith.constant 1.000000e+00 : f32
    %299 = vector.broadcast %cst_210 : f32 to vector<16x16xf32>
    %300 = arith.addf %299, %298 : vector<16x16xf32>
    %cst_211 = arith.constant 1.000000e+00 : f32
    %301 = vector.broadcast %cst_211 : f32 to vector<16x16xf32>
    %302 = arith.divf %301, %300 : vector<16x16xf32>
    %303 = arith.subf %294, %296 : vector<16x16xf32>
    %304 = math.exp %303 : vector<16x16xf32>
    %cst_212 = arith.constant 1.000000e+00 : f32
    %305 = vector.broadcast %cst_212 : f32 to vector<16x16xf32>
    %306 = arith.addf %305, %304 : vector<16x16xf32>
    %cst_213 = arith.constant 1.000000e+00 : f32
    %307 = vector.broadcast %cst_213 : f32 to vector<16x16xf32>
    %308 = arith.divf %307, %306 : vector<16x16xf32>
    %309 = tpu.concatenate %292, %302, %308 in 1 : vector<16x16xf32>, vector<16x16xf32>, vector<16x16xf32> -> vector<16x48xf32>
    %cst_214 = arith.constant dense<0.000000e+00> : vector<9x48xf32>
    %310 = tpu.matmul %10, %309, %cst_214 {dimension_numbers = #tpu.dot_dimension_numbers<[1], [0], [0], [1], [0, 0, 1, 1], [], []>} : vector<9x16xf32>, vector<16x48xf32>, vector<9x48xf32> -> vector<9x48xf32>
    %c0_215 = arith.constant 0 : index
    %c0_216 = arith.constant 0 : index
    %c0_217 = arith.constant 0 : index
    %c0_218 = arith.constant 0 : index
    %311 = vector.load %arg6[%c0_215, %c0_216, %c0_217, %c0_218] : memref<1x5x48x144xf32, #tpu.memory_space<vmem>>, vector<1x1x48x144xf32>
    %312 = vector.shape_cast %311 : vector<1x1x48x144xf32> to vector<48x144xf32>
    %cst_219 = arith.constant dense<0.000000e+00> : vector<9x144xf32>
    %313 = tpu.matmul %310, %312, %cst_219 {dimension_numbers = #tpu.dot_dimension_numbers<[1], [0], [0], [1], [0, 0, 1, 1], [], []>} : vector<9x48xf32>, vector<48x144xf32>, vector<9x144xf32> -> vector<9x144xf32>
    %cst_220 = arith.constant dense<0.000000e+00> : vector<9x48xf32>
    %314 = tpu.matmul %17, %309, %cst_220 {dimension_numbers = #tpu.dot_dimension_numbers<[1], [0], [0], [1], [0, 0, 1, 1], [], []>} : vector<9x16xf32>, vector<16x48xf32>, vector<9x48xf32> -> vector<9x48xf32>
    %c0_221 = arith.constant 0 : index
    %c1_222 = arith.constant 1 : index
    %c0_223 = arith.constant 0 : index
    %c0_224 = arith.constant 0 : index
    %315 = vector.load %arg6[%c0_221, %c1_222, %c0_223, %c0_224] : memref<1x5x48x144xf32, #tpu.memory_space<vmem>>, vector<1x1x48x144xf32>
    %316 = vector.shape_cast %315 : vector<1x1x48x144xf32> to vector<48x144xf32>
    %cst_225 = arith.constant dense<0.000000e+00> : vector<9x144xf32>
    %317 = tpu.matmul %314, %316, %cst_225 {dimension_numbers = #tpu.dot_dimension_numbers<[1], [0], [0], [1], [0, 0, 1, 1], [], []>} : vector<9x48xf32>, vector<48x144xf32>, vector<9x144xf32> -> vector<9x144xf32>
    %318 = arith.addf %313, %317 : vector<9x144xf32>
    %cst_226 = arith.constant dense<0.000000e+00> : vector<9x48xf32>
    %319 = tpu.matmul %24, %309, %cst_226 {dimension_numbers = #tpu.dot_dimension_numbers<[1], [0], [0], [1], [0, 0, 1, 1], [], []>} : vector<9x16xf32>, vector<16x48xf32>, vector<9x48xf32> -> vector<9x48xf32>
    %c0_227 = arith.constant 0 : index
    %c2_228 = arith.constant 2 : index
    %c0_229 = arith.constant 0 : index
    %c0_230 = arith.constant 0 : index
    %320 = vector.load %arg6[%c0_227, %c2_228, %c0_229, %c0_230] : memref<1x5x48x144xf32, #tpu.memory_space<vmem>>, vector<1x1x48x144xf32>
    %321 = vector.shape_cast %320 : vector<1x1x48x144xf32> to vector<48x144xf32>
    %cst_231 = arith.constant dense<0.000000e+00> : vector<9x144xf32>
    %322 = tpu.matmul %319, %321, %cst_231 {dimension_numbers = #tpu.dot_dimension_numbers<[1], [0], [0], [1], [0, 0, 1, 1], [], []>} : vector<9x48xf32>, vector<48x144xf32>, vector<9x144xf32> -> vector<9x144xf32>
    %323 = arith.addf %318, %322 : vector<9x144xf32>
    %cst_232 = arith.constant dense<0.000000e+00> : vector<9x48xf32>
    %324 = tpu.matmul %31, %309, %cst_232 {dimension_numbers = #tpu.dot_dimension_numbers<[1], [0], [0], [1], [0, 0, 1, 1], [], []>} : vector<9x16xf32>, vector<16x48xf32>, vector<9x48xf32> -> vector<9x48xf32>
    %c0_233 = arith.constant 0 : index
    %c3_234 = arith.constant 3 : index
    %c0_235 = arith.constant 0 : index
    %c0_236 = arith.constant 0 : index
    %325 = vector.load %arg6[%c0_233, %c3_234, %c0_235, %c0_236] : memref<1x5x48x144xf32, #tpu.memory_space<vmem>>, vector<1x1x48x144xf32>
    %326 = vector.shape_cast %325 : vector<1x1x48x144xf32> to vector<48x144xf32>
    %cst_237 = arith.constant dense<0.000000e+00> : vector<9x144xf32>
    %327 = tpu.matmul %324, %326, %cst_237 {dimension_numbers = #tpu.dot_dimension_numbers<[1], [0], [0], [1], [0, 0, 1, 1], [], []>} : vector<9x48xf32>, vector<48x144xf32>, vector<9x144xf32> -> vector<9x144xf32>
    %328 = arith.addf %323, %327 : vector<9x144xf32>
    %cst_238 = arith.constant dense<0.000000e+00> : vector<9x48xf32>
    %329 = tpu.matmul %38, %309, %cst_238 {dimension_numbers = #tpu.dot_dimension_numbers<[1], [0], [0], [1], [0, 0, 1, 1], [], []>} : vector<9x16xf32>, vector<16x48xf32>, vector<9x48xf32> -> vector<9x48xf32>
    %c0_239 = arith.constant 0 : index
    %c4_240 = arith.constant 4 : index
    %c0_241 = arith.constant 0 : index
    %c0_242 = arith.constant 0 : index
    %330 = vector.load %arg6[%c0_239, %c4_240, %c0_241, %c0_242] : memref<1x5x48x144xf32, #tpu.memory_space<vmem>>, vector<1x1x48x144xf32>
    %331 = vector.shape_cast %330 : vector<1x1x48x144xf32> to vector<48x144xf32>
    %cst_243 = arith.constant dense<0.000000e+00> : vector<9x144xf32>
    %332 = tpu.matmul %329, %331, %cst_243 {dimension_numbers = #tpu.dot_dimension_numbers<[1], [0], [0], [1], [0, 0, 1, 1], [], []>} : vector<9x48xf32>, vector<48x144xf32>, vector<9x144xf32> -> vector<9x144xf32>
    %333 = arith.addf %328, %332 : vector<9x144xf32>
    %c0_244 = arith.constant 0 : index
    %c0_245 = arith.constant 0 : index
    %c0_246 = arith.constant 0 : index
    %334 = vector.load %arg7[%c0_244, %c0_245, %c0_246] : memref<1x1x144xf32, #tpu.memory_space<vmem>>, vector<1x1x144xf32>
    %335 = vector.shape_cast %334 : vector<1x1x144xf32> to vector<1x144xf32>
    %336 = vector.broadcast %335 : vector<1x144xf32> to vector<9x144xf32>
    %337 = arith.addf %333, %336 : vector<9x144xf32>
    %cst_247 = arith.constant 0.000000e+00 : f32
    %338 = vector.broadcast %cst_247 : f32 to vector<9x144xf32>
    %339 = arith.maximumf %337, %338 : vector<9x144xf32>
    %cst_248 = arith.constant dense<0.000000e+00> : vector<6x144xf32>
    %340 = tpu.matmul %47, %339, %cst_248 {dimension_numbers = #tpu.dot_dimension_numbers<[1], [0], [0], [1], [0, 0, 1, 1], [], []>} : vector<6x9xf32>, vector<9x144xf32>, vector<6x144xf32> -> vector<6x144xf32>
    %c0_249 = arith.constant 0 : index
    %c0_250 = arith.constant 0 : index
    %c0_251 = arith.constant 0 : index
    %c0_252 = arith.constant 0 : index
    %341 = vector.load %arg8[%c0_249, %c0_250, %c0_251, %c0_252] : memref<1x3x144x48xf32, #tpu.memory_space<vmem>>, vector<1x1x144x48xf32>
    %342 = vector.shape_cast %341 : vector<1x1x144x48xf32> to vector<144x48xf32>
    %cst_253 = arith.constant dense<0.000000e+00> : vector<6x48xf32>
    %343 = tpu.matmul %340, %342, %cst_253 {dimension_numbers = #tpu.dot_dimension_numbers<[1], [0], [0], [1], [0, 0, 1, 1], [], []>} : vector<6x144xf32>, vector<144x48xf32>, vector<6x48xf32> -> vector<6x48xf32>
    %cst_254 = arith.constant dense<0.000000e+00> : vector<6x144xf32>
    %344 = tpu.matmul %54, %339, %cst_254 {dimension_numbers = #tpu.dot_dimension_numbers<[1], [0], [0], [1], [0, 0, 1, 1], [], []>} : vector<6x9xf32>, vector<9x144xf32>, vector<6x144xf32> -> vector<6x144xf32>
    %c0_255 = arith.constant 0 : index
    %c1_256 = arith.constant 1 : index
    %c0_257 = arith.constant 0 : index
    %c0_258 = arith.constant 0 : index
    %345 = vector.load %arg8[%c0_255, %c1_256, %c0_257, %c0_258] : memref<1x3x144x48xf32, #tpu.memory_space<vmem>>, vector<1x1x144x48xf32>
    %346 = vector.shape_cast %345 : vector<1x1x144x48xf32> to vector<144x48xf32>
    %cst_259 = arith.constant dense<0.000000e+00> : vector<6x48xf32>
    %347 = tpu.matmul %344, %346, %cst_259 {dimension_numbers = #tpu.dot_dimension_numbers<[1], [0], [0], [1], [0, 0, 1, 1], [], []>} : vector<6x144xf32>, vector<144x48xf32>, vector<6x48xf32> -> vector<6x48xf32>
    %348 = arith.addf %343, %347 : vector<6x48xf32>
    %cst_260 = arith.constant dense<0.000000e+00> : vector<6x144xf32>
    %349 = tpu.matmul %61, %339, %cst_260 {dimension_numbers = #tpu.dot_dimension_numbers<[1], [0], [0], [1], [0, 0, 1, 1], [], []>} : vector<6x9xf32>, vector<9x144xf32>, vector<6x144xf32> -> vector<6x144xf32>
    %c0_261 = arith.constant 0 : index
    %c2_262 = arith.constant 2 : index
    %c0_263 = arith.constant 0 : index
    %c0_264 = arith.constant 0 : index
    %350 = vector.load %arg8[%c0_261, %c2_262, %c0_263, %c0_264] : memref<1x3x144x48xf32, #tpu.memory_space<vmem>>, vector<1x1x144x48xf32>
    %351 = vector.shape_cast %350 : vector<1x1x144x48xf32> to vector<144x48xf32>
    %cst_265 = arith.constant dense<0.000000e+00> : vector<6x48xf32>
    %352 = tpu.matmul %349, %351, %cst_265 {dimension_numbers = #tpu.dot_dimension_numbers<[1], [0], [0], [1], [0, 0, 1, 1], [], []>} : vector<6x144xf32>, vector<144x48xf32>, vector<6x48xf32> -> vector<6x48xf32>
    %353 = arith.addf %348, %352 : vector<6x48xf32>
    %c0_266 = arith.constant 0 : index
    %c0_267 = arith.constant 0 : index
    %c0_268 = arith.constant 0 : index
    %354 = vector.load %arg9[%c0_266, %c0_267, %c0_268] : memref<1x1x48xf32, #tpu.memory_space<vmem>>, vector<1x1x48xf32>
    %355 = vector.shape_cast %354 : vector<1x1x48xf32> to vector<1x48xf32>
    %356 = vector.broadcast %355 : vector<1x48xf32> to vector<6x48xf32>
    %357 = arith.addf %353, %356 : vector<6x48xf32>
    %cst_269 = arith.constant 0.000000e+00 : f32
    %358 = vector.broadcast %cst_269 : f32 to vector<6x48xf32>
    %359 = arith.maximumf %357, %358 : vector<6x48xf32>
    %cst_270 = arith.constant dense<0.000000e+00> : vector<10x48xf32>
    %360 = tpu.matmul %70, %359, %cst_270 {dimension_numbers = #tpu.dot_dimension_numbers<[1], [0], [0], [1], [0, 0, 1, 1], [], []>} : vector<10x6xf32>, vector<6x48xf32>, vector<10x48xf32> -> vector<10x48xf32>
    %c0_271 = arith.constant 0 : index
    %c0_272 = arith.constant 0 : index
    %c0_273 = arith.constant 0 : index
    %c0_274 = arith.constant 0 : index
    %361 = vector.load %arg10[%c0_271, %c0_272, %c0_273, %c0_274] : memref<1x3x48x80xf32, #tpu.memory_space<vmem>>, vector<1x1x48x80xf32>
    %362 = vector.shape_cast %361 : vector<1x1x48x80xf32> to vector<48x80xf32>
    %cst_275 = arith.constant dense<0.000000e+00> : vector<10x80xf32>
    %363 = tpu.matmul %360, %362, %cst_275 {dimension_numbers = #tpu.dot_dimension_numbers<[1], [0], [0], [1], [0, 0, 1, 1], [], []>} : vector<10x48xf32>, vector<48x80xf32>, vector<10x80xf32> -> vector<10x80xf32>
    %cst_276 = arith.constant dense<0.000000e+00> : vector<10x48xf32>
    %364 = tpu.matmul %77, %359, %cst_276 {dimension_numbers = #tpu.dot_dimension_numbers<[1], [0], [0], [1], [0, 0, 1, 1], [], []>} : vector<10x6xf32>, vector<6x48xf32>, vector<10x48xf32> -> vector<10x48xf32>
    %c0_277 = arith.constant 0 : index
    %c1_278 = arith.constant 1 : index
    %c0_279 = arith.constant 0 : index
    %c0_280 = arith.constant 0 : index
    %365 = vector.load %arg10[%c0_277, %c1_278, %c0_279, %c0_280] : memref<1x3x48x80xf32, #tpu.memory_space<vmem>>, vector<1x1x48x80xf32>
    %366 = vector.shape_cast %365 : vector<1x1x48x80xf32> to vector<48x80xf32>
    %cst_281 = arith.constant dense<0.000000e+00> : vector<10x80xf32>
    %367 = tpu.matmul %364, %366, %cst_281 {dimension_numbers = #tpu.dot_dimension_numbers<[1], [0], [0], [1], [0, 0, 1, 1], [], []>} : vector<10x48xf32>, vector<48x80xf32>, vector<10x80xf32> -> vector<10x80xf32>
    %368 = arith.addf %363, %367 : vector<10x80xf32>
    %cst_282 = arith.constant dense<0.000000e+00> : vector<10x48xf32>
    %369 = tpu.matmul %84, %359, %cst_282 {dimension_numbers = #tpu.dot_dimension_numbers<[1], [0], [0], [1], [0, 0, 1, 1], [], []>} : vector<10x6xf32>, vector<6x48xf32>, vector<10x48xf32> -> vector<10x48xf32>
    %c0_283 = arith.constant 0 : index
    %c2_284 = arith.constant 2 : index
    %c0_285 = arith.constant 0 : index
    %c0_286 = arith.constant 0 : index
    %370 = vector.load %arg10[%c0_283, %c2_284, %c0_285, %c0_286] : memref<1x3x48x80xf32, #tpu.memory_space<vmem>>, vector<1x1x48x80xf32>
    %371 = vector.shape_cast %370 : vector<1x1x48x80xf32> to vector<48x80xf32>
    %cst_287 = arith.constant dense<0.000000e+00> : vector<10x80xf32>
    %372 = tpu.matmul %369, %371, %cst_287 {dimension_numbers = #tpu.dot_dimension_numbers<[1], [0], [0], [1], [0, 0, 1, 1], [], []>} : vector<10x48xf32>, vector<48x80xf32>, vector<10x80xf32> -> vector<10x80xf32>
    %373 = arith.addf %368, %372 : vector<10x80xf32>
    %c0_288 = arith.constant 0 : index
    %c0_289 = arith.constant 0 : index
    %c0_290 = arith.constant 0 : index
    %374 = vector.load %arg11[%c0_288, %c0_289, %c0_290] : memref<1x1x80xf32, #tpu.memory_space<vmem>>, vector<1x1x80xf32>
    %375 = vector.shape_cast %374 : vector<1x1x80xf32> to vector<1x80xf32>
    %376 = vector.broadcast %375 : vector<1x80xf32> to vector<10x80xf32>
    %377 = arith.addf %373, %376 : vector<10x80xf32>
    %cst_291 = arith.constant 0.000000e+00 : f32
    %378 = vector.broadcast %cst_291 : f32 to vector<10x80xf32>
    %379 = arith.maximumf %377, %378 : vector<10x80xf32>
    %cst_292 = arith.constant dense<0.000000e+00> : vector<18x80xf32>
    %380 = tpu.matmul %93, %379, %cst_292 {dimension_numbers = #tpu.dot_dimension_numbers<[1], [0], [0], [1], [0, 0, 1, 1], [], []>} : vector<18x10xf32>, vector<10x80xf32>, vector<18x80xf32> -> vector<18x80xf32>
    %c0_293 = arith.constant 0 : index
    %c0_294 = arith.constant 0 : index
    %c0_295 = arith.constant 0 : index
    %c0_296 = arith.constant 0 : index
    %381 = vector.load %arg12[%c0_293, %c0_294, %c0_295, %c0_296] : memref<1x5x80x288xf32, #tpu.memory_space<vmem>>, vector<1x1x80x288xf32>
    %382 = vector.shape_cast %381 : vector<1x1x80x288xf32> to vector<80x288xf32>
    %cst_297 = arith.constant dense<0.000000e+00> : vector<18x288xf32>
    %383 = tpu.matmul %380, %382, %cst_297 {dimension_numbers = #tpu.dot_dimension_numbers<[1], [0], [0], [1], [0, 0, 1, 1], [], []>} : vector<18x80xf32>, vector<80x288xf32>, vector<18x288xf32> -> vector<18x288xf32>
    %cst_298 = arith.constant dense<0.000000e+00> : vector<18x80xf32>
    %384 = tpu.matmul %100, %379, %cst_298 {dimension_numbers = #tpu.dot_dimension_numbers<[1], [0], [0], [1], [0, 0, 1, 1], [], []>} : vector<18x10xf32>, vector<10x80xf32>, vector<18x80xf32> -> vector<18x80xf32>
    %c0_299 = arith.constant 0 : index
    %c1_300 = arith.constant 1 : index
    %c0_301 = arith.constant 0 : index
    %c0_302 = arith.constant 0 : index
    %385 = vector.load %arg12[%c0_299, %c1_300, %c0_301, %c0_302] : memref<1x5x80x288xf32, #tpu.memory_space<vmem>>, vector<1x1x80x288xf32>
    %386 = vector.shape_cast %385 : vector<1x1x80x288xf32> to vector<80x288xf32>
    %cst_303 = arith.constant dense<0.000000e+00> : vector<18x288xf32>
    %387 = tpu.matmul %384, %386, %cst_303 {dimension_numbers = #tpu.dot_dimension_numbers<[1], [0], [0], [1], [0, 0, 1, 1], [], []>} : vector<18x80xf32>, vector<80x288xf32>, vector<18x288xf32> -> vector<18x288xf32>
    %388 = arith.addf %383, %387 : vector<18x288xf32>
    %cst_304 = arith.constant dense<0.000000e+00> : vector<18x80xf32>
    %389 = tpu.matmul %107, %379, %cst_304 {dimension_numbers = #tpu.dot_dimension_numbers<[1], [0], [0], [1], [0, 0, 1, 1], [], []>} : vector<18x10xf32>, vector<10x80xf32>, vector<18x80xf32> -> vector<18x80xf32>
    %c0_305 = arith.constant 0 : index
    %c2_306 = arith.constant 2 : index
    %c0_307 = arith.constant 0 : index
    %c0_308 = arith.constant 0 : index
    %390 = vector.load %arg12[%c0_305, %c2_306, %c0_307, %c0_308] : memref<1x5x80x288xf32, #tpu.memory_space<vmem>>, vector<1x1x80x288xf32>
    %391 = vector.shape_cast %390 : vector<1x1x80x288xf32> to vector<80x288xf32>
    %cst_309 = arith.constant dense<0.000000e+00> : vector<18x288xf32>
    %392 = tpu.matmul %389, %391, %cst_309 {dimension_numbers = #tpu.dot_dimension_numbers<[1], [0], [0], [1], [0, 0, 1, 1], [], []>} : vector<18x80xf32>, vector<80x288xf32>, vector<18x288xf32> -> vector<18x288xf32>
    %393 = arith.addf %388, %392 : vector<18x288xf32>
    %cst_310 = arith.constant dense<0.000000e+00> : vector<18x80xf32>
    %394 = tpu.matmul %114, %379, %cst_310 {dimension_numbers = #tpu.dot_dimension_numbers<[1], [0], [0], [1], [0, 0, 1, 1], [], []>} : vector<18x10xf32>, vector<10x80xf32>, vector<18x80xf32> -> vector<18x80xf32>
    %c0_311 = arith.constant 0 : index
    %c3_312 = arith.constant 3 : index
    %c0_313 = arith.constant 0 : index
    %c0_314 = arith.constant 0 : index
    %395 = vector.load %arg12[%c0_311, %c3_312, %c0_313, %c0_314] : memref<1x5x80x288xf32, #tpu.memory_space<vmem>>, vector<1x1x80x288xf32>
    %396 = vector.shape_cast %395 : vector<1x1x80x288xf32> to vector<80x288xf32>
    %cst_315 = arith.constant dense<0.000000e+00> : vector<18x288xf32>
    %397 = tpu.matmul %394, %396, %cst_315 {dimension_numbers = #tpu.dot_dimension_numbers<[1], [0], [0], [1], [0, 0, 1, 1], [], []>} : vector<18x80xf32>, vector<80x288xf32>, vector<18x288xf32> -> vector<18x288xf32>
    %398 = arith.addf %393, %397 : vector<18x288xf32>
    %cst_316 = arith.constant dense<0.000000e+00> : vector<18x80xf32>
    %399 = tpu.matmul %121, %379, %cst_316 {dimension_numbers = #tpu.dot_dimension_numbers<[1], [0], [0], [1], [0, 0, 1, 1], [], []>} : vector<18x10xf32>, vector<10x80xf32>, vector<18x80xf32> -> vector<18x80xf32>
    %c0_317 = arith.constant 0 : index
    %c4_318 = arith.constant 4 : index
    %c0_319 = arith.constant 0 : index
    %c0_320 = arith.constant 0 : index
    %400 = vector.load %arg12[%c0_317, %c4_318, %c0_319, %c0_320] : memref<1x5x80x288xf32, #tpu.memory_space<vmem>>, vector<1x1x80x288xf32>
    %401 = vector.shape_cast %400 : vector<1x1x80x288xf32> to vector<80x288xf32>
    %cst_321 = arith.constant dense<0.000000e+00> : vector<18x288xf32>
    %402 = tpu.matmul %399, %401, %cst_321 {dimension_numbers = #tpu.dot_dimension_numbers<[1], [0], [0], [1], [0, 0, 1, 1], [], []>} : vector<18x80xf32>, vector<80x288xf32>, vector<18x288xf32> -> vector<18x288xf32>
    %403 = arith.addf %398, %402 : vector<18x288xf32>
    %c0_322 = arith.constant 0 : index
    %c0_323 = arith.constant 0 : index
    %c0_324 = arith.constant 0 : index
    %404 = vector.load %arg13[%c0_322, %c0_323, %c0_324] : memref<1x1x288xf32, #tpu.memory_space<vmem>>, vector<1x1x288xf32>
    %405 = vector.shape_cast %404 : vector<1x1x288xf32> to vector<1x288xf32>
    %406 = vector.broadcast %405 : vector<1x288xf32> to vector<18x288xf32>
    %407 = arith.addf %403, %406 : vector<18x288xf32>
    %cst_325 = arith.constant 0.000000e+00 : f32
    %408 = vector.broadcast %cst_325 : f32 to vector<18x288xf32>
    %409 = arith.maximumf %407, %408 : vector<18x288xf32>
    %cst_326 = arith.constant dense<0.000000e+00> : vector<17x288xf32>
    %410 = tpu.matmul %130, %409, %cst_326 {dimension_numbers = #tpu.dot_dimension_numbers<[1], [0], [0], [1], [0, 0, 1, 1], [], []>} : vector<17x18xf32>, vector<18x288xf32>, vector<17x288xf32> -> vector<17x288xf32>
    %c0_327 = arith.constant 0 : index
    %c0_328 = arith.constant 0 : index
    %c0_329 = arith.constant 0 : index
    %c0_330 = arith.constant 0 : index
    %411 = vector.load %arg14[%c0_327, %c0_328, %c0_329, %c0_330] : memref<1x2x288x17xf32, #tpu.memory_space<vmem>>, vector<1x1x288x17xf32>
    %412 = vector.shape_cast %411 : vector<1x1x288x17xf32> to vector<288x17xf32>
    %cst_331 = arith.constant dense<0.000000e+00> : vector<17x17xf32>
    %413 = tpu.matmul %410, %412, %cst_331 {dimension_numbers = #tpu.dot_dimension_numbers<[1], [0], [0], [1], [0, 0, 1, 1], [], []>} : vector<17x288xf32>, vector<288x17xf32>, vector<17x17xf32> -> vector<17x17xf32>
    %cst_332 = arith.constant dense<0.000000e+00> : vector<17x288xf32>
    %414 = tpu.matmul %137, %409, %cst_332 {dimension_numbers = #tpu.dot_dimension_numbers<[1], [0], [0], [1], [0, 0, 1, 1], [], []>} : vector<17x18xf32>, vector<18x288xf32>, vector<17x288xf32> -> vector<17x288xf32>
    %c0_333 = arith.constant 0 : index
    %c1_334 = arith.constant 1 : index
    %c0_335 = arith.constant 0 : index
    %c0_336 = arith.constant 0 : index
    %415 = vector.load %arg14[%c0_333, %c1_334, %c0_335, %c0_336] : memref<1x2x288x17xf32, #tpu.memory_space<vmem>>, vector<1x1x288x17xf32>
    %416 = vector.shape_cast %415 : vector<1x1x288x17xf32> to vector<288x17xf32>
    %cst_337 = arith.constant dense<0.000000e+00> : vector<17x17xf32>
    %417 = tpu.matmul %414, %416, %cst_337 {dimension_numbers = #tpu.dot_dimension_numbers<[1], [0], [0], [1], [0, 0, 1, 1], [], []>} : vector<17x288xf32>, vector<288x17xf32>, vector<17x17xf32> -> vector<17x17xf32>
    %418 = arith.addf %413, %417 : vector<17x17xf32>
    %c0_338 = arith.constant 0 : index
    %c0_339 = arith.constant 0 : index
    %c0_340 = arith.constant 0 : index
    %419 = vector.load %arg15[%c0_338, %c0_339, %c0_340] : memref<1x1x17xf32, #tpu.memory_space<vmem>>, vector<1x1x17xf32>
    %420 = vector.shape_cast %419 : vector<1x1x17xf32> to vector<1x17xf32>
    %421 = vector.broadcast %420 : vector<1x17xf32> to vector<17x17xf32>
    %422 = arith.addf %418, %421 : vector<17x17xf32>
    %c0_341 = arith.constant 0 : index
    %c1_342 = arith.constant 1 : index
    %c0_343 = arith.constant 0 : index
    %c0_344 = arith.constant 0 : index
    %423 = vector.load %arg16[%c0_341, %c1_342, %c0_343, %c0_344] : memref<1x2x17x17xf32, #tpu.memory_space<vmem>>, vector<1x1x17x17xf32>
    %424 = vector.shape_cast %423 : vector<1x1x17x17xf32> to vector<17x17xf32>
    %425 = vector.shape_cast %422 : vector<17x17xf32> to vector<1x1x17x17xf32>
    tpu.vector_store %arg16[%c0_341, %c1_342, %c0_343, %c0_344], %425 {strides = array<i32>} : memref<1x2x17x17xf32, #tpu.memory_space<vmem>>, vector<1x1x17x17xf32>,
    return
  }
  func.func @transform_0(%arg0: i32) -> (i32, i32, i32, i32) {
    %c0_i32 = arith.constant 0 : i32
    %c0_i32_0 = arith.constant 0 : i32
    %c0_i32_1 = arith.constant 0 : i32
    %c0_i32_2 = arith.constant 0 : i32
    return %arg0, %c0_i32, %c0_i32_0, %c0_i32_1 : i32, i32, i32, i32
  }
  func.func @transform_1(%arg0: i32) -> (i32, i32, i32, i32) {
    %c0_i32 = arith.constant 0 : i32
    %c0_i32_0 = arith.constant 0 : i32
    %c0_i32_1 = arith.constant 0 : i32
    %c0_i32_2 = arith.constant 0 : i32
    return %arg0, %c0_i32, %c0_i32_0, %c0_i32_1 : i32, i32, i32, i32
  }
  func.func @transform_2(%arg0: i32) -> (i32, i32, i32, i32) {
    %c0_i32 = arith.constant 0 : i32
    %c0_i32_0 = arith.constant 0 : i32
    %c0_i32_1 = arith.constant 0 : i32
    %c0_i32_2 = arith.constant 0 : i32
    %c0_i32_3 = arith.constant 0 : i32
    return %c0_i32, %c0_i32_0, %c0_i32_1, %c0_i32_2 : i32, i32, i32, i32
  }
  func.func @transform_3(%arg0: i32) -> (i32, i32) {
    %c0_i32 = arith.constant 0 : i32
    %c0_i32_0 = arith.constant 0 : i32
    %c0_i32_1 = arith.constant 0 : i32
    return %c0_i32, %c0_i32_0 : i32, i32
  }
  func.func @transform_4(%arg0: i32) -> (i32, i32) {
    %c0_i32 = arith.constant 0 : i32
    %c0_i32_0 = arith.constant 0 : i32
    %c0_i32_1 = arith.constant 0 : i32
    return %c0_i32, %c0_i32_0 : i32, i32
  }
  func.func @transform_5(%arg0: i32) -> (i32, i32, i32, i32) {
    %c0_i32 = arith.constant 0 : i32
    %c0_i32_0 = arith.constant 0 : i32
    %c0_i32_1 = arith.constant 0 : i32
    %c0_i32_2 = arith.constant 0 : i32
    return %arg0, %c0_i32, %c0_i32_0, %c0_i32_1 : i32, i32, i32, i32
  }
  func.func @transform_6(%arg0: i32) -> (i32, i32, i32) {
    %c0_i32 = arith.constant 0 : i32
    %c0_i32_0 = arith.constant 0 : i32
    %c0_i32_1 = arith.constant 0 : i32
    return %arg0, %c0_i32, %c0_i32_0 : i32, i32, i32
  }
  func.func @transform_7(%arg0: i32) -> (i32, i32, i32, i32) {
    %c0_i32 = arith.constant 0 : i32
    %c0_i32_0 = arith.constant 0 : i32
    %c0_i32_1 = arith.constant 0 : i32
    %c0_i32_2 = arith.constant 0 : i32
    return %arg0, %c0_i32, %c0_i32_0, %c0_i32_1 : i32, i32, i32, i32
  }
  func.func @transform_8(%arg0: i32) -> (i32, i32, i32) {
    %c0_i32 = arith.constant 0 : i32
    %c0_i32_0 = arith.constant 0 : i32
    %c0_i32_1 = arith.constant 0 : i32
    return %arg0, %c0_i32, %c0_i32_0 : i32, i32, i32
  }
  func.func @transform_9(%arg0: i32) -> (i32, i32, i32, i32) {
    %c0_i32 = arith.constant 0 : i32
    %c0_i32_0 = arith.constant 0 : i32
    %c0_i32_1 = arith.constant 0 : i32
    %c0_i32_2 = arith.constant 0 : i32
    return %arg0, %c0_i32, %c0_i32_0, %c0_i32_1 : i32, i32, i32, i32
  }
  func.func @transform_10(%arg0: i32) -> (i32, i32, i32) {
    %c0_i32 = arith.constant 0 : i32
    %c0_i32_0 = arith.constant 0 : i32
    %c0_i32_1 = arith.constant 0 : i32
    return %arg0, %c0_i32, %c0_i32_0 : i32, i32, i32
  }
  func.func @transform_11(%arg0: i32) -> (i32, i32, i32, i32) {
    %c0_i32 = arith.constant 0 : i32
    %c0_i32_0 = arith.constant 0 : i32
    %c0_i32_1 = arith.constant 0 : i32
    %c0_i32_2 = arith.constant 0 : i32
    return %arg0, %c0_i32, %c0_i32_0, %c0_i32_1 : i32, i32, i32, i32
  }
  func.func @transform_12(%arg0: i32) -> (i32, i32, i32) {
    %c0_i32 = arith.constant 0 : i32
    %c0_i32_0 = arith.constant 0 : i32
    %c0_i32_1 = arith.constant 0 : i32
    return %arg0, %c0_i32, %c0_i32_0 : i32, i32, i32
  }
  func.func @transform_13(%arg0: i32) -> (i32, i32, i32, i32) {
    %c0_i32 = arith.constant 0 : i32
    %c0_i32_0 = arith.constant 0 : i32
    %c0_i32_1 = arith.constant 0 : i32
    %c0_i32_2 = arith.constant 0 : i32
    return %arg0, %c0_i32, %c0_i32_0, %c0_i32_1 : i32, i32, i32, i32
  }
  func.func @transform_14(%arg0: i32) -> (i32, i32, i32) {
    %c0_i32 = arith.constant 0 : i32
    %c0_i32_0 = arith.constant 0 : i32
    %c0_i32_1 = arith.constant 0 : i32
    return %arg0, %c0_i32, %c0_i32_0 : i32, i32, i32
  }
  func.func @transform_15(%arg0: i32) -> (i32, i32, i32, i32) {
    %c0_i32 = arith.constant 0 : i32
    %c0_i32_0 = arith.constant 0 : i32
    %c0_i32_1 = arith.constant 0 : i32
    %c0_i32_2 = arith.constant 0 : i32
    return %arg0, %c0_i32, %c0_i32_0, %c0_i32_1 : i32, i32, i32, i32
  }
  func.func @transform_16(%arg0: i32) -> (i32, i32, i32, i32) {
    %c0_i32 = arith.constant 0 : i32
    %c0_i32_0 = arith.constant 0 : i32
    %c0_i32_1 = arith.constant 0 : i32
    %c0_i32_2 = arith.constant 0 : i32
    return %arg0, %c0_i32, %c0_i32_0, %c0_i32_1 : i32, i32, i32, i32
  }
}

</mosaic_0001>

<llo_original>
// kernel: ggcnn_asgnet_forward.1
$region0: #{ggcnn_asgnet_forward.1}
  #allocation0 [shape = 'u32[]', space=smem, size = 0x4, offset = 0x4, fixed_abs, tag = 'smem constant byte address 0x4 - core index']
  #allocation1 [shape = 'u32[144,128]{1,0:T(1,128)}', space=vmem, size = 0x12000, scoped, tag = 'internal scratch']
  %s0 = inlined_call_operand.vmem [shape: f32[2,2,8,8], index: 0, kind: input, shape index: {}]
  %s1 = inlined_call_operand.vmem [shape: f32[2,2,8,8], index: 1, kind: input, shape index: {}]
  %s2 = inlined_call_operand.vmem [shape: f32[2,2,16,16], index: 2, kind: input, shape index: {}]
  %s3 = inlined_call_operand.vmem [shape: f32[16,8], index: 3, kind: input, shape index: {}]
  %s4 = inlined_call_operand.vmem [shape: f32[8,16], index: 4, kind: input, shape index: {}]
  %s5 = inlined_call_operand.hbm [shape: f32[2,5,48,144], index: 5, kind: input, shape index: {}]
  %s6 = inlined_call_operand.vmem [shape: f32[2,1,144], index: 6, kind: input, shape index: {}]
  %s7 = inlined_call_operand.vmem [shape: f32[2,3,144,48], index: 7, kind: input, shape index: {}]
  %s8 = inlined_call_operand.vmem [shape: f32[2,1,48], index: 8, kind: input, shape index: {}]
  %s9 = inlined_call_operand.vmem [shape: f32[2,3,48,80], index: 9, kind: input, shape index: {}]
  %s10 = inlined_call_operand.vmem [shape: f32[2,1,80], index: 10, kind: input, shape index: {}]
  %s11 = inlined_call_operand.vmem [shape: f32[2,5,80,288], index: 11, kind: input, shape index: {}]
  %s12 = inlined_call_operand.vmem [shape: f32[2,1,288], index: 12, kind: input, shape index: {}]
  %s13 = inlined_call_operand.vmem [shape: f32[2,2,288,17], index: 13, kind: input, shape index: {}]
  %s14 = inlined_call_operand.vmem [shape: f32[2,1,17], index: 14, kind: input, shape index: {}]
  %s15 = inlined_call_operand.vmem [shape: f32[2,2,17,17], index: 15, kind: output, shape index: {0}]
  %s16 = inlined_call_operand.vmem [shape: f32[2,2,16,16], index: 16, kind: output, shape index: {1}]
  %17 = xla_tuple %s15, %s16
  %s18 = sld [smem:[#allocation0]]
  $region105: #{ggcnn_asgnet_forward.1} parent=0
    _
  %s20 = ssub.s32 1, %s18
  %s21 = scalar_select 0, %s20, %s18
  $region1: #{ggcnn_asgnet_forward.1} parent=0
    #allocation2 [shape = 'u8[491520]{0}', space=vmem, size = 0x78000, scoped, tag = 'input window, operand 5']
    #allocation3 [shape = 's32[2]{0}', space=sflag, size = 0x8, scoped, tag = 'scoped memory for ggcnn_asgnet_forward.1']
    %22 = vsyncpa [#allocation3], 0
    %s23 = scalar_lea.sflag [#allocation3], 1
    %24 = vsyncpa %s23, 0
    loop: start=0, step=1, limit=4
    $region2: #{ggcnn_asgnet_forward.1} parent=1 // loop_pre_header
      _
    $region3: #{ggcnn_asgnet_forward.1} parent=1 // loop_header
      %s26 = sphi 0, %s30
      %p27 = scmp.ge.s32.totalorder %s26, 4
      %s36 = sphi 0, %s38
      %s39 = sphi 0, %s36
      %s40 = sphi 0, %s39
      %s56 = sphi 0, %s40
      %s62 = sphi 0, %s64
      %s65 = sphi 0, %s62
      %s66 = sphi 0, %s65
      %s82 = sphi 0, %s66
      %s86 = sphi 0, %s86
      %s88 = sphi 0, %s86
      %s89 = sphi 0, %s88
      %s103 = sphi 0, %s89
      %s107 = sphi 0, %s107
      %s109 = sphi 0, %s107
      %s110 = sphi 0, %s109
      %s124 = sphi 0, %s110
      %s128 = sphi 0, %s128
      %s130 = sphi 0, %s128
      %s131 = sphi 0, %s130
      %s145 = sphi 0, %s131
      %s151 = sphi 0, %s153
      %s154 = sphi 0, %s151
      %s155 = sphi 0, %s154
      %s171 = sphi 0, %s155
      %s177 = sphi 0, %s179
      %s180 = sphi 0, %s177
      %s181 = sphi 0, %s180
      %s197 = sphi 0, %s181
      %s203 = sphi 0, %s205
      %s206 = sphi 0, %s203
      %s207 = sphi 0, %s206
      %s223 = sphi 0, %s207
      %s229 = sphi 0, %s231
      %s232 = sphi 0, %s229
      %s233 = sphi 0, %s232
      %s249 = sphi 0, %s233
      %s255 = sphi 0, %s257
      %s258 = sphi 0, %s255
      %s259 = sphi 0, %s258
      %s275 = sphi 0, %s259
      %s281 = sphi 0, %s283
      %s284 = sphi 0, %s281
      %s285 = sphi 0, %s284
      %s301 = sphi 0, %s285
      %s307 = sphi 0, %s309
      %s310 = sphi 0, %s307
      %s311 = sphi 0, %s310
      %s327 = sphi 0, %s311
      %s333 = sphi 0, %s335
      %s336 = sphi 0, %s333
      %s337 = sphi 0, %s336
      %s353 = sphi 0, %s337
      %s359 = sphi 0, %s361
      %s362 = sphi 0, %s359
      %s363 = sphi 0, %s362
      %s379 = sphi 0, %s363
      %s385 = sphi 0, %s387
      %s388 = sphi 0, %s385
      %s389 = sphi 0, %s388
      %s405 = sphi 0, %s389
      %s411 = sphi 0, %s413
      %s414 = sphi 0, %s411
      %s415 = sphi 0, %s414
      %s431 = sphi 0, %s415
      %s437 = sphi 0, %s439
      %s440 = sphi 0, %s437
      %s441 = sphi 0, %s440
      %s457 = sphi 0, %s441
    $region4: #{ggcnn_asgnet_forward.1} parent=1 // loop_header_branch
      %29 = sbr.rel (%p27) target = $region8
    $region5: #{ggcnn_asgnet_forward.1} parent=1 // loop_body
      %s31 = ssub.s32 %s26, 1
      %s32 = ssub.s32 %s26, 2
      %s33 = sadd.s32 %s26, 1
      %s34 = ssub.s32 %s26, %s33
      %p35 = scmp.eq.s32.totalorder %s34, 0
      %s37 = sadd.s32 %s36, 1
      %s38 = scalar_select %p35, %s36, %s37
      %p41 = pneg %p35
      %p42 = scmp.eq.s32.totalorder %s26, 1
      %p43 = por %p41, %p42
      %p44 = scmp.ne.s32.totalorder %s36, %s39
      %p45 = scmp.eq.s32.totalorder %s26, 0
      %p46 = por %p44, %p45
      %p47 = scmp.ne.s32.totalorder %s36, %s39
      %p48 = scmp.eq.s32.totalorder %s31, 1
      %p49 = por %p47, %p48
      %p50 = scmp.ne.s32.totalorder %s39, %s40
      %p51 = scmp.eq.s32.totalorder %s31, 0
      %p52 = por %p50, %p51
      %p53 = scmp.ne.s32.totalorder %s39, %s40
      %p54 = scmp.eq.s32.totalorder %s32, 1
      %p55 = por %p53, %p54
      %p57 = scmp.ne.s32.totalorder %s40, %s56
      %p58 = scmp.eq.s32.totalorder %s32, 0
      %p59 = por %p57, %p58
      %s60 = ssub.s32 %s26, %s33
      %p61 = scmp.eq.s32.totalorder %s60, 0
      %s63 = sadd.s32 %s62, 1
      %s64 = scalar_select %p61, %s62, %s63
      %p67 = pneg %p61
      %p68 = scmp.eq.s32.totalorder %s26, 1
      %p69 = por %p67, %p68
      %p70 = scmp.ne.s32.totalorder %s62, %s65
      %p71 = scmp.eq.s32.totalorder %s26, 0
      %p72 = por %p70, %p71
      %p73 = scmp.ne.s32.totalorder %s62, %s65
      %p74 = scmp.eq.s32.totalorder %s31, 1
      %p75 = por %p73, %p74
      %p76 = scmp.ne.s32.totalorder %s65, %s66
      %p77 = scmp.eq.s32.totalorder %s31, 0
      %p78 = por %p76, %p77
      %p79 = scmp.ne.s32.totalorder %s65, %s66
      %p80 = scmp.eq.s32.totalorder %s32, 1
      %p81 = por %p79, %p80
      %p83 = scmp.ne.s32.totalorder %s66, %s82
      %p84 = scmp.eq.s32.totalorder %s32, 0
      %p85 = por %p83, %p84
      %s87 = sadd.s32 %s86, 1
      %p90 = scmp.eq.s32.totalorder %s26, 1
      %p91 = scmp.ne.s32.totalorder %s86, %s88
      %p92 = scmp.eq.s32.totalorder %s26, 0
      %p93 = por %p91, %p92
      %p94 = scmp.ne.s32.totalorder %s86, %s88
      %p95 = scmp.eq.s32.totalorder %s31, 1
      %p96 = por %p94, %p95
      %p97 = scmp.ne.s32.totalorder %s88, %s89
      %p98 = scmp.eq.s32.totalorder %s31, 0
      %p99 = por %p97, %p98
      %p100 = scmp.ne.s32.totalorder %s88, %s89
      %p101 = scmp.eq.s32.totalorder %s32, 1
      %p102 = por %p100, %p101
      %p104 = scmp.ne.s32.totalorder %s89, %s103
      %p105 = scmp.eq.s32.totalorder %s32, 0
      %p106 = por %p104, %p105
      %s108 = sadd.s32 %s107, 1
      %p111 = scmp.eq.s32.totalorder %s26, 1
      %p112 = scmp.ne.s32.totalorder %s107, %s109
      %p113 = scmp.eq.s32.totalorder %s26, 0
      %p114 = por %p112, %p113
      %p115 = scmp.ne.s32.totalorder %s107, %s109
      %p116 = scmp.eq.s32.totalorder %s31, 1
      %p117 = por %p115, %p116
      %p118 = scmp.ne.s32.totalorder %s109, %s110
      %p119 = scmp.eq.s32.totalorder %s31, 0
      %p120 = por %p118, %p119
      %p121 = scmp.ne.s32.totalorder %s109, %s110
      %p122 = scmp.eq.s32.totalorder %s32, 1
      %p123 = por %p121, %p122
      %p125 = scmp.ne.s32.totalorder %s110, %s124
      %p126 = scmp.eq.s32.totalorder %s32, 0
      %p127 = por %p125, %p126
      %s129 = sadd.s32 %s128, 1
      %p132 = scmp.eq.s32.totalorder %s26, 1
      %p133 = scmp.ne.s32.totalorder %s128, %s130
      %p134 = scmp.eq.s32.totalorder %s26, 0
      %p135 = por %p133, %p134
      %p136 = scmp.ne.s32.totalorder %s128, %s130
      %p137 = scmp.eq.s32.totalorder %s31, 1
      %p138 = por %p136, %p137
      %p139 = scmp.ne.s32.totalorder %s130, %s131
      %p140 = scmp.eq.s32.totalorder %s31, 0
      %p141 = por %p139, %p140
      %p142 = scmp.ne.s32.totalorder %s130, %s131
      %p143 = scmp.eq.s32.totalorder %s32, 1
      %p144 = por %p142, %p143
      %p146 = scmp.ne.s32.totalorder %s131, %s145
      %p147 = scmp.eq.s32.totalorder %s32, 0
      %p148 = por %p146, %p147
      %s149 = ssub.s32 %s26, %s33
      %p150 = scmp.eq.s32.totalorder %s149, 0
      %s152 = sadd.s32 %s151, 1
      %s153 = scalar_select %p150, %s151, %s152
      %p156 = pneg %p150
      %p157 = scmp.eq.s32.totalorder %s26, 1
      %p158 = por %p156, %p157
      %p159 = scmp.ne.s32.totalorder %s151, %s154
      %p160 = scmp.eq.s32.totalorder %s26, 0
      %p161 = por %p159, %p160
      %p162 = scmp.ne.s32.totalorder %s151, %s154
      %p163 = scmp.eq.s32.totalorder %s31, 1
      %p164 = por %p162, %p163
      %p165 = scmp.ne.s32.totalorder %s154, %s155
      %p166 = scmp.eq.s32.totalorder %s31, 0
      %p167 = por %p165, %p166
      %p168 = scmp.ne.s32.totalorder %s154, %s155
      %p169 = scmp.eq.s32.totalorder %s32, 1
      %p170 = por %p168, %p169
      %p172 = scmp.ne.s32.totalorder %s155, %s171
      %p173 = scmp.eq.s32.totalorder %s32, 0
      %p174 = por %p172, %p173
      %s175 = ssub.s32 %s26, %s33
      %p176 = scmp.eq.s32.totalorder %s175, 0
      %s178 = sadd.s32 %s177, 1
      %s179 = scalar_select %p176, %s177, %s178
      %p182 = pneg %p176
      %p183 = scmp.eq.s32.totalorder %s26, 1
      %p184 = por %p182, %p183
      %p185 = scmp.ne.s32.totalorder %s177, %s180
      %p186 = scmp.eq.s32.totalorder %s26, 0
      %p187 = por %p185, %p186
      %p188 = scmp.ne.s32.totalorder %s177, %s180
      %p189 = scmp.eq.s32.totalorder %s31, 1
      %p190 = por %p188, %p189
      %p191 = scmp.ne.s32.totalorder %s180, %s181
      %p192 = scmp.eq.s32.totalorder %s31, 0
      %p193 = por %p191, %p192
      %p194 = scmp.ne.s32.totalorder %s180, %s181
      %p195 = scmp.eq.s32.totalorder %s32, 1
      %p196 = por %p194, %p195
      %p198 = scmp.ne.s32.totalorder %s181, %s197
      %p199 = scmp.eq.s32.totalorder %s32, 0
      %p200 = por %p198, %p199
      %s201 = ssub.s32 %s26, %s33
      %p202 = scmp.eq.s32.totalorder %s201, 0
      %s204 = sadd.s32 %s203, 1
      %s205 = scalar_select %p202, %s203, %s204
      %p208 = pneg %p202
      %p209 = scmp.eq.s32.totalorder %s26, 1
      %p210 = por %p208, %p209
      %p211 = scmp.ne.s32.totalorder %s203, %s206
      %p212 = scmp.eq.s32.totalorder %s26, 0
      %p213 = por %p211, %p212
      %p214 = scmp.ne.s32.totalorder %s203, %s206
      %p215 = scmp.eq.s32.totalorder %s31, 1
      %p216 = por %p214, %p215
      %p217 = scmp.ne.s32.totalorder %s206, %s207
      %p218 = scmp.eq.s32.totalorder %s31, 0
      %p219 = por %p217, %p218
      %p220 = scmp.ne.s32.totalorder %s206, %s207
      %p221 = scmp.eq.s32.totalorder %s32, 1
      %p222 = por %p220, %p221
      %p224 = scmp.ne.s32.totalorder %s207, %s223
      %p225 = scmp.eq.s32.totalorder %s32, 0
      %p226 = por %p224, %p225
      %s227 = ssub.s32 %s26, %s33
      %p228 = scmp.eq.s32.totalorder %s227, 0
      %s230 = sadd.s32 %s229, 1
      %s231 = scalar_select %p228, %s229, %s230
      %p234 = pneg %p228
      %p235 = scmp.eq.s32.totalorder %s26, 1
      %p236 = por %p234, %p235
      %p237 = scmp.ne.s32.totalorder %s229, %s232
      %p238 = scmp.eq.s32.totalorder %s26, 0
      %p239 = por %p237, %p238
      %p240 = scmp.ne.s32.totalorder %s229, %s232
      %p241 = scmp.eq.s32.totalorder %s31, 1
      %p242 = por %p240, %p241
      %p243 = scmp.ne.s32.totalorder %s232, %s233
      %p244 = scmp.eq.s32.totalorder %s31, 0
      %p245 = por %p243, %p244
      %p246 = scmp.ne.s32.totalorder %s232, %s233
      %p247 = scmp.eq.s32.totalorder %s32, 1
      %p248 = por %p246, %p247
      %p250 = scmp.ne.s32.totalorder %s233, %s249
      %p251 = scmp.eq.s32.totalorder %s32, 0
      %p252 = por %p250, %p251
      %s253 = ssub.s32 %s26, %s33
      %p254 = scmp.eq.s32.totalorder %s253, 0
      %s256 = sadd.s32 %s255, 1
      %s257 = scalar_select %p254, %s255, %s256
      %p260 = pneg %p254
      %p261 = scmp.eq.s32.totalorder %s26, 1
      %p262 = por %p260, %p261
      %p263 = scmp.ne.s32.totalorder %s255, %s258
      %p264 = scmp.eq.s32.totalorder %s26, 0
      %p265 = por %p263, %p264
      %p266 = scmp.ne.s32.totalorder %s255, %s258
      %p267 = scmp.eq.s32.totalorder %s31, 1
      %p268 = por %p266, %p267
      %p269 = scmp.ne.s32.totalorder %s258, %s259
      %p270 = scmp.eq.s32.totalorder %s31, 0
      %p271 = por %p269, %p270
      %p272 = scmp.ne.s32.totalorder %s258, %s259
      %p273 = scmp.eq.s32.totalorder %s32, 1
      %p274 = por %p272, %p273
      %p276 = scmp.ne.s32.totalorder %s259, %s275
      %p277 = scmp.eq.s32.totalorder %s32, 0
      %p278 = por %p276, %p277
      %s279 = ssub.s32 %s26, %s33
      %p280 = scmp.eq.s32.totalorder %s279, 0
      %s282 = sadd.s32 %s281, 1
      %s283 = scalar_select %p280, %s281, %s282
      %p286 = pneg %p280
      %p287 = scmp.eq.s32.totalorder %s26, 1
      %p288 = por %p286, %p287
      %p289 = scmp.ne.s32.totalorder %s281, %s284
      %p290 = scmp.eq.s32.totalorder %s26, 0
      %p291 = por %p289, %p290
      %p292 = scmp.ne.s32.totalorder %s281, %s284
      %p293 = scmp.eq.s32.totalorder %s31, 1
      %p294 = por %p292, %p293
      %p295 = scmp.ne.s32.totalorder %s284, %s285
      %p296 = scmp.eq.s32.totalorder %s31, 0
      %p297 = por %p295, %p296
      %p298 = scmp.ne.s32.totalorder %s284, %s285
      %p299 = scmp.eq.s32.totalorder %s32, 1
      %p300 = por %p298, %p299
      %p302 = scmp.ne.s32.totalorder %s285, %s301
      %p303 = scmp.eq.s32.totalorder %s32, 0
      %p304 = por %p302, %p303
      %s305 = ssub.s32 %s26, %s33
      %p306 = scmp.eq.s32.totalorder %s305, 0
      %s308 = sadd.s32 %s307, 1
      %s309 = scalar_select %p306, %s307, %s308
      %p312 = pneg %p306
      %p313 = scmp.eq.s32.totalorder %s26, 1
      %p314 = por %p312, %p313
      %p315 = scmp.ne.s32.totalorder %s307, %s310
      %p316 = scmp.eq.s32.totalorder %s26, 0
      %p317 = por %p315, %p316
      %p318 = scmp.ne.s32.totalorder %s307, %s310
      %p319 = scmp.eq.s32.totalorder %s31, 1
      %p320 = por %p318, %p319
      %p321 = scmp.ne.s32.totalorder %s310, %s311
      %p322 = scmp.eq.s32.totalorder %s31, 0
      %p323 = por %p321, %p322
      %p324 = scmp.ne.s32.totalorder %s310, %s311
      %p325 = scmp.eq.s32.totalorder %s32, 1
      %p326 = por %p324, %p325
      %p328 = scmp.ne.s32.totalorder %s311, %s327
      %p329 = scmp.eq.s32.totalorder %s32, 0
      %p330 = por %p328, %p329
      %s331 = ssub.s32 %s26, %s33
      %p332 = scmp.eq.s32.totalorder %s331, 0
      %s334 = sadd.s32 %s333, 1
      %s335 = scalar_select %p332, %s333, %s334
      %p338 = pneg %p332
      %p339 = scmp.eq.s32.totalorder %s26, 1
      %p340 = por %p338, %p339
      %p341 = scmp.ne.s32.totalorder %s333, %s336
      %p342 = scmp.eq.s32.totalorder %s26, 0
      %p343 = por %p341, %p342
      %p344 = scmp.ne.s32.totalorder %s333, %s336
      %p345 = scmp.eq.s32.totalorder %s31, 1
      %p346 = por %p344, %p345
      %p347 = scmp.ne.s32.totalorder %s336, %s337
      %p348 = scmp.eq.s32.totalorder %s31, 0
      %p349 = por %p347, %p348
      %p350 = scmp.ne.s32.totalorder %s336, %s337
      %p351 = scmp.eq.s32.totalorder %s32, 1
      %p352 = por %p350, %p351
      %p354 = scmp.ne.s32.totalorder %s337, %s353
      %p355 = scmp.eq.s32.totalorder %s32, 0
      %p356 = por %p354, %p355
      %s357 = ssub.s32 %s26, %s33
      %p358 = scmp.eq.s32.totalorder %s357, 0
      %s360 = sadd.s32 %s359, 1
      %s361 = scalar_select %p358, %s359, %s360
      %p364 = pneg %p358
      %p365 = scmp.eq.s32.totalorder %s26, 1
      %p366 = por %p364, %p365
      %p367 = scmp.ne.s32.totalorder %s359, %s362
      %p368 = scmp.eq.s32.totalorder %s26, 0
      %p369 = por %p367, %p368
      %p370 = scmp.ne.s32.totalorder %s359, %s362
      %p371 = scmp.eq.s32.totalorder %s31, 1
      %p372 = por %p370, %p371
      %p373 = scmp.ne.s32.totalorder %s362, %s363
      %p374 = scmp.eq.s32.totalorder %s31, 0
      %p375 = por %p373, %p374
      %p376 = scmp.ne.s32.totalorder %s362, %s363
      %p377 = scmp.eq.s32.totalorder %s32, 1
      %p378 = por %p376, %p377
      %p380 = scmp.ne.s32.totalorder %s363, %s379
      %p381 = scmp.eq.s32.totalorder %s32, 0
      %p382 = por %p380, %p381
      %s383 = ssub.s32 %s26, %s33
      %p384 = scmp.eq.s32.totalorder %s383, 0
      %s386 = sadd.s32 %s385, 1
      %s387 = scalar_select %p384, %s385, %s386
      %p390 = pneg %p384
      %p391 = scmp.eq.s32.totalorder %s26, 1
      %p392 = por %p390, %p391
      %p393 = scmp.ne.s32.totalorder %s385, %s388
      %p394 = scmp.eq.s32.totalorder %s26, 0
      %p395 = por %p393, %p394
      %p396 = scmp.ne.s32.totalorder %s385, %s388
      %p397 = scmp.eq.s32.totalorder %s31, 1
      %p398 = por %p396, %p397
      %p399 = scmp.ne.s32.totalorder %s388, %s389
      %p400 = scmp.eq.s32.totalorder %s31, 0
      %p401 = por %p399, %p400
      %p402 = scmp.ne.s32.totalorder %s388, %s389
      %p403 = scmp.eq.s32.totalorder %s32, 1
      %p404 = por %p402, %p403
      %p406 = scmp.ne.s32.totalorder %s389, %s405
      %p407 = scmp.eq.s32.totalorder %s32, 0
      %p408 = por %p406, %p407
      %s409 = ssub.s32 %s26, %s33
      %p410 = scmp.eq.s32.totalorder %s409, 0
      %s412 = sadd.s32 %s411, 1
      %s413 = scalar_select %p410, %s411, %s412
      %p416 = pneg %p410
      %p417 = scmp.eq.s32.totalorder %s26, 1
      %p418 = por %p416, %p417
      %p419 = scmp.ne.s32.totalorder %s411, %s414
      %p420 = scmp.eq.s32.totalorder %s26, 0
      %p421 = por %p419, %p420
      %p422 = scmp.ne.s32.totalorder %s411, %s414
      %p423 = scmp.eq.s32.totalorder %s31, 1
      %p424 = por %p422, %p423
      %p425 = scmp.ne.s32.totalorder %s414, %s415
      %p426 = scmp.eq.s32.totalorder %s31, 0
      %p427 = por %p425, %p426
      %p428 = scmp.ne.s32.totalorder %s414, %s415
      %p429 = scmp.eq.s32.totalorder %s32, 1
      %p430 = por %p428, %p429
      %p432 = scmp.ne.s32.totalorder %s415, %s431
      %p433 = scmp.eq.s32.totalorder %s32, 0
      %p434 = por %p432, %p433
      %s435 = ssub.s32 %s26, %s33
      %p436 = scmp.eq.s32.totalorder %s435, 0
      %s438 = sadd.s32 %s437, 1
      %s439 = scalar_select %p436, %s437, %s438
      %p442 = pneg %p436
      %p443 = scmp.eq.s32.totalorder %s26, 1
      %p444 = por %p442, %p443
      %p445 = scmp.ne.s32.totalorder %s437, %s440
      %p446 = scmp.eq.s32.totalorder %s26, 0
      %p447 = por %p445, %p446
      %p448 = scmp.ne.s32.totalorder %s437, %s440
      %p449 = scmp.eq.s32.totalorder %s31, 1
      %p450 = por %p448, %p449
      %p451 = scmp.ne.s32.totalorder %s440, %s441
      %p452 = scmp.eq.s32.totalorder %s31, 0
      %p453 = por %p451, %p452
      %p454 = scmp.ne.s32.totalorder %s440, %s441
      %p455 = scmp.eq.s32.totalorder %s32, 1
      %p456 = por %p454, %p455
      %p458 = scmp.ne.s32.totalorder %s441, %s457
      %p459 = scmp.eq.s32.totalorder %s32, 0
      %p460 = por %p458, %p459
      %p461 = scmp.le.s32.totalorder 1, %s26
      %p462 = scmp.lt.s32.totalorder %s26, 3
      %p463 = pnand %p461, %p462
      %p464 = pneg %p463
      // Predicated region
      $region9: #{ggcnn_asgnet_forward.1} parent=5 // pred_check
        _
      $region10: #{ggcnn_asgnet_forward.1} parent=5 // pred_check_branch
        %466 = sbr.rel (%p463) target = $region12
      $region11: #{ggcnn_asgnet_forward.1} parent=5 // pred_region
        %s467 = ssub.s32 %s26, 1
        // Predicated region
        $region13: #{ggcnn_asgnet_forward.1} parent=11 // pred_check
          %p468 = pneg %p99
        $region14: #{ggcnn_asgnet_forward.1} parent=11 // pred_check_branch
          %470 = sbr.rel (%p468) target = $region16
        $region15: #{ggcnn_asgnet_forward.1} parent=11 // pred_region
          _
        $region16: #{ggcnn_asgnet_forward.1} parent=11 // pred_fallthru
          _
        // Predicated region
        $region17: #{ggcnn_asgnet_forward.1} parent=11 // pred_check
          %p471 = pneg %p120
        $region18: #{ggcnn_asgnet_forward.1} parent=11 // pred_check_branch
          %473 = sbr.rel (%p471) target = $region20
        $region19: #{ggcnn_asgnet_forward.1} parent=11 // pred_region
          _
        $region20: #{ggcnn_asgnet_forward.1} parent=11 // pred_fallthru
          _
        // Predicated region
        $region21: #{ggcnn_asgnet_forward.1} parent=11 // pred_check
          %p474 = pneg %p141
        $region22: #{ggcnn_asgnet_forward.1} parent=11 // pred_check_branch
          %476 = sbr.rel (%p474) target = $region24
        $region23: #{ggcnn_asgnet_forward.1} parent=11 // pred_region
          _
        $region24: #{ggcnn_asgnet_forward.1} parent=11 // pred_fallthru
          _
      $region12: #{ggcnn_asgnet_forward.1} parent=5 // pred_fallthru
        _
      %p477 = scmp.lt.s32.totalorder %s26, 2
      // Predicated region
      $region25: #{ggcnn_asgnet_forward.1} parent=5 // pred_check
        %p478 = pneg %p477
      $region26: #{ggcnn_asgnet_forward.1} parent=5 // pred_check_branch
        %480 = sbr.rel (%p478) target = $region28
      $region27: #{ggcnn_asgnet_forward.1} parent=5 // pred_region
        // Predicated region
        $region29: #{ggcnn_asgnet_forward.1} parent=27 // pred_check
          %p481 = pneg %p46
        $region30: #{ggcnn_asgnet_forward.1} parent=27 // pred_check_branch
          %483 = sbr.rel (%p481) target = $region32
        $region31: #{ggcnn_asgnet_forward.1} parent=27 // pred_region
          %p484 = scmp.lt.s32.totalorder %s26, 1
          %s485 = scalar_select %p484, %s26, 1
          %s486 = smul.addr %s485, 2
          %s487 = smul.addr %s486, 8
          %s488 = scalar_lea.vmem %s0, %s487
        $region32: #{ggcnn_asgnet_forward.1} parent=27 // pred_fallthru
          _
        // Predicated region
        $region33: #{ggcnn_asgnet_forward.1} parent=27 // pred_check
          %p489 = pneg %p72
        $region34: #{ggcnn_asgnet_forward.1} parent=27 // pred_check_branch
          %491 = sbr.rel (%p489) target = $region36
        $region35: #{ggcnn_asgnet_forward.1} parent=27 // pred_region
          %p492 = scmp.lt.s32.totalorder %s26, 1
          %s493 = scalar_select %p492, %s26, 1
          %s494 = smul.addr %s493, 2
          %s495 = smul.addr %s494, 8
          %s496 = scalar_lea.vmem %s1, %s495
        $region36: #{ggcnn_asgnet_forward.1} parent=27 // pred_fallthru
          _
        // Predicated region
        $region37: #{ggcnn_asgnet_forward.1} parent=27 // pred_check
          %p497 = pneg %p161
        $region38: #{ggcnn_asgnet_forward.1} parent=27 // pred_check_branch
          %499 = sbr.rel (%p497) target = $region40
        $region39: #{ggcnn_asgnet_forward.1} parent=27 // pred_region
          %s500 = sand.u32 %s151, 1
          %s501 = scalar_lea.sflag [#allocation3], %s500
          %s502 = sand.u32 %s151, 1
          %s503 = smul.addr %s502, 480
          %s504 = scalar_lea.vmem [#allocation2], %s503
          %s506 = ssub.s32 7680, 7680
          %507 = vsyncadd %s501, %s506
          %s508 = smul.addr %s26, 60
          %s509 = smul.addr %s508, 128
          %s510 = scalar_lea.hbm %s5, %s509
          %s511 = sshll.u32 %s504, 4
          %s512 = int_to_ptr.vmem [resolvable:$true] %s511
          %517 = dma.hbm_to_vmem [thread:$0]  %s510, 7680, %s512, %s501, 256, 256, 16
        $region40: #{ggcnn_asgnet_forward.1} parent=27 // pred_fallthru
          _
        // Predicated region
        $region41: #{ggcnn_asgnet_forward.1} parent=27 // pred_check
          %p518 = pneg %p187
        $region42: #{ggcnn_asgnet_forward.1} parent=27 // pred_check_branch
          %520 = sbr.rel (%p518) target = $region44
        $region43: #{ggcnn_asgnet_forward.1} parent=27 // pred_region
          %p521 = scmp.lt.s32.totalorder %s26, 1
          %s522 = scalar_select %p521, %s26, 1
          %s523 = smul.addr %s522, 2
          %s524 = scalar_lea.vmem %s6, %s523
        $region44: #{ggcnn_asgnet_forward.1} parent=27 // pred_fallthru
          _
        // Predicated region
        $region45: #{ggcnn_asgnet_forward.1} parent=27 // pred_check
          %p525 = pneg %p213
        $region46: #{ggcnn_asgnet_forward.1} parent=27 // pred_check_branch
          %527 = sbr.rel (%p525) target = $region48
        $region47: #{ggcnn_asgnet_forward.1} parent=27 // pred_region
          %p528 = scmp.lt.s32.totalorder %s26, 1
          %s529 = scalar_select %p528, %s26, 1
          %s530 = smul.addr %s529, 54
          %s531 = smul.addr %s530, 8
          %s532 = scalar_lea.vmem %s7, %s531
        $region48: #{ggcnn_asgnet_forward.1} parent=27 // pred_fallthru
          _
        // Predicated region
        $region49: #{ggcnn_asgnet_forward.1} parent=27 // pred_check
          %p533 = pneg %p239
        $region50: #{ggcnn_asgnet_forward.1} parent=27 // pred_check_branch
          %535 = sbr.rel (%p533) target = $region52
        $region51: #{ggcnn_asgnet_forward.1} parent=27 // pred_region
          %p536 = scmp.lt.s32.totalorder %s26, 1
          %s537 = scalar_select %p536, %s26, 1
          %s538 = scalar_lea.vmem %s8, %s537
        $region52: #{ggcnn_asgnet_forward.1} parent=27 // pred_fallthru
          _
        // Predicated region
        $region53: #{ggcnn_asgnet_forward.1} parent=27 // pred_check
          %p539 = pneg %p265
        $region54: #{ggcnn_asgnet_forward.1} parent=27 // pred_check_branch
          %541 = sbr.rel (%p539) target = $region56
        $region55: #{ggcnn_asgnet_forward.1} parent=27 // pred_region
          %p542 = scmp.lt.s32.totalorder %s26, 1
          %s543 = scalar_select %p542, %s26, 1
          %s544 = smul.addr %s543, 18
          %s545 = smul.addr %s544, 8
          %s546 = scalar_lea.vmem %s9, %s545
        $region56: #{ggcnn_asgnet_forward.1} parent=27 // pred_fallthru
          _
        // Predicated region
        $region57: #{ggcnn_asgnet_forward.1} parent=27 // pred_check
          %p547 = pneg %p291
        $region58: #{ggcnn_asgnet_forward.1} parent=27 // pred_check_branch
          %549 = sbr.rel (%p547) target = $region60
        $region59: #{ggcnn_asgnet_forward.1} parent=27 // pred_region
          %p550 = scmp.lt.s32.totalorder %s26, 1
          %s551 = scalar_select %p550, %s26, 1
          %s552 = scalar_lea.vmem %s10, %s551
        $region60: #{ggcnn_asgnet_forward.1} parent=27 // pred_fallthru
          _
        // Predicated region
        $region61: #{ggcnn_asgnet_forward.1} parent=27 // pred_check
          %p553 = pneg %p317
        $region62: #{ggcnn_asgnet_forward.1} parent=27 // pred_check_branch
          %555 = sbr.rel (%p553) target = $region64
        $region63: #{ggcnn_asgnet_forward.1} parent=27 // pred_region
          %p556 = scmp.lt.s32.totalorder %s26, 1
          %s557 = scalar_select %p556, %s26, 1
          %s558 = smul.addr %s557, 150
          %s559 = smul.addr %s558, 8
          %s560 = scalar_lea.vmem %s11, %s559
        $region64: #{ggcnn_asgnet_forward.1} parent=27 // pred_fallthru
          _
        // Predicated region
        $region65: #{ggcnn_asgnet_forward.1} parent=27 // pred_check
          %p561 = pneg %p343
        $region66: #{ggcnn_asgnet_forward.1} parent=27 // pred_check_branch
          %563 = sbr.rel (%p561) target = $region68
        $region67: #{ggcnn_asgnet_forward.1} parent=27 // pred_region
          %p564 = scmp.lt.s32.totalorder %s26, 1
          %s565 = scalar_select %p564, %s26, 1
          %s566 = smul.addr %s565, 3
          %s567 = scalar_lea.vmem %s12, %s566
        $region68: #{ggcnn_asgnet_forward.1} parent=27 // pred_fallthru
          _
        // Predicated region
        $region69: #{ggcnn_asgnet_forward.1} parent=27 // pred_check
          %p568 = pneg %p369
        $region70: #{ggcnn_asgnet_forward.1} parent=27 // pred_check_branch
          %570 = sbr.rel (%p568) target = $region72
        $region71: #{ggcnn_asgnet_forward.1} parent=27 // pred_region
          %p571 = scmp.lt.s32.totalorder %s26, 1
          %s572 = scalar_select %p571, %s26, 1
          %s573 = smul.addr %s572, 72
          %s574 = smul.addr %s573, 8
          %s575 = scalar_lea.vmem %s13, %s574
        $region72: #{ggcnn_asgnet_forward.1} parent=27 // pred_fallthru
          _
        // Predicated region
        $region73: #{ggcnn_asgnet_forward.1} parent=27 // pred_check
          %p576 = pneg %p395
        $region74: #{ggcnn_asgnet_forward.1} parent=27 // pred_check_branch
          %578 = sbr.rel (%p576) target = $region76
        $region75: #{ggcnn_asgnet_forward.1} parent=27 // pred_region
          %p579 = scmp.lt.s32.totalorder %s26, 1
          %s580 = scalar_select %p579, %s26, 1
          %s581 = scalar_lea.vmem %s14, %s580
        $region76: #{ggcnn_asgnet_forward.1} parent=27 // pred_fallthru
          _
      $region28: #{ggcnn_asgnet_forward.1} parent=5 // pred_fallthru
        _
      %p582 = scmp.le.s32.totalorder 1, %s26
      %p583 = scmp.lt.s32.totalorder %s26, 3
      %p584 = pnand %p582, %p583
      %p585 = pneg %p584
      // Predicated region
      $region77: #{ggcnn_asgnet_forward.1} parent=5 // pred_check
        _
      $region78: #{ggcnn_asgnet_forward.1} parent=5 // pred_check_branch
        %587 = sbr.rel (%p584) target = $region80
      $region79: #{ggcnn_asgnet_forward.1} parent=5 // pred_region
        %s588 = ssub.s32 %s26, 1
        %s589 = sand.u32 %s154, 1
        %s590 = scalar_lea.sflag [#allocation3], %s589
        %s591 = sand.u32 %s154, 1
        %s592 = smul.addr %s591, 480
        %s593 = scalar_lea.vmem [#allocation2], %s592
        // Predicated region
        $region81: #{ggcnn_asgnet_forward.1} parent=79 // pred_check
          %p594 = pneg %p167
        $region82: #{ggcnn_asgnet_forward.1} parent=79 // pred_check_branch
          %596 = sbr.rel (%p594) target = $region84
        $region83: #{ggcnn_asgnet_forward.1} parent=79 // pred_region
          %597 = dma.done %s590, 7680
        $region84: #{ggcnn_asgnet_forward.1} parent=79 // pred_fallthru
          _
        %p598 = scmp.lt.s32.totalorder %s31, 1
        %s599 = scalar_select %p598, %s31, 1
        %s600 = smul.addr %s599, 2
        %s601 = smul.addr %s600, 8
        %s602 = scalar_lea.vmem %s0, %s601
        %p603 = pneg %p52
        %p604 = pneg %p49
        %p605 = scmp.lt.s32.totalorder %s31, 1
        %s606 = scalar_select %p605, %s31, 1
        %s607 = smul.addr %s606, 2
        %s608 = smul.addr %s607, 8
        %s609 = scalar_lea.vmem %s1, %s608
        %p610 = pneg %p78
        %p611 = pneg %p75
        %p612 = pneg %p99
        %p613 = pneg %p96
        %p614 = pneg %p120
        %p615 = pneg %p117
        %p616 = pneg %p141
        %p617 = pneg %p138
        %s618 = sand.u32 %s154, 1
        %s619 = scalar_lea.sflag [#allocation3], %s618
        %s620 = sand.u32 %s154, 1
        %s621 = smul.addr %s620, 480
        %s622 = scalar_lea.vmem [#allocation2], %s621
        %p623 = pneg %p167
        %p624 = pneg %p164
        %p625 = scmp.lt.s32.totalorder %s31, 1
        %s626 = scalar_select %p625, %s31, 1
        %s627 = smul.addr %s626, 2
        %s628 = scalar_lea.vmem %s6, %s627
        %p629 = pneg %p193
        %p630 = pneg %p190
        %p631 = scmp.lt.s32.totalorder %s31, 1
        %s632 = scalar_select %p631, %s31, 1
        %s633 = smul.addr %s632, 54
        %s634 = smul.addr %s633, 8
        %s635 = scalar_lea.vmem %s7, %s634
        %p636 = pneg %p219
        %p637 = pneg %p216
        %p638 = scmp.lt.s32.totalorder %s31, 1
        %s639 = scalar_select %p638, %s31, 1
        %s640 = scalar_lea.vmem %s8, %s639
        %p641 = pneg %p245
        %p642 = pneg %p242
        %p643 = scmp.lt.s32.totalorder %s31, 1
        %s644 = scalar_select %p643, %s31, 1
        %s645 = smul.addr %s644, 18
        %s646 = smul.addr %s645, 8
        %s647 = scalar_lea.vmem %s9, %s646
        %p648 = pneg %p271
        %p649 = pneg %p268
        %p650 = scmp.lt.s32.totalorder %s31, 1
        %s651 = scalar_select %p650, %s31, 1
        %s652 = scalar_lea.vmem %s10, %s651
        %p653 = pneg %p297
        %p654 = pneg %p294
        %p655 = scmp.lt.s32.totalorder %s31, 1
        %s656 = scalar_select %p655, %s31, 1
        %s657 = smul.addr %s656, 150
        %s658 = smul.addr %s657, 8
        %s659 = scalar_lea.vmem %s11, %s658
        %p660 = pneg %p323
        %p661 = pneg %p320
        %p662 = scmp.lt.s32.totalorder %s31, 1
        %s663 = scalar_select %p662, %s31, 1
        %s664 = smul.addr %s663, 3
        %s665 = scalar_lea.vmem %s12, %s664
        %p666 = pneg %p349
        %p667 = pneg %p346
        %p668 = scmp.lt.s32.totalorder %s31, 1
        %s669 = scalar_select %p668, %s31, 1
        %s670 = smul.addr %s669, 72
        %s671 = smul.addr %s670, 8
        %s672 = scalar_lea.vmem %s13, %s671
        %p673 = pneg %p375
        %p674 = pneg %p372
        %p675 = scmp.lt.s32.totalorder %s31, 1
        %s676 = scalar_select %p675, %s31, 1
        %s677 = scalar_lea.vmem %s14, %s676
        %p678 = pneg %p401
        %p679 = pneg %p398
        %p680 = pneg %p427
        %p681 = pneg %p424
        %p682 = scmp.lt.s32.totalorder %s31, 1
        %s683 = scalar_select %p682, %s31, 1
        %s684 = smul.addr %s683, 6
        %s685 = smul.addr %s684, 8
        %s686 = scalar_lea.vmem %s15, %s685
        %p687 = pneg %p453
        %p688 = pneg %p450
        %p689 = scmp.lt.s32.totalorder %s31, 1
        %s690 = scalar_select %p689, %s31, 1
        %s691 = smul.addr %s690, 4
        %s692 = smul.addr %s691, 8
        %s693 = scalar_lea.vmem %s16, %s692
        %p694 = scmp.lt.s32.totalorder %s31, 1
        %s695 = scalar_select %p694, %s31, 1
        %s696 = smul.addr %s695, 2
        %s697 = smul.addr %s696, 8
        %s698 = scalar_lea.vmem %s0, %s697
        %p699 = scmp.lt.s32.totalorder %s31, 1
        %s700 = scalar_select %p699, %s31, 1
        %s701 = smul.addr %s700, 2
        %s702 = smul.addr %s701, 8
        %s703 = scalar_lea.vmem %s1, %s702
        %p704 = scmp.lt.s32.totalorder %s31, 1
        %s705 = scalar_select %p704, %s31, 1
        %s706 = smul.addr %s705, 2
        %s707 = scalar_lea.vmem %s6, %s706
        %p708 = scmp.lt.s32.totalorder %s31, 1
        %s709 = scalar_select %p708, %s31, 1
        %s710 = smul.addr %s709, 54
        %s711 = smul.addr %s710, 8
        %s712 = scalar_lea.vmem %s7, %s711
        %p713 = scmp.lt.s32.totalorder %s31, 1
        %s714 = scalar_select %p713, %s31, 1
        %s715 = scalar_lea.vmem %s8, %s714
        %p716 = scmp.lt.s32.totalorder %s31, 1
        %s717 = scalar_select %p716, %s31, 1
        %s718 = smul.addr %s717, 18
        %s719 = smul.addr %s718, 8
        %s720 = scalar_lea.vmem %s9, %s719
        %p721 = scmp.lt.s32.totalorder %s31, 1
        %s722 = scalar_select %p721, %s31, 1
        %s723 = scalar_lea.vmem %s10, %s722
        %p724 = scmp.lt.s32.totalorder %s31, 1
        %s725 = scalar_select %p724, %s31, 1
        %s726 = smul.addr %s725, 150
        %s727 = smul.addr %s726, 8
        %s728 = scalar_lea.vmem %s11, %s727
        %p729 = scmp.lt.s32.totalorder %s31, 1
        %s730 = scalar_select %p729, %s31, 1
        %s731 = smul.addr %s730, 3
        %s732 = scalar_lea.vmem %s12, %s731
        %p733 = scmp.lt.s32.totalorder %s31, 1
        %s734 = scalar_select %p733, %s31, 1
        %s735 = smul.addr %s734, 72
        %s736 = smul.addr %s735, 8
        %s737 = scalar_lea.vmem %s13, %s736
        %p738 = scmp.lt.s32.totalorder %s31, 1
        %s739 = scalar_select %p738, %s31, 1
        %s740 = scalar_lea.vmem %s14, %s739
        %p741 = scmp.lt.s32.totalorder %s31, 1
        %s742 = scalar_select %p741, %s31, 1
        %s743 = smul.addr %s742, 6
        %s744 = smul.addr %s743, 8
        %s745 = scalar_lea.vmem %s15, %s744
        %p746 = scmp.lt.s32.totalorder %s31, 1
        %s747 = scalar_select %p746, %s31, 1
        %s748 = smul.addr %s747, 4
        %s749 = smul.addr %s748, 8
        %s750 = scalar_lea.vmem %s16, %s749
        %v751 = vld [vmem:[%s3] sm:$0xff]
        %v752 = vld [vmem:[%s3 + $0x8] sm:$0xff]
        %v753 = vld [vmem:[%s4] sm:$0xff]
        %v754 = vlaneseq
        %v755 = vshrl.u32 %v754, 7
        %v756 = vadd.s32 %v755, 8
        %v757 = vlaneseq
        %v758 = vand.u32 %v757, 127
        %v759 = vmul.u32 %v755, 2
        %v760 = vmul.u32 %v756, 2
        %v761 = vadd.s32 %v759, 4294967293
        %v762 = vadd.s32 %v760, 4294967293
        %vm763 = vcmp.eq.s32.totalorder %v761, %v758
        %vm764 = vcmp.eq.s32.totalorder %v762, %v758
        %v765 = vsel %vm763, 1, 0
        %v766 = vsel %vm764, 1, 0
        %v767 = vcvt.s32.f32 %v765
        %v768 = vcvt.s32.f32 %v766
        %v769 = vadd.s32 %v759, 4294967294
        %v770 = vadd.s32 %v760, 4294967294
        %vm771 = vcmp.eq.s32.totalorder %v769, %v758
        %vm772 = vcmp.eq.s32.totalorder %v770, %v758
        %v773 = vsel %vm771, 1, 0
        %v774 = vsel %vm772, 1, 0
        %v775 = vcvt.s32.f32 %v773
        %v776 = vcvt.s32.f32 %v774
        %v777 = vadd.s32 %v759, 4294967295
        %v778 = vadd.s32 %v760, 4294967295
        %vm779 = vcmp.eq.s32.totalorder %v777, %v758
        %vm780 = vcmp.eq.s32.totalorder %v778, %v758
        %v781 = vsel %vm779, 1, 0
        %v782 = vsel %vm780, 1, 0
        %v783 = vcvt.s32.f32 %v781
        %v784 = vcvt.s32.f32 %v782
        %vm785 = vcmp.eq.s32.totalorder %v759, %v758
        %vm786 = vcmp.eq.s32.totalorder %v760, %v758
        %v787 = vsel %vm785, 1, 0
        %v788 = vsel %vm786, 1, 0
        %v789 = vcvt.s32.f32 %v787
        %v790 = vcvt.s32.f32 %v788
        %v791 = vadd.s32 %v759, 1
        %v792 = vadd.s32 %v760, 1
        %vm793 = vcmp.eq.s32.totalorder %v791, %v758
        %vm794 = vcmp.eq.s32.totalorder %v792, %v758
        %v795 = vsel %vm793, 1, 0
        %v796 = vsel %vm794, 1, 0
        %v797 = vcvt.s32.f32 %v795
        %v798 = vcvt.s32.f32 %v796
        %v799 = vadd.s32 %v755, 2
        %v800 = vadd.s32 %v756, 2
        %v801 = vmul.u32 %v758, 2
        %vm802 = vcmp.eq.s32.totalorder %v799, %v801
        %vm803 = vcmp.eq.s32.totalorder %v800, %v801
        %v804 = vsel %vm802, 1, 0
        %v805 = vsel %vm803, 1, 0
        %v806 = vcvt.s32.f32 %v804
        %v807 = vcvt.s32.f32 %v805
        %v808 = vadd.s32 %v755, 1
        %v809 = vadd.s32 %v756, 1
        %vm810 = vcmp.eq.s32.totalorder %v808, %v801
        %vm811 = vcmp.eq.s32.totalorder %v809, %v801
        %v812 = vsel %vm810, 1, 0
        %v813 = vsel %vm811, 1, 0
        %v814 = vcvt.s32.f32 %v812
        %v815 = vcvt.s32.f32 %v813
        %vm816 = vcmp.eq.s32.totalorder %v755, %v801
        %vm817 = vcmp.eq.s32.totalorder %v756, %v801
        %v818 = vsel %vm816, 1, 0
        %v819 = vsel %vm817, 1, 0
        %v820 = vcvt.s32.f32 %v818
        %v821 = vcvt.s32.f32 %v819
        %v822 = vadd.s32 %v755, 16
        %v823 = vadd.s32 %v755, 3
        %v824 = vadd.s32 %v756, 3
        %v825 = vadd.s32 %v822, 3
        %vm826 = vcmp.eq.s32.totalorder %v823, %v801
        %vm827 = vcmp.eq.s32.totalorder %v824, %v801
        %vm828 = vcmp.eq.s32.totalorder %v825, %v801
        %v829 = vsel %vm826, 1, 0
        %v830 = vsel %vm827, 1, 0
        %v831 = vsel %vm828, 1, 0
        %v832 = vcvt.s32.f32 %v829
        %v833 = vcvt.s32.f32 %v830
        %v834 = vcvt.s32.f32 %v831
        %v835 = vadd.s32 %v822, 2
        %vm836 = vcmp.eq.s32.totalorder %v835, %v801
        %v837 = vsel %vm836, 1, 0
        %v838 = vcvt.s32.f32 %v837
        %v839 = vadd.s32 %v822, 1
        %vm840 = vcmp.eq.s32.totalorder %v839, %v801
        %v841 = vsel %vm840, 1, 0
        %v842 = vcvt.s32.f32 %v841
        %vm843 = vcmp.eq.s32.totalorder %v822, %v801
        %v844 = vsel %vm843, 1, 0
        %v845 = vcvt.s32.f32 %v844
        %v846 = vadd.s32 %v755, 4294967295
        %v847 = vadd.s32 %v756, 4294967295
        %v848 = vadd.s32 %v822, 4294967295
        %vm849 = vcmp.eq.s32.totalorder %v846, %v801
        %vm850 = vcmp.eq.s32.totalorder %v847, %v801
        %vm851 = vcmp.eq.s32.totalorder %v848, %v801
        %v852 = vsel %vm849, 1, 0
        %v853 = vsel %vm850, 1, 0
        %v854 = vsel %vm851, 1, 0
        %v855 = vcvt.s32.f32 %v852
        %v856 = vcvt.s32.f32 %v853
        %v857 = vcvt.s32.f32 %v854
        %vm858 = vcmp.eq.s32.totalorder %v755, %v758
        %vm859 = vcmp.eq.s32.totalorder %v756, %v758
        %vm860 = vcmp.eq.s32.totalorder %v822, %v758
        %v861 = vsel %vm858, 1, 0
        %v862 = vsel %vm859, 1, 0
        %v863 = vsel %vm860, 1, 0
        %v864 = vcvt.s32.f32 %v861
        %v865 = vcvt.s32.f32 %v862
        %v866 = vcvt.s32.f32 %v863
        %vm867 = vcmp.eq.s32.totalorder %v808, %v758
        %vm868 = vcmp.eq.s32.totalorder %v809, %v758
        %vm869 = vcmp.eq.s32.totalorder %v839, %v758
        %v870 = vsel %vm867, 1, 0
        %v871 = vsel %vm868, 1, 0
        %v872 = vsel %vm869, 1, 0
        %v873 = vcvt.s32.f32 %v870
        %v874 = vcvt.s32.f32 %v871
        %v875 = vcvt.s32.f32 %v872
        %v876 = vld [vmem:[%s703] sm:$0xff]
        %vm877 = vcmask 64512
        %v879 = vsel %vm877, %v751, 0
        %v882 = vsel %vm877, %v752, 0
        %884 = vmatprep.subr.mxu0 0.0
        %885 = vmatpush1.msra.mxu0 0.0
        %886 = vmatprep.subr.mxu0 0.0
        %887 = vmatpush1.msra.mxu0 0.0
        %888 = vmatprep.subr.mxu0 0.0
        %889 = vmatpush1.msra.mxu0 0.0
        %890 = vmatprep.subr.mxu0 0.0
        %891 = vmatpush1.msra.mxu0 0.0
        %892 = vmatprep.subr.mxu0 0.0
        %893 = vmatpush1.msra.mxu0 0.0
        %894 = vmatprep.subr.mxu0 0.0
        %895 = vmatpush1.msra.mxu0 0.0
        %896 = vmatprep.subr.mxu0 0.0
        %897 = vmatpush1.msra.mxu0 0.0
        %898 = vmatprep.subr.mxu0 0.0
        %899 = vmatpush1.msra.mxu0 0.0
        %900 = vmatprep.subr.mxu0 0.0
        %901 = vmatpush1.msra.mxu0 0.0
        %902 = vmatprep.subr.mxu0 0.0
        %903 = vmatpush1.msra.mxu0 0.0
        %904 = vmatprep.subr.mxu0 0.0
        %905 = vmatpush1.msra.mxu0 0.0
        %906 = vmatprep.subr.mxu0 0.0
        %907 = vmatpush1.msra.mxu0 0.0
        %908 = vmatprep.subr.mxu0 0.0
        %909 = vmatpush1.msra.mxu0 0.0
        %910 = vmatprep.subr.mxu0 0.0
        %911 = vmatpush1.msra.mxu0 0.0
        %912 = vmatprep.subr.mxu0 0.0
        %913 = vmatpush1.msra.mxu0 0.0
        %914 = vmatprep.subr.mxu0 0.0
        %915 = vmatpush1.msra.mxu0 %v876
        %916 = vmatprep.subr.mxu0 0.0
        %917 = vmatpush2.msra.mxu0 0.0
        %918 = vmatprep.subr.mxu0 0.0
        %919 = vmatpush2.msra.mxu0 0.0
        %920 = vmatprep.subr.mxu0 0.0
        %921 = vmatpush2.msra.mxu0 0.0
        %922 = vmatprep.subr.mxu0 0.0
        %923 = vmatpush2.msra.mxu0 0.0
        %924 = vmatprep.subr.mxu0 0.0
        %925 = vmatpush2.msra.mxu0 0.0
        %926 = vmatprep.subr.mxu0 0.0
        %927 = vmatpush2.msra.mxu0 0.0
        %928 = vmatprep.subr.mxu0 0.0
        %929 = vmatpush2.msra.mxu0 0.0
        %930 = vmatprep.subr.mxu0 0.0
        %931 = vmatpush2.msra.mxu0 0.0
        %932 = vmatprep.subr.mxu0 0.0
        %933 = vmatpush2.msra.mxu0 0.0
        %934 = vmatprep.subr.mxu0 0.0
        %935 = vmatpush2.msra.mxu0 0.0
        %936 = vmatprep.subr.mxu0 0.0
        %937 = vmatpush2.msra.mxu0 0.0
        %938 = vmatprep.subr.mxu0 0.0
        %939 = vmatpush2.msra.mxu0 0.0
        %940 = vmatprep.subr.mxu0 0.0
        %941 = vmatpush2.msra.mxu0 0.0
        %942 = vmatprep.subr.mxu0 0.0
        %943 = vmatpush2.msra.mxu0 0.0
        %944 = vmatprep.subr.mxu0 0.0
        %945 = vmatpush2.msra.mxu0 0.0
        %946 = vmatprep.subr.mxu0 0.0
        %947 = vmatpush2.msra.mxu0 0.0
        %948 = vmatprep.mubr.f32.mxu0 0.0
        %949 = vmatmul.mubr.f32.gmra.mxu0 %v879
        %v950 = vpop.f32.mrf.mxu0
        %v951 = vadd.f32 0.0, %v950
        %v952 = vpop.f32.mrf.mxu0
        %953 = vmatprep.mubr.f32.mxu0 0.0
        %954 = vmatmul.mubr.f32.gmra.mxu0 %v882
        %v955 = vpop.f32.mrf.mxu0
        %v956 = vadd.f32 0.0, %v955
        %v957 = vpop.f32.mrf.mxu0
        %958 = vdwg.mxu0
        %v960 = vsel %vm877, %v951, 0
        %v963 = vsel %vm877, %v956, 0
        %965 = vmatprep.subr.mxu0 0.0
        %966 = vmatpush1.msra.mxu0 0.0
        %967 = vmatprep.subr.mxu0 0.0
        %968 = vmatpush1.msra.mxu0 0.0
        %969 = vmatprep.subr.mxu0 0.0
        %970 = vmatpush1.msra.mxu0 0.0
        %971 = vmatprep.subr.mxu0 0.0
        %972 = vmatpush1.msra.mxu0 0.0
        %973 = vmatprep.subr.mxu0 0.0
        %974 = vmatpush1.msra.mxu0 0.0
        %975 = vmatprep.subr.mxu0 0.0
        %976 = vmatpush1.msra.mxu0 0.0
        %977 = vmatprep.subr.mxu0 0.0
        %978 = vmatpush1.msra.mxu0 0.0
        %979 = vmatprep.subr.mxu0 0.0
        %980 = vmatpush1.msra.mxu0 0.0
        %981 = vmatprep.subr.mxu0 0.0
        %982 = vmatpush1.msra.mxu0 0.0
        %983 = vmatprep.subr.mxu0 0.0
        %984 = vmatpush1.msra.mxu0 0.0
        %985 = vmatprep.subr.mxu0 0.0
        %986 = vmatpush1.msra.mxu0 0.0
        %987 = vmatprep.subr.mxu0 0.0
        %988 = vmatpush1.msra.mxu0 0.0
        %989 = vmatprep.subr.mxu0 0.0
        %990 = vmatpush1.msra.mxu0 0.0
        %991 = vmatprep.subr.mxu0 0.0
        %992 = vmatpush1.msra.mxu0 0.0
        %993 = vmatprep.subr.mxu0 0.0
        %994 = vmatpush1.msra.mxu0 0.0
        %995 = vmatprep.subr.mxu0 0.0
        %996 = vmatpush1.msra.mxu0 %v753
        %997 = vmatprep.subr.mxu0 0.0
        %998 = vmatpush2.msra.mxu0 0.0
        %999 = vmatprep.subr.mxu0 0.0
        %1000 = vmatpush2.msra.mxu0 0.0
        %1001 = vmatprep.subr.mxu0 0.0
        %1002 = vmatpush2.msra.mxu0 0.0
        %1003 = vmatprep.subr.mxu0 0.0
        %1004 = vmatpush2.msra.mxu0 0.0
        %1005 = vmatprep.subr.mxu0 0.0
        %1006 = vmatpush2.msra.mxu0 0.0
        %1007 = vmatprep.subr.mxu0 0.0
        %1008 = vmatpush2.msra.mxu0 0.0
        %1009 = vmatprep.subr.mxu0 0.0
        %1010 = vmatpush2.msra.mxu0 0.0
        %1011 = vmatprep.subr.mxu0 0.0
        %1012 = vmatpush2.msra.mxu0 0.0
        %1013 = vmatprep.subr.mxu0 0.0
        %1014 = vmatpush2.msra.mxu0 0.0
        %1015 = vmatprep.subr.mxu0 0.0
        %1016 = vmatpush2.msra.mxu0 0.0
        %1017 = vmatprep.subr.mxu0 0.0
        %1018 = vmatpush2.msra.mxu0 0.0
        %1019 = vmatprep.subr.mxu0 0.0
        %1020 = vmatpush2.msra.mxu0 0.0
        %1021 = vmatprep.subr.mxu0 0.0
        %1022 = vmatpush2.msra.mxu0 0.0
        %1023 = vmatprep.subr.mxu0 0.0
        %1024 = vmatpush2.msra.mxu0 0.0
        %1025 = vmatprep.subr.mxu0 0.0
        %1026 = vmatpush2.msra.mxu0 0.0
        %1027 = vmatprep.subr.mxu0 0.0
        %1028 = vmatpush2.msra.mxu0 0.0
        %1029 = vmatprep.mubr.f32.mxu0 0.0
        %1030 = vmatmul.mubr.f32.gmra.mxu0 %v960
        %v1031 = vpop.f32.mrf.mxu0
        %v1032 = vadd.f32 0.0, %v1031
        %v1033 = vpop.f32.mrf.mxu0
        %1034 = vmatprep.mubr.f32.mxu0 0.0
        %1035 = vmatmul.mubr.f32.gmra.mxu0 %v963
        %v1036 = vpop.f32.mrf.mxu0
        %v1037 = vadd.f32 0.0, %v1036
        %v1038 = vpop.f32.mrf.mxu0
        %1039 = vdwg.mxu0
        %vm1040 = vcmask 130048
        %1041 = vst.msk [vmem:[%s750] sm:$0xff] %vm1040, %v1032
        %1042 = vst.msk [vmem:[%s750 + $0x8] sm:$0xff] %vm1040, %v1037
        %v1043 = vld [vmem:[%s698] sm:$0xff]
        %1044 = vmatprep.subr.mxu0 0.0
        %1045 = vmatpush1.msra.mxu0 0.0
        %1046 = vmatprep.subr.mxu0 0.0
        %1047 = vmatpush1.msra.mxu0 0.0
        %1048 = vmatprep.subr.mxu0 0.0
        %1049 = vmatpush1.msra.mxu0 0.0
        %1050 = vmatprep.subr.mxu0 0.0
        %1051 = vmatpush1.msra.mxu0 0.0
        %1052 = vmatprep.subr.mxu0 0.0
        %1053 = vmatpush1.msra.mxu0 0.0
        %1054 = vmatprep.subr.mxu0 0.0
        %1055 = vmatpush1.msra.mxu0 0.0
        %1056 = vmatprep.subr.mxu0 0.0
        %1057 = vmatpush1.msra.mxu0 0.0
        %1058 = vmatprep.subr.mxu0 0.0
        %1059 = vmatpush1.msra.mxu0 0.0
        %1060 = vmatprep.subr.mxu0 0.0
        %1061 = vmatpush1.msra.mxu0 0.0
        %1062 = vmatprep.subr.mxu0 0.0
        %1063 = vmatpush1.msra.mxu0 0.0
        %1064 = vmatprep.subr.mxu0 0.0
        %1065 = vmatpush1.msra.mxu0 0.0
        %1066 = vmatprep.subr.mxu0 0.0
        %1067 = vmatpush1.msra.mxu0 0.0
        %1068 = vmatprep.subr.mxu0 0.0
        %1069 = vmatpush1.msra.mxu0 0.0
        %1070 = vmatprep.subr.mxu0 0.0
        %1071 = vmatpush1.msra.mxu0 0.0
        %1072 = vmatprep.subr.mxu0 0.0
        %1073 = vmatpush1.msra.mxu0 0.0
        %1074 = vmatprep.subr.mxu0 0.0
        %1075 = vmatpush1.msra.mxu0 %v1043
        %1076 = vmatprep.subr.mxu0 0.0
        %1077 = vmatpush2.msra.mxu0 0.0
        %1078 = vmatprep.subr.mxu0 0.0
        %1079 = vmatpush2.msra.mxu0 0.0
        %1080 = vmatprep.subr.mxu0 0.0
        %1081 = vmatpush2.msra.mxu0 0.0
        %1082 = vmatprep.subr.mxu0 0.0
        %1083 = vmatpush2.msra.mxu0 0.0
        %1084 = vmatprep.subr.mxu0 0.0
        %1085 = vmatpush2.msra.mxu0 0.0
        %1086 = vmatprep.subr.mxu0 0.0
        %1087 = vmatpush2.msra.mxu0 0.0
        %1088 = vmatprep.subr.mxu0 0.0
        %1089 = vmatpush2.msra.mxu0 0.0
        %1090 = vmatprep.subr.mxu0 0.0
        %1091 = vmatpush2.msra.mxu0 0.0
        %1092 = vmatprep.subr.mxu0 0.0
        %1093 = vmatpush2.msra.mxu0 0.0
        %1094 = vmatprep.subr.mxu0 0.0
        %1095 = vmatpush2.msra.mxu0 0.0
        %1096 = vmatprep.subr.mxu0 0.0
        %1097 = vmatpush2.msra.mxu0 0.0
        %1098 = vmatprep.subr.mxu0 0.0
        %1099 = vmatpush2.msra.mxu0 0.0
        %1100 = vmatprep.subr.mxu0 0.0
        %1101 = vmatpush2.msra.mxu0 0.0
        %1102 = vmatprep.subr.mxu0 0.0
        %1103 = vmatpush2.msra.mxu0 0.0
        %1104 = vmatprep.subr.mxu0 0.0
        %1105 = vmatpush2.msra.mxu0 0.0
        %1106 = vmatprep.subr.mxu0 0.0
        %1107 = vmatpush2.msra.mxu0 0.0
        %1108 = vmatprep.mubr.f32.mxu0 0.0
        %1109 = vmatmul.mubr.f32.gmra.mxu0 %v879
        %v1110 = vpop.f32.mrf.mxu0
        %v1111 = vadd.f32 0.0, %v1110
        %v1112 = vpop.f32.mrf.mxu0
        %1113 = vmatprep.mubr.f32.mxu0 0.0
        %1114 = vmatmul.mubr.f32.gmra.mxu0 %v882
        %v1115 = vpop.f32.mrf.mxu0
        %v1116 = vadd.f32 0.0, %v1115
        %v1117 = vpop.f32.mrf.mxu0
        %1118 = vdwg.mxu0
        %v1120 = vsel %vm877, %v1111, 0
        %v1123 = vsel %vm877, %v1116, 0
        %1125 = vmatprep.subr.mxu0 0.0
        %1126 = vmatpush1.msra.mxu0 0.0
        %1127 = vmatprep.subr.mxu0 0.0
        %1128 = vmatpush1.msra.mxu0 0.0
        %1129 = vmatprep.subr.mxu0 0.0
        %1130 = vmatpush1.msra.mxu0 0.0
        %1131 = vmatprep.subr.mxu0 0.0
        %1132 = vmatpush1.msra.mxu0 0.0
        %1133 = vmatprep.subr.mxu0 0.0
        %1134 = vmatpush1.msra.mxu0 0.0
        %1135 = vmatprep.subr.mxu0 0.0
        %1136 = vmatpush1.msra.mxu0 0.0
        %1137 = vmatprep.subr.mxu0 0.0
        %1138 = vmatpush1.msra.mxu0 0.0
        %1139 = vmatprep.subr.mxu0 0.0
        %1140 = vmatpush1.msra.mxu0 0.0
        %1141 = vmatprep.subr.mxu0 0.0
        %1142 = vmatpush1.msra.mxu0 0.0
        %1143 = vmatprep.subr.mxu0 0.0
        %1144 = vmatpush1.msra.mxu0 0.0
        %1145 = vmatprep.subr.mxu0 0.0
        %1146 = vmatpush1.msra.mxu0 0.0
        %1147 = vmatprep.subr.mxu0 0.0
        %1148 = vmatpush1.msra.mxu0 0.0
        %1149 = vmatprep.subr.mxu0 0.0
        %1150 = vmatpush1.msra.mxu0 0.0
        %1151 = vmatprep.subr.mxu0 0.0
        %1152 = vmatpush1.msra.mxu0 0.0
        %1153 = vmatprep.subr.mxu0 0.0
        %1154 = vmatpush1.msra.mxu0 0.0
        %1155 = vmatprep.subr.mxu0 0.0
        %1156 = vmatpush1.msra.mxu0 %v753
        %1157 = vmatprep.subr.mxu0 0.0
        %1158 = vmatpush2.msra.mxu0 0.0
        %1159 = vmatprep.subr.mxu0 0.0
        %1160 = vmatpush2.msra.mxu0 0.0
        %1161 = vmatprep.subr.mxu0 0.0
        %1162 = vmatpush2.msra.mxu0 0.0
        %1163 = vmatprep.subr.mxu0 0.0
        %1164 = vmatpush2.msra.mxu0 0.0
        %1165 = vmatprep.subr.mxu0 0.0
        %1166 = vmatpush2.msra.mxu0 0.0
        %1167 = vmatprep.subr.mxu0 0.0
        %1168 = vmatpush2.msra.mxu0 0.0
        %1169 = vmatprep.subr.mxu0 0.0
        %1170 = vmatpush2.msra.mxu0 0.0
        %1171 = vmatprep.subr.mxu0 0.0
        %1172 = vmatpush2.msra.mxu0 0.0
        %1173 = vmatprep.subr.mxu0 0.0
        %1174 = vmatpush2.msra.mxu0 0.0
        %1175 = vmatprep.subr.mxu0 0.0
        %1176 = vmatpush2.msra.mxu0 0.0
        %1177 = vmatprep.subr.mxu0 0.0
        %1178 = vmatpush2.msra.mxu0 0.0
        %1179 = vmatprep.subr.mxu0 0.0
        %1180 = vmatpush2.msra.mxu0 0.0
        %1181 = vmatprep.subr.mxu0 0.0
        %1182 = vmatpush2.msra.mxu0 0.0
        %1183 = vmatprep.subr.mxu0 0.0
        %1184 = vmatpush2.msra.mxu0 0.0
        %1185 = vmatprep.subr.mxu0 0.0
        %1186 = vmatpush2.msra.mxu0 0.0
        %1187 = vmatprep.subr.mxu0 0.0
        %1188 = vmatpush2.msra.mxu0 0.0
        %1189 = vmatprep.mubr.f32.mxu0 0.0
        %1190 = vmatmul.mubr.f32.gmra.mxu0 %v1120
        %v1191 = vpop.f32.mrf.mxu0
        %v1192 = vadd.f32 0.0, %v1191
        %v1193 = vpop.f32.mrf.mxu0
        %1194 = vmatprep.mubr.f32.mxu0 0.0
        %1195 = vmatmul.mubr.f32.gmra.mxu0 %v1123
        %v1196 = vpop.f32.mrf.mxu0
        %v1197 = vadd.f32 0.0, %v1196
        %v1198 = vpop.f32.mrf.mxu0
        %1199 = vdwg.mxu0
        %v1200 = vld [vmem:[%s2] sm:$0xff]
        %v1201 = vld [vmem:[%s2 + $0x8] sm:$0xff]
        %s1202 = scalar_lea.vmem %s2, 16
        %v1203 = vld [vmem:[%s1202] sm:$0xff]
        %v1204 = vld [vmem:[%s1202 + $0x8] sm:$0xff]
        %v1205 = vsub.f32 %v1203, %v1200
        %v1206 = vsub.f32 %v1204, %v1201
        %v1207 = vmul.f32 %v1205, 1.442695
        %v1208 = vpow.pop %v1207
        %v1209 = vmul.f32 %v1206, 1.442695
        %v1210 = vpow.pop %v1209
        %v1211 = vadd.f32 %v1208, 1.0
        %v1212 = vadd.f32 %v1210, 1.0
        %v1213 = vrcp.pop %v1211
        %v1214 = vmul.f32 1.0, %v1213
        %v1215 = vrcp.pop %v1212
        %v1216 = vmul.f32 1.0, %v1215
        %v1217 = vsub.f32 %v1200, %v1203
        %v1218 = vsub.f32 %v1201, %v1204
        %v1219 = vmul.f32 %v1217, 1.442695
        %v1220 = vpow.pop %v1219
        %v1221 = vmul.f32 %v1218, 1.442695
        %v1222 = vpow.pop %v1221
        %v1223 = vadd.f32 %v1220, 1.0
        %v1224 = vadd.f32 %v1222, 1.0
        %v1225 = vrcp.pop %v1223
        %v1226 = vmul.f32 1.0, %v1225
        %v1227 = vrcp.pop %v1224
        %v1228 = vmul.f32 1.0, %v1227
        %1231 = vrot.lane.b32.xlu0 %v1214, 16
        %v1232 = vpop.permute.xlu0 %1231
        %1233 = vrot.lane.b32.xlu0 %v1216, 16
        %v1234 = vpop.permute.xlu0 %1233
        %1239 = vrot.lane.b32.xlu0 %v1226, 32
        %v1240 = vpop.permute.xlu0 %1239
        %1241 = vrot.lane.b32.xlu0 %v1228, 32
        %v1242 = vpop.permute.xlu0 %1241
        %v1245 = vsel %vm1040, %v1192, %v1232
        %v1246 = vsel %vm1040, %v1197, %v1234
        %vm1247 = vcmask 261120
        %v1248 = vsel %vm1247, %v1245, %v1240
        %v1249 = vsel %vm1247, %v1246, %v1242
        %v1251 = vsel %vm1040, %v767, 0
        %v1254 = vsel %vm1040, %v768, 0
        %1256 = vmatprep.subr.mxu0 0.0
        %1257 = vmatpush1.msra.mxu0 0.0
        %1258 = vmatprep.subr.mxu0 0.0
        %1259 = vmatpush1.msra.mxu0 0.0
        %1260 = vmatprep.subr.mxu0 0.0
        %1261 = vmatpush1.msra.mxu0 0.0
        %1262 = vmatprep.subr.mxu0 0.0
        %1263 = vmatpush1.msra.mxu0 0.0
        %1264 = vmatprep.subr.mxu0 0.0
        %1265 = vmatpush1.msra.mxu0 0.0
        %1266 = vmatprep.subr.mxu0 0.0
        %1267 = vmatpush1.msra.mxu0 0.0
        %1268 = vmatprep.subr.mxu0 0.0
        %1269 = vmatpush1.msra.mxu0 0.0
        %1270 = vmatprep.subr.mxu0 0.0
        %1271 = vmatpush1.msra.mxu0 0.0
        %1272 = vmatprep.subr.mxu0 0.0
        %1273 = vmatpush1.msra.mxu0 0.0
        %1274 = vmatprep.subr.mxu0 0.0
        %1275 = vmatpush1.msra.mxu0 0.0
        %1276 = vmatprep.subr.mxu0 0.0
        %1277 = vmatpush1.msra.mxu0 0.0
        %1278 = vmatprep.subr.mxu0 0.0
        %1279 = vmatpush1.msra.mxu0 0.0
        %1280 = vmatprep.subr.mxu0 0.0
        %1281 = vmatpush1.msra.mxu0 0.0
        %1282 = vmatprep.subr.mxu0 0.0
        %1283 = vmatpush1.msra.mxu0 0.0
        %1284 = vmatprep.subr.mxu0 0.0
        %1285 = vmatpush1.msra.mxu0 %v1249
        %1286 = vmatprep.subr.mxu0 0.0
        %1287 = vmatpush1.msra.mxu0 %v1248
        %1288 = vmatprep.subr.mxu0 0.0
        %1289 = vmatpush2.msra.mxu0 0.0
        %1290 = vmatprep.subr.mxu0 0.0
        %1291 = vmatpush2.msra.mxu0 0.0
        %1292 = vmatprep.subr.mxu0 0.0
        %1293 = vmatpush2.msra.mxu0 0.0
        %1294 = vmatprep.subr.mxu0 0.0
        %1295 = vmatpush2.msra.mxu0 0.0
        %1296 = vmatprep.subr.mxu0 0.0
        %1297 = vmatpush2.msra.mxu0 0.0
        %1298 = vmatprep.subr.mxu0 0.0
        %1299 = vmatpush2.msra.mxu0 0.0
        %1300 = vmatprep.subr.mxu0 0.0
        %1301 = vmatpush2.msra.mxu0 0.0
        %1302 = vmatprep.subr.mxu0 0.0
        %1303 = vmatpush2.msra.mxu0 0.0
        %1304 = vmatprep.subr.mxu0 0.0
        %1305 = vmatpush2.msra.mxu0 0.0
        %1306 = vmatprep.subr.mxu0 0.0
        %1307 = vmatpush2.msra.mxu0 0.0
        %1308 = vmatprep.subr.mxu0 0.0
        %1309 = vmatpush2.msra.mxu0 0.0
        %1310 = vmatprep.subr.mxu0 0.0
        %1311 = vmatpush2.msra.mxu0 0.0
        %1312 = vmatprep.subr.mxu0 0.0
        %1313 = vmatpush2.msra.mxu0 0.0
        %1314 = vmatprep.subr.mxu0 0.0
        %1315 = vmatpush2.msra.mxu0 0.0
        %1316 = vmatprep.subr.mxu0 0.0
        %1317 = vmatpush2.msra.mxu0 0.0
        %1318 = vmatprep.subr.mxu0 0.0
        %1319 = vmatpush2.msra.mxu0 0.0
        %1320 = vmatprep.mubr.f32.mxu0 0.0
        %1321 = vmatmul.mubr.f32.gmra.mxu0 %v1251
        %v1322 = vpop.f32.mrf.mxu0
        %v1323 = vadd.f32 0.0, %v1322
        %v1324 = vpop.f32.mrf.mxu0
        %1325 = vmatprep.mubr.f32.mxu0 0.0
        %1326 = vmatmul.mubr.f32.gmra.mxu0 %v1254
        %v1327 = vpop.f32.mrf.mxu0
        %v1328 = vadd.f32 0.0, %v1327
        %v1329 = vpop.f32.mrf.mxu0
        %1330 = vdwg.mxu0
        %v1331 = vld [vmem:[%s593] sm:$0xff]
        %v1332 = vld [vmem:[%s593 + $0x8] sm:$0xff]
        %v1333 = vld [vmem:[%s593 + $0x10] sm:$0xff]
        %v1334 = vld [vmem:[%s593 + $0x18] sm:$0xff]
        %v1335 = vld [vmem:[%s593 + $0x20] sm:$0xff]
        %v1336 = vld [vmem:[%s593 + $0x28] sm:$0xff]
        %v1337 = vld [vmem:[%s593 + $0x30] sm:$0xff]
        %v1338 = vld [vmem:[%s593 + $0x38] sm:$0xff]
        %v1339 = vld [vmem:[%s593 + $0x40] sm:$0xff]
        %v1340 = vld [vmem:[%s593 + $0x48] sm:$0xff]
        %v1341 = vld [vmem:[%s593 + $0x50] sm:$0xff]
        %v1342 = vld [vmem:[%s593 + $0x58] sm:$0xff]
        %v1344 = vsel %vm1040, %v775, 0
        %v1347 = vsel %vm1040, %v776, 0
        %1349 = vmatprep.subr.mxu0 0.0
        %1350 = vmatpush1.msra.mxu0 0.0
        %1351 = vmatprep.subr.mxu0 0.0
        %1352 = vmatpush1.msra.mxu0 0.0
        %1353 = vmatprep.subr.mxu0 0.0
        %1354 = vmatpush1.msra.mxu0 0.0
        %1355 = vmatprep.subr.mxu0 0.0
        %1356 = vmatpush1.msra.mxu0 0.0
        %1357 = vmatprep.subr.mxu0 0.0
        %1358 = vmatpush1.msra.mxu0 0.0
        %1359 = vmatprep.subr.mxu0 0.0
        %1360 = vmatpush1.msra.mxu0 0.0
        %1361 = vmatprep.subr.mxu0 0.0
        %1362 = vmatpush1.msra.mxu0 0.0
        %1363 = vmatprep.subr.mxu0 0.0
        %1364 = vmatpush1.msra.mxu0 0.0
        %1365 = vmatprep.subr.mxu0 0.0
        %1366 = vmatpush1.msra.mxu0 0.0
        %1367 = vmatprep.subr.mxu0 0.0
        %1368 = vmatpush1.msra.mxu0 0.0
        %1369 = vmatprep.subr.mxu0 0.0
        %1370 = vmatpush1.msra.mxu0 0.0
        %1371 = vmatprep.subr.mxu0 0.0
        %1372 = vmatpush1.msra.mxu0 0.0
        %1373 = vmatprep.subr.mxu0 0.0
        %1374 = vmatpush1.msra.mxu0 0.0
        %1375 = vmatprep.subr.mxu0 0.0
        %1376 = vmatpush1.msra.mxu0 0.0
        %1377 = vmatprep.subr.mxu0 0.0
        %1378 = vmatpush1.msra.mxu0 %v1249
        %1379 = vmatprep.subr.mxu0 0.0
        %1380 = vmatpush1.msra.mxu0 %v1248
        %1381 = vmatprep.subr.mxu0 0.0
        %1382 = vmatpush2.msra.mxu0 0.0
        %1383 = vmatprep.subr.mxu0 0.0
        %1384 = vmatpush2.msra.mxu0 0.0
        %1385 = vmatprep.subr.mxu0 0.0
        %1386 = vmatpush2.msra.mxu0 0.0
        %1387 = vmatprep.subr.mxu0 0.0
        %1388 = vmatpush2.msra.mxu0 0.0
        %1389 = vmatprep.subr.mxu0 0.0
        %1390 = vmatpush2.msra.mxu0 0.0
        %1391 = vmatprep.subr.mxu0 0.0
        %1392 = vmatpush2.msra.mxu0 0.0
        %1393 = vmatprep.subr.mxu0 0.0
        %1394 = vmatpush2.msra.mxu0 0.0
        %1395 = vmatprep.subr.mxu0 0.0
        %1396 = vmatpush2.msra.mxu0 0.0
        %1397 = vmatprep.subr.mxu0 0.0
        %1398 = vmatpush2.msra.mxu0 0.0
        %1399 = vmatprep.subr.mxu0 0.0
        %1400 = vmatpush2.msra.mxu0 0.0
        %1401 = vmatprep.subr.mxu0 0.0
        %1402 = vmatpush2.msra.mxu0 0.0
        %1403 = vmatprep.subr.mxu0 0.0
        %1404 = vmatpush2.msra.mxu0 0.0
        %1405 = vmatprep.subr.mxu0 0.0
        %1406 = vmatpush2.msra.mxu0 0.0
        %1407 = vmatprep.subr.mxu0 0.0
        %1408 = vmatpush2.msra.mxu0 0.0
        %1409 = vmatprep.subr.mxu0 0.0
        %1410 = vmatpush2.msra.mxu0 0.0
        %1411 = vmatprep.subr.mxu0 0.0
        %1412 = vmatpush2.msra.mxu0 0.0
        %1413 = vmatprep.mubr.f32.mxu0 0.0
        %1414 = vmatmul.mubr.f32.gmra.mxu0 %v1344
        %v1415 = vpop.f32.mrf.mxu0
        %v1416 = vadd.f32 0.0, %v1415
        %v1417 = vpop.f32.mrf.mxu0
        %1418 = vmatprep.mubr.f32.mxu0 0.0
        %1419 = vmatmul.mubr.f32.gmra.mxu0 %v1347
        %v1420 = vpop.f32.mrf.mxu0
        %v1421 = vadd.f32 0.0, %v1420
        %v1422 = vpop.f32.mrf.mxu0
        %1423 = vdwg.mxu0
        %s1424 = scalar_lea.vmem %s593, 96 [#allocation2]
        %v1425 = vld [vmem:[%s1424] sm:$0xff]
        %v1426 = vld [vmem:[%s1424 + $0x8] sm:$0xff]
        %v1427 = vld [vmem:[%s1424 + $0x10] sm:$0xff]
        %v1428 = vld [vmem:[%s1424 + $0x18] sm:$0xff]
        %v1429 = vld [vmem:[%s1424 + $0x20] sm:$0xff]
        %v1430 = vld [vmem:[%s1424 + $0x28] sm:$0xff]
        %v1431 = vld [vmem:[%s1424 + $0x30] sm:$0xff]
        %v1432 = vld [vmem:[%s1424 + $0x38] sm:$0xff]
        %v1433 = vld [vmem:[%s1424 + $0x40] sm:$0xff]
        %v1434 = vld [vmem:[%s1424 + $0x48] sm:$0xff]
        %v1435 = vld [vmem:[%s1424 + $0x50] sm:$0xff]
        %v1436 = vld [vmem:[%s1424 + $0x58] sm:$0xff]
        %vm1437 = vcmask 392192
        %v1439 = vsel %vm1437, %v1416, 0
        %v1442 = vsel %vm1437, %v1421, 0
        %1444 = vmatprep.subr.mxu0 0.0
        %1445 = vmatpush1.msra.mxu0 0.0
        %1446 = vmatprep.subr.mxu0 0.0
        %1447 = vmatpush1.msra.mxu0 0.0
        %1448 = vmatprep.subr.mxu0 0.0
        %1449 = vmatpush1.msra.mxu0 0.0
        %1450 = vmatprep.subr.mxu0 0.0
        %1451 = vmatpush1.msra.mxu0 0.0
        %1452 = vmatprep.subr.mxu0 0.0
        %1453 = vmatpush1.msra.mxu0 0.0
        %1454 = vmatprep.subr.mxu0 0.0
        %1455 = vmatpush1.msra.mxu0 0.0
        %1456 = vmatprep.subr.mxu0 0.0
        %1457 = vmatpush1.msra.mxu0 0.0
        %1458 = vmatprep.subr.mxu0 0.0
        %1459 = vmatpush1.msra.mxu0 0.0
        %1460 = vmatprep.subr.mxu0 0.0
        %1461 = vmatpush1.msra.mxu0 0.0
        %1462 = vmatprep.subr.mxu0 0.0
        %1463 = vmatpush1.msra.mxu0 0.0
        %1464 = vmatprep.subr.mxu0 %v1436
        %1465 = vmatpush1.msra.mxu0 %v1435
        %1466 = vmatprep.subr.mxu0 %v1434
        %1467 = vmatpush1.msra.mxu0 %v1433
        %1468 = vmatprep.subr.mxu0 %v1432
        %1469 = vmatpush1.msra.mxu0 %v1431
        %1470 = vmatprep.subr.mxu0 %v1430
        %1471 = vmatpush1.msra.mxu0 %v1429
        %1472 = vmatprep.subr.mxu0 %v1428
        %1473 = vmatpush1.msra.mxu0 %v1427
        %1474 = vmatprep.subr.mxu0 %v1426
        %1475 = vmatpush1.msra.mxu0 %v1425
        %1476 = vmatprep.subr.mxu0 0.0
        %1477 = vmatpush2.msra.mxu0 0.0
        %1478 = vmatprep.subr.mxu0 0.0
        %1479 = vmatpush2.msra.mxu0 0.0
        %1480 = vmatprep.subr.mxu0 0.0
        %1481 = vmatpush2.msra.mxu0 0.0
        %1482 = vmatprep.subr.mxu0 0.0
        %1483 = vmatpush2.msra.mxu0 0.0
        %1484 = vmatprep.subr.mxu0 0.0
        %1485 = vmatpush2.msra.mxu0 0.0
        %1486 = vmatprep.subr.mxu0 0.0
        %1487 = vmatpush2.msra.mxu0 0.0
        %1488 = vmatprep.subr.mxu0 0.0
        %1489 = vmatpush2.msra.mxu0 0.0
        %1490 = vmatprep.subr.mxu0 0.0
        %1491 = vmatpush2.msra.mxu0 0.0
        %1492 = vmatprep.subr.mxu0 0.0
        %1493 = vmatpush2.msra.mxu0 0.0
        %1494 = vmatprep.subr.mxu0 0.0
        %1495 = vmatpush2.msra.mxu0 0.0
        %1496 = vmatprep.subr.mxu0 0.0
        %1497 = vmatpush2.msra.mxu0 0.0
        %1498 = vmatprep.subr.mxu0 0.0
        %1499 = vmatpush2.msra.mxu0 0.0
        %1500 = vmatprep.subr.mxu0 0.0
        %1501 = vmatpush2.msra.mxu0 0.0
        %1502 = vmatprep.subr.mxu0 0.0
        %1503 = vmatpush2.msra.mxu0 0.0
        %1504 = vmatprep.subr.mxu0 0.0
        %1505 = vmatpush2.msra.mxu0 0.0
        %1506 = vmatprep.subr.mxu0 0.0
        %1507 = vmatpush2.msra.mxu0 0.0
        %1508 = vmatprep.mubr.f32.mxu0 0.0
        %1509 = vmatmul.mubr.f32.gmra.mxu0 %v1439
        %v1510 = vpop.f32.mrf.mxu0
        %v1511 = vadd.f32 0.0, %v1510
        %v1512 = vpop.f32.mrf.mxu0
        %v1513 = vadd.f32 0.0, %v1512
        %1514 = vmatprep.mubr.f32.mxu0 0.0
        %1515 = vmatmul.mubr.f32.gmra.mxu0 %v1442
        %v1516 = vpop.f32.mrf.mxu0
        %v1517 = vadd.f32 0.0, %v1516
        %v1518 = vpop.f32.mrf.mxu0
        %v1519 = vadd.f32 0.0, %v1518
        %1520 = vdwg.mxu0
        %v1522 = vsel %vm1437, %v1323, 0
        %v1525 = vsel %vm1437, %v1328, 0
        %1527 = vmatprep.subr.mxu0 0.0
        %1528 = vmatpush1.msra.mxu0 0.0
        %1529 = vmatprep.subr.mxu0 0.0
        %1530 = vmatpush1.msra.mxu0 0.0
        %1531 = vmatprep.subr.mxu0 0.0
        %1532 = vmatpush1.msra.mxu0 0.0
        %1533 = vmatprep.subr.mxu0 0.0
        %1534 = vmatpush1.msra.mxu0 0.0
        %1535 = vmatprep.subr.mxu0 0.0
        %1536 = vmatpush1.msra.mxu0 0.0
        %1537 = vmatprep.subr.mxu0 0.0
        %1538 = vmatpush1.msra.mxu0 0.0
        %1539 = vmatprep.subr.mxu0 0.0
        %1540 = vmatpush1.msra.mxu0 0.0
        %1541 = vmatprep.subr.mxu0 0.0
        %1542 = vmatpush1.msra.mxu0 0.0
        %1543 = vmatprep.subr.mxu0 0.0
        %1544 = vmatpush1.msra.mxu0 0.0
        %1545 = vmatprep.subr.mxu0 0.0
        %1546 = vmatpush1.msra.mxu0 0.0
        %1547 = vmatprep.subr.mxu0 %v1342
        %1548 = vmatpush1.msra.mxu0 %v1341
        %1549 = vmatprep.subr.mxu0 %v1340
        %1550 = vmatpush1.msra.mxu0 %v1339
        %1551 = vmatprep.subr.mxu0 %v1338
        %1552 = vmatpush1.msra.mxu0 %v1337
        %1553 = vmatprep.subr.mxu0 %v1336
        %1554 = vmatpush1.msra.mxu0 %v1335
        %1555 = vmatprep.subr.mxu0 %v1334
        %1556 = vmatpush1.msra.mxu0 %v1333
        %1557 = vmatprep.subr.mxu0 %v1332
        %1558 = vmatpush1.msra.mxu0 %v1331
        %1559 = vmatprep.subr.mxu0 0.0
        %1560 = vmatpush2.msra.mxu0 0.0
        %1561 = vmatprep.subr.mxu0 0.0
        %1562 = vmatpush2.msra.mxu0 0.0
        %1563 = vmatprep.subr.mxu0 0.0
        %1564 = vmatpush2.msra.mxu0 0.0
        %1565 = vmatprep.subr.mxu0 0.0
        %1566 = vmatpush2.msra.mxu0 0.0
        %1567 = vmatprep.subr.mxu0 0.0
        %1568 = vmatpush2.msra.mxu0 0.0
        %1569 = vmatprep.subr.mxu0 0.0
        %1570 = vmatpush2.msra.mxu0 0.0
        %1571 = vmatprep.subr.mxu0 0.0
        %1572 = vmatpush2.msra.mxu0 0.0
        %1573 = vmatprep.subr.mxu0 0.0
        %1574 = vmatpush2.msra.mxu0 0.0
        %1575 = vmatprep.subr.mxu0 0.0
        %1576 = vmatpush2.msra.mxu0 0.0
        %1577 = vmatprep.subr.mxu0 0.0
        %1578 = vmatpush2.msra.mxu0 0.0
        %1579 = vmatprep.subr.mxu0 0.0
        %1580 = vmatpush2.msra.mxu0 0.0
        %1581 = vmatprep.subr.mxu0 0.0
        %1582 = vmatpush2.msra.mxu0 0.0
        %1583 = vmatprep.subr.mxu0 0.0
        %1584 = vmatpush2.msra.mxu0 0.0
        %1585 = vmatprep.subr.mxu0 0.0
        %1586 = vmatpush2.msra.mxu0 0.0
        %1587 = vmatprep.subr.mxu0 0.0
        %1588 = vmatpush2.msra.mxu0 0.0
        %1589 = vmatprep.subr.mxu0 0.0
        %1590 = vmatpush2.msra.mxu0 0.0
        %1591 = vmatprep.mubr.f32.mxu0 0.0
        %1592 = vmatmul.mubr.f32.gmra.mxu0 %v1522
        %v1593 = vpop.f32.mrf.mxu0
        %v1594 = vadd.f32 %v1511, %v1593
        %v1595 = vpop.f32.mrf.mxu0
        %v1596 = vadd.f32 %v1513, %v1595
        %1597 = vmatprep.mubr.f32.mxu0 0.0
        %1598 = vmatmul.mubr.f32.gmra.mxu0 %v1525
        %v1599 = vpop.f32.mrf.mxu0
        %v1600 = vadd.f32 %v1517, %v1599
        %v1601 = vpop.f32.mrf.mxu0
        %v1602 = vadd.f32 %v1519, %v1601
        %1603 = vdwg.mxu0
        %v1605 = vsel %vm1040, %v783, 0
        %v1608 = vsel %vm1040, %v784, 0
        %1610 = vmatprep.subr.mxu0 0.0
        %1611 = vmatpush1.msra.mxu0 0.0
        %1612 = vmatprep.subr.mxu0 0.0
        %1613 = vmatpush1.msra.mxu0 0.0
        %1614 = vmatprep.subr.mxu0 0.0
        %1615 = vmatpush1.msra.mxu0 0.0
        %1616 = vmatprep.subr.mxu0 0.0
        %1617 = vmatpush1.msra.mxu0 0.0
        %1618 = vmatprep.subr.mxu0 0.0
        %1619 = vmatpush1.msra.mxu0 0.0
        %1620 = vmatprep.subr.mxu0 0.0
        %1621 = vmatpush1.msra.mxu0 0.0
        %1622 = vmatprep.subr.mxu0 0.0
        %1623 = vmatpush1.msra.mxu0 0.0
        %1624 = vmatprep.subr.mxu0 0.0
        %1625 = vmatpush1.msra.mxu0 0.0
        %1626 = vmatprep.subr.mxu0 0.0
        %1627 = vmatpush1.msra.mxu0 0.0
        %1628 = vmatprep.subr.mxu0 0.0
        %1629 = vmatpush1.msra.mxu0 0.0
        %1630 = vmatprep.subr.mxu0 0.0
        %1631 = vmatpush1.msra.mxu0 0.0
        %1632 = vmatprep.subr.mxu0 0.0
        %1633 = vmatpush1.msra.mxu0 0.0
        %1634 = vmatprep.subr.mxu0 0.0
        %1635 = vmatpush1.msra.mxu0 0.0
        %1636 = vmatprep.subr.mxu0 0.0
        %1637 = vmatpush1.msra.mxu0 0.0
        %1638 = vmatprep.subr.mxu0 0.0
        %1639 = vmatpush1.msra.mxu0 %v1249
        %1640 = vmatprep.subr.mxu0 0.0
        %1641 = vmatpush1.msra.mxu0 %v1248
        %1642 = vmatprep.subr.mxu0 0.0
        %1643 = vmatpush2.msra.mxu0 0.0
        %1644 = vmatprep.subr.mxu0 0.0
        %1645 = vmatpush2.msra.mxu0 0.0
        %1646 = vmatprep.subr.mxu0 0.0
        %1647 = vmatpush2.msra.mxu0 0.0
        %1648 = vmatprep.subr.mxu0 0.0
        %1649 = vmatpush2.msra.mxu0 0.0
        %1650 = vmatprep.subr.mxu0 0.0
        %1651 = vmatpush2.msra.mxu0 0.0
        %1652 = vmatprep.subr.mxu0 0.0
        %1653 = vmatpush2.msra.mxu0 0.0
        %1654 = vmatprep.subr.mxu0 0.0
        %1655 = vmatpush2.msra.mxu0 0.0
        %1656 = vmatprep.subr.mxu0 0.0
        %1657 = vmatpush2.msra.mxu0 0.0
        %1658 = vmatprep.subr.mxu0 0.0
        %1659 = vmatpush2.msra.mxu0 0.0
        %1660 = vmatprep.subr.mxu0 0.0
        %1661 = vmatpush2.msra.mxu0 0.0
        %1662 = vmatprep.subr.mxu0 0.0
        %1663 = vmatpush2.msra.mxu0 0.0
        %1664 = vmatprep.subr.mxu0 0.0
        %1665 = vmatpush2.msra.mxu0 0.0
        %1666 = vmatprep.subr.mxu0 0.0
        %1667 = vmatpush2.msra.mxu0 0.0
        %1668 = vmatprep.subr.mxu0 0.0
        %1669 = vmatpush2.msra.mxu0 0.0
        %1670 = vmatprep.subr.mxu0 0.0
        %1671 = vmatpush2.msra.mxu0 0.0
        %1672 = vmatprep.subr.mxu0 0.0
        %1673 = vmatpush2.msra.mxu0 0.0
        %1674 = vmatprep.mubr.f32.mxu0 0.0
        %1675 = vmatmul.mubr.f32.gmra.mxu0 %v1605
        %v1676 = vpop.f32.mrf.mxu0
        %v1677 = vadd.f32 0.0, %v1676
        %v1678 = vpop.f32.mrf.mxu0
        %1679 = vmatprep.mubr.f32.mxu0 0.0
        %1680 = vmatmul.mubr.f32.gmra.mxu0 %v1608
        %v1681 = vpop.f32.mrf.mxu0
        %v1682 = vadd.f32 0.0, %v1681
        %v1683 = vpop.f32.mrf.mxu0
        %1684 = vdwg.mxu0
        %s1685 = scalar_lea.vmem %s593, 192 [#allocation2]
        %v1686 = vld [vmem:[%s1685] sm:$0xff]
        %v1687 = vld [vmem:[%s1685 + $0x8] sm:$0xff]
        %v1688 = vld [vmem:[%s1685 + $0x10] sm:$0xff]
        %v1689 = vld [vmem:[%s1685 + $0x18] sm:$0xff]
        %v1690 = vld [vmem:[%s1685 + $0x20] sm:$0xff]
        %v1691 = vld [vmem:[%s1685 + $0x28] sm:$0xff]
        %v1692 = vld [vmem:[%s1685 + $0x30] sm:$0xff]
        %v1693 = vld [vmem:[%s1685 + $0x38] sm:$0xff]
        %v1694 = vld [vmem:[%s1685 + $0x40] sm:$0xff]
        %v1695 = vld [vmem:[%s1685 + $0x48] sm:$0xff]
        %v1696 = vld [vmem:[%s1685 + $0x50] sm:$0xff]
        %v1697 = vld [vmem:[%s1685 + $0x58] sm:$0xff]
        %v1699 = vsel %vm1437, %v1677, 0
        %v1702 = vsel %vm1437, %v1682, 0
        %1704 = vmatprep.subr.mxu0 0.0
        %1705 = vmatpush1.msra.mxu0 0.0
        %1706 = vmatprep.subr.mxu0 0.0
        %1707 = vmatpush1.msra.mxu0 0.0
        %1708 = vmatprep.subr.mxu0 0.0
        %1709 = vmatpush1.msra.mxu0 0.0
        %1710 = vmatprep.subr.mxu0 0.0
        %1711 = vmatpush1.msra.mxu0 0.0
        %1712 = vmatprep.subr.mxu0 0.0
        %1713 = vmatpush1.msra.mxu0 0.0
        %1714 = vmatprep.subr.mxu0 0.0
        %1715 = vmatpush1.msra.mxu0 0.0
        %1716 = vmatprep.subr.mxu0 0.0
        %1717 = vmatpush1.msra.mxu0 0.0
        %1718 = vmatprep.subr.mxu0 0.0
        %1719 = vmatpush1.msra.mxu0 0.0
        %1720 = vmatprep.subr.mxu0 0.0
        %1721 = vmatpush1.msra.mxu0 0.0
        %1722 = vmatprep.subr.mxu0 0.0
        %1723 = vmatpush1.msra.mxu0 0.0
        %1724 = vmatprep.subr.mxu0 %v1697
        %1725 = vmatpush1.msra.mxu0 %v1696
        %1726 = vmatprep.subr.mxu0 %v1695
        %1727 = vmatpush1.msra.mxu0 %v1694
        %1728 = vmatprep.subr.mxu0 %v1693
        %1729 = vmatpush1.msra.mxu0 %v1692
        %1730 = vmatprep.subr.mxu0 %v1691
        %1731 = vmatpush1.msra.mxu0 %v1690
        %1732 = vmatprep.subr.mxu0 %v1689
        %1733 = vmatpush1.msra.mxu0 %v1688
        %1734 = vmatprep.subr.mxu0 %v1687
        %1735 = vmatpush1.msra.mxu0 %v1686
        %1736 = vmatprep.subr.mxu0 0.0
        %1737 = vmatpush2.msra.mxu0 0.0
        %1738 = vmatprep.subr.mxu0 0.0
        %1739 = vmatpush2.msra.mxu0 0.0
        %1740 = vmatprep.subr.mxu0 0.0
        %1741 = vmatpush2.msra.mxu0 0.0
        %1742 = vmatprep.subr.mxu0 0.0
        %1743 = vmatpush2.msra.mxu0 0.0
        %1744 = vmatprep.subr.mxu0 0.0
        %1745 = vmatpush2.msra.mxu0 0.0
        %1746 = vmatprep.subr.mxu0 0.0
        %1747 = vmatpush2.msra.mxu0 0.0
        %1748 = vmatprep.subr.mxu0 0.0
        %1749 = vmatpush2.msra.mxu0 0.0
        %1750 = vmatprep.subr.mxu0 0.0
        %1751 = vmatpush2.msra.mxu0 0.0
        %1752 = vmatprep.subr.mxu0 0.0
        %1753 = vmatpush2.msra.mxu0 0.0
        %1754 = vmatprep.subr.mxu0 0.0
        %1755 = vmatpush2.msra.mxu0 0.0
        %1756 = vmatprep.subr.mxu0 0.0
        %1757 = vmatpush2.msra.mxu0 0.0
        %1758 = vmatprep.subr.mxu0 0.0
        %1759 = vmatpush2.msra.mxu0 0.0
        %1760 = vmatprep.subr.mxu0 0.0
        %1761 = vmatpush2.msra.mxu0 0.0
        %1762 = vmatprep.subr.mxu0 0.0
        %1763 = vmatpush2.msra.mxu0 0.0
        %1764 = vmatprep.subr.mxu0 0.0
        %1765 = vmatpush2.msra.mxu0 0.0
        %1766 = vmatprep.subr.mxu0 0.0
        %1767 = vmatpush2.msra.mxu0 0.0
        %1768 = vmatprep.mubr.f32.mxu0 0.0
        %1769 = vmatmul.mubr.f32.gmra.mxu0 %v1699
        %v1770 = vpop.f32.mrf.mxu0
        %v1771 = vadd.f32 0.0, %v1770
        %v1772 = vpop.f32.mrf.mxu0
        %v1773 = vadd.f32 0.0, %v1772
        %1774 = vmatprep.mubr.f32.mxu0 0.0
        %1775 = vmatmul.mubr.f32.gmra.mxu0 %v1702
        %v1776 = vpop.f32.mrf.mxu0
        %v1777 = vadd.f32 0.0, %v1776
        %v1778 = vpop.f32.mrf.mxu0
        %v1779 = vadd.f32 0.0, %v1778
        %1780 = vdwg.mxu0
        %v1781 = vadd.f32 %v1594, %v1771
        %v1782 = vadd.f32 %v1596, %v1773
        %v1783 = vadd.f32 %v1600, %v1777
        %v1784 = vadd.f32 %v1602, %v1779
        %v1786 = vsel %vm1040, %v789, 0
        %v1789 = vsel %vm1040, %v790, 0
        %1791 = vmatprep.subr.mxu0 0.0
        %1792 = vmatpush1.msra.mxu0 0.0
        %1793 = vmatprep.subr.mxu0 0.0
        %1794 = vmatpush1.msra.mxu0 0.0
        %1795 = vmatprep.subr.mxu0 0.0
        %1796 = vmatpush1.msra.mxu0 0.0
        %1797 = vmatprep.subr.mxu0 0.0
        %1798 = vmatpush1.msra.mxu0 0.0
        %1799 = vmatprep.subr.mxu0 0.0
        %1800 = vmatpush1.msra.mxu0 0.0
        %1801 = vmatprep.subr.mxu0 0.0
        %1802 = vmatpush1.msra.mxu0 0.0
        %1803 = vmatprep.subr.mxu0 0.0
        %1804 = vmatpush1.msra.mxu0 0.0
        %1805 = vmatprep.subr.mxu0 0.0
        %1806 = vmatpush1.msra.mxu0 0.0
        %1807 = vmatprep.subr.mxu0 0.0
        %1808 = vmatpush1.msra.mxu0 0.0
        %1809 = vmatprep.subr.mxu0 0.0
        %1810 = vmatpush1.msra.mxu0 0.0
        %1811 = vmatprep.subr.mxu0 0.0
        %1812 = vmatpush1.msra.mxu0 0.0
        %1813 = vmatprep.subr.mxu0 0.0
        %1814 = vmatpush1.msra.mxu0 0.0
        %1815 = vmatprep.subr.mxu0 0.0
        %1816 = vmatpush1.msra.mxu0 0.0
        %1817 = vmatprep.subr.mxu0 0.0
        %1818 = vmatpush1.msra.mxu0 0.0
        %1819 = vmatprep.subr.mxu0 0.0
        %1820 = vmatpush1.msra.mxu0 %v1249
        %1821 = vmatprep.subr.mxu0 0.0
        %1822 = vmatpush1.msra.mxu0 %v1248
        %1823 = vmatprep.subr.mxu0 0.0
        %1824 = vmatpush2.msra.mxu0 0.0
        %1825 = vmatprep.subr.mxu0 0.0
        %1826 = vmatpush2.msra.mxu0 0.0
        %1827 = vmatprep.subr.mxu0 0.0
        %1828 = vmatpush2.msra.mxu0 0.0
        %1829 = vmatprep.subr.mxu0 0.0
        %1830 = vmatpush2.msra.mxu0 0.0
        %1831 = vmatprep.subr.mxu0 0.0
        %1832 = vmatpush2.msra.mxu0 0.0
        %1833 = vmatprep.subr.mxu0 0.0
        %1834 = vmatpush2.msra.mxu0 0.0
        %1835 = vmatprep.subr.mxu0 0.0
        %1836 = vmatpush2.msra.mxu0 0.0
        %1837 = vmatprep.subr.mxu0 0.0
        %1838 = vmatpush2.msra.mxu0 0.0
        %1839 = vmatprep.subr.mxu0 0.0
        %1840 = vmatpush2.msra.mxu0 0.0
        %1841 = vmatprep.subr.mxu0 0.0
        %1842 = vmatpush2.msra.mxu0 0.0
        %1843 = vmatprep.subr.mxu0 0.0
        %1844 = vmatpush2.msra.mxu0 0.0
        %1845 = vmatprep.subr.mxu0 0.0
        %1846 = vmatpush2.msra.mxu0 0.0
        %1847 = vmatprep.subr.mxu0 0.0
        %1848 = vmatpush2.msra.mxu0 0.0
        %1849 = vmatprep.subr.mxu0 0.0
        %1850 = vmatpush2.msra.mxu0 0.0
        %1851 = vmatprep.subr.mxu0 0.0
        %1852 = vmatpush2.msra.mxu0 0.0
        %1853 = vmatprep.subr.mxu0 0.0
        %1854 = vmatpush2.msra.mxu0 0.0
        %1855 = vmatprep.mubr.f32.mxu0 0.0
        %1856 = vmatmul.mubr.f32.gmra.mxu0 %v1786
        %v1857 = vpop.f32.mrf.mxu0
        %v1858 = vadd.f32 0.0, %v1857
        %v1859 = vpop.f32.mrf.mxu0
        %1860 = vmatprep.mubr.f32.mxu0 0.0
        %1861 = vmatmul.mubr.f32.gmra.mxu0 %v1789
        %v1862 = vpop.f32.mrf.mxu0
        %v1863 = vadd.f32 0.0, %v1862
        %v1864 = vpop.f32.mrf.mxu0
        %1865 = vdwg.mxu0
        %s1866 = scalar_lea.vmem %s593, 288 [#allocation2]
        %v1867 = vld [vmem:[%s1866] sm:$0xff]
        %v1868 = vld [vmem:[%s1866 + $0x8] sm:$0xff]
        %v1869 = vld [vmem:[%s1866 + $0x10] sm:$0xff]
        %v1870 = vld [vmem:[%s1866 + $0x18] sm:$0xff]
        %v1871 = vld [vmem:[%s1866 + $0x20] sm:$0xff]
        %v1872 = vld [vmem:[%s1866 + $0x28] sm:$0xff]
        %v1873 = vld [vmem:[%s1866 + $0x30] sm:$0xff]
        %v1874 = vld [vmem:[%s1866 + $0x38] sm:$0xff]
        %v1875 = vld [vmem:[%s1866 + $0x40] sm:$0xff]
        %v1876 = vld [vmem:[%s1866 + $0x48] sm:$0xff]
        %v1877 = vld [vmem:[%s1866 + $0x50] sm:$0xff]
        %v1878 = vld [vmem:[%s1866 + $0x58] sm:$0xff]
        %v1880 = vsel %vm1437, %v1858, 0
        %v1883 = vsel %vm1437, %v1863, 0
        %1885 = vmatprep.subr.mxu0 0.0
        %1886 = vmatpush1.msra.mxu0 0.0
        %1887 = vmatprep.subr.mxu0 0.0
        %1888 = vmatpush1.msra.mxu0 0.0
        %1889 = vmatprep.subr.mxu0 0.0
        %1890 = vmatpush1.msra.mxu0 0.0
        %1891 = vmatprep.subr.mxu0 0.0
        %1892 = vmatpush1.msra.mxu0 0.0
        %1893 = vmatprep.subr.mxu0 0.0
        %1894 = vmatpush1.msra.mxu0 0.0
        %1895 = vmatprep.subr.mxu0 0.0
        %1896 = vmatpush1.msra.mxu0 0.0
        %1897 = vmatprep.subr.mxu0 0.0
        %1898 = vmatpush1.msra.mxu0 0.0
        %1899 = vmatprep.subr.mxu0 0.0
        %1900 = vmatpush1.msra.mxu0 0.0
        %1901 = vmatprep.subr.mxu0 0.0
        %1902 = vmatpush1.msra.mxu0 0.0
        %1903 = vmatprep.subr.mxu0 0.0
        %1904 = vmatpush1.msra.mxu0 0.0
        %1905 = vmatprep.subr.mxu0 %v1878
        %1906 = vmatpush1.msra.mxu0 %v1877
        %1907 = vmatprep.subr.mxu0 %v1876
        %1908 = vmatpush1.msra.mxu0 %v1875
        %1909 = vmatprep.subr.mxu0 %v1874
        %1910 = vmatpush1.msra.mxu0 %v1873
        %1911 = vmatprep.subr.mxu0 %v1872
        %1912 = vmatpush1.msra.mxu0 %v1871
        %1913 = vmatprep.subr.mxu0 %v1870
        %1914 = vmatpush1.msra.mxu0 %v1869
        %1915 = vmatprep.subr.mxu0 %v1868
        %1916 = vmatpush1.msra.mxu0 %v1867
        %1917 = vmatprep.subr.mxu0 0.0
        %1918 = vmatpush2.msra.mxu0 0.0
        %1919 = vmatprep.subr.mxu0 0.0
        %1920 = vmatpush2.msra.mxu0 0.0
        %1921 = vmatprep.subr.mxu0 0.0
        %1922 = vmatpush2.msra.mxu0 0.0
        %1923 = vmatprep.subr.mxu0 0.0
        %1924 = vmatpush2.msra.mxu0 0.0
        %1925 = vmatprep.subr.mxu0 0.0
        %1926 = vmatpush2.msra.mxu0 0.0
        %1927 = vmatprep.subr.mxu0 0.0
        %1928 = vmatpush2.msra.mxu0 0.0
        %1929 = vmatprep.subr.mxu0 0.0
        %1930 = vmatpush2.msra.mxu0 0.0
        %1931 = vmatprep.subr.mxu0 0.0
        %1932 = vmatpush2.msra.mxu0 0.0
        %1933 = vmatprep.subr.mxu0 0.0
        %1934 = vmatpush2.msra.mxu0 0.0
        %1935 = vmatprep.subr.mxu0 0.0
        %1936 = vmatpush2.msra.mxu0 0.0
        %1937 = vmatprep.subr.mxu0 0.0
        %1938 = vmatpush2.msra.mxu0 0.0
        %1939 = vmatprep.subr.mxu0 0.0
        %1940 = vmatpush2.msra.mxu0 0.0
        %1941 = vmatprep.subr.mxu0 0.0
        %1942 = vmatpush2.msra.mxu0 0.0
        %1943 = vmatprep.subr.mxu0 0.0
        %1944 = vmatpush2.msra.mxu0 0.0
        %1945 = vmatprep.subr.mxu0 0.0
        %1946 = vmatpush2.msra.mxu0 0.0
        %1947 = vmatprep.subr.mxu0 0.0
        %1948 = vmatpush2.msra.mxu0 0.0
        %1949 = vmatprep.mubr.f32.mxu0 0.0
        %1950 = vmatmul.mubr.f32.gmra.mxu0 %v1880
        %v1951 = vpop.f32.mrf.mxu0
        %v1952 = vadd.f32 0.0, %v1951
        %v1953 = vpop.f32.mrf.mxu0
        %v1954 = vadd.f32 0.0, %v1953
        %1955 = vmatprep.mubr.f32.mxu0 0.0
        %1956 = vmatmul.mubr.f32.gmra.mxu0 %v1883
        %v1957 = vpop.f32.mrf.mxu0
        %v1958 = vadd.f32 0.0, %v1957
        %v1959 = vpop.f32.mrf.mxu0
        %v1960 = vadd.f32 0.0, %v1959
        %1961 = vdwg.mxu0
        %v1962 = vadd.f32 %v1781, %v1952
        %v1963 = vadd.f32 %v1782, %v1954
        %v1964 = vadd.f32 %v1783, %v1958
        %v1965 = vadd.f32 %v1784, %v1960
        %v1967 = vsel %vm1040, %v797, 0
        %v1970 = vsel %vm1040, %v798, 0
        %1972 = vmatprep.subr.mxu0 0.0
        %1973 = vmatpush1.msra.mxu0 0.0
        %1974 = vmatprep.subr.mxu0 0.0
        %1975 = vmatpush1.msra.mxu0 0.0
        %1976 = vmatprep.subr.mxu0 0.0
        %1977 = vmatpush1.msra.mxu0 0.0
        %1978 = vmatprep.subr.mxu0 0.0
        %1979 = vmatpush1.msra.mxu0 0.0
        %1980 = vmatprep.subr.mxu0 0.0
        %1981 = vmatpush1.msra.mxu0 0.0
        %1982 = vmatprep.subr.mxu0 0.0
        %1983 = vmatpush1.msra.mxu0 0.0
        %1984 = vmatprep.subr.mxu0 0.0
        %1985 = vmatpush1.msra.mxu0 0.0
        %1986 = vmatprep.subr.mxu0 0.0
        %1987 = vmatpush1.msra.mxu0 0.0
        %1988 = vmatprep.subr.mxu0 0.0
        %1989 = vmatpush1.msra.mxu0 0.0
        %1990 = vmatprep.subr.mxu0 0.0
        %1991 = vmatpush1.msra.mxu0 0.0
        %1992 = vmatprep.subr.mxu0 0.0
        %1993 = vmatpush1.msra.mxu0 0.0
        %1994 = vmatprep.subr.mxu0 0.0
        %1995 = vmatpush1.msra.mxu0 0.0
        %1996 = vmatprep.subr.mxu0 0.0
        %1997 = vmatpush1.msra.mxu0 0.0
        %1998 = vmatprep.subr.mxu0 0.0
        %1999 = vmatpush1.msra.mxu0 0.0
        %2000 = vmatprep.subr.mxu0 0.0
        %2001 = vmatpush1.msra.mxu0 %v1249
        %2002 = vmatprep.subr.mxu0 0.0
        %2003 = vmatpush1.msra.mxu0 %v1248
        %2004 = vmatprep.subr.mxu0 0.0
        %2005 = vmatpush2.msra.mxu0 0.0
        %2006 = vmatprep.subr.mxu0 0.0
        %2007 = vmatpush2.msra.mxu0 0.0
        %2008 = vmatprep.subr.mxu0 0.0
        %2009 = vmatpush2.msra.mxu0 0.0
        %2010 = vmatprep.subr.mxu0 0.0
        %2011 = vmatpush2.msra.mxu0 0.0
        %2012 = vmatprep.subr.mxu0 0.0
        %2013 = vmatpush2.msra.mxu0 0.0
        %2014 = vmatprep.subr.mxu0 0.0
        %2015 = vmatpush2.msra.mxu0 0.0
        %2016 = vmatprep.subr.mxu0 0.0
        %2017 = vmatpush2.msra.mxu0 0.0
        %2018 = vmatprep.subr.mxu0 0.0
        %2019 = vmatpush2.msra.mxu0 0.0
        %2020 = vmatprep.subr.mxu0 0.0
        %2021 = vmatpush2.msra.mxu0 0.0
        %2022 = vmatprep.subr.mxu0 0.0
        %2023 = vmatpush2.msra.mxu0 0.0
        %2024 = vmatprep.subr.mxu0 0.0
        %2025 = vmatpush2.msra.mxu0 0.0
        %2026 = vmatprep.subr.mxu0 0.0
        %2027 = vmatpush2.msra.mxu0 0.0
        %2028 = vmatprep.subr.mxu0 0.0
        %2029 = vmatpush2.msra.mxu0 0.0
        %2030 = vmatprep.subr.mxu0 0.0
        %2031 = vmatpush2.msra.mxu0 0.0
        %2032 = vmatprep.subr.mxu0 0.0
        %2033 = vmatpush2.msra.mxu0 0.0
        %2034 = vmatprep.subr.mxu0 0.0
        %2035 = vmatpush2.msra.mxu0 0.0
        %2036 = vmatprep.mubr.f32.mxu0 0.0
        %2037 = vmatmul.mubr.f32.gmra.mxu0 %v1967
        %v2038 = vpop.f32.mrf.mxu0
        %v2039 = vadd.f32 0.0, %v2038
        %v2040 = vpop.f32.mrf.mxu0
        %2041 = vmatprep.mubr.f32.mxu0 0.0
        %2042 = vmatmul.mubr.f32.gmra.mxu0 %v1970
        %v2043 = vpop.f32.mrf.mxu0
        %v2044 = vadd.f32 0.0, %v2043
        %v2045 = vpop.f32.mrf.mxu0
        %2046 = vdwg.mxu0
        %s2047 = scalar_lea.vmem %s593, 384 [#allocation2]
        %v2048 = vld [vmem:[%s2047] sm:$0xff]
        %v2049 = vld [vmem:[%s2047 + $0x8] sm:$0xff]
        %v2050 = vld [vmem:[%s2047 + $0x10] sm:$0xff]
        %v2051 = vld [vmem:[%s2047 + $0x18] sm:$0xff]
        %v2052 = vld [vmem:[%s2047 + $0x20] sm:$0xff]
        %v2053 = vld [vmem:[%s2047 + $0x28] sm:$0xff]
        %v2054 = vld [vmem:[%s2047 + $0x30] sm:$0xff]
        %v2055 = vld [vmem:[%s2047 + $0x38] sm:$0xff]
        %v2056 = vld [vmem:[%s2047 + $0x40] sm:$0xff]
        %v2057 = vld [vmem:[%s2047 + $0x48] sm:$0xff]
        %v2058 = vld [vmem:[%s2047 + $0x50] sm:$0xff]
        %v2059 = vld [vmem:[%s2047 + $0x58] sm:$0xff]
        %v2061 = vsel %vm1437, %v2039, 0
        %v2064 = vsel %vm1437, %v2044, 0
        %2066 = vmatprep.subr.mxu0 0.0
        %2067 = vmatpush1.msra.mxu0 0.0
        %2068 = vmatprep.subr.mxu0 0.0
        %2069 = vmatpush1.msra.mxu0 0.0
        %2070 = vmatprep.subr.mxu0 0.0
        %2071 = vmatpush1.msra.mxu0 0.0
        %2072 = vmatprep.subr.mxu0 0.0
        %2073 = vmatpush1.msra.mxu0 0.0
        %2074 = vmatprep.subr.mxu0 0.0
        %2075 = vmatpush1.msra.mxu0 0.0
        %2076 = vmatprep.subr.mxu0 0.0
        %2077 = vmatpush1.msra.mxu0 0.0
        %2078 = vmatprep.subr.mxu0 0.0
        %2079 = vmatpush1.msra.mxu0 0.0
        %2080 = vmatprep.subr.mxu0 0.0
        %2081 = vmatpush1.msra.mxu0 0.0
        %2082 = vmatprep.subr.mxu0 0.0
        %2083 = vmatpush1.msra.mxu0 0.0
        %2084 = vmatprep.subr.mxu0 0.0
        %2085 = vmatpush1.msra.mxu0 0.0
        %2086 = vmatprep.subr.mxu0 %v2059
        %2087 = vmatpush1.msra.mxu0 %v2058
        %2088 = vmatprep.subr.mxu0 %v2057
        %2089 = vmatpush1.msra.mxu0 %v2056
        %2090 = vmatprep.subr.mxu0 %v2055
        %2091 = vmatpush1.msra.mxu0 %v2054
        %2092 = vmatprep.subr.mxu0 %v2053
        %2093 = vmatpush1.msra.mxu0 %v2052
        %2094 = vmatprep.subr.mxu0 %v2051
        %2095 = vmatpush1.msra.mxu0 %v2050
        %2096 = vmatprep.subr.mxu0 %v2049
        %2097 = vmatpush1.msra.mxu0 %v2048
        %2098 = vmatprep.subr.mxu0 0.0
        %2099 = vmatpush2.msra.mxu0 0.0
        %2100 = vmatprep.subr.mxu0 0.0
        %2101 = vmatpush2.msra.mxu0 0.0
        %2102 = vmatprep.subr.mxu0 0.0
        %2103 = vmatpush2.msra.mxu0 0.0
        %2104 = vmatprep.subr.mxu0 0.0
        %2105 = vmatpush2.msra.mxu0 0.0
        %2106 = vmatprep.subr.mxu0 0.0
        %2107 = vmatpush2.msra.mxu0 0.0
        %2108 = vmatprep.subr.mxu0 0.0
        %2109 = vmatpush2.msra.mxu0 0.0
        %2110 = vmatprep.subr.mxu0 0.0
        %2111 = vmatpush2.msra.mxu0 0.0
        %2112 = vmatprep.subr.mxu0 0.0
        %2113 = vmatpush2.msra.mxu0 0.0
        %2114 = vmatprep.subr.mxu0 0.0
        %2115 = vmatpush2.msra.mxu0 0.0
        %2116 = vmatprep.subr.mxu0 0.0
        %2117 = vmatpush2.msra.mxu0 0.0
        %2118 = vmatprep.subr.mxu0 0.0
        %2119 = vmatpush2.msra.mxu0 0.0
        %2120 = vmatprep.subr.mxu0 0.0
        %2121 = vmatpush2.msra.mxu0 0.0
        %2122 = vmatprep.subr.mxu0 0.0
        %2123 = vmatpush2.msra.mxu0 0.0
        %2124 = vmatprep.subr.mxu0 0.0
        %2125 = vmatpush2.msra.mxu0 0.0
        %2126 = vmatprep.subr.mxu0 0.0
        %2127 = vmatpush2.msra.mxu0 0.0
        %2128 = vmatprep.subr.mxu0 0.0
        %2129 = vmatpush2.msra.mxu0 0.0
        %2130 = vmatprep.mubr.f32.mxu0 0.0
        %2131 = vmatmul.mubr.f32.gmra.mxu0 %v2061
        %v2132 = vpop.f32.mrf.mxu0
        %v2133 = vadd.f32 0.0, %v2132
        %v2134 = vpop.f32.mrf.mxu0
        %v2135 = vadd.f32 0.0, %v2134
        %2136 = vmatprep.mubr.f32.mxu0 0.0
        %2137 = vmatmul.mubr.f32.gmra.mxu0 %v2064
        %v2138 = vpop.f32.mrf.mxu0
        %v2139 = vadd.f32 0.0, %v2138
        %v2140 = vpop.f32.mrf.mxu0
        %v2141 = vadd.f32 0.0, %v2140
        %2142 = vdwg.mxu0
        %v2143 = vadd.f32 %v1962, %v2133
        %v2144 = vadd.f32 %v1963, %v2135
        %v2145 = vadd.f32 %v1964, %v2139
        %v2146 = vadd.f32 %v1965, %v2141
        %v2147 = vld [vmem:[%s707] sm:$0x3]
        %v2149 = vlaneseq
        %v2150 = vshrl.u32 %v2149, 7
        %v2151 = vsub.s32 0, %v2150
        %v2152 = vrot.slane %v2147, %v2151
        %v2153 = vlaneseq
        %v2154 = vshrl.u32 %v2153, 7
        %v2155 = vsub.s32 1, %v2154
        %v2156 = vrot.slane %v2147, %v2155
        %v2159 = vadd.f32 %v2143, %v2152
        %v2160 = vadd.f32 %v2144, %v2156
        %v2161 = vadd.f32 %v2145, %v2152
        %v2162 = vadd.f32 %v2146, %v2156
        %v2163 = vmax.f32 %v2159, 0.0
        %v2164 = vmax.f32 %v2160, 0.0
        %v2165 = vmax.f32 %v2161, 0.0
        %v2166 = vmax.f32 %v2162, 0.0
        %vm2167 = vcmask 72704
        %v2168 = vsel %vm2167, %v775, 0
        %vm2170 = vcmask 1040384
        %v2172 = vsel %vm2170, %v2165, 0
        %v2175 = vsel %vm2170, %v2166, 0
        %2177 = vmatprep.subr.mxu0 0.0
        %2178 = vmatpush1.msra.mxu0 0.0
        %2179 = vmatprep.subr.mxu0 0.0
        %2180 = vmatpush1.msra.mxu0 0.0
        %2181 = vmatprep.subr.mxu0 0.0
        %2182 = vmatpush1.msra.mxu0 0.0
        %2183 = vmatprep.subr.mxu0 0.0
        %2184 = vmatpush1.msra.mxu0 0.0
        %2185 = vmatprep.subr.mxu0 0.0
        %2186 = vmatpush1.msra.mxu0 0.0
        %2187 = vmatprep.subr.mxu0 0.0
        %2188 = vmatpush1.msra.mxu0 0.0
        %2189 = vmatprep.subr.mxu0 0.0
        %2190 = vmatpush1.msra.mxu0 0.0
        %2191 = vmatprep.subr.mxu0 0.0
        %2192 = vmatpush1.msra.mxu0 0.0
        %2193 = vmatprep.subr.mxu0 0.0
        %2194 = vmatpush1.msra.mxu0 0.0
        %2195 = vmatprep.subr.mxu0 0.0
        %2196 = vmatpush1.msra.mxu0 0.0
        %2197 = vmatprep.subr.mxu0 0.0
        %2198 = vmatpush1.msra.mxu0 0.0
        %2199 = vmatprep.subr.mxu0 0.0
        %2200 = vmatpush1.msra.mxu0 0.0
        %2201 = vmatprep.subr.mxu0 0.0
        %2202 = vmatpush1.msra.mxu0 0.0
        %2203 = vmatprep.subr.mxu0 0.0
        %2204 = vmatpush1.msra.mxu0 0.0
        %2205 = vmatprep.subr.mxu0 %v2175
        %2206 = vmatpush1.msra.mxu0 %v2172
        %2207 = vmatprep.subr.mxu0 %v2164
        %2208 = vmatpush1.msra.mxu0 %v2163
        %2209 = vmatprep.subr.mxu0 0.0
        %2210 = vmatpush2.msra.mxu0 0.0
        %2211 = vmatprep.subr.mxu0 0.0
        %2212 = vmatpush2.msra.mxu0 0.0
        %2213 = vmatprep.subr.mxu0 0.0
        %2214 = vmatpush2.msra.mxu0 0.0
        %2215 = vmatprep.subr.mxu0 0.0
        %2216 = vmatpush2.msra.mxu0 0.0
        %2217 = vmatprep.subr.mxu0 0.0
        %2218 = vmatpush2.msra.mxu0 0.0
        %2219 = vmatprep.subr.mxu0 0.0
        %2220 = vmatpush2.msra.mxu0 0.0
        %2221 = vmatprep.subr.mxu0 0.0
        %2222 = vmatpush2.msra.mxu0 0.0
        %2223 = vmatprep.subr.mxu0 0.0
        %2224 = vmatpush2.msra.mxu0 0.0
        %2225 = vmatprep.subr.mxu0 0.0
        %2226 = vmatpush2.msra.mxu0 0.0
        %2227 = vmatprep.subr.mxu0 0.0
        %2228 = vmatpush2.msra.mxu0 0.0
        %2229 = vmatprep.subr.mxu0 0.0
        %2230 = vmatpush2.msra.mxu0 0.0
        %2231 = vmatprep.subr.mxu0 0.0
        %2232 = vmatpush2.msra.mxu0 0.0
        %2233 = vmatprep.subr.mxu0 0.0
        %2234 = vmatpush2.msra.mxu0 0.0
        %2235 = vmatprep.subr.mxu0 0.0
        %2236 = vmatpush2.msra.mxu0 0.0
        %2237 = vmatprep.subr.mxu0 0.0
        %2238 = vmatpush2.msra.mxu0 0.0
        %2239 = vmatprep.subr.mxu0 0.0
        %2240 = vmatpush2.msra.mxu0 0.0
        %2241 = vmatprep.mubr.f32.mxu0 0.0
        %2242 = vmatmul.mubr.f32.gmra.mxu0 %v2168
        %v2243 = vpop.f32.mrf.mxu0
        %v2244 = vadd.f32 0.0, %v2243
        %v2245 = vpop.f32.mrf.mxu0
        %v2246 = vadd.f32 0.0, %v2245
        %2247 = vdwg.mxu0
        %v2248 = vld [vmem:[%s712] sm:$0xff]
        %v2249 = vld [vmem:[%s712 + $0x8] sm:$0xff]
        %v2250 = vld [vmem:[%s712 + $0x10] sm:$0xff]
        %v2251 = vld [vmem:[%s712 + $0x18] sm:$0xff]
        %v2252 = vld [vmem:[%s712 + $0x20] sm:$0xff]
        %v2253 = vld [vmem:[%s712 + $0x28] sm:$0xff]
        %v2254 = vld [vmem:[%s712 + $0x30] sm:$0xff]
        %v2255 = vld [vmem:[%s712 + $0x38] sm:$0xff]
        %v2256 = vld [vmem:[%s712 + $0x40] sm:$0xff]
        %v2257 = vld [vmem:[%s712 + $0x48] sm:$0xff]
        %v2258 = vld [vmem:[%s712 + $0x50] sm:$0xff]
        %v2259 = vld [vmem:[%s712 + $0x58] sm:$0xff]
        %v2260 = vld [vmem:[%s712 + $0x60] sm:$0xff]
        %v2261 = vld [vmem:[%s712 + $0x68] sm:$0xff]
        %v2262 = vld [vmem:[%s712 + $0x70] sm:$0xff]
        %v2263 = vld [vmem:[%s712 + $0x78] sm:$0xff]
        %v2264 = vld [vmem:[%s712 + $0x80] sm:$0xff]
        %v2265 = vld [vmem:[%s712 + $0x88] sm:$0xff]
        %v2266 = vsel %vm2167, %v783, 0
        %2268 = vmatprep.subr.mxu0 0.0
        %2269 = vmatpush1.msra.mxu0 0.0
        %2270 = vmatprep.subr.mxu0 0.0
        %2271 = vmatpush1.msra.mxu0 0.0
        %2272 = vmatprep.subr.mxu0 0.0
        %2273 = vmatpush1.msra.mxu0 0.0
        %2274 = vmatprep.subr.mxu0 0.0
        %2275 = vmatpush1.msra.mxu0 0.0
        %2276 = vmatprep.subr.mxu0 0.0
        %2277 = vmatpush1.msra.mxu0 0.0
        %2278 = vmatprep.subr.mxu0 0.0
        %2279 = vmatpush1.msra.mxu0 0.0
        %2280 = vmatprep.subr.mxu0 0.0
        %2281 = vmatpush1.msra.mxu0 0.0
        %2282 = vmatprep.subr.mxu0 0.0
        %2283 = vmatpush1.msra.mxu0 0.0
        %2284 = vmatprep.subr.mxu0 0.0
        %2285 = vmatpush1.msra.mxu0 0.0
        %2286 = vmatprep.subr.mxu0 0.0
        %2287 = vmatpush1.msra.mxu0 0.0
        %2288 = vmatprep.subr.mxu0 0.0
        %2289 = vmatpush1.msra.mxu0 0.0
        %2290 = vmatprep.subr.mxu0 0.0
        %2291 = vmatpush1.msra.mxu0 0.0
        %2292 = vmatprep.subr.mxu0 0.0
        %2293 = vmatpush1.msra.mxu0 0.0
        %2294 = vmatprep.subr.mxu0 0.0
        %2295 = vmatpush1.msra.mxu0 0.0
        %2296 = vmatprep.subr.mxu0 %v2175
        %2297 = vmatpush1.msra.mxu0 %v2172
        %2298 = vmatprep.subr.mxu0 %v2164
        %2299 = vmatpush1.msra.mxu0 %v2163
        %2300 = vmatprep.subr.mxu0 0.0
        %2301 = vmatpush2.msra.mxu0 0.0
        %2302 = vmatprep.subr.mxu0 0.0
        %2303 = vmatpush2.msra.mxu0 0.0
        %2304 = vmatprep.subr.mxu0 0.0
        %2305 = vmatpush2.msra.mxu0 0.0
        %2306 = vmatprep.subr.mxu0 0.0
        %2307 = vmatpush2.msra.mxu0 0.0
        %2308 = vmatprep.subr.mxu0 0.0
        %2309 = vmatpush2.msra.mxu0 0.0
        %2310 = vmatprep.subr.mxu0 0.0
        %2311 = vmatpush2.msra.mxu0 0.0
        %2312 = vmatprep.subr.mxu0 0.0
        %2313 = vmatpush2.msra.mxu0 0.0
        %2314 = vmatprep.subr.mxu0 0.0
        %2315 = vmatpush2.msra.mxu0 0.0
        %2316 = vmatprep.subr.mxu0 0.0
        %2317 = vmatpush2.msra.mxu0 0.0
        %2318 = vmatprep.subr.mxu0 0.0
        %2319 = vmatpush2.msra.mxu0 0.0
        %2320 = vmatprep.subr.mxu0 0.0
        %2321 = vmatpush2.msra.mxu0 0.0
        %2322 = vmatprep.subr.mxu0 0.0
        %2323 = vmatpush2.msra.mxu0 0.0
        %2324 = vmatprep.subr.mxu0 0.0
        %2325 = vmatpush2.msra.mxu0 0.0
        %2326 = vmatprep.subr.mxu0 0.0
        %2327 = vmatpush2.msra.mxu0 0.0
        %2328 = vmatprep.subr.mxu0 0.0
        %2329 = vmatpush2.msra.mxu0 0.0
        %2330 = vmatprep.subr.mxu0 0.0
        %2331 = vmatpush2.msra.mxu0 0.0
        %2332 = vmatprep.mubr.f32.mxu0 0.0
        %2333 = vmatmul.mubr.f32.gmra.mxu0 %v2266
        %v2334 = vpop.f32.mrf.mxu0
        %v2335 = vadd.f32 0.0, %v2334
        %v2336 = vpop.f32.mrf.mxu0
        %v2337 = vadd.f32 0.0, %v2336
        %2338 = vdwg.mxu0
        %s2339 = scalar_lea.vmem %s712, 144
        %v2340 = vld [vmem:[%s2339] sm:$0xff]
        %v2341 = vld [vmem:[%s2339 + $0x8] sm:$0xff]
        %v2342 = vld [vmem:[%s2339 + $0x10] sm:$0xff]
        %v2343 = vld [vmem:[%s2339 + $0x18] sm:$0xff]
        %v2344 = vld [vmem:[%s2339 + $0x20] sm:$0xff]
        %v2345 = vld [vmem:[%s2339 + $0x28] sm:$0xff]
        %v2346 = vld [vmem:[%s2339 + $0x30] sm:$0xff]
        %v2347 = vld [vmem:[%s2339 + $0x38] sm:$0xff]
        %v2348 = vld [vmem:[%s2339 + $0x40] sm:$0xff]
        %v2349 = vld [vmem:[%s2339 + $0x48] sm:$0xff]
        %v2350 = vld [vmem:[%s2339 + $0x50] sm:$0xff]
        %v2351 = vld [vmem:[%s2339 + $0x58] sm:$0xff]
        %v2352 = vld [vmem:[%s2339 + $0x60] sm:$0xff]
        %v2353 = vld [vmem:[%s2339 + $0x68] sm:$0xff]
        %v2354 = vld [vmem:[%s2339 + $0x70] sm:$0xff]
        %v2355 = vld [vmem:[%s2339 + $0x78] sm:$0xff]
        %v2356 = vld [vmem:[%s2339 + $0x80] sm:$0xff]
        %v2357 = vld [vmem:[%s2339 + $0x88] sm:$0xff]
        %v2359 = vsel %vm1040, %v2337, 0
        %2361 = vmatprep.subr.mxu0 0.0
        %2362 = vmatpush1.msra.mxu0 %v2355
        %2363 = vmatprep.subr.mxu0 0.0
        %2364 = vmatpush1.msra.mxu0 %v2354
        %2365 = vmatprep.subr.mxu0 0.0
        %2366 = vmatpush1.msra.mxu0 %v2353
        %2367 = vmatprep.subr.mxu0 0.0
        %2368 = vmatpush1.msra.mxu0 %v2352
        %2369 = vmatprep.subr.mxu0 0.0
        %2370 = vmatpush1.msra.mxu0 %v2351
        %2371 = vmatprep.subr.mxu0 0.0
        %2372 = vmatpush1.msra.mxu0 %v2350
        %2373 = vmatprep.subr.mxu0 0.0
        %2374 = vmatpush1.msra.mxu0 %v2349
        %2375 = vmatprep.subr.mxu0 0.0
        %2376 = vmatpush1.msra.mxu0 %v2348
        %2377 = vmatprep.subr.mxu0 0.0
        %2378 = vmatpush1.msra.mxu0 %v2347
        %2379 = vmatprep.subr.mxu0 0.0
        %2380 = vmatpush1.msra.mxu0 %v2346
        %2381 = vmatprep.subr.mxu0 0.0
        %2382 = vmatpush1.msra.mxu0 %v2345
        %2383 = vmatprep.subr.mxu0 0.0
        %2384 = vmatpush1.msra.mxu0 %v2344
        %2385 = vmatprep.subr.mxu0 0.0
        %2386 = vmatpush1.msra.mxu0 %v2343
        %2387 = vmatprep.subr.mxu0 0.0
        %2388 = vmatpush1.msra.mxu0 %v2342
        %2389 = vmatprep.subr.mxu0 0.0
        %2390 = vmatpush1.msra.mxu0 %v2341
        %2391 = vmatprep.subr.mxu0 0.0
        %2392 = vmatpush1.msra.mxu0 %v2340
        %2393 = vmatprep.subr.mxu0 0.0
        %2394 = vmatpush2.msra.mxu0 0.0
        %2395 = vmatprep.subr.mxu0 0.0
        %2396 = vmatpush2.msra.mxu0 0.0
        %2397 = vmatprep.subr.mxu0 0.0
        %2398 = vmatpush2.msra.mxu0 0.0
        %2399 = vmatprep.subr.mxu0 0.0
        %2400 = vmatpush2.msra.mxu0 0.0
        %2401 = vmatprep.subr.mxu0 0.0
        %2402 = vmatpush2.msra.mxu0 0.0
        %2403 = vmatprep.subr.mxu0 0.0
        %2404 = vmatpush2.msra.mxu0 0.0
        %2405 = vmatprep.subr.mxu0 0.0
        %2406 = vmatpush2.msra.mxu0 0.0
        %2407 = vmatprep.subr.mxu0 0.0
        %2408 = vmatpush2.msra.mxu0 0.0
        %2409 = vmatprep.subr.mxu0 0.0
        %2410 = vmatpush2.msra.mxu0 0.0
        %2411 = vmatprep.subr.mxu0 0.0
        %2412 = vmatpush2.msra.mxu0 0.0
        %2413 = vmatprep.subr.mxu0 0.0
        %2414 = vmatpush2.msra.mxu0 0.0
        %2415 = vmatprep.subr.mxu0 0.0
        %2416 = vmatpush2.msra.mxu0 0.0
        %2417 = vmatprep.subr.mxu0 0.0
        %2418 = vmatpush2.msra.mxu0 0.0
        %2419 = vmatprep.subr.mxu0 0.0
        %2420 = vmatpush2.msra.mxu0 0.0
        %2421 = vmatprep.subr.mxu0 0.0
        %2422 = vmatpush2.msra.mxu0 %v2357
        %2423 = vmatprep.subr.mxu0 0.0
        %2424 = vmatpush2.msra.mxu0 %v2356
        %2425 = vmatprep.mubr.f32.mxu0 %v2359
        %2426 = vmatmul.mubr.f32.gmra.mxu0 %v2335
        %v2427 = vpop.f32.mrf.mxu0
        %v2428 = vadd.f32 0.0, %v2427
        %v2429 = vpop.f32.mrf.mxu0
        %2430 = vdwg.mxu0
        %v2432 = vsel %vm1040, %v2246, 0
        %2434 = vmatprep.subr.mxu0 0.0
        %2435 = vmatpush1.msra.mxu0 %v2263
        %2436 = vmatprep.subr.mxu0 0.0
        %2437 = vmatpush1.msra.mxu0 %v2262
        %2438 = vmatprep.subr.mxu0 0.0
        %2439 = vmatpush1.msra.mxu0 %v2261
        %2440 = vmatprep.subr.mxu0 0.0
        %2441 = vmatpush1.msra.mxu0 %v2260
        %2442 = vmatprep.subr.mxu0 0.0
        %2443 = vmatpush1.msra.mxu0 %v2259
        %2444 = vmatprep.subr.mxu0 0.0
        %2445 = vmatpush1.msra.mxu0 %v2258
        %2446 = vmatprep.subr.mxu0 0.0
        %2447 = vmatpush1.msra.mxu0 %v2257
        %2448 = vmatprep.subr.mxu0 0.0
        %2449 = vmatpush1.msra.mxu0 %v2256
        %2450 = vmatprep.subr.mxu0 0.0
        %2451 = vmatpush1.msra.mxu0 %v2255
        %2452 = vmatprep.subr.mxu0 0.0
        %2453 = vmatpush1.msra.mxu0 %v2254
        %2454 = vmatprep.subr.mxu0 0.0
        %2455 = vmatpush1.msra.mxu0 %v2253
        %2456 = vmatprep.subr.mxu0 0.0
        %2457 = vmatpush1.msra.mxu0 %v2252
        %2458 = vmatprep.subr.mxu0 0.0
        %2459 = vmatpush1.msra.mxu0 %v2251
        %2460 = vmatprep.subr.mxu0 0.0
        %2461 = vmatpush1.msra.mxu0 %v2250
        %2462 = vmatprep.subr.mxu0 0.0
        %2463 = vmatpush1.msra.mxu0 %v2249
        %2464 = vmatprep.subr.mxu0 0.0
        %2465 = vmatpush1.msra.mxu0 %v2248
        %2466 = vmatprep.subr.mxu0 0.0
        %2467 = vmatpush2.msra.mxu0 0.0
        %2468 = vmatprep.subr.mxu0 0.0
        %2469 = vmatpush2.msra.mxu0 0.0
        %2470 = vmatprep.subr.mxu0 0.0
        %2471 = vmatpush2.msra.mxu0 0.0
        %2472 = vmatprep.subr.mxu0 0.0
        %2473 = vmatpush2.msra.mxu0 0.0
        %2474 = vmatprep.subr.mxu0 0.0
        %2475 = vmatpush2.msra.mxu0 0.0
        %2476 = vmatprep.subr.mxu0 0.0
        %2477 = vmatpush2.msra.mxu0 0.0
        %2478 = vmatprep.subr.mxu0 0.0
        %2479 = vmatpush2.msra.mxu0 0.0
        %2480 = vmatprep.subr.mxu0 0.0
        %2481 = vmatpush2.msra.mxu0 0.0
        %2482 = vmatprep.subr.mxu0 0.0
        %2483 = vmatpush2.msra.mxu0 0.0
        %2484 = vmatprep.subr.mxu0 0.0
        %2485 = vmatpush2.msra.mxu0 0.0
        %2486 = vmatprep.subr.mxu0 0.0
        %2487 = vmatpush2.msra.mxu0 0.0
        %2488 = vmatprep.subr.mxu0 0.0
        %2489 = vmatpush2.msra.mxu0 0.0
        %2490 = vmatprep.subr.mxu0 0.0
        %2491 = vmatpush2.msra.mxu0 0.0
        %2492 = vmatprep.subr.mxu0 0.0
        %2493 = vmatpush2.msra.mxu0 0.0
        %2494 = vmatprep.subr.mxu0 0.0
        %2495 = vmatpush2.msra.mxu0 %v2265
        %2496 = vmatprep.subr.mxu0 0.0
        %2497 = vmatpush2.msra.mxu0 %v2264
        %2498 = vmatprep.mubr.f32.mxu0 %v2432
        %2499 = vmatmul.mubr.f32.gmra.mxu0 %v2244
        %v2500 = vpop.f32.mrf.mxu0
        %v2501 = vadd.f32 %v2428, %v2500
        %v2502 = vpop.f32.mrf.mxu0
        %2503 = vdwg.mxu0
        %v2504 = vsel %vm2167, %v789, 0
        %2506 = vmatprep.subr.mxu0 0.0
        %2507 = vmatpush1.msra.mxu0 0.0
        %2508 = vmatprep.subr.mxu0 0.0
        %2509 = vmatpush1.msra.mxu0 0.0
        %2510 = vmatprep.subr.mxu0 0.0
        %2511 = vmatpush1.msra.mxu0 0.0
        %2512 = vmatprep.subr.mxu0 0.0
        %2513 = vmatpush1.msra.mxu0 0.0
        %2514 = vmatprep.subr.mxu0 0.0
        %2515 = vmatpush1.msra.mxu0 0.0
        %2516 = vmatprep.subr.mxu0 0.0
        %2517 = vmatpush1.msra.mxu0 0.0
        %2518 = vmatprep.subr.mxu0 0.0
        %2519 = vmatpush1.msra.mxu0 0.0
        %2520 = vmatprep.subr.mxu0 0.0
        %2521 = vmatpush1.msra.mxu0 0.0
        %2522 = vmatprep.subr.mxu0 0.0
        %2523 = vmatpush1.msra.mxu0 0.0
        %2524 = vmatprep.subr.mxu0 0.0
        %2525 = vmatpush1.msra.mxu0 0.0
        %2526 = vmatprep.subr.mxu0 0.0
        %2527 = vmatpush1.msra.mxu0 0.0
        %2528 = vmatprep.subr.mxu0 0.0
        %2529 = vmatpush1.msra.mxu0 0.0
        %2530 = vmatprep.subr.mxu0 0.0
        %2531 = vmatpush1.msra.mxu0 0.0
        %2532 = vmatprep.subr.mxu0 0.0
        %2533 = vmatpush1.msra.mxu0 0.0
        %2534 = vmatprep.subr.mxu0 %v2175
        %2535 = vmatpush1.msra.mxu0 %v2172
        %2536 = vmatprep.subr.mxu0 %v2164
        %2537 = vmatpush1.msra.mxu0 %v2163
        %2538 = vmatprep.subr.mxu0 0.0
        %2539 = vmatpush2.msra.mxu0 0.0
        %2540 = vmatprep.subr.mxu0 0.0
        %2541 = vmatpush2.msra.mxu0 0.0
        %2542 = vmatprep.subr.mxu0 0.0
        %2543 = vmatpush2.msra.mxu0 0.0
        %2544 = vmatprep.subr.mxu0 0.0
        %2545 = vmatpush2.msra.mxu0 0.0
        %2546 = vmatprep.subr.mxu0 0.0
        %2547 = vmatpush2.msra.mxu0 0.0
        %2548 = vmatprep.subr.mxu0 0.0
        %2549 = vmatpush2.msra.mxu0 0.0
        %2550 = vmatprep.subr.mxu0 0.0
        %2551 = vmatpush2.msra.mxu0 0.0
        %2552 = vmatprep.subr.mxu0 0.0
        %2553 = vmatpush2.msra.mxu0 0.0
        %2554 = vmatprep.subr.mxu0 0.0
        %2555 = vmatpush2.msra.mxu0 0.0
        %2556 = vmatprep.subr.mxu0 0.0
        %2557 = vmatpush2.msra.mxu0 0.0
        %2558 = vmatprep.subr.mxu0 0.0
        %2559 = vmatpush2.msra.mxu0 0.0
        %2560 = vmatprep.subr.mxu0 0.0
        %2561 = vmatpush2.msra.mxu0 0.0
        %2562 = vmatprep.subr.mxu0 0.0
        %2563 = vmatpush2.msra.mxu0 0.0
        %2564 = vmatprep.subr.mxu0 0.0
        %2565 = vmatpush2.msra.mxu0 0.0
        %2566 = vmatprep.subr.mxu0 0.0
        %2567 = vmatpush2.msra.mxu0 0.0
        %2568 = vmatprep.subr.mxu0 0.0
        %2569 = vmatpush2.msra.mxu0 0.0
        %2570 = vmatprep.mubr.f32.mxu0 0.0
        %2571 = vmatmul.mubr.f32.gmra.mxu0 %v2504
        %v2572 = vpop.f32.mrf.mxu0
        %v2573 = vadd.f32 0.0, %v2572
        %v2574 = vpop.f32.mrf.mxu0
        %v2575 = vadd.f32 0.0, %v2574
        %2576 = vdwg.mxu0
        %s2577 = scalar_lea.vmem %s712, 288
        %v2578 = vld [vmem:[%s2577] sm:$0xff]
        %v2579 = vld [vmem:[%s2577 + $0x8] sm:$0xff]
        %v2580 = vld [vmem:[%s2577 + $0x10] sm:$0xff]
        %v2581 = vld [vmem:[%s2577 + $0x18] sm:$0xff]
        %v2582 = vld [vmem:[%s2577 + $0x20] sm:$0xff]
        %v2583 = vld [vmem:[%s2577 + $0x28] sm:$0xff]
        %v2584 = vld [vmem:[%s2577 + $0x30] sm:$0xff]
        %v2585 = vld [vmem:[%s2577 + $0x38] sm:$0xff]
        %v2586 = vld [vmem:[%s2577 + $0x40] sm:$0xff]
        %v2587 = vld [vmem:[%s2577 + $0x48] sm:$0xff]
        %v2588 = vld [vmem:[%s2577 + $0x50] sm:$0xff]
        %v2589 = vld [vmem:[%s2577 + $0x58] sm:$0xff]
        %v2590 = vld [vmem:[%s2577 + $0x60] sm:$0xff]
        %v2591 = vld [vmem:[%s2577 + $0x68] sm:$0xff]
        %v2592 = vld [vmem:[%s2577 + $0x70] sm:$0xff]
        %v2593 = vld [vmem:[%s2577 + $0x78] sm:$0xff]
        %v2594 = vld [vmem:[%s2577 + $0x80] sm:$0xff]
        %v2595 = vld [vmem:[%s2577 + $0x88] sm:$0xff]
        %v2597 = vsel %vm1040, %v2575, 0
        %2599 = vmatprep.subr.mxu0 0.0
        %2600 = vmatpush1.msra.mxu0 %v2593
        %2601 = vmatprep.subr.mxu0 0.0
        %2602 = vmatpush1.msra.mxu0 %v2592
        %2603 = vmatprep.subr.mxu0 0.0
        %2604 = vmatpush1.msra.mxu0 %v2591
        %2605 = vmatprep.subr.mxu0 0.0
        %2606 = vmatpush1.msra.mxu0 %v2590
        %2607 = vmatprep.subr.mxu0 0.0
        %2608 = vmatpush1.msra.mxu0 %v2589
        %2609 = vmatprep.subr.mxu0 0.0
        %2610 = vmatpush1.msra.mxu0 %v2588
        %2611 = vmatprep.subr.mxu0 0.0
        %2612 = vmatpush1.msra.mxu0 %v2587
        %2613 = vmatprep.subr.mxu0 0.0
        %2614 = vmatpush1.msra.mxu0 %v2586
        %2615 = vmatprep.subr.mxu0 0.0
        %2616 = vmatpush1.msra.mxu0 %v2585
        %2617 = vmatprep.subr.mxu0 0.0
        %2618 = vmatpush1.msra.mxu0 %v2584
        %2619 = vmatprep.subr.mxu0 0.0
        %2620 = vmatpush1.msra.mxu0 %v2583
        %2621 = vmatprep.subr.mxu0 0.0
        %2622 = vmatpush1.msra.mxu0 %v2582
        %2623 = vmatprep.subr.mxu0 0.0
        %2624 = vmatpush1.msra.mxu0 %v2581
        %2625 = vmatprep.subr.mxu0 0.0
        %2626 = vmatpush1.msra.mxu0 %v2580
        %2627 = vmatprep.subr.mxu0 0.0
        %2628 = vmatpush1.msra.mxu0 %v2579
        %2629 = vmatprep.subr.mxu0 0.0
        %2630 = vmatpush1.msra.mxu0 %v2578
        %2631 = vmatprep.subr.mxu0 0.0
        %2632 = vmatpush2.msra.mxu0 0.0
        %2633 = vmatprep.subr.mxu0 0.0
        %2634 = vmatpush2.msra.mxu0 0.0
        %2635 = vmatprep.subr.mxu0 0.0
        %2636 = vmatpush2.msra.mxu0 0.0
        %2637 = vmatprep.subr.mxu0 0.0
        %2638 = vmatpush2.msra.mxu0 0.0
        %2639 = vmatprep.subr.mxu0 0.0
        %2640 = vmatpush2.msra.mxu0 0.0
        %2641 = vmatprep.subr.mxu0 0.0
        %2642 = vmatpush2.msra.mxu0 0.0
        %2643 = vmatprep.subr.mxu0 0.0
        %2644 = vmatpush2.msra.mxu0 0.0
        %2645 = vmatprep.subr.mxu0 0.0
        %2646 = vmatpush2.msra.mxu0 0.0
        %2647 = vmatprep.subr.mxu0 0.0
        %2648 = vmatpush2.msra.mxu0 0.0
        %2649 = vmatprep.subr.mxu0 0.0
        %2650 = vmatpush2.msra.mxu0 0.0
        %2651 = vmatprep.subr.mxu0 0.0
        %2652 = vmatpush2.msra.mxu0 0.0
        %2653 = vmatprep.subr.mxu0 0.0
        %2654 = vmatpush2.msra.mxu0 0.0
        %2655 = vmatprep.subr.mxu0 0.0
        %2656 = vmatpush2.msra.mxu0 0.0
        %2657 = vmatprep.subr.mxu0 0.0
        %2658 = vmatpush2.msra.mxu0 0.0
        %2659 = vmatprep.subr.mxu0 0.0
        %2660 = vmatpush2.msra.mxu0 %v2595
        %2661 = vmatprep.subr.mxu0 0.0
        %2662 = vmatpush2.msra.mxu0 %v2594
        %2663 = vmatprep.mubr.f32.mxu0 %v2597
        %2664 = vmatmul.mubr.f32.gmra.mxu0 %v2573
        %v2665 = vpop.f32.mrf.mxu0
        %v2666 = vadd.f32 0.0, %v2665
        %v2667 = vpop.f32.mrf.mxu0
        %2668 = vdwg.mxu0
        %v2669 = vadd.f32 %v2501, %v2666
        %v2670 = vld [vmem:[%s715] sm:$0x1]
        %v2672 = vlaneseq
        %v2673 = vshrl.u32 %v2672, 7
        %v2674 = vsub.s32 0, %v2673
        %v2675 = vrot.slane %v2670, %v2674
        %v2677 = vadd.f32 %v2669, %v2675
        %v2678 = vmax.f32 %v2677, 0.0
        %vm2679 = vcmask 48128
        %v2681 = vsel %vm2679, %v806, 0
        %v2684 = vsel %vm2679, %v807, 0
        %vm2686 = vcmask 1045504
        %v2688 = vsel %vm2686, %v2678, 0
        %2690 = vmatprep.subr.mxu0 0.0
        %2691 = vmatpush1.msra.mxu0 0.0
        %2692 = vmatprep.subr.mxu0 0.0
        %2693 = vmatpush1.msra.mxu0 0.0
        %2694 = vmatprep.subr.mxu0 0.0
        %2695 = vmatpush1.msra.mxu0 0.0
        %2696 = vmatprep.subr.mxu0 0.0
        %2697 = vmatpush1.msra.mxu0 0.0
        %2698 = vmatprep.subr.mxu0 0.0
        %2699 = vmatpush1.msra.mxu0 0.0
        %2700 = vmatprep.subr.mxu0 0.0
        %2701 = vmatpush1.msra.mxu0 0.0
        %2702 = vmatprep.subr.mxu0 0.0
        %2703 = vmatpush1.msra.mxu0 0.0
        %2704 = vmatprep.subr.mxu0 0.0
        %2705 = vmatpush1.msra.mxu0 0.0
        %2706 = vmatprep.subr.mxu0 0.0
        %2707 = vmatpush1.msra.mxu0 0.0
        %2708 = vmatprep.subr.mxu0 0.0
        %2709 = vmatpush1.msra.mxu0 0.0
        %2710 = vmatprep.subr.mxu0 0.0
        %2711 = vmatpush1.msra.mxu0 0.0
        %2712 = vmatprep.subr.mxu0 0.0
        %2713 = vmatpush1.msra.mxu0 0.0
        %2714 = vmatprep.subr.mxu0 0.0
        %2715 = vmatpush1.msra.mxu0 0.0
        %2716 = vmatprep.subr.mxu0 0.0
        %2717 = vmatpush1.msra.mxu0 0.0
        %2718 = vmatprep.subr.mxu0 0.0
        %2719 = vmatpush1.msra.mxu0 0.0
        %2720 = vmatprep.subr.mxu0 0.0
        %2721 = vmatpush1.msra.mxu0 %v2688
        %2722 = vmatprep.subr.mxu0 0.0
        %2723 = vmatpush2.msra.mxu0 0.0
        %2724 = vmatprep.subr.mxu0 0.0
        %2725 = vmatpush2.msra.mxu0 0.0
        %2726 = vmatprep.subr.mxu0 0.0
        %2727 = vmatpush2.msra.mxu0 0.0
        %2728 = vmatprep.subr.mxu0 0.0
        %2729 = vmatpush2.msra.mxu0 0.0
        %2730 = vmatprep.subr.mxu0 0.0
        %2731 = vmatpush2.msra.mxu0 0.0
        %2732 = vmatprep.subr.mxu0 0.0
        %2733 = vmatpush2.msra.mxu0 0.0
        %2734 = vmatprep.subr.mxu0 0.0
        %2735 = vmatpush2.msra.mxu0 0.0
        %2736 = vmatprep.subr.mxu0 0.0
        %2737 = vmatpush2.msra.mxu0 0.0
        %2738 = vmatprep.subr.mxu0 0.0
        %2739 = vmatpush2.msra.mxu0 0.0
        %2740 = vmatprep.subr.mxu0 0.0
        %2741 = vmatpush2.msra.mxu0 0.0
        %2742 = vmatprep.subr.mxu0 0.0
        %2743 = vmatpush2.msra.mxu0 0.0
        %2744 = vmatprep.subr.mxu0 0.0
        %2745 = vmatpush2.msra.mxu0 0.0
        %2746 = vmatprep.subr.mxu0 0.0
        %2747 = vmatpush2.msra.mxu0 0.0
        %2748 = vmatprep.subr.mxu0 0.0
        %2749 = vmatpush2.msra.mxu0 0.0
        %2750 = vmatprep.subr.mxu0 0.0
        %2751 = vmatpush2.msra.mxu0 0.0
        %2752 = vmatprep.subr.mxu0 0.0
        %2753 = vmatpush2.msra.mxu0 0.0
        %2754 = vmatprep.mubr.f32.mxu0 0.0
        %2755 = vmatmul.mubr.f32.gmra.mxu0 %v2681
        %v2756 = vpop.f32.mrf.mxu0
        %v2757 = vadd.f32 0.0, %v2756
        %v2758 = vpop.f32.mrf.mxu0
        %2759 = vmatprep.mubr.f32.mxu0 0.0
        %2760 = vmatmul.mubr.f32.gmra.mxu0 %v2684
        %v2761 = vpop.f32.mrf.mxu0
        %v2762 = vadd.f32 0.0, %v2761
        %v2763 = vpop.f32.mrf.mxu0
        %2764 = vdwg.mxu0
        %v2765 = vld [vmem:[%s720] sm:$0xff]
        %v2766 = vld [vmem:[%s720 + $0x8] sm:$0xff]
        %v2767 = vld [vmem:[%s720 + $0x10] sm:$0xff]
        %v2768 = vld [vmem:[%s720 + $0x18] sm:$0xff]
        %v2769 = vld [vmem:[%s720 + $0x20] sm:$0xff]
        %v2770 = vld [vmem:[%s720 + $0x28] sm:$0xff]
        %v2772 = vsel %vm2679, %v814, 0
        %v2775 = vsel %vm2679, %v815, 0
        %2777 = vmatprep.subr.mxu0 0.0
        %2778 = vmatpush1.msra.mxu0 0.0
        %2779 = vmatprep.subr.mxu0 0.0
        %2780 = vmatpush1.msra.mxu0 0.0
        %2781 = vmatprep.subr.mxu0 0.0
        %2782 = vmatpush1.msra.mxu0 0.0
        %2783 = vmatprep.subr.mxu0 0.0
        %2784 = vmatpush1.msra.mxu0 0.0
        %2785 = vmatprep.subr.mxu0 0.0
        %2786 = vmatpush1.msra.mxu0 0.0
        %2787 = vmatprep.subr.mxu0 0.0
        %2788 = vmatpush1.msra.mxu0 0.0
        %2789 = vmatprep.subr.mxu0 0.0
        %2790 = vmatpush1.msra.mxu0 0.0
        %2791 = vmatprep.subr.mxu0 0.0
        %2792 = vmatpush1.msra.mxu0 0.0
        %2793 = vmatprep.subr.mxu0 0.0
        %2794 = vmatpush1.msra.mxu0 0.0
        %2795 = vmatprep.subr.mxu0 0.0
        %2796 = vmatpush1.msra.mxu0 0.0
        %2797 = vmatprep.subr.mxu0 0.0
        %2798 = vmatpush1.msra.mxu0 0.0
        %2799 = vmatprep.subr.mxu0 0.0
        %2800 = vmatpush1.msra.mxu0 0.0
        %2801 = vmatprep.subr.mxu0 0.0
        %2802 = vmatpush1.msra.mxu0 0.0
        %2803 = vmatprep.subr.mxu0 0.0
        %2804 = vmatpush1.msra.mxu0 0.0
        %2805 = vmatprep.subr.mxu0 0.0
        %2806 = vmatpush1.msra.mxu0 0.0
        %2807 = vmatprep.subr.mxu0 0.0
        %2808 = vmatpush1.msra.mxu0 %v2688
        %2809 = vmatprep.subr.mxu0 0.0
        %2810 = vmatpush2.msra.mxu0 0.0
        %2811 = vmatprep.subr.mxu0 0.0
        %2812 = vmatpush2.msra.mxu0 0.0
        %2813 = vmatprep.subr.mxu0 0.0
        %2814 = vmatpush2.msra.mxu0 0.0
        %2815 = vmatprep.subr.mxu0 0.0
        %2816 = vmatpush2.msra.mxu0 0.0
        %2817 = vmatprep.subr.mxu0 0.0
        %2818 = vmatpush2.msra.mxu0 0.0
        %2819 = vmatprep.subr.mxu0 0.0
        %2820 = vmatpush2.msra.mxu0 0.0
        %2821 = vmatprep.subr.mxu0 0.0
        %2822 = vmatpush2.msra.mxu0 0.0
        %2823 = vmatprep.subr.mxu0 0.0
        %2824 = vmatpush2.msra.mxu0 0.0
        %2825 = vmatprep.subr.mxu0 0.0
        %2826 = vmatpush2.msra.mxu0 0.0
        %2827 = vmatprep.subr.mxu0 0.0
        %2828 = vmatpush2.msra.mxu0 0.0
        %2829 = vmatprep.subr.mxu0 0.0
        %2830 = vmatpush2.msra.mxu0 0.0
        %2831 = vmatprep.subr.mxu0 0.0
        %2832 = vmatpush2.msra.mxu0 0.0
        %2833 = vmatprep.subr.mxu0 0.0
        %2834 = vmatpush2.msra.mxu0 0.0
        %2835 = vmatprep.subr.mxu0 0.0
        %2836 = vmatpush2.msra.mxu0 0.0
        %2837 = vmatprep.subr.mxu0 0.0
        %2838 = vmatpush2.msra.mxu0 0.0
        %2839 = vmatprep.subr.mxu0 0.0
        %2840 = vmatpush2.msra.mxu0 0.0
        %2841 = vmatprep.mubr.f32.mxu0 0.0
        %2842 = vmatmul.mubr.f32.gmra.mxu0 %v2772
        %v2843 = vpop.f32.mrf.mxu0
        %v2844 = vadd.f32 0.0, %v2843
        %v2845 = vpop.f32.mrf.mxu0
        %2846 = vmatprep.mubr.f32.mxu0 0.0
        %2847 = vmatmul.mubr.f32.gmra.mxu0 %v2775
        %v2848 = vpop.f32.mrf.mxu0
        %v2849 = vadd.f32 0.0, %v2848
        %v2850 = vpop.f32.mrf.mxu0
        %2851 = vdwg.mxu0
        %s2852 = scalar_lea.vmem %s720, 48
        %v2853 = vld [vmem:[%s2852] sm:$0xff]
        %v2854 = vld [vmem:[%s2852 + $0x8] sm:$0xff]
        %v2855 = vld [vmem:[%s2852 + $0x10] sm:$0xff]
        %v2856 = vld [vmem:[%s2852 + $0x18] sm:$0xff]
        %v2857 = vld [vmem:[%s2852 + $0x20] sm:$0xff]
        %v2858 = vld [vmem:[%s2852 + $0x28] sm:$0xff]
        %v2860 = vsel %vm1437, %v2844, 0
        %v2863 = vsel %vm1437, %v2849, 0
        %2865 = vmatprep.subr.mxu0 0.0
        %2866 = vmatpush1.msra.mxu0 0.0
        %2867 = vmatprep.subr.mxu0 0.0
        %2868 = vmatpush1.msra.mxu0 0.0
        %2869 = vmatprep.subr.mxu0 0.0
        %2870 = vmatpush1.msra.mxu0 0.0
        %2871 = vmatprep.subr.mxu0 0.0
        %2872 = vmatpush1.msra.mxu0 0.0
        %2873 = vmatprep.subr.mxu0 0.0
        %2874 = vmatpush1.msra.mxu0 0.0
        %2875 = vmatprep.subr.mxu0 0.0
        %2876 = vmatpush1.msra.mxu0 0.0
        %2877 = vmatprep.subr.mxu0 0.0
        %2878 = vmatpush1.msra.mxu0 0.0
        %2879 = vmatprep.subr.mxu0 0.0
        %2880 = vmatpush1.msra.mxu0 0.0
        %2881 = vmatprep.subr.mxu0 0.0
        %2882 = vmatpush1.msra.mxu0 0.0
        %2883 = vmatprep.subr.mxu0 0.0
        %2884 = vmatpush1.msra.mxu0 0.0
        %2885 = vmatprep.subr.mxu0 0.0
        %2886 = vmatpush1.msra.mxu0 %v2858
        %2887 = vmatprep.subr.mxu0 0.0
        %2888 = vmatpush1.msra.mxu0 %v2857
        %2889 = vmatprep.subr.mxu0 0.0
        %2890 = vmatpush1.msra.mxu0 %v2856
        %2891 = vmatprep.subr.mxu0 0.0
        %2892 = vmatpush1.msra.mxu0 %v2855
        %2893 = vmatprep.subr.mxu0 0.0
        %2894 = vmatpush1.msra.mxu0 %v2854
        %2895 = vmatprep.subr.mxu0 0.0
        %2896 = vmatpush1.msra.mxu0 %v2853
        %2897 = vmatprep.subr.mxu0 0.0
        %2898 = vmatpush2.msra.mxu0 0.0
        %2899 = vmatprep.subr.mxu0 0.0
        %2900 = vmatpush2.msra.mxu0 0.0
        %2901 = vmatprep.subr.mxu0 0.0
        %2902 = vmatpush2.msra.mxu0 0.0
        %2903 = vmatprep.subr.mxu0 0.0
        %2904 = vmatpush2.msra.mxu0 0.0
        %2905 = vmatprep.subr.mxu0 0.0
        %2906 = vmatpush2.msra.mxu0 0.0
        %2907 = vmatprep.subr.mxu0 0.0
        %2908 = vmatpush2.msra.mxu0 0.0
        %2909 = vmatprep.subr.mxu0 0.0
        %2910 = vmatpush2.msra.mxu0 0.0
        %2911 = vmatprep.subr.mxu0 0.0
        %2912 = vmatpush2.msra.mxu0 0.0
        %2913 = vmatprep.subr.mxu0 0.0
        %2914 = vmatpush2.msra.mxu0 0.0
        %2915 = vmatprep.subr.mxu0 0.0
        %2916 = vmatpush2.msra.mxu0 0.0
        %2917 = vmatprep.subr.mxu0 0.0
        %2918 = vmatpush2.msra.mxu0 0.0
        %2919 = vmatprep.subr.mxu0 0.0
        %2920 = vmatpush2.msra.mxu0 0.0
        %2921 = vmatprep.subr.mxu0 0.0
        %2922 = vmatpush2.msra.mxu0 0.0
        %2923 = vmatprep.subr.mxu0 0.0
        %2924 = vmatpush2.msra.mxu0 0.0
        %2925 = vmatprep.subr.mxu0 0.0
        %2926 = vmatpush2.msra.mxu0 0.0
        %2927 = vmatprep.subr.mxu0 0.0
        %2928 = vmatpush2.msra.mxu0 0.0
        %2929 = vmatprep.mubr.f32.mxu0 0.0
        %2930 = vmatmul.mubr.f32.gmra.mxu0 %v2860
        %v2931 = vpop.f32.mrf.mxu0
        %v2932 = vadd.f32 0.0, %v2931
        %v2933 = vpop.f32.mrf.mxu0
        %2934 = vmatprep.mubr.f32.mxu0 0.0
        %2935 = vmatmul.mubr.f32.gmra.mxu0 %v2863
        %v2936 = vpop.f32.mrf.mxu0
        %v2937 = vadd.f32 0.0, %v2936
        %v2938 = vpop.f32.mrf.mxu0
        %2939 = vdwg.mxu0
        %v2941 = vsel %vm1437, %v2757, 0
        %v2944 = vsel %vm1437, %v2762, 0
        %2946 = vmatprep.subr.mxu0 0.0
        %2947 = vmatpush1.msra.mxu0 0.0
        %2948 = vmatprep.subr.mxu0 0.0
        %2949 = vmatpush1.msra.mxu0 0.0
        %2950 = vmatprep.subr.mxu0 0.0
        %2951 = vmatpush1.msra.mxu0 0.0
        %2952 = vmatprep.subr.mxu0 0.0
        %2953 = vmatpush1.msra.mxu0 0.0
        %2954 = vmatprep.subr.mxu0 0.0
        %2955 = vmatpush1.msra.mxu0 0.0
        %2956 = vmatprep.subr.mxu0 0.0
        %2957 = vmatpush1.msra.mxu0 0.0
        %2958 = vmatprep.subr.mxu0 0.0
        %2959 = vmatpush1.msra.mxu0 0.0
        %2960 = vmatprep.subr.mxu0 0.0
        %2961 = vmatpush1.msra.mxu0 0.0
        %2962 = vmatprep.subr.mxu0 0.0
        %2963 = vmatpush1.msra.mxu0 0.0
        %2964 = vmatprep.subr.mxu0 0.0
        %2965 = vmatpush1.msra.mxu0 0.0
        %2966 = vmatprep.subr.mxu0 0.0
        %2967 = vmatpush1.msra.mxu0 %v2770
        %2968 = vmatprep.subr.mxu0 0.0
        %2969 = vmatpush1.msra.mxu0 %v2769
        %2970 = vmatprep.subr.mxu0 0.0
        %2971 = vmatpush1.msra.mxu0 %v2768
        %2972 = vmatprep.subr.mxu0 0.0
        %2973 = vmatpush1.msra.mxu0 %v2767
        %2974 = vmatprep.subr.mxu0 0.0
        %2975 = vmatpush1.msra.mxu0 %v2766
        %2976 = vmatprep.subr.mxu0 0.0
        %2977 = vmatpush1.msra.mxu0 %v2765
        %2978 = vmatprep.subr.mxu0 0.0
        %2979 = vmatpush2.msra.mxu0 0.0
        %2980 = vmatprep.subr.mxu0 0.0
        %2981 = vmatpush2.msra.mxu0 0.0
        %2982 = vmatprep.subr.mxu0 0.0
        %2983 = vmatpush2.msra.mxu0 0.0
        %2984 = vmatprep.subr.mxu0 0.0
        %2985 = vmatpush2.msra.mxu0 0.0
        %2986 = vmatprep.subr.mxu0 0.0
        %2987 = vmatpush2.msra.mxu0 0.0
        %2988 = vmatprep.subr.mxu0 0.0
        %2989 = vmatpush2.msra.mxu0 0.0
        %2990 = vmatprep.subr.mxu0 0.0
        %2991 = vmatpush2.msra.mxu0 0.0
        %2992 = vmatprep.subr.mxu0 0.0
        %2993 = vmatpush2.msra.mxu0 0.0
        %2994 = vmatprep.subr.mxu0 0.0
        %2995 = vmatpush2.msra.mxu0 0.0
        %2996 = vmatprep.subr.mxu0 0.0
        %2997 = vmatpush2.msra.mxu0 0.0
        %2998 = vmatprep.subr.mxu0 0.0
        %2999 = vmatpush2.msra.mxu0 0.0
        %3000 = vmatprep.subr.mxu0 0.0
        %3001 = vmatpush2.msra.mxu0 0.0
        %3002 = vmatprep.subr.mxu0 0.0
        %3003 = vmatpush2.msra.mxu0 0.0
        %3004 = vmatprep.subr.mxu0 0.0
        %3005 = vmatpush2.msra.mxu0 0.0
        %3006 = vmatprep.subr.mxu0 0.0
        %3007 = vmatpush2.msra.mxu0 0.0
        %3008 = vmatprep.subr.mxu0 0.0
        %3009 = vmatpush2.msra.mxu0 0.0
        %3010 = vmatprep.mubr.f32.mxu0 0.0
        %3011 = vmatmul.mubr.f32.gmra.mxu0 %v2941
        %v3012 = vpop.f32.mrf.mxu0
        %v3013 = vadd.f32 %v2932, %v3012
        %v3014 = vpop.f32.mrf.mxu0
        %3015 = vmatprep.mubr.f32.mxu0 0.0
        %3016 = vmatmul.mubr.f32.gmra.mxu0 %v2944
        %v3017 = vpop.f32.mrf.mxu0
        %v3018 = vadd.f32 %v2937, %v3017
        %v3019 = vpop.f32.mrf.mxu0
        %3020 = vdwg.mxu0
        %v3022 = vsel %vm2679, %v820, 0
        %v3025 = vsel %vm2679, %v821, 0
        %3027 = vmatprep.subr.mxu0 0.0
        %3028 = vmatpush1.msra.mxu0 0.0
        %3029 = vmatprep.subr.mxu0 0.0
        %3030 = vmatpush1.msra.mxu0 0.0
        %3031 = vmatprep.subr.mxu0 0.0
        %3032 = vmatpush1.msra.mxu0 0.0
        %3033 = vmatprep.subr.mxu0 0.0
        %3034 = vmatpush1.msra.mxu0 0.0
        %3035 = vmatprep.subr.mxu0 0.0
        %3036 = vmatpush1.msra.mxu0 0.0
        %3037 = vmatprep.subr.mxu0 0.0
        %3038 = vmatpush1.msra.mxu0 0.0
        %3039 = vmatprep.subr.mxu0 0.0
        %3040 = vmatpush1.msra.mxu0 0.0
        %3041 = vmatprep.subr.mxu0 0.0
        %3042 = vmatpush1.msra.mxu0 0.0
        %3043 = vmatprep.subr.mxu0 0.0
        %3044 = vmatpush1.msra.mxu0 0.0
        %3045 = vmatprep.subr.mxu0 0.0
        %3046 = vmatpush1.msra.mxu0 0.0
        %3047 = vmatprep.subr.mxu0 0.0
        %3048 = vmatpush1.msra.mxu0 0.0
        %3049 = vmatprep.subr.mxu0 0.0
        %3050 = vmatpush1.msra.mxu0 0.0
        %3051 = vmatprep.subr.mxu0 0.0
        %3052 = vmatpush1.msra.mxu0 0.0
        %3053 = vmatprep.subr.mxu0 0.0
        %3054 = vmatpush1.msra.mxu0 0.0
        %3055 = vmatprep.subr.mxu0 0.0
        %3056 = vmatpush1.msra.mxu0 0.0
        %3057 = vmatprep.subr.mxu0 0.0
        %3058 = vmatpush1.msra.mxu0 %v2688
        %3059 = vmatprep.subr.mxu0 0.0
        %3060 = vmatpush2.msra.mxu0 0.0
        %3061 = vmatprep.subr.mxu0 0.0
        %3062 = vmatpush2.msra.mxu0 0.0
        %3063 = vmatprep.subr.mxu0 0.0
        %3064 = vmatpush2.msra.mxu0 0.0
        %3065 = vmatprep.subr.mxu0 0.0
        %3066 = vmatpush2.msra.mxu0 0.0
        %3067 = vmatprep.subr.mxu0 0.0
        %3068 = vmatpush2.msra.mxu0 0.0
        %3069 = vmatprep.subr.mxu0 0.0
        %3070 = vmatpush2.msra.mxu0 0.0
        %3071 = vmatprep.subr.mxu0 0.0
        %3072 = vmatpush2.msra.mxu0 0.0
        %3073 = vmatprep.subr.mxu0 0.0
        %3074 = vmatpush2.msra.mxu0 0.0
        %3075 = vmatprep.subr.mxu0 0.0
        %3076 = vmatpush2.msra.mxu0 0.0
        %3077 = vmatprep.subr.mxu0 0.0
        %3078 = vmatpush2.msra.mxu0 0.0
        %3079 = vmatprep.subr.mxu0 0.0
        %3080 = vmatpush2.msra.mxu0 0.0
        %3081 = vmatprep.subr.mxu0 0.0
        %3082 = vmatpush2.msra.mxu0 0.0
        %3083 = vmatprep.subr.mxu0 0.0
        %3084 = vmatpush2.msra.mxu0 0.0
        %3085 = vmatprep.subr.mxu0 0.0
        %3086 = vmatpush2.msra.mxu0 0.0
        %3087 = vmatprep.subr.mxu0 0.0
        %3088 = vmatpush2.msra.mxu0 0.0
        %3089 = vmatprep.subr.mxu0 0.0
        %3090 = vmatpush2.msra.mxu0 0.0
        %3091 = vmatprep.mubr.f32.mxu0 0.0
        %3092 = vmatmul.mubr.f32.gmra.mxu0 %v3022
        %v3093 = vpop.f32.mrf.mxu0
        %v3094 = vadd.f32 0.0, %v3093
        %v3095 = vpop.f32.mrf.mxu0
        %3096 = vmatprep.mubr.f32.mxu0 0.0
        %3097 = vmatmul.mubr.f32.gmra.mxu0 %v3025
        %v3098 = vpop.f32.mrf.mxu0
        %v3099 = vadd.f32 0.0, %v3098
        %v3100 = vpop.f32.mrf.mxu0
        %3101 = vdwg.mxu0
        %s3102 = scalar_lea.vmem %s720, 96
        %v3103 = vld [vmem:[%s3102] sm:$0xff]
        %v3104 = vld [vmem:[%s3102 + $0x8] sm:$0xff]
        %v3105 = vld [vmem:[%s3102 + $0x10] sm:$0xff]
        %v3106 = vld [vmem:[%s3102 + $0x18] sm:$0xff]
        %v3107 = vld [vmem:[%s3102 + $0x20] sm:$0xff]
        %v3108 = vld [vmem:[%s3102 + $0x28] sm:$0xff]
        %v3110 = vsel %vm1437, %v3094, 0
        %v3113 = vsel %vm1437, %v3099, 0
        %3115 = vmatprep.subr.mxu0 0.0
        %3116 = vmatpush1.msra.mxu0 0.0
        %3117 = vmatprep.subr.mxu0 0.0
        %3118 = vmatpush1.msra.mxu0 0.0
        %3119 = vmatprep.subr.mxu0 0.0
        %3120 = vmatpush1.msra.mxu0 0.0
        %3121 = vmatprep.subr.mxu0 0.0
        %3122 = vmatpush1.msra.mxu0 0.0
        %3123 = vmatprep.subr.mxu0 0.0
        %3124 = vmatpush1.msra.mxu0 0.0
        %3125 = vmatprep.subr.mxu0 0.0
        %3126 = vmatpush1.msra.mxu0 0.0
        %3127 = vmatprep.subr.mxu0 0.0
        %3128 = vmatpush1.msra.mxu0 0.0
        %3129 = vmatprep.subr.mxu0 0.0
        %3130 = vmatpush1.msra.mxu0 0.0
        %3131 = vmatprep.subr.mxu0 0.0
        %3132 = vmatpush1.msra.mxu0 0.0
        %3133 = vmatprep.subr.mxu0 0.0
        %3134 = vmatpush1.msra.mxu0 0.0
        %3135 = vmatprep.subr.mxu0 0.0
        %3136 = vmatpush1.msra.mxu0 %v3108
        %3137 = vmatprep.subr.mxu0 0.0
        %3138 = vmatpush1.msra.mxu0 %v3107
        %3139 = vmatprep.subr.mxu0 0.0
        %3140 = vmatpush1.msra.mxu0 %v3106
        %3141 = vmatprep.subr.mxu0 0.0
        %3142 = vmatpush1.msra.mxu0 %v3105
        %3143 = vmatprep.subr.mxu0 0.0
        %3144 = vmatpush1.msra.mxu0 %v3104
        %3145 = vmatprep.subr.mxu0 0.0
        %3146 = vmatpush1.msra.mxu0 %v3103
        %3147 = vmatprep.subr.mxu0 0.0
        %3148 = vmatpush2.msra.mxu0 0.0
        %3149 = vmatprep.subr.mxu0 0.0
        %3150 = vmatpush2.msra.mxu0 0.0
        %3151 = vmatprep.subr.mxu0 0.0
        %3152 = vmatpush2.msra.mxu0 0.0
        %3153 = vmatprep.subr.mxu0 0.0
        %3154 = vmatpush2.msra.mxu0 0.0
        %3155 = vmatprep.subr.mxu0 0.0
        %3156 = vmatpush2.msra.mxu0 0.0
        %3157 = vmatprep.subr.mxu0 0.0
        %3158 = vmatpush2.msra.mxu0 0.0
        %3159 = vmatprep.subr.mxu0 0.0
        %3160 = vmatpush2.msra.mxu0 0.0
        %3161 = vmatprep.subr.mxu0 0.0
        %3162 = vmatpush2.msra.mxu0 0.0
        %3163 = vmatprep.subr.mxu0 0.0
        %3164 = vmatpush2.msra.mxu0 0.0
        %3165 = vmatprep.subr.mxu0 0.0
        %3166 = vmatpush2.msra.mxu0 0.0
        %3167 = vmatprep.subr.mxu0 0.0
        %3168 = vmatpush2.msra.mxu0 0.0
        %3169 = vmatprep.subr.mxu0 0.0
        %3170 = vmatpush2.msra.mxu0 0.0
        %3171 = vmatprep.subr.mxu0 0.0
        %3172 = vmatpush2.msra.mxu0 0.0
        %3173 = vmatprep.subr.mxu0 0.0
        %3174 = vmatpush2.msra.mxu0 0.0
        %3175 = vmatprep.subr.mxu0 0.0
        %3176 = vmatpush2.msra.mxu0 0.0
        %3177 = vmatprep.subr.mxu0 0.0
        %3178 = vmatpush2.msra.mxu0 0.0
        %3179 = vmatprep.mubr.f32.mxu0 0.0
        %3180 = vmatmul.mubr.f32.gmra.mxu0 %v3110
        %v3181 = vpop.f32.mrf.mxu0
        %v3182 = vadd.f32 0.0, %v3181
        %v3183 = vpop.f32.mrf.mxu0
        %3184 = vmatprep.mubr.f32.mxu0 0.0
        %3185 = vmatmul.mubr.f32.gmra.mxu0 %v3113
        %v3186 = vpop.f32.mrf.mxu0
        %v3187 = vadd.f32 0.0, %v3186
        %v3188 = vpop.f32.mrf.mxu0
        %3189 = vdwg.mxu0
        %v3190 = vadd.f32 %v3013, %v3182
        %v3191 = vadd.f32 %v3018, %v3187
        %v3192 = vld [vmem:[%s723] sm:$0x1]
        %v3194 = vlaneseq
        %v3195 = vshrl.u32 %v3194, 7
        %v3196 = vsub.s32 0, %v3195
        %v3197 = vrot.slane %v3192, %v3196
        %v3199 = vadd.f32 %v3190, %v3197
        %v3200 = vadd.f32 %v3191, %v3197
        %v3201 = vmax.f32 %v3199, 0.0
        %v3202 = vmax.f32 %v3200, 0.0
        %vm3203 = vcmask 80896
        %v3205 = vsel %vm3203, %v832, 0
        %v3208 = vsel %vm3203, %v833, 0
        %v3211 = vsel %vm3203, %v834, 0
        %vm3213 = vcmask 1041408
        %v3215 = vsel %vm3213, %v3202, 0
        %3217 = vmatprep.subr.mxu0 0.0
        %3218 = vmatpush1.msra.mxu0 0.0
        %3219 = vmatprep.subr.mxu0 0.0
        %3220 = vmatpush1.msra.mxu0 0.0
        %3221 = vmatprep.subr.mxu0 0.0
        %3222 = vmatpush1.msra.mxu0 0.0
        %3223 = vmatprep.subr.mxu0 0.0
        %3224 = vmatpush1.msra.mxu0 0.0
        %3225 = vmatprep.subr.mxu0 0.0
        %3226 = vmatpush1.msra.mxu0 0.0
        %3227 = vmatprep.subr.mxu0 0.0
        %3228 = vmatpush1.msra.mxu0 0.0
        %3229 = vmatprep.subr.mxu0 0.0
        %3230 = vmatpush1.msra.mxu0 0.0
        %3231 = vmatprep.subr.mxu0 0.0
        %3232 = vmatpush1.msra.mxu0 0.0
        %3233 = vmatprep.subr.mxu0 0.0
        %3234 = vmatpush1.msra.mxu0 0.0
        %3235 = vmatprep.subr.mxu0 0.0
        %3236 = vmatpush1.msra.mxu0 0.0
        %3237 = vmatprep.subr.mxu0 0.0
        %3238 = vmatpush1.msra.mxu0 0.0
        %3239 = vmatprep.subr.mxu0 0.0
        %3240 = vmatpush1.msra.mxu0 0.0
        %3241 = vmatprep.subr.mxu0 0.0
        %3242 = vmatpush1.msra.mxu0 0.0
        %3243 = vmatprep.subr.mxu0 0.0
        %3244 = vmatpush1.msra.mxu0 0.0
        %3245 = vmatprep.subr.mxu0 0.0
        %3246 = vmatpush1.msra.mxu0 %v3215
        %3247 = vmatprep.subr.mxu0 0.0
        %3248 = vmatpush1.msra.mxu0 %v3201
        %3249 = vmatprep.subr.mxu0 0.0
        %3250 = vmatpush2.msra.mxu0 0.0
        %3251 = vmatprep.subr.mxu0 0.0
        %3252 = vmatpush2.msra.mxu0 0.0
        %3253 = vmatprep.subr.mxu0 0.0
        %3254 = vmatpush2.msra.mxu0 0.0
        %3255 = vmatprep.subr.mxu0 0.0
        %3256 = vmatpush2.msra.mxu0 0.0
        %3257 = vmatprep.subr.mxu0 0.0
        %3258 = vmatpush2.msra.mxu0 0.0
        %3259 = vmatprep.subr.mxu0 0.0
        %3260 = vmatpush2.msra.mxu0 0.0
        %3261 = vmatprep.subr.mxu0 0.0
        %3262 = vmatpush2.msra.mxu0 0.0
        %3263 = vmatprep.subr.mxu0 0.0
        %3264 = vmatpush2.msra.mxu0 0.0
        %3265 = vmatprep.subr.mxu0 0.0
        %3266 = vmatpush2.msra.mxu0 0.0
        %3267 = vmatprep.subr.mxu0 0.0
        %3268 = vmatpush2.msra.mxu0 0.0
        %3269 = vmatprep.subr.mxu0 0.0
        %3270 = vmatpush2.msra.mxu0 0.0
        %3271 = vmatprep.subr.mxu0 0.0
        %3272 = vmatpush2.msra.mxu0 0.0
        %3273 = vmatprep.subr.mxu0 0.0
        %3274 = vmatpush2.msra.mxu0 0.0
        %3275 = vmatprep.subr.mxu0 0.0
        %3276 = vmatpush2.msra.mxu0 0.0
        %3277 = vmatprep.subr.mxu0 0.0
        %3278 = vmatpush2.msra.mxu0 0.0
        %3279 = vmatprep.subr.mxu0 0.0
        %3280 = vmatpush2.msra.mxu0 0.0
        %3281 = vmatprep.mubr.f32.mxu0 0.0
        %3282 = vmatmul.mubr.f32.gmra.mxu0 %v3205
        %v3283 = vpop.f32.mrf.mxu0
        %v3284 = vadd.f32 0.0, %v3283
        %v3285 = vpop.f32.mrf.mxu0
        %3286 = vmatprep.mubr.f32.mxu0 0.0
        %3287 = vmatmul.mubr.f32.gmra.mxu0 %v3208
        %v3288 = vpop.f32.mrf.mxu0
        %v3289 = vadd.f32 0.0, %v3288
        %v3290 = vpop.f32.mrf.mxu0
        %3291 = vmatprep.mubr.f32.mxu0 0.0
        %3292 = vmatmul.mubr.f32.gmra.mxu0 %v3211
        %v3293 = vpop.f32.mrf.mxu0
        %v3294 = vadd.f32 0.0, %v3293
        %v3295 = vpop.f32.mrf.mxu0
        %3296 = vdwg.mxu0
        %v3297 = vld [vmem:[%s728] sm:$0xff]
        %v3298 = vld [vmem:[%s728 + $0x8] sm:$0xff]
        %v3299 = vld [vmem:[%s728 + $0x10] sm:$0xff]
        %v3300 = vld [vmem:[%s728 + $0x18] sm:$0xff]
        %v3301 = vld [vmem:[%s728 + $0x20] sm:$0xff]
        %v3302 = vld [vmem:[%s728 + $0x28] sm:$0xff]
        %v3303 = vld [vmem:[%s728 + $0x30] sm:$0xff]
        %v3304 = vld [vmem:[%s728 + $0x38] sm:$0xff]
        %v3305 = vld [vmem:[%s728 + $0x40] sm:$0xff]
        %v3306 = vld [vmem:[%s728 + $0x48] sm:$0xff]
        %v3307 = vld [vmem:[%s728 + $0x50] sm:$0xff]
        %v3308 = vld [vmem:[%s728 + $0x58] sm:$0xff]
        %v3309 = vld [vmem:[%s728 + $0x60] sm:$0xff]
        %v3310 = vld [vmem:[%s728 + $0x68] sm:$0xff]
        %v3311 = vld [vmem:[%s728 + $0x70] sm:$0xff]
        %v3312 = vld [vmem:[%s728 + $0x78] sm:$0xff]
        %v3313 = vld [vmem:[%s728 + $0x80] sm:$0xff]
        %v3314 = vld [vmem:[%s728 + $0x88] sm:$0xff]
        %v3315 = vld [vmem:[%s728 + $0x90] sm:$0xff]
        %v3316 = vld [vmem:[%s728 + $0x98] sm:$0xff]
        %v3317 = vld [vmem:[%s728 + $0xa0] sm:$0xff]
        %v3318 = vld [vmem:[%s728 + $0xa8] sm:$0xff]
        %v3319 = vld [vmem:[%s728 + $0xb0] sm:$0xff]
        %v3320 = vld [vmem:[%s728 + $0xb8] sm:$0xff]
        %v3321 = vld [vmem:[%s728 + $0xc0] sm:$0xff]
        %v3322 = vld [vmem:[%s728 + $0xc8] sm:$0xff]
        %v3323 = vld [vmem:[%s728 + $0xd0] sm:$0xff]
        %v3324 = vld [vmem:[%s728 + $0xd8] sm:$0xff]
        %v3325 = vld [vmem:[%s728 + $0xe0] sm:$0xff]
        %v3326 = vld [vmem:[%s728 + $0xe8] sm:$0xff]
        %v3327 = vsel %vm3203, %v806, 0
        %v3329 = vsel %vm3203, %v807, 0
        %v3332 = vsel %vm3203, %v838, 0
        %3334 = vmatprep.subr.mxu0 0.0
        %3335 = vmatpush1.msra.mxu0 0.0
        %3336 = vmatprep.subr.mxu0 0.0
        %3337 = vmatpush1.msra.mxu0 0.0
        %3338 = vmatprep.subr.mxu0 0.0
        %3339 = vmatpush1.msra.mxu0 0.0
        %3340 = vmatprep.subr.mxu0 0.0
        %3341 = vmatpush1.msra.mxu0 0.0
        %3342 = vmatprep.subr.mxu0 0.0
        %3343 = vmatpush1.msra.mxu0 0.0
        %3344 = vmatprep.subr.mxu0 0.0
        %3345 = vmatpush1.msra.mxu0 0.0
        %3346 = vmatprep.subr.mxu0 0.0
        %3347 = vmatpush1.msra.mxu0 0.0
        %3348 = vmatprep.subr.mxu0 0.0
        %3349 = vmatpush1.msra.mxu0 0.0
        %3350 = vmatprep.subr.mxu0 0.0
        %3351 = vmatpush1.msra.mxu0 0.0
        %3352 = vmatprep.subr.mxu0 0.0
        %3353 = vmatpush1.msra.mxu0 0.0
        %3354 = vmatprep.subr.mxu0 0.0
        %3355 = vmatpush1.msra.mxu0 0.0
        %3356 = vmatprep.subr.mxu0 0.0
        %3357 = vmatpush1.msra.mxu0 0.0
        %3358 = vmatprep.subr.mxu0 0.0
        %3359 = vmatpush1.msra.mxu0 0.0
        %3360 = vmatprep.subr.mxu0 0.0
        %3361 = vmatpush1.msra.mxu0 0.0
        %3362 = vmatprep.subr.mxu0 0.0
        %3363 = vmatpush1.msra.mxu0 %v3215
        %3364 = vmatprep.subr.mxu0 0.0
        %3365 = vmatpush1.msra.mxu0 %v3201
        %3366 = vmatprep.subr.mxu0 0.0
        %3367 = vmatpush2.msra.mxu0 0.0
        %3368 = vmatprep.subr.mxu0 0.0
        %3369 = vmatpush2.msra.mxu0 0.0
        %3370 = vmatprep.subr.mxu0 0.0
        %3371 = vmatpush2.msra.mxu0 0.0
        %3372 = vmatprep.subr.mxu0 0.0
        %3373 = vmatpush2.msra.mxu0 0.0
        %3374 = vmatprep.subr.mxu0 0.0
        %3375 = vmatpush2.msra.mxu0 0.0
        %3376 = vmatprep.subr.mxu0 0.0
        %3377 = vmatpush2.msra.mxu0 0.0
        %3378 = vmatprep.subr.mxu0 0.0
        %3379 = vmatpush2.msra.mxu0 0.0
        %3380 = vmatprep.subr.mxu0 0.0
        %3381 = vmatpush2.msra.mxu0 0.0
        %3382 = vmatprep.subr.mxu0 0.0
        %3383 = vmatpush2.msra.mxu0 0.0
        %3384 = vmatprep.subr.mxu0 0.0
        %3385 = vmatpush2.msra.mxu0 0.0
        %3386 = vmatprep.subr.mxu0 0.0
        %3387 = vmatpush2.msra.mxu0 0.0
        %3388 = vmatprep.subr.mxu0 0.0
        %3389 = vmatpush2.msra.mxu0 0.0
        %3390 = vmatprep.subr.mxu0 0.0
        %3391 = vmatpush2.msra.mxu0 0.0
        %3392 = vmatprep.subr.mxu0 0.0
        %3393 = vmatpush2.msra.mxu0 0.0
        %3394 = vmatprep.subr.mxu0 0.0
        %3395 = vmatpush2.msra.mxu0 0.0
        %3396 = vmatprep.subr.mxu0 0.0
        %3397 = vmatpush2.msra.mxu0 0.0
        %3398 = vmatprep.mubr.f32.mxu0 0.0
        %3399 = vmatmul.mubr.f32.gmra.mxu0 %v3327
        %v3400 = vpop.f32.mrf.mxu0
        %v3401 = vadd.f32 0.0, %v3400
        %v3402 = vpop.f32.mrf.mxu0
        %3403 = vmatprep.mubr.f32.mxu0 0.0
        %3404 = vmatmul.mubr.f32.gmra.mxu0 %v3329
        %v3405 = vpop.f32.mrf.mxu0
        %v3406 = vadd.f32 0.0, %v3405
        %v3407 = vpop.f32.mrf.mxu0
        %3408 = vmatprep.mubr.f32.mxu0 0.0
        %3409 = vmatmul.mubr.f32.gmra.mxu0 %v3332
        %v3410 = vpop.f32.mrf.mxu0
        %v3411 = vadd.f32 0.0, %v3410
        %v3412 = vpop.f32.mrf.mxu0
        %3413 = vdwg.mxu0
        %s3414 = scalar_lea.vmem %s728, 240
        %v3415 = vld [vmem:[%s3414] sm:$0xff]
        %v3416 = vld [vmem:[%s3414 + $0x8] sm:$0xff]
        %v3417 = vld [vmem:[%s3414 + $0x10] sm:$0xff]
        %v3418 = vld [vmem:[%s3414 + $0x18] sm:$0xff]
        %v3419 = vld [vmem:[%s3414 + $0x20] sm:$0xff]
        %v3420 = vld [vmem:[%s3414 + $0x28] sm:$0xff]
        %v3421 = vld [vmem:[%s3414 + $0x30] sm:$0xff]
        %v3422 = vld [vmem:[%s3414 + $0x38] sm:$0xff]
        %v3423 = vld [vmem:[%s3414 + $0x40] sm:$0xff]
        %v3424 = vld [vmem:[%s3414 + $0x48] sm:$0xff]
        %v3425 = vld [vmem:[%s3414 + $0x50] sm:$0xff]
        %v3426 = vld [vmem:[%s3414 + $0x58] sm:$0xff]
        %v3427 = vld [vmem:[%s3414 + $0x60] sm:$0xff]
        %v3428 = vld [vmem:[%s3414 + $0x68] sm:$0xff]
        %v3429 = vld [vmem:[%s3414 + $0x70] sm:$0xff]
        %v3430 = vld [vmem:[%s3414 + $0x78] sm:$0xff]
        %v3431 = vld [vmem:[%s3414 + $0x80] sm:$0xff]
        %v3432 = vld [vmem:[%s3414 + $0x88] sm:$0xff]
        %v3433 = vld [vmem:[%s3414 + $0x90] sm:$0xff]
        %v3434 = vld [vmem:[%s3414 + $0x98] sm:$0xff]
        %v3435 = vld [vmem:[%s3414 + $0xa0] sm:$0xff]
        %v3436 = vld [vmem:[%s3414 + $0xa8] sm:$0xff]
        %v3437 = vld [vmem:[%s3414 + $0xb0] sm:$0xff]
        %v3438 = vld [vmem:[%s3414 + $0xb8] sm:$0xff]
        %v3439 = vld [vmem:[%s3414 + $0xc0] sm:$0xff]
        %v3440 = vld [vmem:[%s3414 + $0xc8] sm:$0xff]
        %v3441 = vld [vmem:[%s3414 + $0xd0] sm:$0xff]
        %v3442 = vld [vmem:[%s3414 + $0xd8] sm:$0xff]
        %v3443 = vld [vmem:[%s3414 + $0xe0] sm:$0xff]
        %v3444 = vld [vmem:[%s3414 + $0xe8] sm:$0xff]
        %vm3445 = vcmask 654336
        %v3447 = vsel %vm3445, %v3401, 0
        %v3450 = vsel %vm3445, %v3406, 0
        %v3453 = vsel %vm3445, %v3411, 0
        %3455 = vmatprep.subr.mxu0 0.0
        %3456 = vmatpush1.msra.mxu0 0.0
        %3457 = vmatprep.subr.mxu0 0.0
        %3458 = vmatpush1.msra.mxu0 0.0
        %3459 = vmatprep.subr.mxu0 0.0
        %3460 = vmatpush1.msra.mxu0 0.0
        %3461 = vmatprep.subr.mxu0 0.0
        %3462 = vmatpush1.msra.mxu0 0.0
        %3463 = vmatprep.subr.mxu0 0.0
        %3464 = vmatpush1.msra.mxu0 0.0
        %3465 = vmatprep.subr.mxu0 0.0
        %3466 = vmatpush1.msra.mxu0 0.0
        %3467 = vmatprep.subr.mxu0 %v3443
        %3468 = vmatpush1.msra.mxu0 %v3442
        %3469 = vmatprep.subr.mxu0 %v3440
        %3470 = vmatpush1.msra.mxu0 %v3439
        %3471 = vmatprep.subr.mxu0 %v3437
        %3472 = vmatpush1.msra.mxu0 %v3436
        %3473 = vmatprep.subr.mxu0 %v3434
        %3474 = vmatpush1.msra.mxu0 %v3433
        %3475 = vmatprep.subr.mxu0 %v3431
        %3476 = vmatpush1.msra.mxu0 %v3430
        %3477 = vmatprep.subr.mxu0 %v3428
        %3478 = vmatpush1.msra.mxu0 %v3427
        %3479 = vmatprep.subr.mxu0 %v3425
        %3480 = vmatpush1.msra.mxu0 %v3424
        %3481 = vmatprep.subr.mxu0 %v3422
        %3482 = vmatpush1.msra.mxu0 %v3421
        %3483 = vmatprep.subr.mxu0 %v3419
        %3484 = vmatpush1.msra.mxu0 %v3418
        %3485 = vmatprep.subr.mxu0 %v3416
        %3486 = vmatpush1.msra.mxu0 %v3415
        %3487 = vmatprep.subr.mxu0 0.0
        %3488 = vmatpush2.msra.mxu0 0.0
        %3489 = vmatprep.subr.mxu0 0.0
        %3490 = vmatpush2.msra.mxu0 0.0
        %3491 = vmatprep.subr.mxu0 0.0
        %3492 = vmatpush2.msra.mxu0 0.0
        %3493 = vmatprep.subr.mxu0 0.0
        %3494 = vmatpush2.msra.mxu0 0.0
        %3495 = vmatprep.subr.mxu0 0.0
        %3496 = vmatpush2.msra.mxu0 0.0
        %3497 = vmatprep.subr.mxu0 0.0
        %3498 = vmatpush2.msra.mxu0 0.0
        %3499 = vmatprep.subr.mxu0 0.0
        %3500 = vmatpush2.msra.mxu0 0.0
        %3501 = vmatprep.subr.mxu0 0.0
        %3502 = vmatpush2.msra.mxu0 0.0
        %3503 = vmatprep.subr.mxu0 0.0
        %3504 = vmatpush2.msra.mxu0 0.0
        %3505 = vmatprep.subr.mxu0 0.0
        %3506 = vmatpush2.msra.mxu0 0.0
        %3507 = vmatprep.subr.mxu0 0.0
        %3508 = vmatpush2.msra.mxu0 0.0
        %3509 = vmatprep.subr.mxu0 0.0
        %3510 = vmatpush2.msra.mxu0 0.0
        %3511 = vmatprep.subr.mxu0 0.0
        %3512 = vmatpush2.msra.mxu0 0.0
        %3513 = vmatprep.subr.mxu0 0.0
        %3514 = vmatpush2.msra.mxu0 0.0
        %3515 = vmatprep.subr.mxu0 0.0
        %3516 = vmatpush2.msra.mxu0 0.0
        %3517 = vmatprep.subr.mxu0 0.0
        %3518 = vmatpush2.msra.mxu0 0.0
        %3519 = vmatprep.mubr.f32.mxu0 0.0
        %3520 = vmatmul.mubr.f32.gmra.mxu0 %v3447
        %v3521 = vpop.f32.mrf.mxu0
        %v3522 = vadd.f32 0.0, %v3521
        %v3523 = vpop.f32.mrf.mxu0
        %v3524 = vadd.f32 0.0, %v3523
        %3525 = vmatprep.mubr.f32.mxu0 0.0
        %3526 = vmatmul.mubr.f32.gmra.mxu0 %v3450
        %v3527 = vpop.f32.mrf.mxu0
        %v3528 = vadd.f32 0.0, %v3527
        %v3529 = vpop.f32.mrf.mxu0
        %v3530 = vadd.f32 0.0, %v3529
        %3531 = vmatprep.mubr.f32.mxu0 0.0
        %3532 = vmatmul.mubr.f32.gmra.mxu0 %v3453
        %v3533 = vpop.f32.mrf.mxu0
        %v3534 = vadd.f32 0.0, %v3533
        %v3535 = vpop.f32.mrf.mxu0
        %v3536 = vadd.f32 0.0, %v3535
        %3537 = vdwg.mxu0
        %3538 = vmatprep.subr.mxu0 0.0
        %3539 = vmatpush1.msra.mxu0 0.0
        %3540 = vmatprep.subr.mxu0 0.0
        %3541 = vmatpush1.msra.mxu0 0.0
        %3542 = vmatprep.subr.mxu0 0.0
        %3543 = vmatpush1.msra.mxu0 0.0
        %3544 = vmatprep.subr.mxu0 0.0
        %3545 = vmatpush1.msra.mxu0 0.0
        %3546 = vmatprep.subr.mxu0 0.0
        %3547 = vmatpush1.msra.mxu0 0.0
        %3548 = vmatprep.subr.mxu0 0.0
        %3549 = vmatpush1.msra.mxu0 0.0
        %3550 = vmatprep.subr.mxu0 0.0
        %3551 = vmatpush1.msra.mxu0 %v3444
        %3552 = vmatprep.subr.mxu0 0.0
        %3553 = vmatpush1.msra.mxu0 %v3441
        %3554 = vmatprep.subr.mxu0 0.0
        %3555 = vmatpush1.msra.mxu0 %v3438
        %3556 = vmatprep.subr.mxu0 0.0
        %3557 = vmatpush1.msra.mxu0 %v3435
        %3558 = vmatprep.subr.mxu0 0.0
        %3559 = vmatpush1.msra.mxu0 %v3432
        %3560 = vmatprep.subr.mxu0 0.0
        %3561 = vmatpush1.msra.mxu0 %v3429
        %3562 = vmatprep.subr.mxu0 0.0
        %3563 = vmatpush1.msra.mxu0 %v3426
        %3564 = vmatprep.subr.mxu0 0.0
        %3565 = vmatpush1.msra.mxu0 %v3423
        %3566 = vmatprep.subr.mxu0 0.0
        %3567 = vmatpush1.msra.mxu0 %v3420
        %3568 = vmatprep.subr.mxu0 0.0
        %3569 = vmatpush1.msra.mxu0 %v3417
        %3570 = vmatprep.subr.mxu0 0.0
        %3571 = vmatpush2.msra.mxu0 0.0
        %3572 = vmatprep.subr.mxu0 0.0
        %3573 = vmatpush2.msra.mxu0 0.0
        %3574 = vmatprep.subr.mxu0 0.0
        %3575 = vmatpush2.msra.mxu0 0.0
        %3576 = vmatprep.subr.mxu0 0.0
        %3577 = vmatpush2.msra.mxu0 0.0
        %3578 = vmatprep.subr.mxu0 0.0
        %3579 = vmatpush2.msra.mxu0 0.0
        %3580 = vmatprep.subr.mxu0 0.0
        %3581 = vmatpush2.msra.mxu0 0.0
        %3582 = vmatprep.subr.mxu0 0.0
        %3583 = vmatpush2.msra.mxu0 0.0
        %3584 = vmatprep.subr.mxu0 0.0
        %3585 = vmatpush2.msra.mxu0 0.0
        %3586 = vmatprep.subr.mxu0 0.0
        %3587 = vmatpush2.msra.mxu0 0.0
        %3588 = vmatprep.subr.mxu0 0.0
        %3589 = vmatpush2.msra.mxu0 0.0
        %3590 = vmatprep.subr.mxu0 0.0
        %3591 = vmatpush2.msra.mxu0 0.0
        %3592 = vmatprep.subr.mxu0 0.0
        %3593 = vmatpush2.msra.mxu0 0.0
        %3594 = vmatprep.subr.mxu0 0.0
        %3595 = vmatpush2.msra.mxu0 0.0
        %3596 = vmatprep.subr.mxu0 0.0
        %3597 = vmatpush2.msra.mxu0 0.0
        %3598 = vmatprep.subr.mxu0 0.0
        %3599 = vmatpush2.msra.mxu0 0.0
        %3600 = vmatprep.subr.mxu0 0.0
        %3601 = vmatpush2.msra.mxu0 0.0
        %3602 = vmatprep.mubr.f32.mxu0 0.0
        %3603 = vmatmul.mubr.f32.gmra.mxu0 %v3447
        %v3604 = vpop.f32.mrf.mxu0
        %v3605 = vadd.f32 0.0, %v3604
        %v3606 = vpop.f32.mrf.mxu0
        %3607 = vmatprep.mubr.f32.mxu0 0.0
        %3608 = vmatmul.mubr.f32.gmra.mxu0 %v3450
        %v3609 = vpop.f32.mrf.mxu0
        %v3610 = vadd.f32 0.0, %v3609
        %v3611 = vpop.f32.mrf.mxu0
        %3612 = vmatprep.mubr.f32.mxu0 0.0
        %3613 = vmatmul.mubr.f32.gmra.mxu0 %v3453
        %v3614 = vpop.f32.mrf.mxu0
        %v3615 = vadd.f32 0.0, %v3614
        %v3616 = vpop.f32.mrf.mxu0
        %3617 = vdwg.mxu0
        %v3619 = vsel %vm3445, %v3284, 0
        %v3622 = vsel %vm3445, %v3289, 0
        %v3625 = vsel %vm3445, %v3294, 0
        %3627 = vmatprep.subr.mxu0 0.0
        %3628 = vmatpush1.msra.mxu0 0.0
        %3629 = vmatprep.subr.mxu0 0.0
        %3630 = vmatpush1.msra.mxu0 0.0
        %3631 = vmatprep.subr.mxu0 0.0
        %3632 = vmatpush1.msra.mxu0 0.0
        %3633 = vmatprep.subr.mxu0 0.0
        %3634 = vmatpush1.msra.mxu0 0.0
        %3635 = vmatprep.subr.mxu0 0.0
        %3636 = vmatpush1.msra.mxu0 0.0
        %3637 = vmatprep.subr.mxu0 0.0
        %3638 = vmatpush1.msra.mxu0 0.0
        %3639 = vmatprep.subr.mxu0 %v3325
        %3640 = vmatpush1.msra.mxu0 %v3324
        %3641 = vmatprep.subr.mxu0 %v3322
        %3642 = vmatpush1.msra.mxu0 %v3321
        %3643 = vmatprep.subr.mxu0 %v3319
        %3644 = vmatpush1.msra.mxu0 %v3318
        %3645 = vmatprep.subr.mxu0 %v3316
        %3646 = vmatpush1.msra.mxu0 %v3315
        %3647 = vmatprep.subr.mxu0 %v3313
        %3648 = vmatpush1.msra.mxu0 %v3312
        %3649 = vmatprep.subr.mxu0 %v3310
        %3650 = vmatpush1.msra.mxu0 %v3309
        %3651 = vmatprep.subr.mxu0 %v3307
        %3652 = vmatpush1.msra.mxu0 %v3306
        %3653 = vmatprep.subr.mxu0 %v3304
        %3654 = vmatpush1.msra.mxu0 %v3303
        %3655 = vmatprep.subr.mxu0 %v3301
        %3656 = vmatpush1.msra.mxu0 %v3300
        %3657 = vmatprep.subr.mxu0 %v3298
        %3658 = vmatpush1.msra.mxu0 %v3297
        %3659 = vmatprep.subr.mxu0 0.0
        %3660 = vmatpush2.msra.mxu0 0.0
        %3661 = vmatprep.subr.mxu0 0.0
        %3662 = vmatpush2.msra.mxu0 0.0
        %3663 = vmatprep.subr.mxu0 0.0
        %3664 = vmatpush2.msra.mxu0 0.0
        %3665 = vmatprep.subr.mxu0 0.0
        %3666 = vmatpush2.msra.mxu0 0.0
        %3667 = vmatprep.subr.mxu0 0.0
        %3668 = vmatpush2.msra.mxu0 0.0
        %3669 = vmatprep.subr.mxu0 0.0
        %3670 = vmatpush2.msra.mxu0 0.0
        %3671 = vmatprep.subr.mxu0 0.0
        %3672 = vmatpush2.msra.mxu0 0.0
        %3673 = vmatprep.subr.mxu0 0.0
        %3674 = vmatpush2.msra.mxu0 0.0
        %3675 = vmatprep.subr.mxu0 0.0
        %3676 = vmatpush2.msra.mxu0 0.0
        %3677 = vmatprep.subr.mxu0 0.0
        %3678 = vmatpush2.msra.mxu0 0.0
        %3679 = vmatprep.subr.mxu0 0.0
        %3680 = vmatpush2.msra.mxu0 0.0
        %3681 = vmatprep.subr.mxu0 0.0
        %3682 = vmatpush2.msra.mxu0 0.0
        %3683 = vmatprep.subr.mxu0 0.0
        %3684 = vmatpush2.msra.mxu0 0.0
        %3685 = vmatprep.subr.mxu0 0.0
        %3686 = vmatpush2.msra.mxu0 0.0
        %3687 = vmatprep.subr.mxu0 0.0
        %3688 = vmatpush2.msra.mxu0 0.0
        %3689 = vmatprep.subr.mxu0 0.0
        %3690 = vmatpush2.msra.mxu0 0.0
        %3691 = vmatprep.mubr.f32.mxu0 0.0
        %3692 = vmatmul.mubr.f32.gmra.mxu0 %v3619
        %v3693 = vpop.f32.mrf.mxu0
        %v3694 = vadd.f32 %v3522, %v3693
        %v3695 = vpop.f32.mrf.mxu0
        %v3696 = vadd.f32 %v3524, %v3695
        %3697 = vmatprep.mubr.f32.mxu0 0.0
        %3698 = vmatmul.mubr.f32.gmra.mxu0 %v3622
        %v3699 = vpop.f32.mrf.mxu0
        %v3700 = vadd.f32 %v3528, %v3699
        %v3701 = vpop.f32.mrf.mxu0
        %v3702 = vadd.f32 %v3530, %v3701
        %3703 = vmatprep.mubr.f32.mxu0 0.0
        %3704 = vmatmul.mubr.f32.gmra.mxu0 %v3625
        %v3705 = vpop.f32.mrf.mxu0
        %v3706 = vadd.f32 %v3534, %v3705
        %v3707 = vpop.f32.mrf.mxu0
        %v3708 = vadd.f32 %v3536, %v3707
        %3709 = vdwg.mxu0
        %3710 = vmatprep.subr.mxu0 0.0
        %3711 = vmatpush1.msra.mxu0 0.0
        %3712 = vmatprep.subr.mxu0 0.0
        %3713 = vmatpush1.msra.mxu0 0.0
        %3714 = vmatprep.subr.mxu0 0.0
        %3715 = vmatpush1.msra.mxu0 0.0
        %3716 = vmatprep.subr.mxu0 0.0
        %3717 = vmatpush1.msra.mxu0 0.0
        %3718 = vmatprep.subr.mxu0 0.0
        %3719 = vmatpush1.msra.mxu0 0.0
        %3720 = vmatprep.subr.mxu0 0.0
        %3721 = vmatpush1.msra.mxu0 0.0
        %3722 = vmatprep.subr.mxu0 0.0
        %3723 = vmatpush1.msra.mxu0 %v3326
        %3724 = vmatprep.subr.mxu0 0.0
        %3725 = vmatpush1.msra.mxu0 %v3323
        %3726 = vmatprep.subr.mxu0 0.0
        %3727 = vmatpush1.msra.mxu0 %v3320
        %3728 = vmatprep.subr.mxu0 0.0
        %3729 = vmatpush1.msra.mxu0 %v3317
        %3730 = vmatprep.subr.mxu0 0.0
        %3731 = vmatpush1.msra.mxu0 %v3314
        %3732 = vmatprep.subr.mxu0 0.0
        %3733 = vmatpush1.msra.mxu0 %v3311
        %3734 = vmatprep.subr.mxu0 0.0
        %3735 = vmatpush1.msra.mxu0 %v3308
        %3736 = vmatprep.subr.mxu0 0.0
        %3737 = vmatpush1.msra.mxu0 %v3305
        %3738 = vmatprep.subr.mxu0 0.0
        %3739 = vmatpush1.msra.mxu0 %v3302
        %3740 = vmatprep.subr.mxu0 0.0
        %3741 = vmatpush1.msra.mxu0 %v3299
        %3742 = vmatprep.subr.mxu0 0.0
        %3743 = vmatpush2.msra.mxu0 0.0
        %3744 = vmatprep.subr.mxu0 0.0
        %3745 = vmatpush2.msra.mxu0 0.0
        %3746 = vmatprep.subr.mxu0 0.0
        %3747 = vmatpush2.msra.mxu0 0.0
        %3748 = vmatprep.subr.mxu0 0.0
        %3749 = vmatpush2.msra.mxu0 0.0
        %3750 = vmatprep.subr.mxu0 0.0
        %3751 = vmatpush2.msra.mxu0 0.0
        %3752 = vmatprep.subr.mxu0 0.0
        %3753 = vmatpush2.msra.mxu0 0.0
        %3754 = vmatprep.subr.mxu0 0.0
        %3755 = vmatpush2.msra.mxu0 0.0
        %3756 = vmatprep.subr.mxu0 0.0
        %3757 = vmatpush2.msra.mxu0 0.0
        %3758 = vmatprep.subr.mxu0 0.0
        %3759 = vmatpush2.msra.mxu0 0.0
        %3760 = vmatprep.subr.mxu0 0.0
        %3761 = vmatpush2.msra.mxu0 0.0
        %3762 = vmatprep.subr.mxu0 0.0
        %3763 = vmatpush2.msra.mxu0 0.0
        %3764 = vmatprep.subr.mxu0 0.0
        %3765 = vmatpush2.msra.mxu0 0.0
        %3766 = vmatprep.subr.mxu0 0.0
        %3767 = vmatpush2.msra.mxu0 0.0
        %3768 = vmatprep.subr.mxu0 0.0
        %3769 = vmatpush2.msra.mxu0 0.0
        %3770 = vmatprep.subr.mxu0 0.0
        %3771 = vmatpush2.msra.mxu0 0.0
        %3772 = vmatprep.subr.mxu0 0.0
        %3773 = vmatpush2.msra.mxu0 0.0
        %3774 = vmatprep.mubr.f32.mxu0 0.0
        %3775 = vmatmul.mubr.f32.gmra.mxu0 %v3619
        %v3776 = vpop.f32.mrf.mxu0
        %v3777 = vadd.f32 %v3605, %v3776
        %v3778 = vpop.f32.mrf.mxu0
        %3779 = vmatprep.mubr.f32.mxu0 0.0
        %3780 = vmatmul.mubr.f32.gmra.mxu0 %v3622
        %v3781 = vpop.f32.mrf.mxu0
        %v3782 = vadd.f32 %v3610, %v3781
        %v3783 = vpop.f32.mrf.mxu0
        %3784 = vmatprep.mubr.f32.mxu0 0.0
        %3785 = vmatmul.mubr.f32.gmra.mxu0 %v3625
        %v3786 = vpop.f32.mrf.mxu0
        %v3787 = vadd.f32 %v3615, %v3786
        %v3788 = vpop.f32.mrf.mxu0
        %3789 = vdwg.mxu0
        %v3790 = vsel %vm3203, %v814, 0
        %v3792 = vsel %vm3203, %v815, 0
        %v3795 = vsel %vm3203, %v842, 0
        %3797 = vmatprep.subr.mxu0 0.0
        %3798 = vmatpush1.msra.mxu0 0.0
        %3799 = vmatprep.subr.mxu0 0.0
        %3800 = vmatpush1.msra.mxu0 0.0
        %3801 = vmatprep.subr.mxu0 0.0
        %3802 = vmatpush1.msra.mxu0 0.0
        %3803 = vmatprep.subr.mxu0 0.0
        %3804 = vmatpush1.msra.mxu0 0.0
        %3805 = vmatprep.subr.mxu0 0.0
        %3806 = vmatpush1.msra.mxu0 0.0
        %3807 = vmatprep.subr.mxu0 0.0
        %3808 = vmatpush1.msra.mxu0 0.0
        %3809 = vmatprep.subr.mxu0 0.0
        %3810 = vmatpush1.msra.mxu0 0.0
        %3811 = vmatprep.subr.mxu0 0.0
        %3812 = vmatpush1.msra.mxu0 0.0
        %3813 = vmatprep.subr.mxu0 0.0
        %3814 = vmatpush1.msra.mxu0 0.0
        %3815 = vmatprep.subr.mxu0 0.0
        %3816 = vmatpush1.msra.mxu0 0.0
        %3817 = vmatprep.subr.mxu0 0.0
        %3818 = vmatpush1.msra.mxu0 0.0
        %3819 = vmatprep.subr.mxu0 0.0
        %3820 = vmatpush1.msra.mxu0 0.0
        %3821 = vmatprep.subr.mxu0 0.0
        %3822 = vmatpush1.msra.mxu0 0.0
        %3823 = vmatprep.subr.mxu0 0.0
        %3824 = vmatpush1.msra.mxu0 0.0
        %3825 = vmatprep.subr.mxu0 0.0
        %3826 = vmatpush1.msra.mxu0 %v3215
        %3827 = vmatprep.subr.mxu0 0.0
        %3828 = vmatpush1.msra.mxu0 %v3201
        %3829 = vmatprep.subr.mxu0 0.0
        %3830 = vmatpush2.msra.mxu0 0.0
        %3831 = vmatprep.subr.mxu0 0.0
        %3832 = vmatpush2.msra.mxu0 0.0
        %3833 = vmatprep.subr.mxu0 0.0
        %3834 = vmatpush2.msra.mxu0 0.0
        %3835 = vmatprep.subr.mxu0 0.0
        %3836 = vmatpush2.msra.mxu0 0.0
        %3837 = vmatprep.subr.mxu0 0.0
        %3838 = vmatpush2.msra.mxu0 0.0
        %3839 = vmatprep.subr.mxu0 0.0
        %3840 = vmatpush2.msra.mxu0 0.0
        %3841 = vmatprep.subr.mxu0 0.0
        %3842 = vmatpush2.msra.mxu0 0.0
        %3843 = vmatprep.subr.mxu0 0.0
        %3844 = vmatpush2.msra.mxu0 0.0
        %3845 = vmatprep.subr.mxu0 0.0
        %3846 = vmatpush2.msra.mxu0 0.0
        %3847 = vmatprep.subr.mxu0 0.0
        %3848 = vmatpush2.msra.mxu0 0.0
        %3849 = vmatprep.subr.mxu0 0.0
        %3850 = vmatpush2.msra.mxu0 0.0
        %3851 = vmatprep.subr.mxu0 0.0
        %3852 = vmatpush2.msra.mxu0 0.0
        %3853 = vmatprep.subr.mxu0 0.0
        %3854 = vmatpush2.msra.mxu0 0.0
        %3855 = vmatprep.subr.mxu0 0.0
        %3856 = vmatpush2.msra.mxu0 0.0
        %3857 = vmatprep.subr.mxu0 0.0
        %3858 = vmatpush2.msra.mxu0 0.0
        %3859 = vmatprep.subr.mxu0 0.0
        %3860 = vmatpush2.msra.mxu0 0.0
        %3861 = vmatprep.mubr.f32.mxu0 0.0
        %3862 = vmatmul.mubr.f32.gmra.mxu0 %v3790
        %v3863 = vpop.f32.mrf.mxu0
        %v3864 = vadd.f32 0.0, %v3863
        %v3865 = vpop.f32.mrf.mxu0
        %3866 = vmatprep.mubr.f32.mxu0 0.0
        %3867 = vmatmul.mubr.f32.gmra.mxu0 %v3792
        %v3868 = vpop.f32.mrf.mxu0
        %v3869 = vadd.f32 0.0, %v3868
        %v3870 = vpop.f32.mrf.mxu0
        %3871 = vmatprep.mubr.f32.mxu0 0.0
        %3872 = vmatmul.mubr.f32.gmra.mxu0 %v3795
        %v3873 = vpop.f32.mrf.mxu0
        %v3874 = vadd.f32 0.0, %v3873
        %v3875 = vpop.f32.mrf.mxu0
        %3876 = vdwg.mxu0
        %s3877 = scalar_lea.vmem %s728, 480
        %v3878 = vld [vmem:[%s3877] sm:$0xff]
        %v3879 = vld [vmem:[%s3877 + $0x8] sm:$0xff]
        %v3880 = vld [vmem:[%s3877 + $0x10] sm:$0xff]
        %v3881 = vld [vmem:[%s3877 + $0x18] sm:$0xff]
        %v3882 = vld [vmem:[%s3877 + $0x20] sm:$0xff]
        %v3883 = vld [vmem:[%s3877 + $0x28] sm:$0xff]
        %v3884 = vld [vmem:[%s3877 + $0x30] sm:$0xff]
        %v3885 = vld [vmem:[%s3877 + $0x38] sm:$0xff]
        %v3886 = vld [vmem:[%s3877 + $0x40] sm:$0xff]
        %v3887 = vld [vmem:[%s3877 + $0x48] sm:$0xff]
        %v3888 = vld [vmem:[%s3877 + $0x50] sm:$0xff]
        %v3889 = vld [vmem:[%s3877 + $0x58] sm:$0xff]
        %v3890 = vld [vmem:[%s3877 + $0x60] sm:$0xff]
        %v3891 = vld [vmem:[%s3877 + $0x68] sm:$0xff]
        %v3892 = vld [vmem:[%s3877 + $0x70] sm:$0xff]
        %v3893 = vld [vmem:[%s3877 + $0x78] sm:$0xff]
        %v3894 = vld [vmem:[%s3877 + $0x80] sm:$0xff]
        %v3895 = vld [vmem:[%s3877 + $0x88] sm:$0xff]
        %v3896 = vld [vmem:[%s3877 + $0x90] sm:$0xff]
        %v3897 = vld [vmem:[%s3877 + $0x98] sm:$0xff]
        %v3898 = vld [vmem:[%s3877 + $0xa0] sm:$0xff]
        %v3899 = vld [vmem:[%s3877 + $0xa8] sm:$0xff]
        %v3900 = vld [vmem:[%s3877 + $0xb0] sm:$0xff]
        %v3901 = vld [vmem:[%s3877 + $0xb8] sm:$0xff]
        %v3902 = vld [vmem:[%s3877 + $0xc0] sm:$0xff]
        %v3903 = vld [vmem:[%s3877 + $0xc8] sm:$0xff]
        %v3904 = vld [vmem:[%s3877 + $0xd0] sm:$0xff]
        %v3905 = vld [vmem:[%s3877 + $0xd8] sm:$0xff]
        %v3906 = vld [vmem:[%s3877 + $0xe0] sm:$0xff]
        %v3907 = vld [vmem:[%s3877 + $0xe8] sm:$0xff]
        %v3909 = vsel %vm3445, %v3864, 0
        %v3912 = vsel %vm3445, %v3869, 0
        %v3915 = vsel %vm3445, %v3874, 0
        %3917 = vmatprep.subr.mxu0 0.0
        %3918 = vmatpush1.msra.mxu0 0.0
        %3919 = vmatprep.subr.mxu0 0.0
        %3920 = vmatpush1.msra.mxu0 0.0
        %3921 = vmatprep.subr.mxu0 0.0
        %3922 = vmatpush1.msra.mxu0 0.0
        %3923 = vmatprep.subr.mxu0 0.0
        %3924 = vmatpush1.msra.mxu0 0.0
        %3925 = vmatprep.subr.mxu0 0.0
        %3926 = vmatpush1.msra.mxu0 0.0
        %3927 = vmatprep.subr.mxu0 0.0
        %3928 = vmatpush1.msra.mxu0 0.0
        %3929 = vmatprep.subr.mxu0 %v3906
        %3930 = vmatpush1.msra.mxu0 %v3905
        %3931 = vmatprep.subr.mxu0 %v3903
        %3932 = vmatpush1.msra.mxu0 %v3902
        %3933 = vmatprep.subr.mxu0 %v3900
        %3934 = vmatpush1.msra.mxu0 %v3899
        %3935 = vmatprep.subr.mxu0 %v3897
        %3936 = vmatpush1.msra.mxu0 %v3896
        %3937 = vmatprep.subr.mxu0 %v3894
        %3938 = vmatpush1.msra.mxu0 %v3893
        %3939 = vmatprep.subr.mxu0 %v3891
        %3940 = vmatpush1.msra.mxu0 %v3890
        %3941 = vmatprep.subr.mxu0 %v3888
        %3942 = vmatpush1.msra.mxu0 %v3887
        %3943 = vmatprep.subr.mxu0 %v3885
        %3944 = vmatpush1.msra.mxu0 %v3884
        %3945 = vmatprep.subr.mxu0 %v3882
        %3946 = vmatpush1.msra.mxu0 %v3881
        %3947 = vmatprep.subr.mxu0 %v3879
        %3948 = vmatpush1.msra.mxu0 %v3878
        %3949 = vmatprep.subr.mxu0 0.0
        %3950 = vmatpush2.msra.mxu0 0.0
        %3951 = vmatprep.subr.mxu0 0.0
        %3952 = vmatpush2.msra.mxu0 0.0
        %3953 = vmatprep.subr.mxu0 0.0
        %3954 = vmatpush2.msra.mxu0 0.0
        %3955 = vmatprep.subr.mxu0 0.0
        %3956 = vmatpush2.msra.mxu0 0.0
        %3957 = vmatprep.subr.mxu0 0.0
        %3958 = vmatpush2.msra.mxu0 0.0
        %3959 = vmatprep.subr.mxu0 0.0
        %3960 = vmatpush2.msra.mxu0 0.0
        %3961 = vmatprep.subr.mxu0 0.0
        %3962 = vmatpush2.msra.mxu0 0.0
        %3963 = vmatprep.subr.mxu0 0.0
        %3964 = vmatpush2.msra.mxu0 0.0
        %3965 = vmatprep.subr.mxu0 0.0
        %3966 = vmatpush2.msra.mxu0 0.0
        %3967 = vmatprep.subr.mxu0 0.0
        %3968 = vmatpush2.msra.mxu0 0.0
        %3969 = vmatprep.subr.mxu0 0.0
        %3970 = vmatpush2.msra.mxu0 0.0
        %3971 = vmatprep.subr.mxu0 0.0
        %3972 = vmatpush2.msra.mxu0 0.0
        %3973 = vmatprep.subr.mxu0 0.0
        %3974 = vmatpush2.msra.mxu0 0.0
        %3975 = vmatprep.subr.mxu0 0.0
        %3976 = vmatpush2.msra.mxu0 0.0
        %3977 = vmatprep.subr.mxu0 0.0
        %3978 = vmatpush2.msra.mxu0 0.0
        %3979 = vmatprep.subr.mxu0 0.0
        %3980 = vmatpush2.msra.mxu0 0.0
        %3981 = vmatprep.mubr.f32.mxu0 0.0
        %3982 = vmatmul.mubr.f32.gmra.mxu0 %v3909
        %v3983 = vpop.f32.mrf.mxu0
        %v3984 = vadd.f32 0.0, %v3983
        %v3985 = vpop.f32.mrf.mxu0
        %v3986 = vadd.f32 0.0, %v3985
        %3987 = vmatprep.mubr.f32.mxu0 0.0
        %3988 = vmatmul.mubr.f32.gmra.mxu0 %v3912
        %v3989 = vpop.f32.mrf.mxu0
        %v3990 = vadd.f32 0.0, %v3989
        %v3991 = vpop.f32.mrf.mxu0
        %v3992 = vadd.f32 0.0, %v3991
        %3993 = vmatprep.mubr.f32.mxu0 0.0
        %3994 = vmatmul.mubr.f32.gmra.mxu0 %v3915
        %v3995 = vpop.f32.mrf.mxu0
        %v3996 = vadd.f32 0.0, %v3995
        %v3997 = vpop.f32.mrf.mxu0
        %v3998 = vadd.f32 0.0, %v3997
        %3999 = vdwg.mxu0
        %4000 = vmatprep.subr.mxu0 0.0
        %4001 = vmatpush1.msra.mxu0 0.0
        %4002 = vmatprep.subr.mxu0 0.0
        %4003 = vmatpush1.msra.mxu0 0.0
        %4004 = vmatprep.subr.mxu0 0.0
        %4005 = vmatpush1.msra.mxu0 0.0
        %4006 = vmatprep.subr.mxu0 0.0
        %4007 = vmatpush1.msra.mxu0 0.0
        %4008 = vmatprep.subr.mxu0 0.0
        %4009 = vmatpush1.msra.mxu0 0.0
        %4010 = vmatprep.subr.mxu0 0.0
        %4011 = vmatpush1.msra.mxu0 0.0
        %4012 = vmatprep.subr.mxu0 0.0
        %4013 = vmatpush1.msra.mxu0 %v3907
        %4014 = vmatprep.subr.mxu0 0.0
        %4015 = vmatpush1.msra.mxu0 %v3904
        %4016 = vmatprep.subr.mxu0 0.0
        %4017 = vmatpush1.msra.mxu0 %v3901
        %4018 = vmatprep.subr.mxu0 0.0
        %4019 = vmatpush1.msra.mxu0 %v3898
        %4020 = vmatprep.subr.mxu0 0.0
        %4021 = vmatpush1.msra.mxu0 %v3895
        %4022 = vmatprep.subr.mxu0 0.0
        %4023 = vmatpush1.msra.mxu0 %v3892
        %4024 = vmatprep.subr.mxu0 0.0
        %4025 = vmatpush1.msra.mxu0 %v3889
        %4026 = vmatprep.subr.mxu0 0.0
        %4027 = vmatpush1.msra.mxu0 %v3886
        %4028 = vmatprep.subr.mxu0 0.0
        %4029 = vmatpush1.msra.mxu0 %v3883
        %4030 = vmatprep.subr.mxu0 0.0
        %4031 = vmatpush1.msra.mxu0 %v3880
        %4032 = vmatprep.subr.mxu0 0.0
        %4033 = vmatpush2.msra.mxu0 0.0
        %4034 = vmatprep.subr.mxu0 0.0
        %4035 = vmatpush2.msra.mxu0 0.0
        %4036 = vmatprep.subr.mxu0 0.0
        %4037 = vmatpush2.msra.mxu0 0.0
        %4038 = vmatprep.subr.mxu0 0.0
        %4039 = vmatpush2.msra.mxu0 0.0
        %4040 = vmatprep.subr.mxu0 0.0
        %4041 = vmatpush2.msra.mxu0 0.0
        %4042 = vmatprep.subr.mxu0 0.0
        %4043 = vmatpush2.msra.mxu0 0.0
        %4044 = vmatprep.subr.mxu0 0.0
        %4045 = vmatpush2.msra.mxu0 0.0
        %4046 = vmatprep.subr.mxu0 0.0
        %4047 = vmatpush2.msra.mxu0 0.0
        %4048 = vmatprep.subr.mxu0 0.0
        %4049 = vmatpush2.msra.mxu0 0.0
        %4050 = vmatprep.subr.mxu0 0.0
        %4051 = vmatpush2.msra.mxu0 0.0
        %4052 = vmatprep.subr.mxu0 0.0
        %4053 = vmatpush2.msra.mxu0 0.0
        %4054 = vmatprep.subr.mxu0 0.0
        %4055 = vmatpush2.msra.mxu0 0.0
        %4056 = vmatprep.subr.mxu0 0.0
        %4057 = vmatpush2.msra.mxu0 0.0
        %4058 = vmatprep.subr.mxu0 0.0
        %4059 = vmatpush2.msra.mxu0 0.0
        %4060 = vmatprep.subr.mxu0 0.0
        %4061 = vmatpush2.msra.mxu0 0.0
        %4062 = vmatprep.subr.mxu0 0.0
        %4063 = vmatpush2.msra.mxu0 0.0
        %4064 = vmatprep.mubr.f32.mxu0 0.0
        %4065 = vmatmul.mubr.f32.gmra.mxu0 %v3909
        %v4066 = vpop.f32.mrf.mxu0
        %v4067 = vadd.f32 0.0, %v4066
        %v4068 = vpop.f32.mrf.mxu0
        %4069 = vmatprep.mubr.f32.mxu0 0.0
        %4070 = vmatmul.mubr.f32.gmra.mxu0 %v3912
        %v4071 = vpop.f32.mrf.mxu0
        %v4072 = vadd.f32 0.0, %v4071
        %v4073 = vpop.f32.mrf.mxu0
        %4074 = vmatprep.mubr.f32.mxu0 0.0
        %4075 = vmatmul.mubr.f32.gmra.mxu0 %v3915
        %v4076 = vpop.f32.mrf.mxu0
        %v4077 = vadd.f32 0.0, %v4076
        %v4078 = vpop.f32.mrf.mxu0
        %4079 = vdwg.mxu0
        %v4080 = vadd.f32 %v3694, %v3984
        %v4081 = vadd.f32 %v3696, %v3986
        %v4082 = vadd.f32 %v3777, %v4067
        %v4083 = vadd.f32 %v3700, %v3990
        %v4084 = vadd.f32 %v3702, %v3992
        %v4085 = vadd.f32 %v3782, %v4072
        %v4086 = vadd.f32 %v3706, %v3996
        %v4087 = vadd.f32 %v3708, %v3998
        %v4088 = vadd.f32 %v3787, %v4077
        %v4089 = vsel %vm3203, %v820, 0
        %v4091 = vsel %vm3203, %v821, 0
        %v4094 = vsel %vm3203, %v845, 0
        %4096 = vmatprep.subr.mxu0 0.0
        %4097 = vmatpush1.msra.mxu0 0.0
        %4098 = vmatprep.subr.mxu0 0.0
        %4099 = vmatpush1.msra.mxu0 0.0
        %4100 = vmatprep.subr.mxu0 0.0
        %4101 = vmatpush1.msra.mxu0 0.0
        %4102 = vmatprep.subr.mxu0 0.0
        %4103 = vmatpush1.msra.mxu0 0.0
        %4104 = vmatprep.subr.mxu0 0.0
        %4105 = vmatpush1.msra.mxu0 0.0
        %4106 = vmatprep.subr.mxu0 0.0
        %4107 = vmatpush1.msra.mxu0 0.0
        %4108 = vmatprep.subr.mxu0 0.0
        %4109 = vmatpush1.msra.mxu0 0.0
        %4110 = vmatprep.subr.mxu0 0.0
        %4111 = vmatpush1.msra.mxu0 0.0
        %4112 = vmatprep.subr.mxu0 0.0
        %4113 = vmatpush1.msra.mxu0 0.0
        %4114 = vmatprep.subr.mxu0 0.0
        %4115 = vmatpush1.msra.mxu0 0.0
        %4116 = vmatprep.subr.mxu0 0.0
        %4117 = vmatpush1.msra.mxu0 0.0
        %4118 = vmatprep.subr.mxu0 0.0
        %4119 = vmatpush1.msra.mxu0 0.0
        %4120 = vmatprep.subr.mxu0 0.0
        %4121 = vmatpush1.msra.mxu0 0.0
        %4122 = vmatprep.subr.mxu0 0.0
        %4123 = vmatpush1.msra.mxu0 0.0
        %4124 = vmatprep.subr.mxu0 0.0
        %4125 = vmatpush1.msra.mxu0 %v3215
        %4126 = vmatprep.subr.mxu0 0.0
        %4127 = vmatpush1.msra.mxu0 %v3201
        %4128 = vmatprep.subr.mxu0 0.0
        %4129 = vmatpush2.msra.mxu0 0.0
        %4130 = vmatprep.subr.mxu0 0.0
        %4131 = vmatpush2.msra.mxu0 0.0
        %4132 = vmatprep.subr.mxu0 0.0
        %4133 = vmatpush2.msra.mxu0 0.0
        %4134 = vmatprep.subr.mxu0 0.0
        %4135 = vmatpush2.msra.mxu0 0.0
        %4136 = vmatprep.subr.mxu0 0.0
        %4137 = vmatpush2.msra.mxu0 0.0
        %4138 = vmatprep.subr.mxu0 0.0
        %4139 = vmatpush2.msra.mxu0 0.0
        %4140 = vmatprep.subr.mxu0 0.0
        %4141 = vmatpush2.msra.mxu0 0.0
        %4142 = vmatprep.subr.mxu0 0.0
        %4143 = vmatpush2.msra.mxu0 0.0
        %4144 = vmatprep.subr.mxu0 0.0
        %4145 = vmatpush2.msra.mxu0 0.0
        %4146 = vmatprep.subr.mxu0 0.0
        %4147 = vmatpush2.msra.mxu0 0.0
        %4148 = vmatprep.subr.mxu0 0.0
        %4149 = vmatpush2.msra.mxu0 0.0
        %4150 = vmatprep.subr.mxu0 0.0
        %4151 = vmatpush2.msra.mxu0 0.0
        %4152 = vmatprep.subr.mxu0 0.0
        %4153 = vmatpush2.msra.mxu0 0.0
        %4154 = vmatprep.subr.mxu0 0.0
        %4155 = vmatpush2.msra.mxu0 0.0
        %4156 = vmatprep.subr.mxu0 0.0
        %4157 = vmatpush2.msra.mxu0 0.0
        %4158 = vmatprep.subr.mxu0 0.0
        %4159 = vmatpush2.msra.mxu0 0.0
        %4160 = vmatprep.mubr.f32.mxu0 0.0
        %4161 = vmatmul.mubr.f32.gmra.mxu0 %v4089
        %v4162 = vpop.f32.mrf.mxu0
        %v4163 = vadd.f32 0.0, %v4162
        %v4164 = vpop.f32.mrf.mxu0
        %4165 = vmatprep.mubr.f32.mxu0 0.0
        %4166 = vmatmul.mubr.f32.gmra.mxu0 %v4091
        %v4167 = vpop.f32.mrf.mxu0
        %v4168 = vadd.f32 0.0, %v4167
        %v4169 = vpop.f32.mrf.mxu0
        %4170 = vmatprep.mubr.f32.mxu0 0.0
        %4171 = vmatmul.mubr.f32.gmra.mxu0 %v4094
        %v4172 = vpop.f32.mrf.mxu0
        %v4173 = vadd.f32 0.0, %v4172
        %v4174 = vpop.f32.mrf.mxu0
        %4175 = vdwg.mxu0
        %s4176 = scalar_lea.vmem %s728, 720
        %v4177 = vld [vmem:[%s4176] sm:$0xff]
        %v4178 = vld [vmem:[%s4176 + $0x8] sm:$0xff]
        %v4179 = vld [vmem:[%s4176 + $0x10] sm:$0xff]
        %v4180 = vld [vmem:[%s4176 + $0x18] sm:$0xff]
        %v4181 = vld [vmem:[%s4176 + $0x20] sm:$0xff]
        %v4182 = vld [vmem:[%s4176 + $0x28] sm:$0xff]
        %v4183 = vld [vmem:[%s4176 + $0x30] sm:$0xff]
        %v4184 = vld [vmem:[%s4176 + $0x38] sm:$0xff]
        %v4185 = vld [vmem:[%s4176 + $0x40] sm:$0xff]
        %v4186 = vld [vmem:[%s4176 + $0x48] sm:$0xff]
        %v4187 = vld [vmem:[%s4176 + $0x50] sm:$0xff]
        %v4188 = vld [vmem:[%s4176 + $0x58] sm:$0xff]
        %v4189 = vld [vmem:[%s4176 + $0x60] sm:$0xff]
        %v4190 = vld [vmem:[%s4176 + $0x68] sm:$0xff]
        %v4191 = vld [vmem:[%s4176 + $0x70] sm:$0xff]
        %v4192 = vld [vmem:[%s4176 + $0x78] sm:$0xff]
        %v4193 = vld [vmem:[%s4176 + $0x80] sm:$0xff]
        %v4194 = vld [vmem:[%s4176 + $0x88] sm:$0xff]
        %v4195 = vld [vmem:[%s4176 + $0x90] sm:$0xff]
        %v4196 = vld [vmem:[%s4176 + $0x98] sm:$0xff]
        %v4197 = vld [vmem:[%s4176 + $0xa0] sm:$0xff]
        %v4198 = vld [vmem:[%s4176 + $0xa8] sm:$0xff]
        %v4199 = vld [vmem:[%s4176 + $0xb0] sm:$0xff]
        %v4200 = vld [vmem:[%s4176 + $0xb8] sm:$0xff]
        %v4201 = vld [vmem:[%s4176 + $0xc0] sm:$0xff]
        %v4202 = vld [vmem:[%s4176 + $0xc8] sm:$0xff]
        %v4203 = vld [vmem:[%s4176 + $0xd0] sm:$0xff]
        %v4204 = vld [vmem:[%s4176 + $0xd8] sm:$0xff]
        %v4205 = vld [vmem:[%s4176 + $0xe0] sm:$0xff]
        %v4206 = vld [vmem:[%s4176 + $0xe8] sm:$0xff]
        %v4208 = vsel %vm3445, %v4163, 0
        %v4211 = vsel %vm3445, %v4168, 0
        %v4214 = vsel %vm3445, %v4173, 0
        %4216 = vmatprep.subr.mxu0 0.0
        %4217 = vmatpush1.msra.mxu0 0.0
        %4218 = vmatprep.subr.mxu0 0.0
        %4219 = vmatpush1.msra.mxu0 0.0
        %4220 = vmatprep.subr.mxu0 0.0
        %4221 = vmatpush1.msra.mxu0 0.0
        %4222 = vmatprep.subr.mxu0 0.0
        %4223 = vmatpush1.msra.mxu0 0.0
        %4224 = vmatprep.subr.mxu0 0.0
        %4225 = vmatpush1.msra.mxu0 0.0
        %4226 = vmatprep.subr.mxu0 0.0
        %4227 = vmatpush1.msra.mxu0 0.0
        %4228 = vmatprep.subr.mxu0 %v4205
        %4229 = vmatpush1.msra.mxu0 %v4204
        %4230 = vmatprep.subr.mxu0 %v4202
        %4231 = vmatpush1.msra.mxu0 %v4201
        %4232 = vmatprep.subr.mxu0 %v4199
        %4233 = vmatpush1.msra.mxu0 %v4198
        %4234 = vmatprep.subr.mxu0 %v4196
        %4235 = vmatpush1.msra.mxu0 %v4195
        %4236 = vmatprep.subr.mxu0 %v4193
        %4237 = vmatpush1.msra.mxu0 %v4192
        %4238 = vmatprep.subr.mxu0 %v4190
        %4239 = vmatpush1.msra.mxu0 %v4189
        %4240 = vmatprep.subr.mxu0 %v4187
        %4241 = vmatpush1.msra.mxu0 %v4186
        %4242 = vmatprep.subr.mxu0 %v4184
        %4243 = vmatpush1.msra.mxu0 %v4183
        %4244 = vmatprep.subr.mxu0 %v4181
        %4245 = vmatpush1.msra.mxu0 %v4180
        %4246 = vmatprep.subr.mxu0 %v4178
        %4247 = vmatpush1.msra.mxu0 %v4177
        %4248 = vmatprep.subr.mxu0 0.0
        %4249 = vmatpush2.msra.mxu0 0.0
        %4250 = vmatprep.subr.mxu0 0.0
        %4251 = vmatpush2.msra.mxu0 0.0
        %4252 = vmatprep.subr.mxu0 0.0
        %4253 = vmatpush2.msra.mxu0 0.0
        %4254 = vmatprep.subr.mxu0 0.0
        %4255 = vmatpush2.msra.mxu0 0.0
        %4256 = vmatprep.subr.mxu0 0.0
        %4257 = vmatpush2.msra.mxu0 0.0
        %4258 = vmatprep.subr.mxu0 0.0
        %4259 = vmatpush2.msra.mxu0 0.0
        %4260 = vmatprep.subr.mxu0 0.0
        %4261 = vmatpush2.msra.mxu0 0.0
        %4262 = vmatprep.subr.mxu0 0.0
        %4263 = vmatpush2.msra.mxu0 0.0
        %4264 = vmatprep.subr.mxu0 0.0
        %4265 = vmatpush2.msra.mxu0 0.0
        %4266 = vmatprep.subr.mxu0 0.0
        %4267 = vmatpush2.msra.mxu0 0.0
        %4268 = vmatprep.subr.mxu0 0.0
        %4269 = vmatpush2.msra.mxu0 0.0
        %4270 = vmatprep.subr.mxu0 0.0
        %4271 = vmatpush2.msra.mxu0 0.0
        %4272 = vmatprep.subr.mxu0 0.0
        %4273 = vmatpush2.msra.mxu0 0.0
        %4274 = vmatprep.subr.mxu0 0.0
        %4275 = vmatpush2.msra.mxu0 0.0
        %4276 = vmatprep.subr.mxu0 0.0
        %4277 = vmatpush2.msra.mxu0 0.0
        %4278 = vmatprep.subr.mxu0 0.0
        %4279 = vmatpush2.msra.mxu0 0.0
        %4280 = vmatprep.mubr.f32.mxu0 0.0
        %4281 = vmatmul.mubr.f32.gmra.mxu0 %v4208
        %v4282 = vpop.f32.mrf.mxu0
        %v4283 = vadd.f32 0.0, %v4282
        %v4284 = vpop.f32.mrf.mxu0
        %v4285 = vadd.f32 0.0, %v4284
        %4286 = vmatprep.mubr.f32.mxu0 0.0
        %4287 = vmatmul.mubr.f32.gmra.mxu0 %v4211
        %v4288 = vpop.f32.mrf.mxu0
        %v4289 = vadd.f32 0.0, %v4288
        %v4290 = vpop.f32.mrf.mxu0
        %v4291 = vadd.f32 0.0, %v4290
        %4292 = vmatprep.mubr.f32.mxu0 0.0
        %4293 = vmatmul.mubr.f32.gmra.mxu0 %v4214
        %v4294 = vpop.f32.mrf.mxu0
        %v4295 = vadd.f32 0.0, %v4294
        %v4296 = vpop.f32.mrf.mxu0
        %v4297 = vadd.f32 0.0, %v4296
        %4298 = vdwg.mxu0
        %4299 = vmatprep.subr.mxu0 0.0
        %4300 = vmatpush1.msra.mxu0 0.0
        %4301 = vmatprep.subr.mxu0 0.0
        %4302 = vmatpush1.msra.mxu0 0.0
        %4303 = vmatprep.subr.mxu0 0.0
        %4304 = vmatpush1.msra.mxu0 0.0
        %4305 = vmatprep.subr.mxu0 0.0
        %4306 = vmatpush1.msra.mxu0 0.0
        %4307 = vmatprep.subr.mxu0 0.0
        %4308 = vmatpush1.msra.mxu0 0.0
        %4309 = vmatprep.subr.mxu0 0.0
        %4310 = vmatpush1.msra.mxu0 0.0
        %4311 = vmatprep.subr.mxu0 0.0
        %4312 = vmatpush1.msra.mxu0 %v4206
        %4313 = vmatprep.subr.mxu0 0.0
        %4314 = vmatpush1.msra.mxu0 %v4203
        %4315 = vmatprep.subr.mxu0 0.0
        %4316 = vmatpush1.msra.mxu0 %v4200
        %4317 = vmatprep.subr.mxu0 0.0
        %4318 = vmatpush1.msra.mxu0 %v4197
        %4319 = vmatprep.subr.mxu0 0.0
        %4320 = vmatpush1.msra.mxu0 %v4194
        %4321 = vmatprep.subr.mxu0 0.0
        %4322 = vmatpush1.msra.mxu0 %v4191
        %4323 = vmatprep.subr.mxu0 0.0
        %4324 = vmatpush1.msra.mxu0 %v4188
        %4325 = vmatprep.subr.mxu0 0.0
        %4326 = vmatpush1.msra.mxu0 %v4185
        %4327 = vmatprep.subr.mxu0 0.0
        %4328 = vmatpush1.msra.mxu0 %v4182
        %4329 = vmatprep.subr.mxu0 0.0
        %4330 = vmatpush1.msra.mxu0 %v4179
        %4331 = vmatprep.subr.mxu0 0.0
        %4332 = vmatpush2.msra.mxu0 0.0
        %4333 = vmatprep.subr.mxu0 0.0
        %4334 = vmatpush2.msra.mxu0 0.0
        %4335 = vmatprep.subr.mxu0 0.0
        %4336 = vmatpush2.msra.mxu0 0.0
        %4337 = vmatprep.subr.mxu0 0.0
        %4338 = vmatpush2.msra.mxu0 0.0
        %4339 = vmatprep.subr.mxu0 0.0
        %4340 = vmatpush2.msra.mxu0 0.0
        %4341 = vmatprep.subr.mxu0 0.0
        %4342 = vmatpush2.msra.mxu0 0.0
        %4343 = vmatprep.subr.mxu0 0.0
        %4344 = vmatpush2.msra.mxu0 0.0
        %4345 = vmatprep.subr.mxu0 0.0
        %4346 = vmatpush2.msra.mxu0 0.0
        %4347 = vmatprep.subr.mxu0 0.0
        %4348 = vmatpush2.msra.mxu0 0.0
        %4349 = vmatprep.subr.mxu0 0.0
        %4350 = vmatpush2.msra.mxu0 0.0
        %4351 = vmatprep.subr.mxu0 0.0
        %4352 = vmatpush2.msra.mxu0 0.0
        %4353 = vmatprep.subr.mxu0 0.0
        %4354 = vmatpush2.msra.mxu0 0.0
        %4355 = vmatprep.subr.mxu0 0.0
        %4356 = vmatpush2.msra.mxu0 0.0
        %4357 = vmatprep.subr.mxu0 0.0
        %4358 = vmatpush2.msra.mxu0 0.0
        %4359 = vmatprep.subr.mxu0 0.0
        %4360 = vmatpush2.msra.mxu0 0.0
        %4361 = vmatprep.subr.mxu0 0.0
        %4362 = vmatpush2.msra.mxu0 0.0
        %4363 = vmatprep.mubr.f32.mxu0 0.0
        %4364 = vmatmul.mubr.f32.gmra.mxu0 %v4208
        %v4365 = vpop.f32.mrf.mxu0
        %v4366 = vadd.f32 0.0, %v4365
        %v4367 = vpop.f32.mrf.mxu0
        %4368 = vmatprep.mubr.f32.mxu0 0.0
        %4369 = vmatmul.mubr.f32.gmra.mxu0 %v4211
        %v4370 = vpop.f32.mrf.mxu0
        %v4371 = vadd.f32 0.0, %v4370
        %v4372 = vpop.f32.mrf.mxu0
        %4373 = vmatprep.mubr.f32.mxu0 0.0
        %4374 = vmatmul.mubr.f32.gmra.mxu0 %v4214
        %v4375 = vpop.f32.mrf.mxu0
        %v4376 = vadd.f32 0.0, %v4375
        %v4377 = vpop.f32.mrf.mxu0
        %4378 = vdwg.mxu0
        %v4379 = vadd.f32 %v4080, %v4283
        %v4380 = vadd.f32 %v4081, %v4285
        %v4381 = vadd.f32 %v4082, %v4366
        %v4382 = vadd.f32 %v4083, %v4289
        %v4383 = vadd.f32 %v4084, %v4291
        %v4384 = vadd.f32 %v4085, %v4371
        %v4385 = vadd.f32 %v4086, %v4295
        %v4386 = vadd.f32 %v4087, %v4297
        %v4387 = vadd.f32 %v4088, %v4376
        %v4389 = vsel %vm3203, %v855, 0
        %v4392 = vsel %vm3203, %v856, 0
        %v4395 = vsel %vm3203, %v857, 0
        %4397 = vmatprep.subr.mxu0 0.0
        %4398 = vmatpush1.msra.mxu0 0.0
        %4399 = vmatprep.subr.mxu0 0.0
        %4400 = vmatpush1.msra.mxu0 0.0
        %4401 = vmatprep.subr.mxu0 0.0
        %4402 = vmatpush1.msra.mxu0 0.0
        %4403 = vmatprep.subr.mxu0 0.0
        %4404 = vmatpush1.msra.mxu0 0.0
        %4405 = vmatprep.subr.mxu0 0.0
        %4406 = vmatpush1.msra.mxu0 0.0
        %4407 = vmatprep.subr.mxu0 0.0
        %4408 = vmatpush1.msra.mxu0 0.0
        %4409 = vmatprep.subr.mxu0 0.0
        %4410 = vmatpush1.msra.mxu0 0.0
        %4411 = vmatprep.subr.mxu0 0.0
        %4412 = vmatpush1.msra.mxu0 0.0
        %4413 = vmatprep.subr.mxu0 0.0
        %4414 = vmatpush1.msra.mxu0 0.0
        %4415 = vmatprep.subr.mxu0 0.0
        %4416 = vmatpush1.msra.mxu0 0.0
        %4417 = vmatprep.subr.mxu0 0.0
        %4418 = vmatpush1.msra.mxu0 0.0
        %4419 = vmatprep.subr.mxu0 0.0
        %4420 = vmatpush1.msra.mxu0 0.0
        %4421 = vmatprep.subr.mxu0 0.0
        %4422 = vmatpush1.msra.mxu0 0.0
        %4423 = vmatprep.subr.mxu0 0.0
        %4424 = vmatpush1.msra.mxu0 0.0
        %4425 = vmatprep.subr.mxu0 0.0
        %4426 = vmatpush1.msra.mxu0 %v3215
        %4427 = vmatprep.subr.mxu0 0.0
        %4428 = vmatpush1.msra.mxu0 %v3201
        %4429 = vmatprep.subr.mxu0 0.0
        %4430 = vmatpush2.msra.mxu0 0.0
        %4431 = vmatprep.subr.mxu0 0.0
        %4432 = vmatpush2.msra.mxu0 0.0
        %4433 = vmatprep.subr.mxu0 0.0
        %4434 = vmatpush2.msra.mxu0 0.0
        %4435 = vmatprep.subr.mxu0 0.0
        %4436 = vmatpush2.msra.mxu0 0.0
        %4437 = vmatprep.subr.mxu0 0.0
        %4438 = vmatpush2.msra.mxu0 0.0
        %4439 = vmatprep.subr.mxu0 0.0
        %4440 = vmatpush2.msra.mxu0 0.0
        %4441 = vmatprep.subr.mxu0 0.0
        %4442 = vmatpush2.msra.mxu0 0.0
        %4443 = vmatprep.subr.mxu0 0.0
        %4444 = vmatpush2.msra.mxu0 0.0
        %4445 = vmatprep.subr.mxu0 0.0
        %4446 = vmatpush2.msra.mxu0 0.0
        %4447 = vmatprep.subr.mxu0 0.0
        %4448 = vmatpush2.msra.mxu0 0.0
        %4449 = vmatprep.subr.mxu0 0.0
        %4450 = vmatpush2.msra.mxu0 0.0
        %4451 = vmatprep.subr.mxu0 0.0
        %4452 = vmatpush2.msra.mxu0 0.0
        %4453 = vmatprep.subr.mxu0 0.0
        %4454 = vmatpush2.msra.mxu0 0.0
        %4455 = vmatprep.subr.mxu0 0.0
        %4456 = vmatpush2.msra.mxu0 0.0
        %4457 = vmatprep.subr.mxu0 0.0
        %4458 = vmatpush2.msra.mxu0 0.0
        %4459 = vmatprep.subr.mxu0 0.0
        %4460 = vmatpush2.msra.mxu0 0.0
        %4461 = vmatprep.mubr.f32.mxu0 0.0
        %4462 = vmatmul.mubr.f32.gmra.mxu0 %v4389
        %v4463 = vpop.f32.mrf.mxu0
        %v4464 = vadd.f32 0.0, %v4463
        %v4465 = vpop.f32.mrf.mxu0
        %4466 = vmatprep.mubr.f32.mxu0 0.0
        %4467 = vmatmul.mubr.f32.gmra.mxu0 %v4392
        %v4468 = vpop.f32.mrf.mxu0
        %v4469 = vadd.f32 0.0, %v4468
        %v4470 = vpop.f32.mrf.mxu0
        %4471 = vmatprep.mubr.f32.mxu0 0.0
        %4472 = vmatmul.mubr.f32.gmra.mxu0 %v4395
        %v4473 = vpop.f32.mrf.mxu0
        %v4474 = vadd.f32 0.0, %v4473
        %v4475 = vpop.f32.mrf.mxu0
        %4476 = vdwg.mxu0
        %s4477 = scalar_lea.vmem %s728, 960
        %v4478 = vld [vmem:[%s4477] sm:$0xff]
        %v4479 = vld [vmem:[%s4477 + $0x8] sm:$0xff]
        %v4480 = vld [vmem:[%s4477 + $0x10] sm:$0xff]
        %v4481 = vld [vmem:[%s4477 + $0x18] sm:$0xff]
        %v4482 = vld [vmem:[%s4477 + $0x20] sm:$0xff]
        %v4483 = vld [vmem:[%s4477 + $0x28] sm:$0xff]
        %v4484 = vld [vmem:[%s4477 + $0x30] sm:$0xff]
        %v4485 = vld [vmem:[%s4477 + $0x38] sm:$0xff]
        %v4486 = vld [vmem:[%s4477 + $0x40] sm:$0xff]
        %v4487 = vld [vmem:[%s4477 + $0x48] sm:$0xff]
        %v4488 = vld [vmem:[%s4477 + $0x50] sm:$0xff]
        %v4489 = vld [vmem:[%s4477 + $0x58] sm:$0xff]
        %v4490 = vld [vmem:[%s4477 + $0x60] sm:$0xff]
        %v4491 = vld [vmem:[%s4477 + $0x68] sm:$0xff]
        %v4492 = vld [vmem:[%s4477 + $0x70] sm:$0xff]
        %v4493 = vld [vmem:[%s4477 + $0x78] sm:$0xff]
        %v4494 = vld [vmem:[%s4477 + $0x80] sm:$0xff]
        %v4495 = vld [vmem:[%s4477 + $0x88] sm:$0xff]
        %v4496 = vld [vmem:[%s4477 + $0x90] sm:$0xff]
        %v4497 = vld [vmem:[%s4477 + $0x98] sm:$0xff]
        %v4498 = vld [vmem:[%s4477 + $0xa0] sm:$0xff]
        %v4499 = vld [vmem:[%s4477 + $0xa8] sm:$0xff]
        %v4500 = vld [vmem:[%s4477 + $0xb0] sm:$0xff]
        %v4501 = vld [vmem:[%s4477 + $0xb8] sm:$0xff]
        %v4502 = vld [vmem:[%s4477 + $0xc0] sm:$0xff]
        %v4503 = vld [vmem:[%s4477 + $0xc8] sm:$0xff]
        %v4504 = vld [vmem:[%s4477 + $0xd0] sm:$0xff]
        %v4505 = vld [vmem:[%s4477 + $0xd8] sm:$0xff]
        %v4506 = vld [vmem:[%s4477 + $0xe0] sm:$0xff]
        %v4507 = vld [vmem:[%s4477 + $0xe8] sm:$0xff]
        %v4509 = vsel %vm3445, %v4464, 0
        %v4512 = vsel %vm3445, %v4469, 0
        %v4515 = vsel %vm3445, %v4474, 0
        %4517 = vmatprep.subr.mxu0 0.0
        %4518 = vmatpush1.msra.mxu0 0.0
        %4519 = vmatprep.subr.mxu0 0.0
        %4520 = vmatpush1.msra.mxu0 0.0
        %4521 = vmatprep.subr.mxu0 0.0
        %4522 = vmatpush1.msra.mxu0 0.0
        %4523 = vmatprep.subr.mxu0 0.0
        %4524 = vmatpush1.msra.mxu0 0.0
        %4525 = vmatprep.subr.mxu0 0.0
        %4526 = vmatpush1.msra.mxu0 0.0
        %4527 = vmatprep.subr.mxu0 0.0
        %4528 = vmatpush1.msra.mxu0 0.0
        %4529 = vmatprep.subr.mxu0 %v4506
        %4530 = vmatpush1.msra.mxu0 %v4505
        %4531 = vmatprep.subr.mxu0 %v4503
        %4532 = vmatpush1.msra.mxu0 %v4502
        %4533 = vmatprep.subr.mxu0 %v4500
        %4534 = vmatpush1.msra.mxu0 %v4499
        %4535 = vmatprep.subr.mxu0 %v4497
        %4536 = vmatpush1.msra.mxu0 %v4496
        %4537 = vmatprep.subr.mxu0 %v4494
        %4538 = vmatpush1.msra.mxu0 %v4493
        %4539 = vmatprep.subr.mxu0 %v4491
        %4540 = vmatpush1.msra.mxu0 %v4490
        %4541 = vmatprep.subr.mxu0 %v4488
        %4542 = vmatpush1.msra.mxu0 %v4487
        %4543 = vmatprep.subr.mxu0 %v4485
        %4544 = vmatpush1.msra.mxu0 %v4484
        %4545 = vmatprep.subr.mxu0 %v4482
        %4546 = vmatpush1.msra.mxu0 %v4481
        %4547 = vmatprep.subr.mxu0 %v4479
        %4548 = vmatpush1.msra.mxu0 %v4478
        %4549 = vmatprep.subr.mxu0 0.0
        %4550 = vmatpush2.msra.mxu0 0.0
        %4551 = vmatprep.subr.mxu0 0.0
        %4552 = vmatpush2.msra.mxu0 0.0
        %4553 = vmatprep.subr.mxu0 0.0
        %4554 = vmatpush2.msra.mxu0 0.0
        %4555 = vmatprep.subr.mxu0 0.0
        %4556 = vmatpush2.msra.mxu0 0.0
        %4557 = vmatprep.subr.mxu0 0.0
        %4558 = vmatpush2.msra.mxu0 0.0
        %4559 = vmatprep.subr.mxu0 0.0
        %4560 = vmatpush2.msra.mxu0 0.0
        %4561 = vmatprep.subr.mxu0 0.0
        %4562 = vmatpush2.msra.mxu0 0.0
        %4563 = vmatprep.subr.mxu0 0.0
        %4564 = vmatpush2.msra.mxu0 0.0
        %4565 = vmatprep.subr.mxu0 0.0
        %4566 = vmatpush2.msra.mxu0 0.0
        %4567 = vmatprep.subr.mxu0 0.0
        %4568 = vmatpush2.msra.mxu0 0.0
        %4569 = vmatprep.subr.mxu0 0.0
        %4570 = vmatpush2.msra.mxu0 0.0
        %4571 = vmatprep.subr.mxu0 0.0
        %4572 = vmatpush2.msra.mxu0 0.0
        %4573 = vmatprep.subr.mxu0 0.0
        %4574 = vmatpush2.msra.mxu0 0.0
        %4575 = vmatprep.subr.mxu0 0.0
        %4576 = vmatpush2.msra.mxu0 0.0
        %4577 = vmatprep.subr.mxu0 0.0
        %4578 = vmatpush2.msra.mxu0 0.0
        %4579 = vmatprep.subr.mxu0 0.0
        %4580 = vmatpush2.msra.mxu0 0.0
        %4581 = vmatprep.mubr.f32.mxu0 0.0
        %4582 = vmatmul.mubr.f32.gmra.mxu0 %v4509
        %v4583 = vpop.f32.mrf.mxu0
        %v4584 = vadd.f32 0.0, %v4583
        %v4585 = vpop.f32.mrf.mxu0
        %v4586 = vadd.f32 0.0, %v4585
        %4587 = vmatprep.mubr.f32.mxu0 0.0
        %4588 = vmatmul.mubr.f32.gmra.mxu0 %v4512
        %v4589 = vpop.f32.mrf.mxu0
        %v4590 = vadd.f32 0.0, %v4589
        %v4591 = vpop.f32.mrf.mxu0
        %v4592 = vadd.f32 0.0, %v4591
        %4593 = vmatprep.mubr.f32.mxu0 0.0
        %4594 = vmatmul.mubr.f32.gmra.mxu0 %v4515
        %v4595 = vpop.f32.mrf.mxu0
        %v4596 = vadd.f32 0.0, %v4595
        %v4597 = vpop.f32.mrf.mxu0
        %v4598 = vadd.f32 0.0, %v4597
        %4599 = vdwg.mxu0
        %4600 = vmatprep.subr.mxu0 0.0
        %4601 = vmatpush1.msra.mxu0 0.0
        %4602 = vmatprep.subr.mxu0 0.0
        %4603 = vmatpush1.msra.mxu0 0.0
        %4604 = vmatprep.subr.mxu0 0.0
        %4605 = vmatpush1.msra.mxu0 0.0
        %4606 = vmatprep.subr.mxu0 0.0
        %4607 = vmatpush1.msra.mxu0 0.0
        %4608 = vmatprep.subr.mxu0 0.0
        %4609 = vmatpush1.msra.mxu0 0.0
        %4610 = vmatprep.subr.mxu0 0.0
        %4611 = vmatpush1.msra.mxu0 0.0
        %4612 = vmatprep.subr.mxu0 0.0
        %4613 = vmatpush1.msra.mxu0 %v4507
        %4614 = vmatprep.subr.mxu0 0.0
        %4615 = vmatpush1.msra.mxu0 %v4504
        %4616 = vmatprep.subr.mxu0 0.0
        %4617 = vmatpush1.msra.mxu0 %v4501
        %4618 = vmatprep.subr.mxu0 0.0
        %4619 = vmatpush1.msra.mxu0 %v4498
        %4620 = vmatprep.subr.mxu0 0.0
        %4621 = vmatpush1.msra.mxu0 %v4495
        %4622 = vmatprep.subr.mxu0 0.0
        %4623 = vmatpush1.msra.mxu0 %v4492
        %4624 = vmatprep.subr.mxu0 0.0
        %4625 = vmatpush1.msra.mxu0 %v4489
        %4626 = vmatprep.subr.mxu0 0.0
        %4627 = vmatpush1.msra.mxu0 %v4486
        %4628 = vmatprep.subr.mxu0 0.0
        %4629 = vmatpush1.msra.mxu0 %v4483
        %4630 = vmatprep.subr.mxu0 0.0
        %4631 = vmatpush1.msra.mxu0 %v4480
        %4632 = vmatprep.subr.mxu0 0.0
        %4633 = vmatpush2.msra.mxu0 0.0
        %4634 = vmatprep.subr.mxu0 0.0
        %4635 = vmatpush2.msra.mxu0 0.0
        %4636 = vmatprep.subr.mxu0 0.0
        %4637 = vmatpush2.msra.mxu0 0.0
        %4638 = vmatprep.subr.mxu0 0.0
        %4639 = vmatpush2.msra.mxu0 0.0
        %4640 = vmatprep.subr.mxu0 0.0
        %4641 = vmatpush2.msra.mxu0 0.0
        %4642 = vmatprep.subr.mxu0 0.0
        %4643 = vmatpush2.msra.mxu0 0.0
        %4644 = vmatprep.subr.mxu0 0.0
        %4645 = vmatpush2.msra.mxu0 0.0
        %4646 = vmatprep.subr.mxu0 0.0
        %4647 = vmatpush2.msra.mxu0 0.0
        %4648 = vmatprep.subr.mxu0 0.0
        %4649 = vmatpush2.msra.mxu0 0.0
        %4650 = vmatprep.subr.mxu0 0.0
        %4651 = vmatpush2.msra.mxu0 0.0
        %4652 = vmatprep.subr.mxu0 0.0
        %4653 = vmatpush2.msra.mxu0 0.0
        %4654 = vmatprep.subr.mxu0 0.0
        %4655 = vmatpush2.msra.mxu0 0.0
        %4656 = vmatprep.subr.mxu0 0.0
        %4657 = vmatpush2.msra.mxu0 0.0
        %4658 = vmatprep.subr.mxu0 0.0
        %4659 = vmatpush2.msra.mxu0 0.0
        %4660 = vmatprep.subr.mxu0 0.0
        %4661 = vmatpush2.msra.mxu0 0.0
        %4662 = vmatprep.subr.mxu0 0.0
        %4663 = vmatpush2.msra.mxu0 0.0
        %4664 = vmatprep.mubr.f32.mxu0 0.0
        %4665 = vmatmul.mubr.f32.gmra.mxu0 %v4509
        %v4666 = vpop.f32.mrf.mxu0
        %v4667 = vadd.f32 0.0, %v4666
        %v4668 = vpop.f32.mrf.mxu0
        %4669 = vmatprep.mubr.f32.mxu0 0.0
        %4670 = vmatmul.mubr.f32.gmra.mxu0 %v4512
        %v4671 = vpop.f32.mrf.mxu0
        %v4672 = vadd.f32 0.0, %v4671
        %v4673 = vpop.f32.mrf.mxu0
        %4674 = vmatprep.mubr.f32.mxu0 0.0
        %4675 = vmatmul.mubr.f32.gmra.mxu0 %v4515
        %v4676 = vpop.f32.mrf.mxu0
        %v4677 = vadd.f32 0.0, %v4676
        %v4678 = vpop.f32.mrf.mxu0
        %4679 = vdwg.mxu0
        %v4680 = vadd.f32 %v4379, %v4584
        %v4681 = vadd.f32 %v4380, %v4586
        %v4682 = vadd.f32 %v4381, %v4667
        %v4683 = vadd.f32 %v4382, %v4590
        %v4684 = vadd.f32 %v4383, %v4592
        %v4685 = vadd.f32 %v4384, %v4672
        %v4686 = vadd.f32 %v4385, %v4596
        %v4687 = vadd.f32 %v4386, %v4598
        %v4688 = vadd.f32 %v4387, %v4677
        %v4689 = vld [vmem:[%s732] sm:$0x7]
        %v4691 = vlaneseq
        %v4692 = vshrl.u32 %v4691, 7
        %v4693 = vsub.s32 0, %v4692
        %v4694 = vrot.slane %v4689, %v4693
        %v4695 = vlaneseq
        %v4696 = vshrl.u32 %v4695, 7
        %v4697 = vsub.s32 1, %v4696
        %v4698 = vrot.slane %v4689, %v4697
        %v4699 = vlaneseq
        %v4700 = vshrl.u32 %v4699, 7
        %v4701 = vsub.s32 2, %v4700
        %v4702 = vrot.slane %v4689, %v4701
        %v4706 = vadd.f32 %v4680, %v4694
        %v4707 = vadd.f32 %v4681, %v4698
        %v4708 = vadd.f32 %v4682, %v4702
        %v4709 = vadd.f32 %v4683, %v4694
        %v4710 = vadd.f32 %v4684, %v4698
        %v4711 = vadd.f32 %v4685, %v4702
        %v4712 = vadd.f32 %v4686, %v4694
        %v4713 = vadd.f32 %v4687, %v4698
        %v4714 = vadd.f32 %v4688, %v4702
        %v4715 = vmax.f32 %v4706, 0.0
        %v4716 = vmax.f32 %v4707, 0.0
        %v4717 = vmax.f32 %v4708, 0.0
        %v4718 = vmax.f32 %v4709, 0.0
        %v4719 = vmax.f32 %v4710, 0.0
        %v4720 = vmax.f32 %v4711, 0.0
        %v4721 = vmax.f32 %v4712, 0.0
        %v4722 = vmax.f32 %v4713, 0.0
        %v4723 = vmax.f32 %v4714, 0.0
        %vm4724 = vcmask 146432
        %v4726 = vsel %vm4724, %v864, 0
        %v4729 = vsel %vm4724, %v865, 0
        %v4732 = vsel %vm4724, %v866, 0
        %v4735 = vsel %vm3213, %v4721, 0
        %v4738 = vsel %vm3213, %v4722, 0
        %v4741 = vsel %vm3213, %v4723, 0
        %4743 = vmatprep.subr.mxu0 0.0
        %4744 = vmatpush1.msra.mxu0 0.0
        %4745 = vmatprep.subr.mxu0 0.0
        %4746 = vmatpush1.msra.mxu0 0.0
        %4747 = vmatprep.subr.mxu0 0.0
        %4748 = vmatpush1.msra.mxu0 0.0
        %4749 = vmatprep.subr.mxu0 0.0
        %4750 = vmatpush1.msra.mxu0 0.0
        %4751 = vmatprep.subr.mxu0 0.0
        %4752 = vmatpush1.msra.mxu0 0.0
        %4753 = vmatprep.subr.mxu0 0.0
        %4754 = vmatpush1.msra.mxu0 0.0
        %4755 = vmatprep.subr.mxu0 0.0
        %4756 = vmatpush1.msra.mxu0 0.0
        %4757 = vmatprep.subr.mxu0 0.0
        %4758 = vmatpush1.msra.mxu0 0.0
        %4759 = vmatprep.subr.mxu0 0.0
        %4760 = vmatpush1.msra.mxu0 0.0
        %4761 = vmatprep.subr.mxu0 0.0
        %4762 = vmatpush1.msra.mxu0 0.0
        %4763 = vmatprep.subr.mxu0 0.0
        %4764 = vmatpush1.msra.mxu0 0.0
        %4765 = vmatprep.subr.mxu0 0.0
        %4766 = vmatpush1.msra.mxu0 0.0
        %4767 = vmatprep.subr.mxu0 0.0
        %4768 = vmatpush1.msra.mxu0 0.0
        %4769 = vmatprep.subr.mxu0 %v4738
        %4770 = vmatpush1.msra.mxu0 %v4735
        %4771 = vmatprep.subr.mxu0 %v4719
        %4772 = vmatpush1.msra.mxu0 %v4718
        %4773 = vmatprep.subr.mxu0 %v4716
        %4774 = vmatpush1.msra.mxu0 %v4715
        %4775 = vmatprep.subr.mxu0 0.0
        %4776 = vmatpush2.msra.mxu0 0.0
        %4777 = vmatprep.subr.mxu0 0.0
        %4778 = vmatpush2.msra.mxu0 0.0
        %4779 = vmatprep.subr.mxu0 0.0
        %4780 = vmatpush2.msra.mxu0 0.0
        %4781 = vmatprep.subr.mxu0 0.0
        %4782 = vmatpush2.msra.mxu0 0.0
        %4783 = vmatprep.subr.mxu0 0.0
        %4784 = vmatpush2.msra.mxu0 0.0
        %4785 = vmatprep.subr.mxu0 0.0
        %4786 = vmatpush2.msra.mxu0 0.0
        %4787 = vmatprep.subr.mxu0 0.0
        %4788 = vmatpush2.msra.mxu0 0.0
        %4789 = vmatprep.subr.mxu0 0.0
        %4790 = vmatpush2.msra.mxu0 0.0
        %4791 = vmatprep.subr.mxu0 0.0
        %4792 = vmatpush2.msra.mxu0 0.0
        %4793 = vmatprep.subr.mxu0 0.0
        %4794 = vmatpush2.msra.mxu0 0.0
        %4795 = vmatprep.subr.mxu0 0.0
        %4796 = vmatpush2.msra.mxu0 0.0
        %4797 = vmatprep.subr.mxu0 0.0
        %4798 = vmatpush2.msra.mxu0 0.0
        %4799 = vmatprep.subr.mxu0 0.0
        %4800 = vmatpush2.msra.mxu0 0.0
        %4801 = vmatprep.subr.mxu0 0.0
        %4802 = vmatpush2.msra.mxu0 0.0
        %4803 = vmatprep.subr.mxu0 0.0
        %4804 = vmatpush2.msra.mxu0 0.0
        %4805 = vmatprep.subr.mxu0 0.0
        %4806 = vmatpush2.msra.mxu0 0.0
        %4807 = vmatprep.mubr.f32.mxu0 0.0
        %4808 = vmatmul.mubr.f32.gmra.mxu0 %v4726
        %v4809 = vpop.f32.mrf.mxu0
        %v4810 = vadd.f32 0.0, %v4809
        %v4811 = vpop.f32.mrf.mxu0
        %v4812 = vadd.f32 0.0, %v4811
        %4813 = vmatprep.mubr.f32.mxu0 0.0
        %4814 = vmatmul.mubr.f32.gmra.mxu0 %v4729
        %v4815 = vpop.f32.mrf.mxu0
        %v4816 = vadd.f32 0.0, %v4815
        %v4817 = vpop.f32.mrf.mxu0
        %v4818 = vadd.f32 0.0, %v4817
        %4819 = vmatprep.mubr.f32.mxu0 0.0
        %4820 = vmatmul.mubr.f32.gmra.mxu0 %v4732
        %v4821 = vpop.f32.mrf.mxu0
        %v4822 = vadd.f32 0.0, %v4821
        %v4823 = vpop.f32.mrf.mxu0
        %v4824 = vadd.f32 0.0, %v4823
        %4825 = vdwg.mxu0
        %4826 = vmatprep.subr.mxu0 0.0
        %4827 = vmatpush1.msra.mxu0 0.0
        %4828 = vmatprep.subr.mxu0 0.0
        %4829 = vmatpush1.msra.mxu0 0.0
        %4830 = vmatprep.subr.mxu0 0.0
        %4831 = vmatpush1.msra.mxu0 0.0
        %4832 = vmatprep.subr.mxu0 0.0
        %4833 = vmatpush1.msra.mxu0 0.0
        %4834 = vmatprep.subr.mxu0 0.0
        %4835 = vmatpush1.msra.mxu0 0.0
        %4836 = vmatprep.subr.mxu0 0.0
        %4837 = vmatpush1.msra.mxu0 0.0
        %4838 = vmatprep.subr.mxu0 0.0
        %4839 = vmatpush1.msra.mxu0 0.0
        %4840 = vmatprep.subr.mxu0 0.0
        %4841 = vmatpush1.msra.mxu0 0.0
        %4842 = vmatprep.subr.mxu0 0.0
        %4843 = vmatpush1.msra.mxu0 0.0
        %4844 = vmatprep.subr.mxu0 0.0
        %4845 = vmatpush1.msra.mxu0 0.0
        %4846 = vmatprep.subr.mxu0 0.0
        %4847 = vmatpush1.msra.mxu0 0.0
        %4848 = vmatprep.subr.mxu0 0.0
        %4849 = vmatpush1.msra.mxu0 0.0
        %4850 = vmatprep.subr.mxu0 0.0
        %4851 = vmatpush1.msra.mxu0 0.0
        %4852 = vmatprep.subr.mxu0 0.0
        %4853 = vmatpush1.msra.mxu0 %v4741
        %4854 = vmatprep.subr.mxu0 0.0
        %4855 = vmatpush1.msra.mxu0 %v4720
        %4856 = vmatprep.subr.mxu0 0.0
        %4857 = vmatpush1.msra.mxu0 %v4717
        %4858 = vmatprep.subr.mxu0 0.0
        %4859 = vmatpush2.msra.mxu0 0.0
        %4860 = vmatprep.subr.mxu0 0.0
        %4861 = vmatpush2.msra.mxu0 0.0
        %4862 = vmatprep.subr.mxu0 0.0
        %4863 = vmatpush2.msra.mxu0 0.0
        %4864 = vmatprep.subr.mxu0 0.0
        %4865 = vmatpush2.msra.mxu0 0.0
        %4866 = vmatprep.subr.mxu0 0.0
        %4867 = vmatpush2.msra.mxu0 0.0
        %4868 = vmatprep.subr.mxu0 0.0
        %4869 = vmatpush2.msra.mxu0 0.0
        %4870 = vmatprep.subr.mxu0 0.0
        %4871 = vmatpush2.msra.mxu0 0.0
        %4872 = vmatprep.subr.mxu0 0.0
        %4873 = vmatpush2.msra.mxu0 0.0
        %4874 = vmatprep.subr.mxu0 0.0
        %4875 = vmatpush2.msra.mxu0 0.0
        %4876 = vmatprep.subr.mxu0 0.0
        %4877 = vmatpush2.msra.mxu0 0.0
        %4878 = vmatprep.subr.mxu0 0.0
        %4879 = vmatpush2.msra.mxu0 0.0
        %4880 = vmatprep.subr.mxu0 0.0
        %4881 = vmatpush2.msra.mxu0 0.0
        %4882 = vmatprep.subr.mxu0 0.0
        %4883 = vmatpush2.msra.mxu0 0.0
        %4884 = vmatprep.subr.mxu0 0.0
        %4885 = vmatpush2.msra.mxu0 0.0
        %4886 = vmatprep.subr.mxu0 0.0
        %4887 = vmatpush2.msra.mxu0 0.0
        %4888 = vmatprep.subr.mxu0 0.0
        %4889 = vmatpush2.msra.mxu0 0.0
        %4890 = vmatprep.mubr.f32.mxu0 0.0
        %4891 = vmatmul.mubr.f32.gmra.mxu0 %v4726
        %v4892 = vpop.f32.mrf.mxu0
        %v4893 = vadd.f32 0.0, %v4892
        %v4894 = vpop.f32.mrf.mxu0
        %4895 = vmatprep.mubr.f32.mxu0 0.0
        %4896 = vmatmul.mubr.f32.gmra.mxu0 %v4729
        %v4897 = vpop.f32.mrf.mxu0
        %v4898 = vadd.f32 0.0, %v4897
        %v4899 = vpop.f32.mrf.mxu0
        %4900 = vmatprep.mubr.f32.mxu0 0.0
        %4901 = vmatmul.mubr.f32.gmra.mxu0 %v4732
        %v4902 = vpop.f32.mrf.mxu0
        %v4903 = vadd.f32 0.0, %v4902
        %v4904 = vpop.f32.mrf.mxu0
        %4905 = vdwg.mxu0
        %v4906 = vld [vmem:[%s737] sm:$0xff]
        %v4907 = vld [vmem:[%s737 + $0x8] sm:$0xff]
        %v4908 = vld [vmem:[%s737 + $0x10] sm:$0xff]
        %v4909 = vld [vmem:[%s737 + $0x18] sm:$0xff]
        %v4910 = vld [vmem:[%s737 + $0x20] sm:$0xff]
        %v4911 = vld [vmem:[%s737 + $0x28] sm:$0xff]
        %v4912 = vld [vmem:[%s737 + $0x30] sm:$0xff]
        %v4913 = vld [vmem:[%s737 + $0x38] sm:$0xff]
        %v4914 = vld [vmem:[%s737 + $0x40] sm:$0xff]
        %v4915 = vld [vmem:[%s737 + $0x48] sm:$0xff]
        %v4916 = vld [vmem:[%s737 + $0x50] sm:$0xff]
        %v4917 = vld [vmem:[%s737 + $0x58] sm:$0xff]
        %v4918 = vld [vmem:[%s737 + $0x60] sm:$0xff]
        %v4919 = vld [vmem:[%s737 + $0x68] sm:$0xff]
        %v4920 = vld [vmem:[%s737 + $0x70] sm:$0xff]
        %v4921 = vld [vmem:[%s737 + $0x78] sm:$0xff]
        %v4922 = vld [vmem:[%s737 + $0x80] sm:$0xff]
        %v4923 = vld [vmem:[%s737 + $0x88] sm:$0xff]
        %v4924 = vld [vmem:[%s737 + $0x90] sm:$0xff]
        %v4925 = vld [vmem:[%s737 + $0x98] sm:$0xff]
        %v4926 = vld [vmem:[%s737 + $0xa0] sm:$0xff]
        %v4927 = vld [vmem:[%s737 + $0xa8] sm:$0xff]
        %v4928 = vld [vmem:[%s737 + $0xb0] sm:$0xff]
        %v4929 = vld [vmem:[%s737 + $0xb8] sm:$0xff]
        %v4930 = vld [vmem:[%s737 + $0xc0] sm:$0xff]
        %v4931 = vld [vmem:[%s737 + $0xc8] sm:$0xff]
        %v4932 = vld [vmem:[%s737 + $0xd0] sm:$0xff]
        %v4933 = vld [vmem:[%s737 + $0xd8] sm:$0xff]
        %v4934 = vld [vmem:[%s737 + $0xe0] sm:$0xff]
        %v4935 = vld [vmem:[%s737 + $0xe8] sm:$0xff]
        %v4936 = vld [vmem:[%s737 + $0xf0] sm:$0xff]
        %v4937 = vld [vmem:[%s737 + $0xf8] sm:$0xff]
        %v4938 = vld [vmem:[%s737 + $0x100] sm:$0xff]
        %v4939 = vld [vmem:[%s737 + $0x108] sm:$0xff]
        %v4940 = vld [vmem:[%s737 + $0x110] sm:$0xff]
        %v4941 = vld [vmem:[%s737 + $0x118] sm:$0xff]
        %v4943 = vsel %vm4724, %v873, 0
        %v4946 = vsel %vm4724, %v874, 0
        %v4949 = vsel %vm4724, %v875, 0
        %4951 = vmatprep.subr.mxu0 0.0
        %4952 = vmatpush1.msra.mxu0 0.0
        %4953 = vmatprep.subr.mxu0 0.0
        %4954 = vmatpush1.msra.mxu0 0.0
        %4955 = vmatprep.subr.mxu0 0.0
        %4956 = vmatpush1.msra.mxu0 0.0
        %4957 = vmatprep.subr.mxu0 0.0
        %4958 = vmatpush1.msra.mxu0 0.0
        %4959 = vmatprep.subr.mxu0 0.0
        %4960 = vmatpush1.msra.mxu0 0.0
        %4961 = vmatprep.subr.mxu0 0.0
        %4962 = vmatpush1.msra.mxu0 0.0
        %4963 = vmatprep.subr.mxu0 0.0
        %4964 = vmatpush1.msra.mxu0 0.0
        %4965 = vmatprep.subr.mxu0 0.0
        %4966 = vmatpush1.msra.mxu0 0.0
        %4967 = vmatprep.subr.mxu0 0.0
        %4968 = vmatpush1.msra.mxu0 0.0
        %4969 = vmatprep.subr.mxu0 0.0
        %4970 = vmatpush1.msra.mxu0 0.0
        %4971 = vmatprep.subr.mxu0 0.0
        %4972 = vmatpush1.msra.mxu0 0.0
        %4973 = vmatprep.subr.mxu0 0.0
        %4974 = vmatpush1.msra.mxu0 0.0
        %4975 = vmatprep.subr.mxu0 0.0
        %4976 = vmatpush1.msra.mxu0 0.0
        %4977 = vmatprep.subr.mxu0 %v4738
        %4978 = vmatpush1.msra.mxu0 %v4735
        %4979 = vmatprep.subr.mxu0 %v4719
        %4980 = vmatpush1.msra.mxu0 %v4718
        %4981 = vmatprep.subr.mxu0 %v4716
        %4982 = vmatpush1.msra.mxu0 %v4715
        %4983 = vmatprep.subr.mxu0 0.0
        %4984 = vmatpush2.msra.mxu0 0.0
        %4985 = vmatprep.subr.mxu0 0.0
        %4986 = vmatpush2.msra.mxu0 0.0
        %4987 = vmatprep.subr.mxu0 0.0
        %4988 = vmatpush2.msra.mxu0 0.0
        %4989 = vmatprep.subr.mxu0 0.0
        %4990 = vmatpush2.msra.mxu0 0.0
        %4991 = vmatprep.subr.mxu0 0.0
        %4992 = vmatpush2.msra.mxu0 0.0
        %4993 = vmatprep.subr.mxu0 0.0
        %4994 = vmatpush2.msra.mxu0 0.0
        %4995 = vmatprep.subr.mxu0 0.0
        %4996 = vmatpush2.msra.mxu0 0.0
        %4997 = vmatprep.subr.mxu0 0.0
        %4998 = vmatpush2.msra.mxu0 0.0
        %4999 = vmatprep.subr.mxu0 0.0
        %5000 = vmatpush2.msra.mxu0 0.0
        %5001 = vmatprep.subr.mxu0 0.0
        %5002 = vmatpush2.msra.mxu0 0.0
        %5003 = vmatprep.subr.mxu0 0.0
        %5004 = vmatpush2.msra.mxu0 0.0
        %5005 = vmatprep.subr.mxu0 0.0
        %5006 = vmatpush2.msra.mxu0 0.0
        %5007 = vmatprep.subr.mxu0 0.0
        %5008 = vmatpush2.msra.mxu0 0.0
        %5009 = vmatprep.subr.mxu0 0.0
        %5010 = vmatpush2.msra.mxu0 0.0
        %5011 = vmatprep.subr.mxu0 0.0
        %5012 = vmatpush2.msra.mxu0 0.0
        %5013 = vmatprep.subr.mxu0 0.0
        %5014 = vmatpush2.msra.mxu0 0.0
        %5015 = vmatprep.mubr.f32.mxu0 0.0
        %5016 = vmatmul.mubr.f32.gmra.mxu0 %v4943
        %v5017 = vpop.f32.mrf.mxu0
        %v5018 = vadd.f32 0.0, %v5017
        %v5019 = vpop.f32.mrf.mxu0
        %v5020 = vadd.f32 0.0, %v5019
        %5021 = vmatprep.mubr.f32.mxu0 0.0
        %5022 = vmatmul.mubr.f32.gmra.mxu0 %v4946
        %v5023 = vpop.f32.mrf.mxu0
        %v5024 = vadd.f32 0.0, %v5023
        %v5025 = vpop.f32.mrf.mxu0
        %v5026 = vadd.f32 0.0, %v5025
        %5027 = vmatprep.mubr.f32.mxu0 0.0
        %5028 = vmatmul.mubr.f32.gmra.mxu0 %v4949
        %v5029 = vpop.f32.mrf.mxu0
        %v5030 = vadd.f32 0.0, %v5029
        %v5031 = vpop.f32.mrf.mxu0
        %v5032 = vadd.f32 0.0, %v5031
        %5033 = vdwg.mxu0
        %5034 = vmatprep.subr.mxu0 0.0
        %5035 = vmatpush1.msra.mxu0 0.0
        %5036 = vmatprep.subr.mxu0 0.0
        %5037 = vmatpush1.msra.mxu0 0.0
        %5038 = vmatprep.subr.mxu0 0.0
        %5039 = vmatpush1.msra.mxu0 0.0
        %5040 = vmatprep.subr.mxu0 0.0
        %5041 = vmatpush1.msra.mxu0 0.0
        %5042 = vmatprep.subr.mxu0 0.0
        %5043 = vmatpush1.msra.mxu0 0.0
        %5044 = vmatprep.subr.mxu0 0.0
        %5045 = vmatpush1.msra.mxu0 0.0
        %5046 = vmatprep.subr.mxu0 0.0
        %5047 = vmatpush1.msra.mxu0 0.0
        %5048 = vmatprep.subr.mxu0 0.0
        %5049 = vmatpush1.msra.mxu0 0.0
        %5050 = vmatprep.subr.mxu0 0.0
        %5051 = vmatpush1.msra.mxu0 0.0
        %5052 = vmatprep.subr.mxu0 0.0
        %5053 = vmatpush1.msra.mxu0 0.0
        %5054 = vmatprep.subr.mxu0 0.0
        %5055 = vmatpush1.msra.mxu0 0.0
        %5056 = vmatprep.subr.mxu0 0.0
        %5057 = vmatpush1.msra.mxu0 0.0
        %5058 = vmatprep.subr.mxu0 0.0
        %5059 = vmatpush1.msra.mxu0 0.0
        %5060 = vmatprep.subr.mxu0 0.0
        %5061 = vmatpush1.msra.mxu0 %v4741
        %5062 = vmatprep.subr.mxu0 0.0
        %5063 = vmatpush1.msra.mxu0 %v4720
        %5064 = vmatprep.subr.mxu0 0.0
        %5065 = vmatpush1.msra.mxu0 %v4717
        %5066 = vmatprep.subr.mxu0 0.0
        %5067 = vmatpush2.msra.mxu0 0.0
        %5068 = vmatprep.subr.mxu0 0.0
        %5069 = vmatpush2.msra.mxu0 0.0
        %5070 = vmatprep.subr.mxu0 0.0
        %5071 = vmatpush2.msra.mxu0 0.0
        %5072 = vmatprep.subr.mxu0 0.0
        %5073 = vmatpush2.msra.mxu0 0.0
        %5074 = vmatprep.subr.mxu0 0.0
        %5075 = vmatpush2.msra.mxu0 0.0
        %5076 = vmatprep.subr.mxu0 0.0
        %5077 = vmatpush2.msra.mxu0 0.0
        %5078 = vmatprep.subr.mxu0 0.0
        %5079 = vmatpush2.msra.mxu0 0.0
        %5080 = vmatprep.subr.mxu0 0.0
        %5081 = vmatpush2.msra.mxu0 0.0
        %5082 = vmatprep.subr.mxu0 0.0
        %5083 = vmatpush2.msra.mxu0 0.0
        %5084 = vmatprep.subr.mxu0 0.0
        %5085 = vmatpush2.msra.mxu0 0.0
        %5086 = vmatprep.subr.mxu0 0.0
        %5087 = vmatpush2.msra.mxu0 0.0
        %5088 = vmatprep.subr.mxu0 0.0
        %5089 = vmatpush2.msra.mxu0 0.0
        %5090 = vmatprep.subr.mxu0 0.0
        %5091 = vmatpush2.msra.mxu0 0.0
        %5092 = vmatprep.subr.mxu0 0.0
        %5093 = vmatpush2.msra.mxu0 0.0
        %5094 = vmatprep.subr.mxu0 0.0
        %5095 = vmatpush2.msra.mxu0 0.0
        %5096 = vmatprep.subr.mxu0 0.0
        %5097 = vmatpush2.msra.mxu0 0.0
        %5098 = vmatprep.mubr.f32.mxu0 0.0
        %5099 = vmatmul.mubr.f32.gmra.mxu0 %v4943
        %v5100 = vpop.f32.mrf.mxu0
        %v5101 = vadd.f32 0.0, %v5100
        %v5102 = vpop.f32.mrf.mxu0
        %5103 = vmatprep.mubr.f32.mxu0 0.0
        %5104 = vmatmul.mubr.f32.gmra.mxu0 %v4946
        %v5105 = vpop.f32.mrf.mxu0
        %v5106 = vadd.f32 0.0, %v5105
        %v5107 = vpop.f32.mrf.mxu0
        %5108 = vmatprep.mubr.f32.mxu0 0.0
        %5109 = vmatmul.mubr.f32.gmra.mxu0 %v4949
        %v5110 = vpop.f32.mrf.mxu0
        %v5111 = vadd.f32 0.0, %v5110
        %v5112 = vpop.f32.mrf.mxu0
        %5113 = vdwg.mxu0
        %s5114 = scalar_lea.vmem %s737, 288
        %v5115 = vld [vmem:[%s5114] sm:$0xff]
        %v5116 = vld [vmem:[%s5114 + $0x8] sm:$0xff]
        %v5117 = vld [vmem:[%s5114 + $0x10] sm:$0xff]
        %v5118 = vld [vmem:[%s5114 + $0x18] sm:$0xff]
        %v5119 = vld [vmem:[%s5114 + $0x20] sm:$0xff]
        %v5120 = vld [vmem:[%s5114 + $0x28] sm:$0xff]
        %v5121 = vld [vmem:[%s5114 + $0x30] sm:$0xff]
        %v5122 = vld [vmem:[%s5114 + $0x38] sm:$0xff]
        %v5123 = vld [vmem:[%s5114 + $0x40] sm:$0xff]
        %v5124 = vld [vmem:[%s5114 + $0x48] sm:$0xff]
        %v5125 = vld [vmem:[%s5114 + $0x50] sm:$0xff]
        %v5126 = vld [vmem:[%s5114 + $0x58] sm:$0xff]
        %v5127 = vld [vmem:[%s5114 + $0x60] sm:$0xff]
        %v5128 = vld [vmem:[%s5114 + $0x68] sm:$0xff]
        %v5129 = vld [vmem:[%s5114 + $0x70] sm:$0xff]
        %v5130 = vld [vmem:[%s5114 + $0x78] sm:$0xff]
        %v5131 = vld [vmem:[%s5114 + $0x80] sm:$0xff]
        %v5132 = vld [vmem:[%s5114 + $0x88] sm:$0xff]
        %v5133 = vld [vmem:[%s5114 + $0x90] sm:$0xff]
        %v5134 = vld [vmem:[%s5114 + $0x98] sm:$0xff]
        %v5135 = vld [vmem:[%s5114 + $0xa0] sm:$0xff]
        %v5136 = vld [vmem:[%s5114 + $0xa8] sm:$0xff]
        %v5137 = vld [vmem:[%s5114 + $0xb0] sm:$0xff]
        %v5138 = vld [vmem:[%s5114 + $0xb8] sm:$0xff]
        %v5139 = vld [vmem:[%s5114 + $0xc0] sm:$0xff]
        %v5140 = vld [vmem:[%s5114 + $0xc8] sm:$0xff]
        %v5141 = vld [vmem:[%s5114 + $0xd0] sm:$0xff]
        %v5142 = vld [vmem:[%s5114 + $0xd8] sm:$0xff]
        %v5143 = vld [vmem:[%s5114 + $0xe0] sm:$0xff]
        %v5144 = vld [vmem:[%s5114 + $0xe8] sm:$0xff]
        %v5145 = vld [vmem:[%s5114 + $0xf0] sm:$0xff]
        %v5146 = vld [vmem:[%s5114 + $0xf8] sm:$0xff]
        %v5147 = vld [vmem:[%s5114 + $0x100] sm:$0xff]
        %v5148 = vld [vmem:[%s5114 + $0x108] sm:$0xff]
        %v5149 = vld [vmem:[%s5114 + $0x110] sm:$0xff]
        %v5150 = vld [vmem:[%s5114 + $0x118] sm:$0xff]
        %v5152 = vsel %vm1247, %v5101, 0
        %v5155 = vsel %vm1247, %v5106, 0
        %v5158 = vsel %vm1247, %v5111, 0
        %5160 = vmatprep.subr.mxu0 0.0
        %5161 = vmatpush1.msra.mxu0 %v5130
        %5162 = vmatprep.subr.mxu0 0.0
        %5163 = vmatpush1.msra.mxu0 %v5129
        %5164 = vmatprep.subr.mxu0 0.0
        %5165 = vmatpush1.msra.mxu0 %v5128
        %5166 = vmatprep.subr.mxu0 0.0
        %5167 = vmatpush1.msra.mxu0 %v5127
        %5168 = vmatprep.subr.mxu0 0.0
        %5169 = vmatpush1.msra.mxu0 %v5126
        %5170 = vmatprep.subr.mxu0 0.0
        %5171 = vmatpush1.msra.mxu0 %v5125
        %5172 = vmatprep.subr.mxu0 0.0
        %5173 = vmatpush1.msra.mxu0 %v5124
        %5174 = vmatprep.subr.mxu0 0.0
        %5175 = vmatpush1.msra.mxu0 %v5123
        %5176 = vmatprep.subr.mxu0 0.0
        %5177 = vmatpush1.msra.mxu0 %v5122
        %5178 = vmatprep.subr.mxu0 0.0
        %5179 = vmatpush1.msra.mxu0 %v5121
        %5180 = vmatprep.subr.mxu0 0.0
        %5181 = vmatpush1.msra.mxu0 %v5120
        %5182 = vmatprep.subr.mxu0 0.0
        %5183 = vmatpush1.msra.mxu0 %v5119
        %5184 = vmatprep.subr.mxu0 0.0
        %5185 = vmatpush1.msra.mxu0 %v5118
        %5186 = vmatprep.subr.mxu0 0.0
        %5187 = vmatpush1.msra.mxu0 %v5117
        %5188 = vmatprep.subr.mxu0 0.0
        %5189 = vmatpush1.msra.mxu0 %v5116
        %5190 = vmatprep.subr.mxu0 0.0
        %5191 = vmatpush1.msra.mxu0 %v5115
        %5192 = vmatprep.subr.mxu0 0.0
        %5193 = vmatpush2.msra.mxu0 %v5146
        %5194 = vmatprep.subr.mxu0 0.0
        %5195 = vmatpush2.msra.mxu0 %v5145
        %5196 = vmatprep.subr.mxu0 0.0
        %5197 = vmatpush2.msra.mxu0 %v5144
        %5198 = vmatprep.subr.mxu0 0.0
        %5199 = vmatpush2.msra.mxu0 %v5143
        %5200 = vmatprep.subr.mxu0 0.0
        %5201 = vmatpush2.msra.mxu0 %v5142
        %5202 = vmatprep.subr.mxu0 0.0
        %5203 = vmatpush2.msra.mxu0 %v5141
        %5204 = vmatprep.subr.mxu0 0.0
        %5205 = vmatpush2.msra.mxu0 %v5140
        %5206 = vmatprep.subr.mxu0 0.0
        %5207 = vmatpush2.msra.mxu0 %v5139
        %5208 = vmatprep.subr.mxu0 0.0
        %5209 = vmatpush2.msra.mxu0 %v5138
        %5210 = vmatprep.subr.mxu0 0.0
        %5211 = vmatpush2.msra.mxu0 %v5137
        %5212 = vmatprep.subr.mxu0 0.0
        %5213 = vmatpush2.msra.mxu0 %v5136
        %5214 = vmatprep.subr.mxu0 0.0
        %5215 = vmatpush2.msra.mxu0 %v5135
        %5216 = vmatprep.subr.mxu0 0.0
        %5217 = vmatpush2.msra.mxu0 %v5134
        %5218 = vmatprep.subr.mxu0 0.0
        %5219 = vmatpush2.msra.mxu0 %v5133
        %5220 = vmatprep.subr.mxu0 0.0
        %5221 = vmatpush2.msra.mxu0 %v5132
        %5222 = vmatprep.subr.mxu0 0.0
        %5223 = vmatpush2.msra.mxu0 %v5131
        %5224 = vmatprep.mubr.f32.mxu0 %v5020
        %5225 = vmatmul.mubr.f32.gmra.mxu0 %v5018
        %v5226 = vpop.f32.mrf.mxu0
        %v5227 = vadd.f32 0.0, %v5226
        %v5228 = vpop.f32.mrf.mxu0
        %5229 = vmatprep.mubr.f32.mxu0 %v5026
        %5230 = vmatmul.mubr.f32.gmra.mxu0 %v5024
        %v5231 = vpop.f32.mrf.mxu0
        %v5232 = vadd.f32 0.0, %v5231
        %v5233 = vpop.f32.mrf.mxu0
        %5234 = vmatprep.mubr.f32.mxu0 %v5032
        %5235 = vmatmul.mubr.f32.gmra.mxu0 %v5030
        %v5236 = vpop.f32.mrf.mxu0
        %v5237 = vadd.f32 0.0, %v5236
        %v5238 = vpop.f32.mrf.mxu0
        %5239 = vdwg.mxu0
        %5240 = vmatprep.subr.mxu0 0.0
        %5241 = vmatpush1.msra.mxu0 0.0
        %5242 = vmatprep.subr.mxu0 0.0
        %5243 = vmatpush1.msra.mxu0 0.0
        %5244 = vmatprep.subr.mxu0 0.0
        %5245 = vmatpush1.msra.mxu0 0.0
        %5246 = vmatprep.subr.mxu0 0.0
        %5247 = vmatpush1.msra.mxu0 0.0
        %5248 = vmatprep.subr.mxu0 0.0
        %5249 = vmatpush1.msra.mxu0 0.0
        %5250 = vmatprep.subr.mxu0 0.0
        %5251 = vmatpush1.msra.mxu0 0.0
        %5252 = vmatprep.subr.mxu0 0.0
        %5253 = vmatpush1.msra.mxu0 0.0
        %5254 = vmatprep.subr.mxu0 0.0
        %5255 = vmatpush1.msra.mxu0 0.0
        %5256 = vmatprep.subr.mxu0 0.0
        %5257 = vmatpush1.msra.mxu0 0.0
        %5258 = vmatprep.subr.mxu0 0.0
        %5259 = vmatpush1.msra.mxu0 0.0
        %5260 = vmatprep.subr.mxu0 0.0
        %5261 = vmatpush1.msra.mxu0 0.0
        %5262 = vmatprep.subr.mxu0 0.0
        %5263 = vmatpush1.msra.mxu0 0.0
        %5264 = vmatprep.subr.mxu0 0.0
        %5265 = vmatpush1.msra.mxu0 %v5150
        %5266 = vmatprep.subr.mxu0 0.0
        %5267 = vmatpush1.msra.mxu0 %v5149
        %5268 = vmatprep.subr.mxu0 0.0
        %5269 = vmatpush1.msra.mxu0 %v5148
        %5270 = vmatprep.subr.mxu0 0.0
        %5271 = vmatpush1.msra.mxu0 %v5147
        %5272 = vmatprep.subr.mxu0 0.0
        %5273 = vmatpush2.msra.mxu0 0.0
        %5274 = vmatprep.subr.mxu0 0.0
        %5275 = vmatpush2.msra.mxu0 0.0
        %5276 = vmatprep.subr.mxu0 0.0
        %5277 = vmatpush2.msra.mxu0 0.0
        %5278 = vmatprep.subr.mxu0 0.0
        %5279 = vmatpush2.msra.mxu0 0.0
        %5280 = vmatprep.subr.mxu0 0.0
        %5281 = vmatpush2.msra.mxu0 0.0
        %5282 = vmatprep.subr.mxu0 0.0
        %5283 = vmatpush2.msra.mxu0 0.0
        %5284 = vmatprep.subr.mxu0 0.0
        %5285 = vmatpush2.msra.mxu0 0.0
        %5286 = vmatprep.subr.mxu0 0.0
        %5287 = vmatpush2.msra.mxu0 0.0
        %5288 = vmatprep.subr.mxu0 0.0
        %5289 = vmatpush2.msra.mxu0 0.0
        %5290 = vmatprep.subr.mxu0 0.0
        %5291 = vmatpush2.msra.mxu0 0.0
        %5292 = vmatprep.subr.mxu0 0.0
        %5293 = vmatpush2.msra.mxu0 0.0
        %5294 = vmatprep.subr.mxu0 0.0
        %5295 = vmatpush2.msra.mxu0 0.0
        %5296 = vmatprep.subr.mxu0 0.0
        %5297 = vmatpush2.msra.mxu0 0.0
        %5298 = vmatprep.subr.mxu0 0.0
        %5299 = vmatpush2.msra.mxu0 0.0
        %5300 = vmatprep.subr.mxu0 0.0
        %5301 = vmatpush2.msra.mxu0 0.0
        %5302 = vmatprep.subr.mxu0 0.0
        %5303 = vmatpush2.msra.mxu0 0.0
        %5304 = vmatprep.mubr.f32.mxu0 0.0
        %5305 = vmatmul.mubr.f32.gmra.mxu0 %v5152
        %v5306 = vpop.f32.mrf.mxu0
        %v5307 = vadd.f32 %v5227, %v5306
        %v5308 = vpop.f32.mrf.mxu0
        %5309 = vmatprep.mubr.f32.mxu0 0.0
        %5310 = vmatmul.mubr.f32.gmra.mxu0 %v5155
        %v5311 = vpop.f32.mrf.mxu0
        %v5312 = vadd.f32 %v5232, %v5311
        %v5313 = vpop.f32.mrf.mxu0
        %5314 = vmatprep.mubr.f32.mxu0 0.0
        %5315 = vmatmul.mubr.f32.gmra.mxu0 %v5158
        %v5316 = vpop.f32.mrf.mxu0
        %v5317 = vadd.f32 %v5237, %v5316
        %v5318 = vpop.f32.mrf.mxu0
        %5319 = vdwg.mxu0
        %v5321 = vsel %vm1247, %v4893, 0
        %v5324 = vsel %vm1247, %v4898, 0
        %v5327 = vsel %vm1247, %v4903, 0
        %5329 = vmatprep.subr.mxu0 0.0
        %5330 = vmatpush1.msra.mxu0 %v4921
        %5331 = vmatprep.subr.mxu0 0.0
        %5332 = vmatpush1.msra.mxu0 %v4920
        %5333 = vmatprep.subr.mxu0 0.0
        %5334 = vmatpush1.msra.mxu0 %v4919
        %5335 = vmatprep.subr.mxu0 0.0
        %5336 = vmatpush1.msra.mxu0 %v4918
        %5337 = vmatprep.subr.mxu0 0.0
        %5338 = vmatpush1.msra.mxu0 %v4917
        %5339 = vmatprep.subr.mxu0 0.0
        %5340 = vmatpush1.msra.mxu0 %v4916
        %5341 = vmatprep.subr.mxu0 0.0
        %5342 = vmatpush1.msra.mxu0 %v4915
        %5343 = vmatprep.subr.mxu0 0.0
        %5344 = vmatpush1.msra.mxu0 %v4914
        %5345 = vmatprep.subr.mxu0 0.0
        %5346 = vmatpush1.msra.mxu0 %v4913
        %5347 = vmatprep.subr.mxu0 0.0
        %5348 = vmatpush1.msra.mxu0 %v4912
        %5349 = vmatprep.subr.mxu0 0.0
        %5350 = vmatpush1.msra.mxu0 %v4911
        %5351 = vmatprep.subr.mxu0 0.0
        %5352 = vmatpush1.msra.mxu0 %v4910
        %5353 = vmatprep.subr.mxu0 0.0
        %5354 = vmatpush1.msra.mxu0 %v4909
        %5355 = vmatprep.subr.mxu0 0.0
        %5356 = vmatpush1.msra.mxu0 %v4908
        %5357 = vmatprep.subr.mxu0 0.0
        %5358 = vmatpush1.msra.mxu0 %v4907
        %5359 = vmatprep.subr.mxu0 0.0
        %5360 = vmatpush1.msra.mxu0 %v4906
        %5361 = vmatprep.subr.mxu0 0.0
        %5362 = vmatpush2.msra.mxu0 %v4937
        %5363 = vmatprep.subr.mxu0 0.0
        %5364 = vmatpush2.msra.mxu0 %v4936
        %5365 = vmatprep.subr.mxu0 0.0
        %5366 = vmatpush2.msra.mxu0 %v4935
        %5367 = vmatprep.subr.mxu0 0.0
        %5368 = vmatpush2.msra.mxu0 %v4934
        %5369 = vmatprep.subr.mxu0 0.0
        %5370 = vmatpush2.msra.mxu0 %v4933
        %5371 = vmatprep.subr.mxu0 0.0
        %5372 = vmatpush2.msra.mxu0 %v4932
        %5373 = vmatprep.subr.mxu0 0.0
        %5374 = vmatpush2.msra.mxu0 %v4931
        %5375 = vmatprep.subr.mxu0 0.0
        %5376 = vmatpush2.msra.mxu0 %v4930
        %5377 = vmatprep.subr.mxu0 0.0
        %5378 = vmatpush2.msra.mxu0 %v4929
        %5379 = vmatprep.subr.mxu0 0.0
        %5380 = vmatpush2.msra.mxu0 %v4928
        %5381 = vmatprep.subr.mxu0 0.0
        %5382 = vmatpush2.msra.mxu0 %v4927
        %5383 = vmatprep.subr.mxu0 0.0
        %5384 = vmatpush2.msra.mxu0 %v4926
        %5385 = vmatprep.subr.mxu0 0.0
        %5386 = vmatpush2.msra.mxu0 %v4925
        %5387 = vmatprep.subr.mxu0 0.0
        %5388 = vmatpush2.msra.mxu0 %v4924
        %5389 = vmatprep.subr.mxu0 0.0
        %5390 = vmatpush2.msra.mxu0 %v4923
        %5391 = vmatprep.subr.mxu0 0.0
        %5392 = vmatpush2.msra.mxu0 %v4922
        %5393 = vmatprep.mubr.f32.mxu0 %v4812
        %5394 = vmatmul.mubr.f32.gmra.mxu0 %v4810
        %v5395 = vpop.f32.mrf.mxu0
        %v5396 = vadd.f32 %v5307, %v5395
        %v5397 = vpop.f32.mrf.mxu0
        %5398 = vmatprep.mubr.f32.mxu0 %v4818
        %5399 = vmatmul.mubr.f32.gmra.mxu0 %v4816
        %v5400 = vpop.f32.mrf.mxu0
        %v5401 = vadd.f32 %v5312, %v5400
        %v5402 = vpop.f32.mrf.mxu0
        %5403 = vmatprep.mubr.f32.mxu0 %v4824
        %5404 = vmatmul.mubr.f32.gmra.mxu0 %v4822
        %v5405 = vpop.f32.mrf.mxu0
        %v5406 = vadd.f32 %v5317, %v5405
        %v5407 = vpop.f32.mrf.mxu0
        %5408 = vdwg.mxu0
        %5409 = vmatprep.subr.mxu0 0.0
        %5410 = vmatpush1.msra.mxu0 0.0
        %5411 = vmatprep.subr.mxu0 0.0
        %5412 = vmatpush1.msra.mxu0 0.0
        %5413 = vmatprep.subr.mxu0 0.0
        %5414 = vmatpush1.msra.mxu0 0.0
        %5415 = vmatprep.subr.mxu0 0.0
        %5416 = vmatpush1.msra.mxu0 0.0
        %5417 = vmatprep.subr.mxu0 0.0
        %5418 = vmatpush1.msra.mxu0 0.0
        %5419 = vmatprep.subr.mxu0 0.0
        %5420 = vmatpush1.msra.mxu0 0.0
        %5421 = vmatprep.subr.mxu0 0.0
        %5422 = vmatpush1.msra.mxu0 0.0
        %5423 = vmatprep.subr.mxu0 0.0
        %5424 = vmatpush1.msra.mxu0 0.0
        %5425 = vmatprep.subr.mxu0 0.0
        %5426 = vmatpush1.msra.mxu0 0.0
        %5427 = vmatprep.subr.mxu0 0.0
        %5428 = vmatpush1.msra.mxu0 0.0
        %5429 = vmatprep.subr.mxu0 0.0
        %5430 = vmatpush1.msra.mxu0 0.0
        %5431 = vmatprep.subr.mxu0 0.0
        %5432 = vmatpush1.msra.mxu0 0.0
        %5433 = vmatprep.subr.mxu0 0.0
        %5434 = vmatpush1.msra.mxu0 %v4941
        %5435 = vmatprep.subr.mxu0 0.0
        %5436 = vmatpush1.msra.mxu0 %v4940
        %5437 = vmatprep.subr.mxu0 0.0
        %5438 = vmatpush1.msra.mxu0 %v4939
        %5439 = vmatprep.subr.mxu0 0.0
        %5440 = vmatpush1.msra.mxu0 %v4938
        %5441 = vmatprep.subr.mxu0 0.0
        %5442 = vmatpush2.msra.mxu0 0.0
        %5443 = vmatprep.subr.mxu0 0.0
        %5444 = vmatpush2.msra.mxu0 0.0
        %5445 = vmatprep.subr.mxu0 0.0
        %5446 = vmatpush2.msra.mxu0 0.0
        %5447 = vmatprep.subr.mxu0 0.0
        %5448 = vmatpush2.msra.mxu0 0.0
        %5449 = vmatprep.subr.mxu0 0.0
        %5450 = vmatpush2.msra.mxu0 0.0
        %5451 = vmatprep.subr.mxu0 0.0
        %5452 = vmatpush2.msra.mxu0 0.0
        %5453 = vmatprep.subr.mxu0 0.0
        %5454 = vmatpush2.msra.mxu0 0.0
        %5455 = vmatprep.subr.mxu0 0.0
        %5456 = vmatpush2.msra.mxu0 0.0
        %5457 = vmatprep.subr.mxu0 0.0
        %5458 = vmatpush2.msra.mxu0 0.0
        %5459 = vmatprep.subr.mxu0 0.0
        %5460 = vmatpush2.msra.mxu0 0.0
        %5461 = vmatprep.subr.mxu0 0.0
        %5462 = vmatpush2.msra.mxu0 0.0
        %5463 = vmatprep.subr.mxu0 0.0
        %5464 = vmatpush2.msra.mxu0 0.0
        %5465 = vmatprep.subr.mxu0 0.0
        %5466 = vmatpush2.msra.mxu0 0.0
        %5467 = vmatprep.subr.mxu0 0.0
        %5468 = vmatpush2.msra.mxu0 0.0
        %5469 = vmatprep.subr.mxu0 0.0
        %5470 = vmatpush2.msra.mxu0 0.0
        %5471 = vmatprep.subr.mxu0 0.0
        %5472 = vmatpush2.msra.mxu0 0.0
        %5473 = vmatprep.mubr.f32.mxu0 0.0
        %5474 = vmatmul.mubr.f32.gmra.mxu0 %v5321
        %v5475 = vpop.f32.mrf.mxu0
        %v5476 = vadd.f32 %v5396, %v5475
        %v5477 = vpop.f32.mrf.mxu0
        %5478 = vmatprep.mubr.f32.mxu0 0.0
        %5479 = vmatmul.mubr.f32.gmra.mxu0 %v5324
        %v5480 = vpop.f32.mrf.mxu0
        %v5481 = vadd.f32 %v5401, %v5480
        %v5482 = vpop.f32.mrf.mxu0
        %5483 = vmatprep.mubr.f32.mxu0 0.0
        %5484 = vmatmul.mubr.f32.gmra.mxu0 %v5327
        %v5485 = vpop.f32.mrf.mxu0
        %v5486 = vadd.f32 %v5406, %v5485
        %v5487 = vpop.f32.mrf.mxu0
        %5488 = vdwg.mxu0
        %v5489 = vld [vmem:[%s740] sm:$0x1]
        %v5491 = vlaneseq
        %v5492 = vshrl.u32 %v5491, 7
        %v5493 = vsub.s32 0, %v5492
        %v5494 = vrot.slane %v5489, %v5493
        %v5496 = vadd.f32 %v5476, %v5494
        %v5497 = vadd.f32 %v5481, %v5494
        %v5498 = vadd.f32 %v5486, %v5494
        %vm5499 = vcmask 138240
        %5500 = vst.msk [vmem:[%s745] sm:$0xff] %vm5499, %v5496
        %5501 = vst.msk [vmem:[%s745 + $0x8] sm:$0xff] %vm5499, %v5497
        %vm5502 = vcmask 131072
        %5503 = vst.msk [vmem:[%s745 + $0x10] sm:$0x1] %vm5502, %v5498
        %s5504 = scalar_lea.vmem %s703, 8
        %v5505 = vld [vmem:[%s5504] sm:$0xff]
        %5506 = vmatprep.subr.mxu0 0.0
        %5507 = vmatpush1.msra.mxu0 0.0
        %5508 = vmatprep.subr.mxu0 0.0
        %5509 = vmatpush1.msra.mxu0 0.0
        %5510 = vmatprep.subr.mxu0 0.0
        %5511 = vmatpush1.msra.mxu0 0.0
        %5512 = vmatprep.subr.mxu0 0.0
        %5513 = vmatpush1.msra.mxu0 0.0
        %5514 = vmatprep.subr.mxu0 0.0
        %5515 = vmatpush1.msra.mxu0 0.0
        %5516 = vmatprep.subr.mxu0 0.0
        %5517 = vmatpush1.msra.mxu0 0.0
        %5518 = vmatprep.subr.mxu0 0.0
        %5519 = vmatpush1.msra.mxu0 0.0
        %5520 = vmatprep.subr.mxu0 0.0
        %5521 = vmatpush1.msra.mxu0 0.0
        %5522 = vmatprep.subr.mxu0 0.0
        %5523 = vmatpush1.msra.mxu0 0.0
        %5524 = vmatprep.subr.mxu0 0.0
        %5525 = vmatpush1.msra.mxu0 0.0
        %5526 = vmatprep.subr.mxu0 0.0
        %5527 = vmatpush1.msra.mxu0 0.0
        %5528 = vmatprep.subr.mxu0 0.0
        %5529 = vmatpush1.msra.mxu0 0.0
        %5530 = vmatprep.subr.mxu0 0.0
        %5531 = vmatpush1.msra.mxu0 0.0
        %5532 = vmatprep.subr.mxu0 0.0
        %5533 = vmatpush1.msra.mxu0 0.0
        %5534 = vmatprep.subr.mxu0 0.0
        %5535 = vmatpush1.msra.mxu0 0.0
        %5536 = vmatprep.subr.mxu0 0.0
        %5537 = vmatpush1.msra.mxu0 %v5505
        %5538 = vmatprep.subr.mxu0 0.0
        %5539 = vmatpush2.msra.mxu0 0.0
        %5540 = vmatprep.subr.mxu0 0.0
        %5541 = vmatpush2.msra.mxu0 0.0
        %5542 = vmatprep.subr.mxu0 0.0
        %5543 = vmatpush2.msra.mxu0 0.0
        %5544 = vmatprep.subr.mxu0 0.0
        %5545 = vmatpush2.msra.mxu0 0.0
        %5546 = vmatprep.subr.mxu0 0.0
        %5547 = vmatpush2.msra.mxu0 0.0
        %5548 = vmatprep.subr.mxu0 0.0
        %5549 = vmatpush2.msra.mxu0 0.0
        %5550 = vmatprep.subr.mxu0 0.0
        %5551 = vmatpush2.msra.mxu0 0.0
        %5552 = vmatprep.subr.mxu0 0.0
        %5553 = vmatpush2.msra.mxu0 0.0
        %5554 = vmatprep.subr.mxu0 0.0
        %5555 = vmatpush2.msra.mxu0 0.0
        %5556 = vmatprep.subr.mxu0 0.0
        %5557 = vmatpush2.msra.mxu0 0.0
        %5558 = vmatprep.subr.mxu0 0.0
        %5559 = vmatpush2.msra.mxu0 0.0
        %5560 = vmatprep.subr.mxu0 0.0
        %5561 = vmatpush2.msra.mxu0 0.0
        %5562 = vmatprep.subr.mxu0 0.0
        %5563 = vmatpush2.msra.mxu0 0.0
        %5564 = vmatprep.subr.mxu0 0.0
        %5565 = vmatpush2.msra.mxu0 0.0
        %5566 = vmatprep.subr.mxu0 0.0
        %5567 = vmatpush2.msra.mxu0 0.0
        %5568 = vmatprep.subr.mxu0 0.0
        %5569 = vmatpush2.msra.mxu0 0.0
        %5570 = vmatprep.mubr.f32.mxu0 0.0
        %5571 = vmatmul.mubr.f32.gmra.mxu0 %v879
        %v5572 = vpop.f32.mrf.mxu0
        %v5573 = vadd.f32 0.0, %v5572
        %v5574 = vpop.f32.mrf.mxu0
        %5575 = vmatprep.mubr.f32.mxu0 0.0
        %5576 = vmatmul.mubr.f32.gmra.mxu0 %v882
        %v5577 = vpop.f32.mrf.mxu0
        %v5578 = vadd.f32 0.0, %v5577
        %v5579 = vpop.f32.mrf.mxu0
        %5580 = vdwg.mxu0
        %v5582 = vsel %vm877, %v5573, 0
        %v5585 = vsel %vm877, %v5578, 0
        %5587 = vmatprep.subr.mxu0 0.0
        %5588 = vmatpush1.msra.mxu0 0.0
        %5589 = vmatprep.subr.mxu0 0.0
        %5590 = vmatpush1.msra.mxu0 0.0
        %5591 = vmatprep.subr.mxu0 0.0
        %5592 = vmatpush1.msra.mxu0 0.0
        %5593 = vmatprep.subr.mxu0 0.0
        %5594 = vmatpush1.msra.mxu0 0.0
        %5595 = vmatprep.subr.mxu0 0.0
        %5596 = vmatpush1.msra.mxu0 0.0
        %5597 = vmatprep.subr.mxu0 0.0
        %5598 = vmatpush1.msra.mxu0 0.0
        %5599 = vmatprep.subr.mxu0 0.0
        %5600 = vmatpush1.msra.mxu0 0.0
        %5601 = vmatprep.subr.mxu0 0.0
        %5602 = vmatpush1.msra.mxu0 0.0
        %5603 = vmatprep.subr.mxu0 0.0
        %5604 = vmatpush1.msra.mxu0 0.0
        %5605 = vmatprep.subr.mxu0 0.0
        %5606 = vmatpush1.msra.mxu0 0.0
        %5607 = vmatprep.subr.mxu0 0.0
        %5608 = vmatpush1.msra.mxu0 0.0
        %5609 = vmatprep.subr.mxu0 0.0
        %5610 = vmatpush1.msra.mxu0 0.0
        %5611 = vmatprep.subr.mxu0 0.0
        %5612 = vmatpush1.msra.mxu0 0.0
        %5613 = vmatprep.subr.mxu0 0.0
        %5614 = vmatpush1.msra.mxu0 0.0
        %5615 = vmatprep.subr.mxu0 0.0
        %5616 = vmatpush1.msra.mxu0 0.0
        %5617 = vmatprep.subr.mxu0 0.0
        %5618 = vmatpush1.msra.mxu0 %v753
        %5619 = vmatprep.subr.mxu0 0.0
        %5620 = vmatpush2.msra.mxu0 0.0
        %5621 = vmatprep.subr.mxu0 0.0
        %5622 = vmatpush2.msra.mxu0 0.0
        %5623 = vmatprep.subr.mxu0 0.0
        %5624 = vmatpush2.msra.mxu0 0.0
        %5625 = vmatprep.subr.mxu0 0.0
        %5626 = vmatpush2.msra.mxu0 0.0
        %5627 = vmatprep.subr.mxu0 0.0
        %5628 = vmatpush2.msra.mxu0 0.0
        %5629 = vmatprep.subr.mxu0 0.0
        %5630 = vmatpush2.msra.mxu0 0.0
        %5631 = vmatprep.subr.mxu0 0.0
        %5632 = vmatpush2.msra.mxu0 0.0
        %5633 = vmatprep.subr.mxu0 0.0
        %5634 = vmatpush2.msra.mxu0 0.0
        %5635 = vmatprep.subr.mxu0 0.0
        %5636 = vmatpush2.msra.mxu0 0.0
        %5637 = vmatprep.subr.mxu0 0.0
        %5638 = vmatpush2.msra.mxu0 0.0
        %5639 = vmatprep.subr.mxu0 0.0
        %5640 = vmatpush2.msra.mxu0 0.0
        %5641 = vmatprep.subr.mxu0 0.0
        %5642 = vmatpush2.msra.mxu0 0.0
        %5643 = vmatprep.subr.mxu0 0.0
        %5644 = vmatpush2.msra.mxu0 0.0
        %5645 = vmatprep.subr.mxu0 0.0
        %5646 = vmatpush2.msra.mxu0 0.0
        %5647 = vmatprep.subr.mxu0 0.0
        %5648 = vmatpush2.msra.mxu0 0.0
        %5649 = vmatprep.subr.mxu0 0.0
        %5650 = vmatpush2.msra.mxu0 0.0
        %5651 = vmatprep.mubr.f32.mxu0 0.0
        %5652 = vmatmul.mubr.f32.gmra.mxu0 %v5582
        %v5653 = vpop.f32.mrf.mxu0
        %v5654 = vadd.f32 0.0, %v5653
        %v5655 = vpop.f32.mrf.mxu0
        %5656 = vmatprep.mubr.f32.mxu0 0.0
        %5657 = vmatmul.mubr.f32.gmra.mxu0 %v5585
        %v5658 = vpop.f32.mrf.mxu0
        %v5659 = vadd.f32 0.0, %v5658
        %v5660 = vpop.f32.mrf.mxu0
        %5661 = vdwg.mxu0
        %s5662 = scalar_lea.vmem %s750, 16
        %5663 = vst.msk [vmem:[%s5662] sm:$0xff] %vm1040, %v5654
        %5664 = vst.msk [vmem:[%s5662 + $0x8] sm:$0xff] %vm1040, %v5659
        %s5665 = scalar_lea.vmem %s698, 8
        %v5666 = vld [vmem:[%s5665] sm:$0xff]
        %5667 = vmatprep.subr.mxu0 0.0
        %5668 = vmatpush1.msra.mxu0 0.0
        %5669 = vmatprep.subr.mxu0 0.0
        %5670 = vmatpush1.msra.mxu0 0.0
        %5671 = vmatprep.subr.mxu0 0.0
        %5672 = vmatpush1.msra.mxu0 0.0
        %5673 = vmatprep.subr.mxu0 0.0
        %5674 = vmatpush1.msra.mxu0 0.0
        %5675 = vmatprep.subr.mxu0 0.0
        %5676 = vmatpush1.msra.mxu0 0.0
        %5677 = vmatprep.subr.mxu0 0.0
        %5678 = vmatpush1.msra.mxu0 0.0
        %5679 = vmatprep.subr.mxu0 0.0
        %5680 = vmatpush1.msra.mxu0 0.0
        %5681 = vmatprep.subr.mxu0 0.0
        %5682 = vmatpush1.msra.mxu0 0.0
        %5683 = vmatprep.subr.mxu0 0.0
        %5684 = vmatpush1.msra.mxu0 0.0
        %5685 = vmatprep.subr.mxu0 0.0
        %5686 = vmatpush1.msra.mxu0 0.0
        %5687 = vmatprep.subr.mxu0 0.0
        %5688 = vmatpush1.msra.mxu0 0.0
        %5689 = vmatprep.subr.mxu0 0.0
        %5690 = vmatpush1.msra.mxu0 0.0
        %5691 = vmatprep.subr.mxu0 0.0
        %5692 = vmatpush1.msra.mxu0 0.0
        %5693 = vmatprep.subr.mxu0 0.0
        %5694 = vmatpush1.msra.mxu0 0.0
        %5695 = vmatprep.subr.mxu0 0.0
        %5696 = vmatpush1.msra.mxu0 0.0
        %5697 = vmatprep.subr.mxu0 0.0
        %5698 = vmatpush1.msra.mxu0 %v5666
        %5699 = vmatprep.subr.mxu0 0.0
        %5700 = vmatpush2.msra.mxu0 0.0
        %5701 = vmatprep.subr.mxu0 0.0
        %5702 = vmatpush2.msra.mxu0 0.0
        %5703 = vmatprep.subr.mxu0 0.0
        %5704 = vmatpush2.msra.mxu0 0.0
        %5705 = vmatprep.subr.mxu0 0.0
        %5706 = vmatpush2.msra.mxu0 0.0
        %5707 = vmatprep.subr.mxu0 0.0
        %5708 = vmatpush2.msra.mxu0 0.0
        %5709 = vmatprep.subr.mxu0 0.0
        %5710 = vmatpush2.msra.mxu0 0.0
        %5711 = vmatprep.subr.mxu0 0.0
        %5712 = vmatpush2.msra.mxu0 0.0
        %5713 = vmatprep.subr.mxu0 0.0
        %5714 = vmatpush2.msra.mxu0 0.0
        %5715 = vmatprep.subr.mxu0 0.0
        %5716 = vmatpush2.msra.mxu0 0.0
        %5717 = vmatprep.subr.mxu0 0.0
        %5718 = vmatpush2.msra.mxu0 0.0
        %5719 = vmatprep.subr.mxu0 0.0
        %5720 = vmatpush2.msra.mxu0 0.0
        %5721 = vmatprep.subr.mxu0 0.0
        %5722 = vmatpush2.msra.mxu0 0.0
        %5723 = vmatprep.subr.mxu0 0.0
        %5724 = vmatpush2.msra.mxu0 0.0
        %5725 = vmatprep.subr.mxu0 0.0
        %5726 = vmatpush2.msra.mxu0 0.0
        %5727 = vmatprep.subr.mxu0 0.0
        %5728 = vmatpush2.msra.mxu0 0.0
        %5729 = vmatprep.subr.mxu0 0.0
        %5730 = vmatpush2.msra.mxu0 0.0
        %5731 = vmatprep.mubr.f32.mxu0 0.0
        %5732 = vmatmul.mubr.f32.gmra.mxu0 %v879
        %v5733 = vpop.f32.mrf.mxu0
        %v5734 = vadd.f32 0.0, %v5733
        %v5735 = vpop.f32.mrf.mxu0
        %5736 = vmatprep.mubr.f32.mxu0 0.0
        %5737 = vmatmul.mubr.f32.gmra.mxu0 %v882
        %v5738 = vpop.f32.mrf.mxu0
        %v5739 = vadd.f32 0.0, %v5738
        %v5740 = vpop.f32.mrf.mxu0
        %5741 = vdwg.mxu0
        %v5743 = vsel %vm877, %v5734, 0
        %v5746 = vsel %vm877, %v5739, 0
        %5748 = vmatprep.subr.mxu0 0.0
        %5749 = vmatpush1.msra.mxu0 0.0
        %5750 = vmatprep.subr.mxu0 0.0
        %5751 = vmatpush1.msra.mxu0 0.0
        %5752 = vmatprep.subr.mxu0 0.0
        %5753 = vmatpush1.msra.mxu0 0.0
        %5754 = vmatprep.subr.mxu0 0.0
        %5755 = vmatpush1.msra.mxu0 0.0
        %5756 = vmatprep.subr.mxu0 0.0
        %5757 = vmatpush1.msra.mxu0 0.0
        %5758 = vmatprep.subr.mxu0 0.0
        %5759 = vmatpush1.msra.mxu0 0.0
        %5760 = vmatprep.subr.mxu0 0.0
        %5761 = vmatpush1.msra.mxu0 0.0
        %5762 = vmatprep.subr.mxu0 0.0
        %5763 = vmatpush1.msra.mxu0 0.0
        %5764 = vmatprep.subr.mxu0 0.0
        %5765 = vmatpush1.msra.mxu0 0.0
        %5766 = vmatprep.subr.mxu0 0.0
        %5767 = vmatpush1.msra.mxu0 0.0
        %5768 = vmatprep.subr.mxu0 0.0
        %5769 = vmatpush1.msra.mxu0 0.0
        %5770 = vmatprep.subr.mxu0 0.0
        %5771 = vmatpush1.msra.mxu0 0.0
        %5772 = vmatprep.subr.mxu0 0.0
        %5773 = vmatpush1.msra.mxu0 0.0
        %5774 = vmatprep.subr.mxu0 0.0
        %5775 = vmatpush1.msra.mxu0 0.0
        %5776 = vmatprep.subr.mxu0 0.0
        %5777 = vmatpush1.msra.mxu0 0.0
        %5778 = vmatprep.subr.mxu0 0.0
        %5779 = vmatpush1.msra.mxu0 %v753
        %5780 = vmatprep.subr.mxu0 0.0
        %5781 = vmatpush2.msra.mxu0 0.0
        %5782 = vmatprep.subr.mxu0 0.0
        %5783 = vmatpush2.msra.mxu0 0.0
        %5784 = vmatprep.subr.mxu0 0.0
        %5785 = vmatpush2.msra.mxu0 0.0
        %5786 = vmatprep.subr.mxu0 0.0
        %5787 = vmatpush2.msra.mxu0 0.0
        %5788 = vmatprep.subr.mxu0 0.0
        %5789 = vmatpush2.msra.mxu0 0.0
        %5790 = vmatprep.subr.mxu0 0.0
        %5791 = vmatpush2.msra.mxu0 0.0
        %5792 = vmatprep.subr.mxu0 0.0
        %5793 = vmatpush2.msra.mxu0 0.0
        %5794 = vmatprep.subr.mxu0 0.0
        %5795 = vmatpush2.msra.mxu0 0.0
        %5796 = vmatprep.subr.mxu0 0.0
        %5797 = vmatpush2.msra.mxu0 0.0
        %5798 = vmatprep.subr.mxu0 0.0
        %5799 = vmatpush2.msra.mxu0 0.0
        %5800 = vmatprep.subr.mxu0 0.0
        %5801 = vmatpush2.msra.mxu0 0.0
        %5802 = vmatprep.subr.mxu0 0.0
        %5803 = vmatpush2.msra.mxu0 0.0
        %5804 = vmatprep.subr.mxu0 0.0
        %5805 = vmatpush2.msra.mxu0 0.0
        %5806 = vmatprep.subr.mxu0 0.0
        %5807 = vmatpush2.msra.mxu0 0.0
        %5808 = vmatprep.subr.mxu0 0.0
        %5809 = vmatpush2.msra.mxu0 0.0
        %5810 = vmatprep.subr.mxu0 0.0
        %5811 = vmatpush2.msra.mxu0 0.0
        %5812 = vmatprep.mubr.f32.mxu0 0.0
        %5813 = vmatmul.mubr.f32.gmra.mxu0 %v5743
        %v5814 = vpop.f32.mrf.mxu0
        %v5815 = vadd.f32 0.0, %v5814
        %v5816 = vpop.f32.mrf.mxu0
        %5817 = vmatprep.mubr.f32.mxu0 0.0
        %5818 = vmatmul.mubr.f32.gmra.mxu0 %v5746
        %v5819 = vpop.f32.mrf.mxu0
        %v5820 = vadd.f32 0.0, %v5819
        %v5821 = vpop.f32.mrf.mxu0
        %5822 = vdwg.mxu0
        %s5823 = scalar_lea.vmem %s2, 32
        %v5824 = vld [vmem:[%s5823] sm:$0xff]
        %v5825 = vld [vmem:[%s5823 + $0x8] sm:$0xff]
        %s5826 = scalar_lea.vmem %s2, 48
        %v5827 = vld [vmem:[%s5826] sm:$0xff]
        %v5828 = vld [vmem:[%s5826 + $0x8] sm:$0xff]
        %v5829 = vsub.f32 %v5827, %v5824
        %v5830 = vsub.f32 %v5828, %v5825
        %v5831 = vmul.f32 %v5829, 1.442695
        %v5832 = vpow.pop %v5831
        %v5833 = vmul.f32 %v5830, 1.442695
        %v5834 = vpow.pop %v5833
        %v5835 = vadd.f32 %v5832, 1.0
        %v5836 = vadd.f32 %v5834, 1.0
        %v5837 = vrcp.pop %v5835
        %v5838 = vmul.f32 1.0, %v5837
        %v5839 = vrcp.pop %v5836
        %v5840 = vmul.f32 1.0, %v5839
        %v5841 = vsub.f32 %v5824, %v5827
        %v5842 = vsub.f32 %v5825, %v5828
        %v5843 = vmul.f32 %v5841, 1.442695
        %v5844 = vpow.pop %v5843
        %v5845 = vmul.f32 %v5842, 1.442695
        %v5846 = vpow.pop %v5845
        %v5847 = vadd.f32 %v5844, 1.0
        %v5848 = vadd.f32 %v5846, 1.0
        %v5849 = vrcp.pop %v5847
        %v5850 = vmul.f32 1.0, %v5849
        %v5851 = vrcp.pop %v5848
        %v5852 = vmul.f32 1.0, %v5851
        %5855 = vrot.lane.b32.xlu0 %v5838, 16
        %v5856 = vpop.permute.xlu0 %5855
        %5857 = vrot.lane.b32.xlu0 %v5840, 16
        %v5858 = vpop.permute.xlu0 %5857
        %5863 = vrot.lane.b32.xlu0 %v5850, 32
        %v5864 = vpop.permute.xlu0 %5863
        %5865 = vrot.lane.b32.xlu0 %v5852, 32
        %v5866 = vpop.permute.xlu0 %5865
        %v5869 = vsel %vm1040, %v5815, %v5856
        %v5870 = vsel %vm1040, %v5820, %v5858
        %v5871 = vsel %vm1247, %v5869, %v5864
        %v5872 = vsel %vm1247, %v5870, %v5866
        %5873 = vmatprep.subr.mxu0 0.0
        %5874 = vmatpush1.msra.mxu0 0.0
        %5875 = vmatprep.subr.mxu0 0.0
        %5876 = vmatpush1.msra.mxu0 0.0
        %5877 = vmatprep.subr.mxu0 0.0
        %5878 = vmatpush1.msra.mxu0 0.0
        %5879 = vmatprep.subr.mxu0 0.0
        %5880 = vmatpush1.msra.mxu0 0.0
        %5881 = vmatprep.subr.mxu0 0.0
        %5882 = vmatpush1.msra.mxu0 0.0
        %5883 = vmatprep.subr.mxu0 0.0
        %5884 = vmatpush1.msra.mxu0 0.0
        %5885 = vmatprep.subr.mxu0 0.0
        %5886 = vmatpush1.msra.mxu0 0.0
        %5887 = vmatprep.subr.mxu0 0.0
        %5888 = vmatpush1.msra.mxu0 0.0
        %5889 = vmatprep.subr.mxu0 0.0
        %5890 = vmatpush1.msra.mxu0 0.0
        %5891 = vmatprep.subr.mxu0 0.0
        %5892 = vmatpush1.msra.mxu0 0.0
        %5893 = vmatprep.subr.mxu0 0.0
        %5894 = vmatpush1.msra.mxu0 0.0
        %5895 = vmatprep.subr.mxu0 0.0
        %5896 = vmatpush1.msra.mxu0 0.0
        %5897 = vmatprep.subr.mxu0 0.0
        %5898 = vmatpush1.msra.mxu0 0.0
        %5899 = vmatprep.subr.mxu0 0.0
        %5900 = vmatpush1.msra.mxu0 0.0
        %5901 = vmatprep.subr.mxu0 0.0
        %5902 = vmatpush1.msra.mxu0 %v5872
        %5903 = vmatprep.subr.mxu0 0.0
        %5904 = vmatpush1.msra.mxu0 %v5871
        %5905 = vmatprep.subr.mxu0 0.0
        %5906 = vmatpush2.msra.mxu0 0.0
        %5907 = vmatprep.subr.mxu0 0.0
        %5908 = vmatpush2.msra.mxu0 0.0
        %5909 = vmatprep.subr.mxu0 0.0
        %5910 = vmatpush2.msra.mxu0 0.0
        %5911 = vmatprep.subr.mxu0 0.0
        %5912 = vmatpush2.msra.mxu0 0.0
        %5913 = vmatprep.subr.mxu0 0.0
        %5914 = vmatpush2.msra.mxu0 0.0
        %5915 = vmatprep.subr.mxu0 0.0
        %5916 = vmatpush2.msra.mxu0 0.0
        %5917 = vmatprep.subr.mxu0 0.0
        %5918 = vmatpush2.msra.mxu0 0.0
        %5919 = vmatprep.subr.mxu0 0.0
        %5920 = vmatpush2.msra.mxu0 0.0
        %5921 = vmatprep.subr.mxu0 0.0
        %5922 = vmatpush2.msra.mxu0 0.0
        %5923 = vmatprep.subr.mxu0 0.0
        %5924 = vmatpush2.msra.mxu0 0.0
        %5925 = vmatprep.subr.mxu0 0.0
        %5926 = vmatpush2.msra.mxu0 0.0
        %5927 = vmatprep.subr.mxu0 0.0
        %5928 = vmatpush2.msra.mxu0 0.0
        %5929 = vmatprep.subr.mxu0 0.0
        %5930 = vmatpush2.msra.mxu0 0.0
        %5931 = vmatprep.subr.mxu0 0.0
        %5932 = vmatpush2.msra.mxu0 0.0
        %5933 = vmatprep.subr.mxu0 0.0
        %5934 = vmatpush2.msra.mxu0 0.0
        %5935 = vmatprep.subr.mxu0 0.0
        %5936 = vmatpush2.msra.mxu0 0.0
        %5937 = vmatprep.mubr.f32.mxu0 0.0
        %5938 = vmatmul.mubr.f32.gmra.mxu0 %v1251
        %v5939 = vpop.f32.mrf.mxu0
        %v5940 = vadd.f32 0.0, %v5939
        %v5941 = vpop.f32.mrf.mxu0
        %5942 = vmatprep.mubr.f32.mxu0 0.0
        %5943 = vmatmul.mubr.f32.gmra.mxu0 %v1254
        %v5944 = vpop.f32.mrf.mxu0
        %v5945 = vadd.f32 0.0, %v5944
        %v5946 = vpop.f32.mrf.mxu0
        %5947 = vdwg.mxu0
        %v5948 = vld [vmem:[%s593] sm:$0xff]
        %v5949 = vld [vmem:[%s593 + $0x8] sm:$0xff]
        %v5950 = vld [vmem:[%s593 + $0x10] sm:$0xff]
        %v5951 = vld [vmem:[%s593 + $0x18] sm:$0xff]
        %v5952 = vld [vmem:[%s593 + $0x20] sm:$0xff]
        %v5953 = vld [vmem:[%s593 + $0x28] sm:$0xff]
        %v5954 = vld [vmem:[%s593 + $0x30] sm:$0xff]
        %v5955 = vld [vmem:[%s593 + $0x38] sm:$0xff]
        %v5956 = vld [vmem:[%s593 + $0x40] sm:$0xff]
        %v5957 = vld [vmem:[%s593 + $0x48] sm:$0xff]
        %v5958 = vld [vmem:[%s593 + $0x50] sm:$0xff]
        %v5959 = vld [vmem:[%s593 + $0x58] sm:$0xff]
        %5960 = vmatprep.subr.mxu0 0.0
        %5961 = vmatpush1.msra.mxu0 0.0
        %5962 = vmatprep.subr.mxu0 0.0
        %5963 = vmatpush1.msra.mxu0 0.0
        %5964 = vmatprep.subr.mxu0 0.0
        %5965 = vmatpush1.msra.mxu0 0.0
        %5966 = vmatprep.subr.mxu0 0.0
        %5967 = vmatpush1.msra.mxu0 0.0
        %5968 = vmatprep.subr.mxu0 0.0
        %5969 = vmatpush1.msra.mxu0 0.0
        %5970 = vmatprep.subr.mxu0 0.0
        %5971 = vmatpush1.msra.mxu0 0.0
        %5972 = vmatprep.subr.mxu0 0.0
        %5973 = vmatpush1.msra.mxu0 0.0
        %5974 = vmatprep.subr.mxu0 0.0
        %5975 = vmatpush1.msra.mxu0 0.0
        %5976 = vmatprep.subr.mxu0 0.0
        %5977 = vmatpush1.msra.mxu0 0.0
        %5978 = vmatprep.subr.mxu0 0.0
        %5979 = vmatpush1.msra.mxu0 0.0
        %5980 = vmatprep.subr.mxu0 0.0
        %5981 = vmatpush1.msra.mxu0 0.0
        %5982 = vmatprep.subr.mxu0 0.0
        %5983 = vmatpush1.msra.mxu0 0.0
        %5984 = vmatprep.subr.mxu0 0.0
        %5985 = vmatpush1.msra.mxu0 0.0
        %5986 = vmatprep.subr.mxu0 0.0
        %5987 = vmatpush1.msra.mxu0 0.0
        %5988 = vmatprep.subr.mxu0 0.0
        %5989 = vmatpush1.msra.mxu0 %v5872
        %5990 = vmatprep.subr.mxu0 0.0
        %5991 = vmatpush1.msra.mxu0 %v5871
        %5992 = vmatprep.subr.mxu0 0.0
        %5993 = vmatpush2.msra.mxu0 0.0
        %5994 = vmatprep.subr.mxu0 0.0
        %5995 = vmatpush2.msra.mxu0 0.0
        %5996 = vmatprep.subr.mxu0 0.0
        %5997 = vmatpush2.msra.mxu0 0.0
        %5998 = vmatprep.subr.mxu0 0.0
        %5999 = vmatpush2.msra.mxu0 0.0
        %6000 = vmatprep.subr.mxu0 0.0
        %6001 = vmatpush2.msra.mxu0 0.0
        %6002 = vmatprep.subr.mxu0 0.0
        %6003 = vmatpush2.msra.mxu0 0.0
        %6004 = vmatprep.subr.mxu0 0.0
        %6005 = vmatpush2.msra.mxu0 0.0
        %6006 = vmatprep.subr.mxu0 0.0
        %6007 = vmatpush2.msra.mxu0 0.0
        %6008 = vmatprep.subr.mxu0 0.0
        %6009 = vmatpush2.msra.mxu0 0.0
        %6010 = vmatprep.subr.mxu0 0.0
        %6011 = vmatpush2.msra.mxu0 0.0
        %6012 = vmatprep.subr.mxu0 0.0
        %6013 = vmatpush2.msra.mxu0 0.0
        %6014 = vmatprep.subr.mxu0 0.0
        %6015 = vmatpush2.msra.mxu0 0.0
        %6016 = vmatprep.subr.mxu0 0.0
        %6017 = vmatpush2.msra.mxu0 0.0
        %6018 = vmatprep.subr.mxu0 0.0
        %6019 = vmatpush2.msra.mxu0 0.0
        %6020 = vmatprep.subr.mxu0 0.0
        %6021 = vmatpush2.msra.mxu0 0.0
        %6022 = vmatprep.subr.mxu0 0.0
        %6023 = vmatpush2.msra.mxu0 0.0
        %6024 = vmatprep.mubr.f32.mxu0 0.0
        %6025 = vmatmul.mubr.f32.gmra.mxu0 %v1344
        %v6026 = vpop.f32.mrf.mxu0
        %v6027 = vadd.f32 0.0, %v6026
        %v6028 = vpop.f32.mrf.mxu0
        %6029 = vmatprep.mubr.f32.mxu0 0.0
        %6030 = vmatmul.mubr.f32.gmra.mxu0 %v1347
        %v6031 = vpop.f32.mrf.mxu0
        %v6032 = vadd.f32 0.0, %v6031
        %v6033 = vpop.f32.mrf.mxu0
        %6034 = vdwg.mxu0
        %v6035 = vld [vmem:[%s1424] sm:$0xff]
        %v6036 = vld [vmem:[%s1424 + $0x8] sm:$0xff]
        %v6037 = vld [vmem:[%s1424 + $0x10] sm:$0xff]
        %v6038 = vld [vmem:[%s1424 + $0x18] sm:$0xff]
        %v6039 = vld [vmem:[%s1424 + $0x20] sm:$0xff]
        %v6040 = vld [vmem:[%s1424 + $0x28] sm:$0xff]
        %v6041 = vld [vmem:[%s1424 + $0x30] sm:$0xff]
        %v6042 = vld [vmem:[%s1424 + $0x38] sm:$0xff]
        %v6043 = vld [vmem:[%s1424 + $0x40] sm:$0xff]
        %v6044 = vld [vmem:[%s1424 + $0x48] sm:$0xff]
        %v6045 = vld [vmem:[%s1424 + $0x50] sm:$0xff]
        %v6046 = vld [vmem:[%s1424 + $0x58] sm:$0xff]
        %v6048 = vsel %vm1437, %v6027, 0
        %v6051 = vsel %vm1437, %v6032, 0
        %6053 = vmatprep.subr.mxu0 0.0
        %6054 = vmatpush1.msra.mxu0 0.0
        %6055 = vmatprep.subr.mxu0 0.0
        %6056 = vmatpush1.msra.mxu0 0.0
        %6057 = vmatprep.subr.mxu0 0.0
        %6058 = vmatpush1.msra.mxu0 0.0
        %6059 = vmatprep.subr.mxu0 0.0
        %6060 = vmatpush1.msra.mxu0 0.0
        %6061 = vmatprep.subr.mxu0 0.0
        %6062 = vmatpush1.msra.mxu0 0.0
        %6063 = vmatprep.subr.mxu0 0.0
        %6064 = vmatpush1.msra.mxu0 0.0
        %6065 = vmatprep.subr.mxu0 0.0
        %6066 = vmatpush1.msra.mxu0 0.0
        %6067 = vmatprep.subr.mxu0 0.0
        %6068 = vmatpush1.msra.mxu0 0.0
        %6069 = vmatprep.subr.mxu0 0.0
        %6070 = vmatpush1.msra.mxu0 0.0
        %6071 = vmatprep.subr.mxu0 0.0
        %6072 = vmatpush1.msra.mxu0 0.0
        %6073 = vmatprep.subr.mxu0 %v6046
        %6074 = vmatpush1.msra.mxu0 %v6045
        %6075 = vmatprep.subr.mxu0 %v6044
        %6076 = vmatpush1.msra.mxu0 %v6043
        %6077 = vmatprep.subr.mxu0 %v6042
        %6078 = vmatpush1.msra.mxu0 %v6041
        %6079 = vmatprep.subr.mxu0 %v6040
        %6080 = vmatpush1.msra.mxu0 %v6039
        %6081 = vmatprep.subr.mxu0 %v6038
        %6082 = vmatpush1.msra.mxu0 %v6037
        %6083 = vmatprep.subr.mxu0 %v6036
        %6084 = vmatpush1.msra.mxu0 %v6035
        %6085 = vmatprep.subr.mxu0 0.0
        %6086 = vmatpush2.msra.mxu0 0.0
        %6087 = vmatprep.subr.mxu0 0.0
        %6088 = vmatpush2.msra.mxu0 0.0
        %6089 = vmatprep.subr.mxu0 0.0
        %6090 = vmatpush2.msra.mxu0 0.0
        %6091 = vmatprep.subr.mxu0 0.0
        %6092 = vmatpush2.msra.mxu0 0.0
        %6093 = vmatprep.subr.mxu0 0.0
        %6094 = vmatpush2.msra.mxu0 0.0
        %6095 = vmatprep.subr.mxu0 0.0
        %6096 = vmatpush2.msra.mxu0 0.0
        %6097 = vmatprep.subr.mxu0 0.0
        %6098 = vmatpush2.msra.mxu0 0.0
        %6099 = vmatprep.subr.mxu0 0.0
        %6100 = vmatpush2.msra.mxu0 0.0
        %6101 = vmatprep.subr.mxu0 0.0
        %6102 = vmatpush2.msra.mxu0 0.0
        %6103 = vmatprep.subr.mxu0 0.0
        %6104 = vmatpush2.msra.mxu0 0.0
        %6105 = vmatprep.subr.mxu0 0.0
        %6106 = vmatpush2.msra.mxu0 0.0
        %6107 = vmatprep.subr.mxu0 0.0
        %6108 = vmatpush2.msra.mxu0 0.0
        %6109 = vmatprep.subr.mxu0 0.0
        %6110 = vmatpush2.msra.mxu0 0.0
        %6111 = vmatprep.subr.mxu0 0.0
        %6112 = vmatpush2.msra.mxu0 0.0
        %6113 = vmatprep.subr.mxu0 0.0
        %6114 = vmatpush2.msra.mxu0 0.0
        %6115 = vmatprep.subr.mxu0 0.0
        %6116 = vmatpush2.msra.mxu0 0.0
        %6117 = vmatprep.mubr.f32.mxu0 0.0
        %6118 = vmatmul.mubr.f32.gmra.mxu0 %v6048
        %v6119 = vpop.f32.mrf.mxu0
        %v6120 = vadd.f32 0.0, %v6119
        %v6121 = vpop.f32.mrf.mxu0
        %v6122 = vadd.f32 0.0, %v6121
        %6123 = vmatprep.mubr.f32.mxu0 0.0
        %6124 = vmatmul.mubr.f32.gmra.mxu0 %v6051
        %v6125 = vpop.f32.mrf.mxu0
        %v6126 = vadd.f32 0.0, %v6125
        %v6127 = vpop.f32.mrf.mxu0
        %v6128 = vadd.f32 0.0, %v6127
        %6129 = vdwg.mxu0
        %v6131 = vsel %vm1437, %v5940, 0
        %v6134 = vsel %vm1437, %v5945, 0
        %6136 = vmatprep.subr.mxu0 0.0
        %6137 = vmatpush1.msra.mxu0 0.0
        %6138 = vmatprep.subr.mxu0 0.0
        %6139 = vmatpush1.msra.mxu0 0.0
        %6140 = vmatprep.subr.mxu0 0.0
        %6141 = vmatpush1.msra.mxu0 0.0
        %6142 = vmatprep.subr.mxu0 0.0
        %6143 = vmatpush1.msra.mxu0 0.0
        %6144 = vmatprep.subr.mxu0 0.0
        %6145 = vmatpush1.msra.mxu0 0.0
        %6146 = vmatprep.subr.mxu0 0.0
        %6147 = vmatpush1.msra.mxu0 0.0
        %6148 = vmatprep.subr.mxu0 0.0
        %6149 = vmatpush1.msra.mxu0 0.0
        %6150 = vmatprep.subr.mxu0 0.0
        %6151 = vmatpush1.msra.mxu0 0.0
        %6152 = vmatprep.subr.mxu0 0.0
        %6153 = vmatpush1.msra.mxu0 0.0
        %6154 = vmatprep.subr.mxu0 0.0
        %6155 = vmatpush1.msra.mxu0 0.0
        %6156 = vmatprep.subr.mxu0 %v5959
        %6157 = vmatpush1.msra.mxu0 %v5958
        %6158 = vmatprep.subr.mxu0 %v5957
        %6159 = vmatpush1.msra.mxu0 %v5956
        %6160 = vmatprep.subr.mxu0 %v5955
        %6161 = vmatpush1.msra.mxu0 %v5954
        %6162 = vmatprep.subr.mxu0 %v5953
        %6163 = vmatpush1.msra.mxu0 %v5952
        %6164 = vmatprep.subr.mxu0 %v5951
        %6165 = vmatpush1.msra.mxu0 %v5950
        %6166 = vmatprep.subr.mxu0 %v5949
        %6167 = vmatpush1.msra.mxu0 %v5948
        %6168 = vmatprep.subr.mxu0 0.0
        %6169 = vmatpush2.msra.mxu0 0.0
        %6170 = vmatprep.subr.mxu0 0.0
        %6171 = vmatpush2.msra.mxu0 0.0
        %6172 = vmatprep.subr.mxu0 0.0
        %6173 = vmatpush2.msra.mxu0 0.0
        %6174 = vmatprep.subr.mxu0 0.0
        %6175 = vmatpush2.msra.mxu0 0.0
        %6176 = vmatprep.subr.mxu0 0.0
        %6177 = vmatpush2.msra.mxu0 0.0
        %6178 = vmatprep.subr.mxu0 0.0
        %6179 = vmatpush2.msra.mxu0 0.0
        %6180 = vmatprep.subr.mxu0 0.0
        %6181 = vmatpush2.msra.mxu0 0.0
        %6182 = vmatprep.subr.mxu0 0.0
        %6183 = vmatpush2.msra.mxu0 0.0
        %6184 = vmatprep.subr.mxu0 0.0
        %6185 = vmatpush2.msra.mxu0 0.0
        %6186 = vmatprep.subr.mxu0 0.0
        %6187 = vmatpush2.msra.mxu0 0.0
        %6188 = vmatprep.subr.mxu0 0.0
        %6189 = vmatpush2.msra.mxu0 0.0
        %6190 = vmatprep.subr.mxu0 0.0
        %6191 = vmatpush2.msra.mxu0 0.0
        %6192 = vmatprep.subr.mxu0 0.0
        %6193 = vmatpush2.msra.mxu0 0.0
        %6194 = vmatprep.subr.mxu0 0.0
        %6195 = vmatpush2.msra.mxu0 0.0
        %6196 = vmatprep.subr.mxu0 0.0
        %6197 = vmatpush2.msra.mxu0 0.0
        %6198 = vmatprep.subr.mxu0 0.0
        %6199 = vmatpush2.msra.mxu0 0.0
        %6200 = vmatprep.mubr.f32.mxu0 0.0
        %6201 = vmatmul.mubr.f32.gmra.mxu0 %v6131
        %v6202 = vpop.f32.mrf.mxu0
        %v6203 = vadd.f32 %v6120, %v6202
        %v6204 = vpop.f32.mrf.mxu0
        %v6205 = vadd.f32 %v6122, %v6204
        %6206 = vmatprep.mubr.f32.mxu0 0.0
        %6207 = vmatmul.mubr.f32.gmra.mxu0 %v6134
        %v6208 = vpop.f32.mrf.mxu0
        %v6209 = vadd.f32 %v6126, %v6208
        %v6210 = vpop.f32.mrf.mxu0
        %v6211 = vadd.f32 %v6128, %v6210
        %6212 = vdwg.mxu0
        %6213 = vmatprep.subr.mxu0 0.0
        %6214 = vmatpush1.msra.mxu0 0.0
        %6215 = vmatprep.subr.mxu0 0.0
        %6216 = vmatpush1.msra.mxu0 0.0
        %6217 = vmatprep.subr.mxu0 0.0
        %6218 = vmatpush1.msra.mxu0 0.0
        %6219 = vmatprep.subr.mxu0 0.0
        %6220 = vmatpush1.msra.mxu0 0.0
        %6221 = vmatprep.subr.mxu0 0.0
        %6222 = vmatpush1.msra.mxu0 0.0
        %6223 = vmatprep.subr.mxu0 0.0
        %6224 = vmatpush1.msra.mxu0 0.0
        %6225 = vmatprep.subr.mxu0 0.0
        %6226 = vmatpush1.msra.mxu0 0.0
        %6227 = vmatprep.subr.mxu0 0.0
        %6228 = vmatpush1.msra.mxu0 0.0
        %6229 = vmatprep.subr.mxu0 0.0
        %6230 = vmatpush1.msra.mxu0 0.0
        %6231 = vmatprep.subr.mxu0 0.0
        %6232 = vmatpush1.msra.mxu0 0.0
        %6233 = vmatprep.subr.mxu0 0.0
        %6234 = vmatpush1.msra.mxu0 0.0
        %6235 = vmatprep.subr.mxu0 0.0
        %6236 = vmatpush1.msra.mxu0 0.0
        %6237 = vmatprep.subr.mxu0 0.0
        %6238 = vmatpush1.msra.mxu0 0.0
        %6239 = vmatprep.subr.mxu0 0.0
        %6240 = vmatpush1.msra.mxu0 0.0
        %6241 = vmatprep.subr.mxu0 0.0
        %6242 = vmatpush1.msra.mxu0 %v5872
        %6243 = vmatprep.subr.mxu0 0.0
        %6244 = vmatpush1.msra.mxu0 %v5871
        %6245 = vmatprep.subr.mxu0 0.0
        %6246 = vmatpush2.msra.mxu0 0.0
        %6247 = vmatprep.subr.mxu0 0.0
        %6248 = vmatpush2.msra.mxu0 0.0
        %6249 = vmatprep.subr.mxu0 0.0
        %6250 = vmatpush2.msra.mxu0 0.0
        %6251 = vmatprep.subr.mxu0 0.0
        %6252 = vmatpush2.msra.mxu0 0.0
        %6253 = vmatprep.subr.mxu0 0.0
        %6254 = vmatpush2.msra.mxu0 0.0
        %6255 = vmatprep.subr.mxu0 0.0
        %6256 = vmatpush2.msra.mxu0 0.0
        %6257 = vmatprep.subr.mxu0 0.0
        %6258 = vmatpush2.msra.mxu0 0.0
        %6259 = vmatprep.subr.mxu0 0.0
        %6260 = vmatpush2.msra.mxu0 0.0
        %6261 = vmatprep.subr.mxu0 0.0
        %6262 = vmatpush2.msra.mxu0 0.0
        %6263 = vmatprep.subr.mxu0 0.0
        %6264 = vmatpush2.msra.mxu0 0.0
        %6265 = vmatprep.subr.mxu0 0.0
        %6266 = vmatpush2.msra.mxu0 0.0
        %6267 = vmatprep.subr.mxu0 0.0
        %6268 = vmatpush2.msra.mxu0 0.0
        %6269 = vmatprep.subr.mxu0 0.0
        %6270 = vmatpush2.msra.mxu0 0.0
        %6271 = vmatprep.subr.mxu0 0.0
        %6272 = vmatpush2.msra.mxu0 0.0
        %6273 = vmatprep.subr.mxu0 0.0
        %6274 = vmatpush2.msra.mxu0 0.0
        %6275 = vmatprep.subr.mxu0 0.0
        %6276 = vmatpush2.msra.mxu0 0.0
        %6277 = vmatprep.mubr.f32.mxu0 0.0
        %6278 = vmatmul.mubr.f32.gmra.mxu0 %v1605
        %v6279 = vpop.f32.mrf.mxu0
        %v6280 = vadd.f32 0.0, %v6279
        %v6281 = vpop.f32.mrf.mxu0
        %6282 = vmatprep.mubr.f32.mxu0 0.0
        %6283 = vmatmul.mubr.f32.gmra.mxu0 %v1608
        %v6284 = vpop.f32.mrf.mxu0
        %v6285 = vadd.f32 0.0, %v6284
        %v6286 = vpop.f32.mrf.mxu0
        %6287 = vdwg.mxu0
        %v6288 = vld [vmem:[%s1685] sm:$0xff]
        %v6289 = vld [vmem:[%s1685 + $0x8] sm:$0xff]
        %v6290 = vld [vmem:[%s1685 + $0x10] sm:$0xff]
        %v6291 = vld [vmem:[%s1685 + $0x18] sm:$0xff]
        %v6292 = vld [vmem:[%s1685 + $0x20] sm:$0xff]
        %v6293 = vld [vmem:[%s1685 + $0x28] sm:$0xff]
        %v6294 = vld [vmem:[%s1685 + $0x30] sm:$0xff]
        %v6295 = vld [vmem:[%s1685 + $0x38] sm:$0xff]
        %v6296 = vld [vmem:[%s1685 + $0x40] sm:$0xff]
        %v6297 = vld [vmem:[%s1685 + $0x48] sm:$0xff]
        %v6298 = vld [vmem:[%s1685 + $0x50] sm:$0xff]
        %v6299 = vld [vmem:[%s1685 + $0x58] sm:$0xff]
        %v6301 = vsel %vm1437, %v6280, 0
        %v6304 = vsel %vm1437, %v6285, 0
        %6306 = vmatprep.subr.mxu0 0.0
        %6307 = vmatpush1.msra.mxu0 0.0
        %6308 = vmatprep.subr.mxu0 0.0
        %6309 = vmatpush1.msra.mxu0 0.0
        %6310 = vmatprep.subr.mxu0 0.0
        %6311 = vmatpush1.msra.mxu0 0.0
        %6312 = vmatprep.subr.mxu0 0.0
        %6313 = vmatpush1.msra.mxu0 0.0
        %6314 = vmatprep.subr.mxu0 0.0
        %6315 = vmatpush1.msra.mxu0 0.0
        %6316 = vmatprep.subr.mxu0 0.0
        %6317 = vmatpush1.msra.mxu0 0.0
        %6318 = vmatprep.subr.mxu0 0.0
        %6319 = vmatpush1.msra.mxu0 0.0
        %6320 = vmatprep.subr.mxu0 0.0
        %6321 = vmatpush1.msra.mxu0 0.0
        %6322 = vmatprep.subr.mxu0 0.0
        %6323 = vmatpush1.msra.mxu0 0.0
        %6324 = vmatprep.subr.mxu0 0.0
        %6325 = vmatpush1.msra.mxu0 0.0
        %6326 = vmatprep.subr.mxu0 %v6299
        %6327 = vmatpush1.msra.mxu0 %v6298
        %6328 = vmatprep.subr.mxu0 %v6297
        %6329 = vmatpush1.msra.mxu0 %v6296
        %6330 = vmatprep.subr.mxu0 %v6295
        %6331 = vmatpush1.msra.mxu0 %v6294
        %6332 = vmatprep.subr.mxu0 %v6293
        %6333 = vmatpush1.msra.mxu0 %v6292
        %6334 = vmatprep.subr.mxu0 %v6291
        %6335 = vmatpush1.msra.mxu0 %v6290
        %6336 = vmatprep.subr.mxu0 %v6289
        %6337 = vmatpush1.msra.mxu0 %v6288
        %6338 = vmatprep.subr.mxu0 0.0
        %6339 = vmatpush2.msra.mxu0 0.0
        %6340 = vmatprep.subr.mxu0 0.0
        %6341 = vmatpush2.msra.mxu0 0.0
        %6342 = vmatprep.subr.mxu0 0.0
        %6343 = vmatpush2.msra.mxu0 0.0
        %6344 = vmatprep.subr.mxu0 0.0
        %6345 = vmatpush2.msra.mxu0 0.0
        %6346 = vmatprep.subr.mxu0 0.0
        %6347 = vmatpush2.msra.mxu0 0.0
        %6348 = vmatprep.subr.mxu0 0.0
        %6349 = vmatpush2.msra.mxu0 0.0
        %6350 = vmatprep.subr.mxu0 0.0
        %6351 = vmatpush2.msra.mxu0 0.0
        %6352 = vmatprep.subr.mxu0 0.0
        %6353 = vmatpush2.msra.mxu0 0.0
        %6354 = vmatprep.subr.mxu0 0.0
        %6355 = vmatpush2.msra.mxu0 0.0
        %6356 = vmatprep.subr.mxu0 0.0
        %6357 = vmatpush2.msra.mxu0 0.0
        %6358 = vmatprep.subr.mxu0 0.0
        %6359 = vmatpush2.msra.mxu0 0.0
        %6360 = vmatprep.subr.mxu0 0.0
        %6361 = vmatpush2.msra.mxu0 0.0
        %6362 = vmatprep.subr.mxu0 0.0
        %6363 = vmatpush2.msra.mxu0 0.0
        %6364 = vmatprep.subr.mxu0 0.0
        %6365 = vmatpush2.msra.mxu0 0.0
        %6366 = vmatprep.subr.mxu0 0.0
        %6367 = vmatpush2.msra.mxu0 0.0
        %6368 = vmatprep.subr.mxu0 0.0
        %6369 = vmatpush2.msra.mxu0 0.0
        %6370 = vmatprep.mubr.f32.mxu0 0.0
        %6371 = vmatmul.mubr.f32.gmra.mxu0 %v6301
        %v6372 = vpop.f32.mrf.mxu0
        %v6373 = vadd.f32 0.0, %v6372
        %v6374 = vpop.f32.mrf.mxu0
        %v6375 = vadd.f32 0.0, %v6374
        %6376 = vmatprep.mubr.f32.mxu0 0.0
        %6377 = vmatmul.mubr.f32.gmra.mxu0 %v6304
        %v6378 = vpop.f32.mrf.mxu0
        %v6379 = vadd.f32 0.0, %v6378
        %v6380 = vpop.f32.mrf.mxu0
        %v6381 = vadd.f32 0.0, %v6380
        %6382 = vdwg.mxu0
        %v6383 = vadd.f32 %v6203, %v6373
        %v6384 = vadd.f32 %v6205, %v6375
        %v6385 = vadd.f32 %v6209, %v6379
        %v6386 = vadd.f32 %v6211, %v6381
        %6387 = vmatprep.subr.mxu0 0.0
        %6388 = vmatpush1.msra.mxu0 0.0
        %6389 = vmatprep.subr.mxu0 0.0
        %6390 = vmatpush1.msra.mxu0 0.0
        %6391 = vmatprep.subr.mxu0 0.0
        %6392 = vmatpush1.msra.mxu0 0.0
        %6393 = vmatprep.subr.mxu0 0.0
        %6394 = vmatpush1.msra.mxu0 0.0
        %6395 = vmatprep.subr.mxu0 0.0
        %6396 = vmatpush1.msra.mxu0 0.0
        %6397 = vmatprep.subr.mxu0 0.0
        %6398 = vmatpush1.msra.mxu0 0.0
        %6399 = vmatprep.subr.mxu0 0.0
        %6400 = vmatpush1.msra.mxu0 0.0
        %6401 = vmatprep.subr.mxu0 0.0
        %6402 = vmatpush1.msra.mxu0 0.0
        %6403 = vmatprep.subr.mxu0 0.0
        %6404 = vmatpush1.msra.mxu0 0.0
        %6405 = vmatprep.subr.mxu0 0.0
        %6406 = vmatpush1.msra.mxu0 0.0
        %6407 = vmatprep.subr.mxu0 0.0
        %6408 = vmatpush1.msra.mxu0 0.0
        %6409 = vmatprep.subr.mxu0 0.0
        %6410 = vmatpush1.msra.mxu0 0.0
        %6411 = vmatprep.subr.mxu0 0.0
        %6412 = vmatpush1.msra.mxu0 0.0
        %6413 = vmatprep.subr.mxu0 0.0
        %6414 = vmatpush1.msra.mxu0 0.0
        %6415 = vmatprep.subr.mxu0 0.0
        %6416 = vmatpush1.msra.mxu0 %v5872
        %6417 = vmatprep.subr.mxu0 0.0
        %6418 = vmatpush1.msra.mxu0 %v5871
        %6419 = vmatprep.subr.mxu0 0.0
        %6420 = vmatpush2.msra.mxu0 0.0
        %6421 = vmatprep.subr.mxu0 0.0
        %6422 = vmatpush2.msra.mxu0 0.0
        %6423 = vmatprep.subr.mxu0 0.0
        %6424 = vmatpush2.msra.mxu0 0.0
        %6425 = vmatprep.subr.mxu0 0.0
        %6426 = vmatpush2.msra.mxu0 0.0
        %6427 = vmatprep.subr.mxu0 0.0
        %6428 = vmatpush2.msra.mxu0 0.0
        %6429 = vmatprep.subr.mxu0 0.0
        %6430 = vmatpush2.msra.mxu0 0.0
        %6431 = vmatprep.subr.mxu0 0.0
        %6432 = vmatpush2.msra.mxu0 0.0
        %6433 = vmatprep.subr.mxu0 0.0
        %6434 = vmatpush2.msra.mxu0 0.0
        %6435 = vmatprep.subr.mxu0 0.0
        %6436 = vmatpush2.msra.mxu0 0.0
        %6437 = vmatprep.subr.mxu0 0.0
        %6438 = vmatpush2.msra.mxu0 0.0
        %6439 = vmatprep.subr.mxu0 0.0
        %6440 = vmatpush2.msra.mxu0 0.0
        %6441 = vmatprep.subr.mxu0 0.0
        %6442 = vmatpush2.msra.mxu0 0.0
        %6443 = vmatprep.subr.mxu0 0.0
        %6444 = vmatpush2.msra.mxu0 0.0
        %6445 = vmatprep.subr.mxu0 0.0
        %6446 = vmatpush2.msra.mxu0 0.0
        %6447 = vmatprep.subr.mxu0 0.0
        %6448 = vmatpush2.msra.mxu0 0.0
        %6449 = vmatprep.subr.mxu0 0.0
        %6450 = vmatpush2.msra.mxu0 0.0
        %6451 = vmatprep.mubr.f32.mxu0 0.0
        %6452 = vmatmul.mubr.f32.gmra.mxu0 %v1786
        %v6453 = vpop.f32.mrf.mxu0
        %v6454 = vadd.f32 0.0, %v6453
        %v6455 = vpop.f32.mrf.mxu0
        %6456 = vmatprep.mubr.f32.mxu0 0.0
        %6457 = vmatmul.mubr.f32.gmra.mxu0 %v1789
        %v6458 = vpop.f32.mrf.mxu0
        %v6459 = vadd.f32 0.0, %v6458
        %v6460 = vpop.f32.mrf.mxu0
        %6461 = vdwg.mxu0
        %v6462 = vld [vmem:[%s1866] sm:$0xff]
        %v6463 = vld [vmem:[%s1866 + $0x8] sm:$0xff]
        %v6464 = vld [vmem:[%s1866 + $0x10] sm:$0xff]
        %v6465 = vld [vmem:[%s1866 + $0x18] sm:$0xff]
        %v6466 = vld [vmem:[%s1866 + $0x20] sm:$0xff]
        %v6467 = vld [vmem:[%s1866 + $0x28] sm:$0xff]
        %v6468 = vld [vmem:[%s1866 + $0x30] sm:$0xff]
        %v6469 = vld [vmem:[%s1866 + $0x38] sm:$0xff]
        %v6470 = vld [vmem:[%s1866 + $0x40] sm:$0xff]
        %v6471 = vld [vmem:[%s1866 + $0x48] sm:$0xff]
        %v6472 = vld [vmem:[%s1866 + $0x50] sm:$0xff]
        %v6473 = vld [vmem:[%s1866 + $0x58] sm:$0xff]
        %v6475 = vsel %vm1437, %v6454, 0
        %v6478 = vsel %vm1437, %v6459, 0
        %6480 = vmatprep.subr.mxu0 0.0
        %6481 = vmatpush1.msra.mxu0 0.0
        %6482 = vmatprep.subr.mxu0 0.0
        %6483 = vmatpush1.msra.mxu0 0.0
        %6484 = vmatprep.subr.mxu0 0.0
        %6485 = vmatpush1.msra.mxu0 0.0
        %6486 = vmatprep.subr.mxu0 0.0
        %6487 = vmatpush1.msra.mxu0 0.0
        %6488 = vmatprep.subr.mxu0 0.0
        %6489 = vmatpush1.msra.mxu0 0.0
        %6490 = vmatprep.subr.mxu0 0.0
        %6491 = vmatpush1.msra.mxu0 0.0
        %6492 = vmatprep.subr.mxu0 0.0
        %6493 = vmatpush1.msra.mxu0 0.0
        %6494 = vmatprep.subr.mxu0 0.0
        %6495 = vmatpush1.msra.mxu0 0.0
        %6496 = vmatprep.subr.mxu0 0.0
        %6497 = vmatpush1.msra.mxu0 0.0
        %6498 = vmatprep.subr.mxu0 0.0
        %6499 = vmatpush1.msra.mxu0 0.0
        %6500 = vmatprep.subr.mxu0 %v6473
        %6501 = vmatpush1.msra.mxu0 %v6472
        %6502 = vmatprep.subr.mxu0 %v6471
        %6503 = vmatpush1.msra.mxu0 %v6470
        %6504 = vmatprep.subr.mxu0 %v6469
        %6505 = vmatpush1.msra.mxu0 %v6468
        %6506 = vmatprep.subr.mxu0 %v6467
        %6507 = vmatpush1.msra.mxu0 %v6466
        %6508 = vmatprep.subr.mxu0 %v6465
        %6509 = vmatpush1.msra.mxu0 %v6464
        %6510 = vmatprep.subr.mxu0 %v6463
        %6511 = vmatpush1.msra.mxu0 %v6462
        %6512 = vmatprep.subr.mxu0 0.0
        %6513 = vmatpush2.msra.mxu0 0.0
        %6514 = vmatprep.subr.mxu0 0.0
        %6515 = vmatpush2.msra.mxu0 0.0
        %6516 = vmatprep.subr.mxu0 0.0
        %6517 = vmatpush2.msra.mxu0 0.0
        %6518 = vmatprep.subr.mxu0 0.0
        %6519 = vmatpush2.msra.mxu0 0.0
        %6520 = vmatprep.subr.mxu0 0.0
        %6521 = vmatpush2.msra.mxu0 0.0
        %6522 = vmatprep.subr.mxu0 0.0
        %6523 = vmatpush2.msra.mxu0 0.0
        %6524 = vmatprep.subr.mxu0 0.0
        %6525 = vmatpush2.msra.mxu0 0.0
        %6526 = vmatprep.subr.mxu0 0.0
        %6527 = vmatpush2.msra.mxu0 0.0
        %6528 = vmatprep.subr.mxu0 0.0
        %6529 = vmatpush2.msra.mxu0 0.0
        %6530 = vmatprep.subr.mxu0 0.0
        %6531 = vmatpush2.msra.mxu0 0.0
        %6532 = vmatprep.subr.mxu0 0.0
        %6533 = vmatpush2.msra.mxu0 0.0
        %6534 = vmatprep.subr.mxu0 0.0
        %6535 = vmatpush2.msra.mxu0 0.0
        %6536 = vmatprep.subr.mxu0 0.0
        %6537 = vmatpush2.msra.mxu0 0.0
        %6538 = vmatprep.subr.mxu0 0.0
        %6539 = vmatpush2.msra.mxu0 0.0
        %6540 = vmatprep.subr.mxu0 0.0
        %6541 = vmatpush2.msra.mxu0 0.0
        %6542 = vmatprep.subr.mxu0 0.0
        %6543 = vmatpush2.msra.mxu0 0.0
        %6544 = vmatprep.mubr.f32.mxu0 0.0
        %6545 = vmatmul.mubr.f32.gmra.mxu0 %v6475
        %v6546 = vpop.f32.mrf.mxu0
        %v6547 = vadd.f32 0.0, %v6546
        %v6548 = vpop.f32.mrf.mxu0
        %v6549 = vadd.f32 0.0, %v6548
        %6550 = vmatprep.mubr.f32.mxu0 0.0
        %6551 = vmatmul.mubr.f32.gmra.mxu0 %v6478
        %v6552 = vpop.f32.mrf.mxu0
        %v6553 = vadd.f32 0.0, %v6552
        %v6554 = vpop.f32.mrf.mxu0
        %v6555 = vadd.f32 0.0, %v6554
        %6556 = vdwg.mxu0
        %v6557 = vadd.f32 %v6383, %v6547
        %v6558 = vadd.f32 %v6384, %v6549
        %v6559 = vadd.f32 %v6385, %v6553
        %v6560 = vadd.f32 %v6386, %v6555
        %6561 = vmatprep.subr.mxu0 0.0
        %6562 = vmatpush1.msra.mxu0 0.0
        %6563 = vmatprep.subr.mxu0 0.0
        %6564 = vmatpush1.msra.mxu0 0.0
        %6565 = vmatprep.subr.mxu0 0.0
        %6566 = vmatpush1.msra.mxu0 0.0
        %6567 = vmatprep.subr.mxu0 0.0
        %6568 = vmatpush1.msra.mxu0 0.0
        %6569 = vmatprep.subr.mxu0 0.0
        %6570 = vmatpush1.msra.mxu0 0.0
        %6571 = vmatprep.subr.mxu0 0.0
        %6572 = vmatpush1.msra.mxu0 0.0
        %6573 = vmatprep.subr.mxu0 0.0
        %6574 = vmatpush1.msra.mxu0 0.0
        %6575 = vmatprep.subr.mxu0 0.0
        %6576 = vmatpush1.msra.mxu0 0.0
        %6577 = vmatprep.subr.mxu0 0.0
        %6578 = vmatpush1.msra.mxu0 0.0
        %6579 = vmatprep.subr.mxu0 0.0
        %6580 = vmatpush1.msra.mxu0 0.0
        %6581 = vmatprep.subr.mxu0 0.0
        %6582 = vmatpush1.msra.mxu0 0.0
        %6583 = vmatprep.subr.mxu0 0.0
        %6584 = vmatpush1.msra.mxu0 0.0
        %6585 = vmatprep.subr.mxu0 0.0
        %6586 = vmatpush1.msra.mxu0 0.0
        %6587 = vmatprep.subr.mxu0 0.0
        %6588 = vmatpush1.msra.mxu0 0.0
        %6589 = vmatprep.subr.mxu0 0.0
        %6590 = vmatpush1.msra.mxu0 %v5872
        %6591 = vmatprep.subr.mxu0 0.0
        %6592 = vmatpush1.msra.mxu0 %v5871
        %6593 = vmatprep.subr.mxu0 0.0
        %6594 = vmatpush2.msra.mxu0 0.0
        %6595 = vmatprep.subr.mxu0 0.0
        %6596 = vmatpush2.msra.mxu0 0.0
        %6597 = vmatprep.subr.mxu0 0.0
        %6598 = vmatpush2.msra.mxu0 0.0
        %6599 = vmatprep.subr.mxu0 0.0
        %6600 = vmatpush2.msra.mxu0 0.0
        %6601 = vmatprep.subr.mxu0 0.0
        %6602 = vmatpush2.msra.mxu0 0.0
        %6603 = vmatprep.subr.mxu0 0.0
        %6604 = vmatpush2.msra.mxu0 0.0
        %6605 = vmatprep.subr.mxu0 0.0
        %6606 = vmatpush2.msra.mxu0 0.0
        %6607 = vmatprep.subr.mxu0 0.0
        %6608 = vmatpush2.msra.mxu0 0.0
        %6609 = vmatprep.subr.mxu0 0.0
        %6610 = vmatpush2.msra.mxu0 0.0
        %6611 = vmatprep.subr.mxu0 0.0
        %6612 = vmatpush2.msra.mxu0 0.0
        %6613 = vmatprep.subr.mxu0 0.0
        %6614 = vmatpush2.msra.mxu0 0.0
        %6615 = vmatprep.subr.mxu0 0.0
        %6616 = vmatpush2.msra.mxu0 0.0
        %6617 = vmatprep.subr.mxu0 0.0
        %6618 = vmatpush2.msra.mxu0 0.0
        %6619 = vmatprep.subr.mxu0 0.0
        %6620 = vmatpush2.msra.mxu0 0.0
        %6621 = vmatprep.subr.mxu0 0.0
        %6622 = vmatpush2.msra.mxu0 0.0
        %6623 = vmatprep.subr.mxu0 0.0
        %6624 = vmatpush2.msra.mxu0 0.0
        %6625 = vmatprep.mubr.f32.mxu0 0.0
        %6626 = vmatmul.mubr.f32.gmra.mxu0 %v1967
        %v6627 = vpop.f32.mrf.mxu0
        %v6628 = vadd.f32 0.0, %v6627
        %v6629 = vpop.f32.mrf.mxu0
        %6630 = vmatprep.mubr.f32.mxu0 0.0
        %6631 = vmatmul.mubr.f32.gmra.mxu0 %v1970
        %v6632 = vpop.f32.mrf.mxu0
        %v6633 = vadd.f32 0.0, %v6632
        %v6634 = vpop.f32.mrf.mxu0
        %6635 = vdwg.mxu0
        %v6636 = vld [vmem:[%s2047] sm:$0xff]
        %v6637 = vld [vmem:[%s2047 + $0x8] sm:$0xff]
        %v6638 = vld [vmem:[%s2047 + $0x10] sm:$0xff]
        %v6639 = vld [vmem:[%s2047 + $0x18] sm:$0xff]
        %v6640 = vld [vmem:[%s2047 + $0x20] sm:$0xff]
        %v6641 = vld [vmem:[%s2047 + $0x28] sm:$0xff]
        %v6642 = vld [vmem:[%s2047 + $0x30] sm:$0xff]
        %v6643 = vld [vmem:[%s2047 + $0x38] sm:$0xff]
        %v6644 = vld [vmem:[%s2047 + $0x40] sm:$0xff]
        %v6645 = vld [vmem:[%s2047 + $0x48] sm:$0xff]
        %v6646 = vld [vmem:[%s2047 + $0x50] sm:$0xff]
        %v6647 = vld [vmem:[%s2047 + $0x58] sm:$0xff]
        %v6649 = vsel %vm1437, %v6628, 0
        %v6652 = vsel %vm1437, %v6633, 0
        %6654 = vmatprep.subr.mxu0 0.0
        %6655 = vmatpush1.msra.mxu0 0.0
        %6656 = vmatprep.subr.mxu0 0.0
        %6657 = vmatpush1.msra.mxu0 0.0
        %6658 = vmatprep.subr.mxu0 0.0
        %6659 = vmatpush1.msra.mxu0 0.0
        %6660 = vmatprep.subr.mxu0 0.0
        %6661 = vmatpush1.msra.mxu0 0.0
        %6662 = vmatprep.subr.mxu0 0.0
        %6663 = vmatpush1.msra.mxu0 0.0
        %6664 = vmatprep.subr.mxu0 0.0
        %6665 = vmatpush1.msra.mxu0 0.0
        %6666 = vmatprep.subr.mxu0 0.0
        %6667 = vmatpush1.msra.mxu0 0.0
        %6668 = vmatprep.subr.mxu0 0.0
        %6669 = vmatpush1.msra.mxu0 0.0
        %6670 = vmatprep.subr.mxu0 0.0
        %6671 = vmatpush1.msra.mxu0 0.0
        %6672 = vmatprep.subr.mxu0 0.0
        %6673 = vmatpush1.msra.mxu0 0.0
        %6674 = vmatprep.subr.mxu0 %v6647
        %6675 = vmatpush1.msra.mxu0 %v6646
        %6676 = vmatprep.subr.mxu0 %v6645
        %6677 = vmatpush1.msra.mxu0 %v6644
        %6678 = vmatprep.subr.mxu0 %v6643
        %6679 = vmatpush1.msra.mxu0 %v6642
        %6680 = vmatprep.subr.mxu0 %v6641
        %6681 = vmatpush1.msra.mxu0 %v6640
        %6682 = vmatprep.subr.mxu0 %v6639
        %6683 = vmatpush1.msra.mxu0 %v6638
        %6684 = vmatprep.subr.mxu0 %v6637
        %6685 = vmatpush1.msra.mxu0 %v6636
        %6686 = vmatprep.subr.mxu0 0.0
        %6687 = vmatpush2.msra.mxu0 0.0
        %6688 = vmatprep.subr.mxu0 0.0
        %6689 = vmatpush2.msra.mxu0 0.0
        %6690 = vmatprep.subr.mxu0 0.0
        %6691 = vmatpush2.msra.mxu0 0.0
        %6692 = vmatprep.subr.mxu0 0.0
        %6693 = vmatpush2.msra.mxu0 0.0
        %6694 = vmatprep.subr.mxu0 0.0
        %6695 = vmatpush2.msra.mxu0 0.0
        %6696 = vmatprep.subr.mxu0 0.0
        %6697 = vmatpush2.msra.mxu0 0.0
        %6698 = vmatprep.subr.mxu0 0.0
        %6699 = vmatpush2.msra.mxu0 0.0
        %6700 = vmatprep.subr.mxu0 0.0
        %6701 = vmatpush2.msra.mxu0 0.0
        %6702 = vmatprep.subr.mxu0 0.0
        %6703 = vmatpush2.msra.mxu0 0.0
        %6704 = vmatprep.subr.mxu0 0.0
        %6705 = vmatpush2.msra.mxu0 0.0
        %6706 = vmatprep.subr.mxu0 0.0
        %6707 = vmatpush2.msra.mxu0 0.0
        %6708 = vmatprep.subr.mxu0 0.0
        %6709 = vmatpush2.msra.mxu0 0.0
        %6710 = vmatprep.subr.mxu0 0.0
        %6711 = vmatpush2.msra.mxu0 0.0
        %6712 = vmatprep.subr.mxu0 0.0
        %6713 = vmatpush2.msra.mxu0 0.0
        %6714 = vmatprep.subr.mxu0 0.0
        %6715 = vmatpush2.msra.mxu0 0.0
        %6716 = vmatprep.subr.mxu0 0.0
        %6717 = vmatpush2.msra.mxu0 0.0
        %6718 = vmatprep.mubr.f32.mxu0 0.0
        %6719 = vmatmul.mubr.f32.gmra.mxu0 %v6649
        %v6720 = vpop.f32.mrf.mxu0
        %v6721 = vadd.f32 0.0, %v6720
        %v6722 = vpop.f32.mrf.mxu0
        %v6723 = vadd.f32 0.0, %v6722
        %6724 = vmatprep.mubr.f32.mxu0 0.0
        %6725 = vmatmul.mubr.f32.gmra.mxu0 %v6652
        %v6726 = vpop.f32.mrf.mxu0
        %v6727 = vadd.f32 0.0, %v6726
        %v6728 = vpop.f32.mrf.mxu0
        %v6729 = vadd.f32 0.0, %v6728
        %6730 = vdwg.mxu0
        %v6731 = vadd.f32 %v6557, %v6721
        %v6732 = vadd.f32 %v6558, %v6723
        %v6733 = vadd.f32 %v6559, %v6727
        %v6734 = vadd.f32 %v6560, %v6729
        %v6735 = vld [vmem:[%s707] sm:$0x3]
        %v6737 = vlaneseq
        %v6738 = vshrl.u32 %v6737, 7
        %v6739 = vsub.s32 0, %v6738
        %v6740 = vrot.slane %v6735, %v6739
        %v6741 = vlaneseq
        %v6742 = vshrl.u32 %v6741, 7
        %v6743 = vsub.s32 1, %v6742
        %v6744 = vrot.slane %v6735, %v6743
        %v6747 = vadd.f32 %v6731, %v6740
        %v6748 = vadd.f32 %v6732, %v6744
        %v6749 = vadd.f32 %v6733, %v6740
        %v6750 = vadd.f32 %v6734, %v6744
        %v6751 = vmax.f32 %v6747, 0.0
        %v6752 = vmax.f32 %v6748, 0.0
        %v6753 = vmax.f32 %v6749, 0.0
        %v6754 = vmax.f32 %v6750, 0.0
        %v6756 = vsel %vm2170, %v6753, 0
        %v6759 = vsel %vm2170, %v6754, 0
        %6761 = vmatprep.subr.mxu0 0.0
        %6762 = vmatpush1.msra.mxu0 0.0
        %6763 = vmatprep.subr.mxu0 0.0
        %6764 = vmatpush1.msra.mxu0 0.0
        %6765 = vmatprep.subr.mxu0 0.0
        %6766 = vmatpush1.msra.mxu0 0.0
        %6767 = vmatprep.subr.mxu0 0.0
        %6768 = vmatpush1.msra.mxu0 0.0
        %6769 = vmatprep.subr.mxu0 0.0
        %6770 = vmatpush1.msra.mxu0 0.0
        %6771 = vmatprep.subr.mxu0 0.0
        %6772 = vmatpush1.msra.mxu0 0.0
        %6773 = vmatprep.subr.mxu0 0.0
        %6774 = vmatpush1.msra.mxu0 0.0
        %6775 = vmatprep.subr.mxu0 0.0
        %6776 = vmatpush1.msra.mxu0 0.0
        %6777 = vmatprep.subr.mxu0 0.0
        %6778 = vmatpush1.msra.mxu0 0.0
        %6779 = vmatprep.subr.mxu0 0.0
        %6780 = vmatpush1.msra.mxu0 0.0
        %6781 = vmatprep.subr.mxu0 0.0
        %6782 = vmatpush1.msra.mxu0 0.0
        %6783 = vmatprep.subr.mxu0 0.0
        %6784 = vmatpush1.msra.mxu0 0.0
        %6785 = vmatprep.subr.mxu0 0.0
        %6786 = vmatpush1.msra.mxu0 0.0
        %6787 = vmatprep.subr.mxu0 0.0
        %6788 = vmatpush1.msra.mxu0 0.0
        %6789 = vmatprep.subr.mxu0 %v6759
        %6790 = vmatpush1.msra.mxu0 %v6756
        %6791 = vmatprep.subr.mxu0 %v6752
        %6792 = vmatpush1.msra.mxu0 %v6751
        %6793 = vmatprep.subr.mxu0 0.0
        %6794 = vmatpush2.msra.mxu0 0.0
        %6795 = vmatprep.subr.mxu0 0.0
        %6796 = vmatpush2.msra.mxu0 0.0
        %6797 = vmatprep.subr.mxu0 0.0
        %6798 = vmatpush2.msra.mxu0 0.0
        %6799 = vmatprep.subr.mxu0 0.0
        %6800 = vmatpush2.msra.mxu0 0.0
        %6801 = vmatprep.subr.mxu0 0.0
        %6802 = vmatpush2.msra.mxu0 0.0
        %6803 = vmatprep.subr.mxu0 0.0
        %6804 = vmatpush2.msra.mxu0 0.0
        %6805 = vmatprep.subr.mxu0 0.0
        %6806 = vmatpush2.msra.mxu0 0.0
        %6807 = vmatprep.subr.mxu0 0.0
        %6808 = vmatpush2.msra.mxu0 0.0
        %6809 = vmatprep.subr.mxu0 0.0
        %6810 = vmatpush2.msra.mxu0 0.0
        %6811 = vmatprep.subr.mxu0 0.0
        %6812 = vmatpush2.msra.mxu0 0.0
        %6813 = vmatprep.subr.mxu0 0.0
        %6814 = vmatpush2.msra.mxu0 0.0
        %6815 = vmatprep.subr.mxu0 0.0
        %6816 = vmatpush2.msra.mxu0 0.0
        %6817 = vmatprep.subr.mxu0 0.0
        %6818 = vmatpush2.msra.mxu0 0.0
        %6819 = vmatprep.subr.mxu0 0.0
        %6820 = vmatpush2.msra.mxu0 0.0
        %6821 = vmatprep.subr.mxu0 0.0
        %6822 = vmatpush2.msra.mxu0 0.0
        %6823 = vmatprep.subr.mxu0 0.0
        %6824 = vmatpush2.msra.mxu0 0.0
        %6825 = vmatprep.mubr.f32.mxu0 0.0
        %6826 = vmatmul.mubr.f32.gmra.mxu0 %v2168
        %v6827 = vpop.f32.mrf.mxu0
        %v6828 = vadd.f32 0.0, %v6827
        %v6829 = vpop.f32.mrf.mxu0
        %v6830 = vadd.f32 0.0, %v6829
        %6831 = vdwg.mxu0
        %v6832 = vld [vmem:[%s712] sm:$0xff]
        %v6833 = vld [vmem:[%s712 + $0x8] sm:$0xff]
        %v6834 = vld [vmem:[%s712 + $0x10] sm:$0xff]
        %v6835 = vld [vmem:[%s712 + $0x18] sm:$0xff]
        %v6836 = vld [vmem:[%s712 + $0x20] sm:$0xff]
        %v6837 = vld [vmem:[%s712 + $0x28] sm:$0xff]
        %v6838 = vld [vmem:[%s712 + $0x30] sm:$0xff]
        %v6839 = vld [vmem:[%s712 + $0x38] sm:$0xff]
        %v6840 = vld [vmem:[%s712 + $0x40] sm:$0xff]
        %v6841 = vld [vmem:[%s712 + $0x48] sm:$0xff]
        %v6842 = vld [vmem:[%s712 + $0x50] sm:$0xff]
        %v6843 = vld [vmem:[%s712 + $0x58] sm:$0xff]
        %v6844 = vld [vmem:[%s712 + $0x60] sm:$0xff]
        %v6845 = vld [vmem:[%s712 + $0x68] sm:$0xff]
        %v6846 = vld [vmem:[%s712 + $0x70] sm:$0xff]
        %v6847 = vld [vmem:[%s712 + $0x78] sm:$0xff]
        %v6848 = vld [vmem:[%s712 + $0x80] sm:$0xff]
        %v6849 = vld [vmem:[%s712 + $0x88] sm:$0xff]
        %6850 = vmatprep.subr.mxu0 0.0
        %6851 = vmatpush1.msra.mxu0 0.0
        %6852 = vmatprep.subr.mxu0 0.0
        %6853 = vmatpush1.msra.mxu0 0.0
        %6854 = vmatprep.subr.mxu0 0.0
        %6855 = vmatpush1.msra.mxu0 0.0
        %6856 = vmatprep.subr.mxu0 0.0
        %6857 = vmatpush1.msra.mxu0 0.0
        %6858 = vmatprep.subr.mxu0 0.0
        %6859 = vmatpush1.msra.mxu0 0.0
        %6860 = vmatprep.subr.mxu0 0.0
        %6861 = vmatpush1.msra.mxu0 0.0
        %6862 = vmatprep.subr.mxu0 0.0
        %6863 = vmatpush1.msra.mxu0 0.0
        %6864 = vmatprep.subr.mxu0 0.0
        %6865 = vmatpush1.msra.mxu0 0.0
        %6866 = vmatprep.subr.mxu0 0.0
        %6867 = vmatpush1.msra.mxu0 0.0
        %6868 = vmatprep.subr.mxu0 0.0
        %6869 = vmatpush1.msra.mxu0 0.0
        %6870 = vmatprep.subr.mxu0 0.0
        %6871 = vmatpush1.msra.mxu0 0.0
        %6872 = vmatprep.subr.mxu0 0.0
        %6873 = vmatpush1.msra.mxu0 0.0
        %6874 = vmatprep.subr.mxu0 0.0
        %6875 = vmatpush1.msra.mxu0 0.0
        %6876 = vmatprep.subr.mxu0 0.0
        %6877 = vmatpush1.msra.mxu0 0.0
        %6878 = vmatprep.subr.mxu0 %v6759
        %6879 = vmatpush1.msra.mxu0 %v6756
        %6880 = vmatprep.subr.mxu0 %v6752
        %6881 = vmatpush1.msra.mxu0 %v6751
        %6882 = vmatprep.subr.mxu0 0.0
        %6883 = vmatpush2.msra.mxu0 0.0
        %6884 = vmatprep.subr.mxu0 0.0
        %6885 = vmatpush2.msra.mxu0 0.0
        %6886 = vmatprep.subr.mxu0 0.0
        %6887 = vmatpush2.msra.mxu0 0.0
        %6888 = vmatprep.subr.mxu0 0.0
        %6889 = vmatpush2.msra.mxu0 0.0
        %6890 = vmatprep.subr.mxu0 0.0
        %6891 = vmatpush2.msra.mxu0 0.0
        %6892 = vmatprep.subr.mxu0 0.0
        %6893 = vmatpush2.msra.mxu0 0.0
        %6894 = vmatprep.subr.mxu0 0.0
        %6895 = vmatpush2.msra.mxu0 0.0
        %6896 = vmatprep.subr.mxu0 0.0
        %6897 = vmatpush2.msra.mxu0 0.0
        %6898 = vmatprep.subr.mxu0 0.0
        %6899 = vmatpush2.msra.mxu0 0.0
        %6900 = vmatprep.subr.mxu0 0.0
        %6901 = vmatpush2.msra.mxu0 0.0
        %6902 = vmatprep.subr.mxu0 0.0
        %6903 = vmatpush2.msra.mxu0 0.0
        %6904 = vmatprep.subr.mxu0 0.0
        %6905 = vmatpush2.msra.mxu0 0.0
        %6906 = vmatprep.subr.mxu0 0.0
        %6907 = vmatpush2.msra.mxu0 0.0
        %6908 = vmatprep.subr.mxu0 0.0
        %6909 = vmatpush2.msra.mxu0 0.0
        %6910 = vmatprep.subr.mxu0 0.0
        %6911 = vmatpush2.msra.mxu0 0.0
        %6912 = vmatprep.subr.mxu0 0.0
        %6913 = vmatpush2.msra.mxu0 0.0
        %6914 = vmatprep.mubr.f32.mxu0 0.0
        %6915 = vmatmul.mubr.f32.gmra.mxu0 %v2266
        %v6916 = vpop.f32.mrf.mxu0
        %v6917 = vadd.f32 0.0, %v6916
        %v6918 = vpop.f32.mrf.mxu0
        %v6919 = vadd.f32 0.0, %v6918
        %6920 = vdwg.mxu0
        %v6921 = vld [vmem:[%s2339] sm:$0xff]
        %v6922 = vld [vmem:[%s2339 + $0x8] sm:$0xff]
        %v6923 = vld [vmem:[%s2339 + $0x10] sm:$0xff]
        %v6924 = vld [vmem:[%s2339 + $0x18] sm:$0xff]
        %v6925 = vld [vmem:[%s2339 + $0x20] sm:$0xff]
        %v6926 = vld [vmem:[%s2339 + $0x28] sm:$0xff]
        %v6927 = vld [vmem:[%s2339 + $0x30] sm:$0xff]
        %v6928 = vld [vmem:[%s2339 + $0x38] sm:$0xff]
        %v6929 = vld [vmem:[%s2339 + $0x40] sm:$0xff]
        %v6930 = vld [vmem:[%s2339 + $0x48] sm:$0xff]
        %v6931 = vld [vmem:[%s2339 + $0x50] sm:$0xff]
        %v6932 = vld [vmem:[%s2339 + $0x58] sm:$0xff]
        %v6933 = vld [vmem:[%s2339 + $0x60] sm:$0xff]
        %v6934 = vld [vmem:[%s2339 + $0x68] sm:$0xff]
        %v6935 = vld [vmem:[%s2339 + $0x70] sm:$0xff]
        %v6936 = vld [vmem:[%s2339 + $0x78] sm:$0xff]
        %v6937 = vld [vmem:[%s2339 + $0x80] sm:$0xff]
        %v6938 = vld [vmem:[%s2339 + $0x88] sm:$0xff]
        %v6940 = vsel %vm1040, %v6919, 0
        %6942 = vmatprep.subr.mxu0 0.0
        %6943 = vmatpush1.msra.mxu0 %v6936
        %6944 = vmatprep.subr.mxu0 0.0
        %6945 = vmatpush1.msra.mxu0 %v6935
        %6946 = vmatprep.subr.mxu0 0.0
        %6947 = vmatpush1.msra.mxu0 %v6934
        %6948 = vmatprep.subr.mxu0 0.0
        %6949 = vmatpush1.msra.mxu0 %v6933
        %6950 = vmatprep.subr.mxu0 0.0
        %6951 = vmatpush1.msra.mxu0 %v6932
        %6952 = vmatprep.subr.mxu0 0.0
        %6953 = vmatpush1.msra.mxu0 %v6931
        %6954 = vmatprep.subr.mxu0 0.0
        %6955 = vmatpush1.msra.mxu0 %v6930
        %6956 = vmatprep.subr.mxu0 0.0
        %6957 = vmatpush1.msra.mxu0 %v6929
        %6958 = vmatprep.subr.mxu0 0.0
        %6959 = vmatpush1.msra.mxu0 %v6928
        %6960 = vmatprep.subr.mxu0 0.0
        %6961 = vmatpush1.msra.mxu0 %v6927
        %6962 = vmatprep.subr.mxu0 0.0
        %6963 = vmatpush1.msra.mxu0 %v6926
        %6964 = vmatprep.subr.mxu0 0.0
        %6965 = vmatpush1.msra.mxu0 %v6925
        %6966 = vmatprep.subr.mxu0 0.0
        %6967 = vmatpush1.msra.mxu0 %v6924
        %6968 = vmatprep.subr.mxu0 0.0
        %6969 = vmatpush1.msra.mxu0 %v6923
        %6970 = vmatprep.subr.mxu0 0.0
        %6971 = vmatpush1.msra.mxu0 %v6922
        %6972 = vmatprep.subr.mxu0 0.0
        %6973 = vmatpush1.msra.mxu0 %v6921
        %6974 = vmatprep.subr.mxu0 0.0
        %6975 = vmatpush2.msra.mxu0 0.0
        %6976 = vmatprep.subr.mxu0 0.0
        %6977 = vmatpush2.msra.mxu0 0.0
        %6978 = vmatprep.subr.mxu0 0.0
        %6979 = vmatpush2.msra.mxu0 0.0
        %6980 = vmatprep.subr.mxu0 0.0
        %6981 = vmatpush2.msra.mxu0 0.0
        %6982 = vmatprep.subr.mxu0 0.0
        %6983 = vmatpush2.msra.mxu0 0.0
        %6984 = vmatprep.subr.mxu0 0.0
        %6985 = vmatpush2.msra.mxu0 0.0
        %6986 = vmatprep.subr.mxu0 0.0
        %6987 = vmatpush2.msra.mxu0 0.0
        %6988 = vmatprep.subr.mxu0 0.0
        %6989 = vmatpush2.msra.mxu0 0.0
        %6990 = vmatprep.subr.mxu0 0.0
        %6991 = vmatpush2.msra.mxu0 0.0
        %6992 = vmatprep.subr.mxu0 0.0
        %6993 = vmatpush2.msra.mxu0 0.0
        %6994 = vmatprep.subr.mxu0 0.0
        %6995 = vmatpush2.msra.mxu0 0.0
        %6996 = vmatprep.subr.mxu0 0.0
        %6997 = vmatpush2.msra.mxu0 0.0
        %6998 = vmatprep.subr.mxu0 0.0
        %6999 = vmatpush2.msra.mxu0 0.0
        %7000 = vmatprep.subr.mxu0 0.0
        %7001 = vmatpush2.msra.mxu0 0.0
        %7002 = vmatprep.subr.mxu0 0.0
        %7003 = vmatpush2.msra.mxu0 %v6938
        %7004 = vmatprep.subr.mxu0 0.0
        %7005 = vmatpush2.msra.mxu0 %v6937
        %7006 = vmatprep.mubr.f32.mxu0 %v6940
        %7007 = vmatmul.mubr.f32.gmra.mxu0 %v6917
        %v7008 = vpop.f32.mrf.mxu0
        %v7009 = vadd.f32 0.0, %v7008
        %v7010 = vpop.f32.mrf.mxu0
        %7011 = vdwg.mxu0
        %v7013 = vsel %vm1040, %v6830, 0
        %7015 = vmatprep.subr.mxu0 0.0
        %7016 = vmatpush1.msra.mxu0 %v6847
        %7017 = vmatprep.subr.mxu0 0.0
        %7018 = vmatpush1.msra.mxu0 %v6846
        %7019 = vmatprep.subr.mxu0 0.0
        %7020 = vmatpush1.msra.mxu0 %v6845
        %7021 = vmatprep.subr.mxu0 0.0
        %7022 = vmatpush1.msra.mxu0 %v6844
        %7023 = vmatprep.subr.mxu0 0.0
        %7024 = vmatpush1.msra.mxu0 %v6843
        %7025 = vmatprep.subr.mxu0 0.0
        %7026 = vmatpush1.msra.mxu0 %v6842
        %7027 = vmatprep.subr.mxu0 0.0
        %7028 = vmatpush1.msra.mxu0 %v6841
        %7029 = vmatprep.subr.mxu0 0.0
        %7030 = vmatpush1.msra.mxu0 %v6840
        %7031 = vmatprep.subr.mxu0 0.0
        %7032 = vmatpush1.msra.mxu0 %v6839
        %7033 = vmatprep.subr.mxu0 0.0
        %7034 = vmatpush1.msra.mxu0 %v6838
        %7035 = vmatprep.subr.mxu0 0.0
        %7036 = vmatpush1.msra.mxu0 %v6837
        %7037 = vmatprep.subr.mxu0 0.0
        %7038 = vmatpush1.msra.mxu0 %v6836
        %7039 = vmatprep.subr.mxu0 0.0
        %7040 = vmatpush1.msra.mxu0 %v6835
        %7041 = vmatprep.subr.mxu0 0.0
        %7042 = vmatpush1.msra.mxu0 %v6834
        %7043 = vmatprep.subr.mxu0 0.0
        %7044 = vmatpush1.msra.mxu0 %v6833
        %7045 = vmatprep.subr.mxu0 0.0
        %7046 = vmatpush1.msra.mxu0 %v6832
        %7047 = vmatprep.subr.mxu0 0.0
        %7048 = vmatpush2.msra.mxu0 0.0
        %7049 = vmatprep.subr.mxu0 0.0
        %7050 = vmatpush2.msra.mxu0 0.0
        %7051 = vmatprep.subr.mxu0 0.0
        %7052 = vmatpush2.msra.mxu0 0.0
        %7053 = vmatprep.subr.mxu0 0.0
        %7054 = vmatpush2.msra.mxu0 0.0
        %7055 = vmatprep.subr.mxu0 0.0
        %7056 = vmatpush2.msra.mxu0 0.0
        %7057 = vmatprep.subr.mxu0 0.0
        %7058 = vmatpush2.msra.mxu0 0.0
        %7059 = vmatprep.subr.mxu0 0.0
        %7060 = vmatpush2.msra.mxu0 0.0
        %7061 = vmatprep.subr.mxu0 0.0
        %7062 = vmatpush2.msra.mxu0 0.0
        %7063 = vmatprep.subr.mxu0 0.0
        %7064 = vmatpush2.msra.mxu0 0.0
        %7065 = vmatprep.subr.mxu0 0.0
        %7066 = vmatpush2.msra.mxu0 0.0
        %7067 = vmatprep.subr.mxu0 0.0
        %7068 = vmatpush2.msra.mxu0 0.0
        %7069 = vmatprep.subr.mxu0 0.0
        %7070 = vmatpush2.msra.mxu0 0.0
        %7071 = vmatprep.subr.mxu0 0.0
        %7072 = vmatpush2.msra.mxu0 0.0
        %7073 = vmatprep.subr.mxu0 0.0
        %7074 = vmatpush2.msra.mxu0 0.0
        %7075 = vmatprep.subr.mxu0 0.0
        %7076 = vmatpush2.msra.mxu0 %v6849
        %7077 = vmatprep.subr.mxu0 0.0
        %7078 = vmatpush2.msra.mxu0 %v6848
        %7079 = vmatprep.mubr.f32.mxu0 %v7013
        %7080 = vmatmul.mubr.f32.gmra.mxu0 %v6828
        %v7081 = vpop.f32.mrf.mxu0
        %v7082 = vadd.f32 %v7009, %v7081
        %v7083 = vpop.f32.mrf.mxu0
        %7084 = vdwg.mxu0
        %7085 = vmatprep.subr.mxu0 0.0
        %7086 = vmatpush1.msra.mxu0 0.0
        %7087 = vmatprep.subr.mxu0 0.0
        %7088 = vmatpush1.msra.mxu0 0.0
        %7089 = vmatprep.subr.mxu0 0.0
        %7090 = vmatpush1.msra.mxu0 0.0
        %7091 = vmatprep.subr.mxu0 0.0
        %7092 = vmatpush1.msra.mxu0 0.0
        %7093 = vmatprep.subr.mxu0 0.0
        %7094 = vmatpush1.msra.mxu0 0.0
        %7095 = vmatprep.subr.mxu0 0.0
        %7096 = vmatpush1.msra.mxu0 0.0
        %7097 = vmatprep.subr.mxu0 0.0
        %7098 = vmatpush1.msra.mxu0 0.0
        %7099 = vmatprep.subr.mxu0 0.0
        %7100 = vmatpush1.msra.mxu0 0.0
        %7101 = vmatprep.subr.mxu0 0.0
        %7102 = vmatpush1.msra.mxu0 0.0
        %7103 = vmatprep.subr.mxu0 0.0
        %7104 = vmatpush1.msra.mxu0 0.0
        %7105 = vmatprep.subr.mxu0 0.0
        %7106 = vmatpush1.msra.mxu0 0.0
        %7107 = vmatprep.subr.mxu0 0.0
        %7108 = vmatpush1.msra.mxu0 0.0
        %7109 = vmatprep.subr.mxu0 0.0
        %7110 = vmatpush1.msra.mxu0 0.0
        %7111 = vmatprep.subr.mxu0 0.0
        %7112 = vmatpush1.msra.mxu0 0.0
        %7113 = vmatprep.subr.mxu0 %v6759
        %7114 = vmatpush1.msra.mxu0 %v6756
        %7115 = vmatprep.subr.mxu0 %v6752
        %7116 = vmatpush1.msra.mxu0 %v6751
        %7117 = vmatprep.subr.mxu0 0.0
        %7118 = vmatpush2.msra.mxu0 0.0
        %7119 = vmatprep.subr.mxu0 0.0
        %7120 = vmatpush2.msra.mxu0 0.0
        %7121 = vmatprep.subr.mxu0 0.0
        %7122 = vmatpush2.msra.mxu0 0.0
        %7123 = vmatprep.subr.mxu0 0.0
        %7124 = vmatpush2.msra.mxu0 0.0
        %7125 = vmatprep.subr.mxu0 0.0
        %7126 = vmatpush2.msra.mxu0 0.0
        %7127 = vmatprep.subr.mxu0 0.0
        %7128 = vmatpush2.msra.mxu0 0.0
        %7129 = vmatprep.subr.mxu0 0.0
        %7130 = vmatpush2.msra.mxu0 0.0
        %7131 = vmatprep.subr.mxu0 0.0
        %7132 = vmatpush2.msra.mxu0 0.0
        %7133 = vmatprep.subr.mxu0 0.0
        %7134 = vmatpush2.msra.mxu0 0.0
        %7135 = vmatprep.subr.mxu0 0.0
        %7136 = vmatpush2.msra.mxu0 0.0
        %7137 = vmatprep.subr.mxu0 0.0
        %7138 = vmatpush2.msra.mxu0 0.0
        %7139 = vmatprep.subr.mxu0 0.0
        %7140 = vmatpush2.msra.mxu0 0.0
        %7141 = vmatprep.subr.mxu0 0.0
        %7142 = vmatpush2.msra.mxu0 0.0
        %7143 = vmatprep.subr.mxu0 0.0
        %7144 = vmatpush2.msra.mxu0 0.0
        %7145 = vmatprep.subr.mxu0 0.0
        %7146 = vmatpush2.msra.mxu0 0.0
        %7147 = vmatprep.subr.mxu0 0.0
        %7148 = vmatpush2.msra.mxu0 0.0
        %7149 = vmatprep.mubr.f32.mxu0 0.0
        %7150 = vmatmul.mubr.f32.gmra.mxu0 %v2504
        %v7151 = vpop.f32.mrf.mxu0
        %v7152 = vadd.f32 0.0, %v7151
        %v7153 = vpop.f32.mrf.mxu0
        %v7154 = vadd.f32 0.0, %v7153
        %7155 = vdwg.mxu0
        %v7156 = vld [vmem:[%s2577] sm:$0xff]
        %v7157 = vld [vmem:[%s2577 + $0x8] sm:$0xff]
        %v7158 = vld [vmem:[%s2577 + $0x10] sm:$0xff]
        %v7159 = vld [vmem:[%s2577 + $0x18] sm:$0xff]
        %v7160 = vld [vmem:[%s2577 + $0x20] sm:$0xff]
        %v7161 = vld [vmem:[%s2577 + $0x28] sm:$0xff]
        %v7162 = vld [vmem:[%s2577 + $0x30] sm:$0xff]
        %v7163 = vld [vmem:[%s2577 + $0x38] sm:$0xff]
        %v7164 = vld [vmem:[%s2577 + $0x40] sm:$0xff]
        %v7165 = vld [vmem:[%s2577 + $0x48] sm:$0xff]
        %v7166 = vld [vmem:[%s2577 + $0x50] sm:$0xff]
        %v7167 = vld [vmem:[%s2577 + $0x58] sm:$0xff]
        %v7168 = vld [vmem:[%s2577 + $0x60] sm:$0xff]
        %v7169 = vld [vmem:[%s2577 + $0x68] sm:$0xff]
        %v7170 = vld [vmem:[%s2577 + $0x70] sm:$0xff]
        %v7171 = vld [vmem:[%s2577 + $0x78] sm:$0xff]
        %v7172 = vld [vmem:[%s2577 + $0x80] sm:$0xff]
        %v7173 = vld [vmem:[%s2577 + $0x88] sm:$0xff]
        %v7175 = vsel %vm1040, %v7154, 0
        %7177 = vmatprep.subr.mxu0 0.0
        %7178 = vmatpush1.msra.mxu0 %v7171
        %7179 = vmatprep.subr.mxu0 0.0
        %7180 = vmatpush1.msra.mxu0 %v7170
        %7181 = vmatprep.subr.mxu0 0.0
        %7182 = vmatpush1.msra.mxu0 %v7169
        %7183 = vmatprep.subr.mxu0 0.0
        %7184 = vmatpush1.msra.mxu0 %v7168
        %7185 = vmatprep.subr.mxu0 0.0
        %7186 = vmatpush1.msra.mxu0 %v7167
        %7187 = vmatprep.subr.mxu0 0.0
        %7188 = vmatpush1.msra.mxu0 %v7166
        %7189 = vmatprep.subr.mxu0 0.0
        %7190 = vmatpush1.msra.mxu0 %v7165
        %7191 = vmatprep.subr.mxu0 0.0
        %7192 = vmatpush1.msra.mxu0 %v7164
        %7193 = vmatprep.subr.mxu0 0.0
        %7194 = vmatpush1.msra.mxu0 %v7163
        %7195 = vmatprep.subr.mxu0 0.0
        %7196 = vmatpush1.msra.mxu0 %v7162
        %7197 = vmatprep.subr.mxu0 0.0
        %7198 = vmatpush1.msra.mxu0 %v7161
        %7199 = vmatprep.subr.mxu0 0.0
        %7200 = vmatpush1.msra.mxu0 %v7160
        %7201 = vmatprep.subr.mxu0 0.0
        %7202 = vmatpush1.msra.mxu0 %v7159
        %7203 = vmatprep.subr.mxu0 0.0
        %7204 = vmatpush1.msra.mxu0 %v7158
        %7205 = vmatprep.subr.mxu0 0.0
        %7206 = vmatpush1.msra.mxu0 %v7157
        %7207 = vmatprep.subr.mxu0 0.0
        %7208 = vmatpush1.msra.mxu0 %v7156
        %7209 = vmatprep.subr.mxu0 0.0
        %7210 = vmatpush2.msra.mxu0 0.0
        %7211 = vmatprep.subr.mxu0 0.0
        %7212 = vmatpush2.msra.mxu0 0.0
        %7213 = vmatprep.subr.mxu0 0.0
        %7214 = vmatpush2.msra.mxu0 0.0
        %7215 = vmatprep.subr.mxu0 0.0
        %7216 = vmatpush2.msra.mxu0 0.0
        %7217 = vmatprep.subr.mxu0 0.0
        %7218 = vmatpush2.msra.mxu0 0.0
        %7219 = vmatprep.subr.mxu0 0.0
        %7220 = vmatpush2.msra.mxu0 0.0
        %7221 = vmatprep.subr.mxu0 0.0
        %7222 = vmatpush2.msra.mxu0 0.0
        %7223 = vmatprep.subr.mxu0 0.0
        %7224 = vmatpush2.msra.mxu0 0.0
        %7225 = vmatprep.subr.mxu0 0.0
        %7226 = vmatpush2.msra.mxu0 0.0
        %7227 = vmatprep.subr.mxu0 0.0
        %7228 = vmatpush2.msra.mxu0 0.0
        %7229 = vmatprep.subr.mxu0 0.0
        %7230 = vmatpush2.msra.mxu0 0.0
        %7231 = vmatprep.subr.mxu0 0.0
        %7232 = vmatpush2.msra.mxu0 0.0
        %7233 = vmatprep.subr.mxu0 0.0
        %7234 = vmatpush2.msra.mxu0 0.0
        %7235 = vmatprep.subr.mxu0 0.0
        %7236 = vmatpush2.msra.mxu0 0.0
        %7237 = vmatprep.subr.mxu0 0.0
        %7238 = vmatpush2.msra.mxu0 %v7173
        %7239 = vmatprep.subr.mxu0 0.0
        %7240 = vmatpush2.msra.mxu0 %v7172
        %7241 = vmatprep.mubr.f32.mxu0 %v7175
        %7242 = vmatmul.mubr.f32.gmra.mxu0 %v7152
        %v7243 = vpop.f32.mrf.mxu0
        %v7244 = vadd.f32 0.0, %v7243
        %v7245 = vpop.f32.mrf.mxu0
        %7246 = vdwg.mxu0
        %v7247 = vadd.f32 %v7082, %v7244
        %v7248 = vld [vmem:[%s715] sm:$0x1]
        %v7250 = vlaneseq
        %v7251 = vshrl.u32 %v7250, 7
        %v7252 = vsub.s32 0, %v7251
        %v7253 = vrot.slane %v7248, %v7252
        %v7255 = vadd.f32 %v7247, %v7253
        %v7256 = vmax.f32 %v7255, 0.0
        %v7258 = vsel %vm2686, %v7256, 0
        %7260 = vmatprep.subr.mxu0 0.0
        %7261 = vmatpush1.msra.mxu0 0.0
        %7262 = vmatprep.subr.mxu0 0.0
        %7263 = vmatpush1.msra.mxu0 0.0
        %7264 = vmatprep.subr.mxu0 0.0
        %7265 = vmatpush1.msra.mxu0 0.0
        %7266 = vmatprep.subr.mxu0 0.0
        %7267 = vmatpush1.msra.mxu0 0.0
        %7268 = vmatprep.subr.mxu0 0.0
        %7269 = vmatpush1.msra.mxu0 0.0
        %7270 = vmatprep.subr.mxu0 0.0
        %7271 = vmatpush1.msra.mxu0 0.0
        %7272 = vmatprep.subr.mxu0 0.0
        %7273 = vmatpush1.msra.mxu0 0.0
        %7274 = vmatprep.subr.mxu0 0.0
        %7275 = vmatpush1.msra.mxu0 0.0
        %7276 = vmatprep.subr.mxu0 0.0
        %7277 = vmatpush1.msra.mxu0 0.0
        %7278 = vmatprep.subr.mxu0 0.0
        %7279 = vmatpush1.msra.mxu0 0.0
        %7280 = vmatprep.subr.mxu0 0.0
        %7281 = vmatpush1.msra.mxu0 0.0
        %7282 = vmatprep.subr.mxu0 0.0
        %7283 = vmatpush1.msra.mxu0 0.0
        %7284 = vmatprep.subr.mxu0 0.0
        %7285 = vmatpush1.msra.mxu0 0.0
        %7286 = vmatprep.subr.mxu0 0.0
        %7287 = vmatpush1.msra.mxu0 0.0
        %7288 = vmatprep.subr.mxu0 0.0
        %7289 = vmatpush1.msra.mxu0 0.0
        %7290 = vmatprep.subr.mxu0 0.0
        %7291 = vmatpush1.msra.mxu0 %v7258
        %7292 = vmatprep.subr.mxu0 0.0
        %7293 = vmatpush2.msra.mxu0 0.0
        %7294 = vmatprep.subr.mxu0 0.0
        %7295 = vmatpush2.msra.mxu0 0.0
        %7296 = vmatprep.subr.mxu0 0.0
        %7297 = vmatpush2.msra.mxu0 0.0
        %7298 = vmatprep.subr.mxu0 0.0
        %7299 = vmatpush2.msra.mxu0 0.0
        %7300 = vmatprep.subr.mxu0 0.0
        %7301 = vmatpush2.msra.mxu0 0.0
        %7302 = vmatprep.subr.mxu0 0.0
        %7303 = vmatpush2.msra.mxu0 0.0
        %7304 = vmatprep.subr.mxu0 0.0
        %7305 = vmatpush2.msra.mxu0 0.0
        %7306 = vmatprep.subr.mxu0 0.0
        %7307 = vmatpush2.msra.mxu0 0.0
        %7308 = vmatprep.subr.mxu0 0.0
        %7309 = vmatpush2.msra.mxu0 0.0
        %7310 = vmatprep.subr.mxu0 0.0
        %7311 = vmatpush2.msra.mxu0 0.0
        %7312 = vmatprep.subr.mxu0 0.0
        %7313 = vmatpush2.msra.mxu0 0.0
        %7314 = vmatprep.subr.mxu0 0.0
        %7315 = vmatpush2.msra.mxu0 0.0
        %7316 = vmatprep.subr.mxu0 0.0
        %7317 = vmatpush2.msra.mxu0 0.0
        %7318 = vmatprep.subr.mxu0 0.0
        %7319 = vmatpush2.msra.mxu0 0.0
        %7320 = vmatprep.subr.mxu0 0.0
        %7321 = vmatpush2.msra.mxu0 0.0
        %7322 = vmatprep.subr.mxu0 0.0
        %7323 = vmatpush2.msra.mxu0 0.0
        %7324 = vmatprep.mubr.f32.mxu0 0.0
        %7325 = vmatmul.mubr.f32.gmra.mxu0 %v2681
        %v7326 = vpop.f32.mrf.mxu0
        %v7327 = vadd.f32 0.0, %v7326
        %v7328 = vpop.f32.mrf.mxu0
        %7329 = vmatprep.mubr.f32.mxu0 0.0
        %7330 = vmatmul.mubr.f32.gmra.mxu0 %v2684
        %v7331 = vpop.f32.mrf.mxu0
        %v7332 = vadd.f32 0.0, %v7331
        %v7333 = vpop.f32.mrf.mxu0
        %7334 = vdwg.mxu0
        %v7335 = vld [vmem:[%s720] sm:$0xff]
        %v7336 = vld [vmem:[%s720 + $0x8] sm:$0xff]
        %v7337 = vld [vmem:[%s720 + $0x10] sm:$0xff]
        %v7338 = vld [vmem:[%s720 + $0x18] sm:$0xff]
        %v7339 = vld [vmem:[%s720 + $0x20] sm:$0xff]
        %v7340 = vld [vmem:[%s720 + $0x28] sm:$0xff]
        %7341 = vmatprep.subr.mxu0 0.0
        %7342 = vmatpush1.msra.mxu0 0.0
        %7343 = vmatprep.subr.mxu0 0.0
        %7344 = vmatpush1.msra.mxu0 0.0
        %7345 = vmatprep.subr.mxu0 0.0
        %7346 = vmatpush1.msra.mxu0 0.0
        %7347 = vmatprep.subr.mxu0 0.0
        %7348 = vmatpush1.msra.mxu0 0.0
        %7349 = vmatprep.subr.mxu0 0.0
        %7350 = vmatpush1.msra.mxu0 0.0
        %7351 = vmatprep.subr.mxu0 0.0
        %7352 = vmatpush1.msra.mxu0 0.0
        %7353 = vmatprep.subr.mxu0 0.0
        %7354 = vmatpush1.msra.mxu0 0.0
        %7355 = vmatprep.subr.mxu0 0.0
        %7356 = vmatpush1.msra.mxu0 0.0
        %7357 = vmatprep.subr.mxu0 0.0
        %7358 = vmatpush1.msra.mxu0 0.0
        %7359 = vmatprep.subr.mxu0 0.0
        %7360 = vmatpush1.msra.mxu0 0.0
        %7361 = vmatprep.subr.mxu0 0.0
        %7362 = vmatpush1.msra.mxu0 0.0
        %7363 = vmatprep.subr.mxu0 0.0
        %7364 = vmatpush1.msra.mxu0 0.0
        %7365 = vmatprep.subr.mxu0 0.0
        %7366 = vmatpush1.msra.mxu0 0.0
        %7367 = vmatprep.subr.mxu0 0.0
        %7368 = vmatpush1.msra.mxu0 0.0
        %7369 = vmatprep.subr.mxu0 0.0
        %7370 = vmatpush1.msra.mxu0 0.0
        %7371 = vmatprep.subr.mxu0 0.0
        %7372 = vmatpush1.msra.mxu0 %v7258
        %7373 = vmatprep.subr.mxu0 0.0
        %7374 = vmatpush2.msra.mxu0 0.0
        %7375 = vmatprep.subr.mxu0 0.0
        %7376 = vmatpush2.msra.mxu0 0.0
        %7377 = vmatprep.subr.mxu0 0.0
        %7378 = vmatpush2.msra.mxu0 0.0
        %7379 = vmatprep.subr.mxu0 0.0
        %7380 = vmatpush2.msra.mxu0 0.0
        %7381 = vmatprep.subr.mxu0 0.0
        %7382 = vmatpush2.msra.mxu0 0.0
        %7383 = vmatprep.subr.mxu0 0.0
        %7384 = vmatpush2.msra.mxu0 0.0
        %7385 = vmatprep.subr.mxu0 0.0
        %7386 = vmatpush2.msra.mxu0 0.0
        %7387 = vmatprep.subr.mxu0 0.0
        %7388 = vmatpush2.msra.mxu0 0.0
        %7389 = vmatprep.subr.mxu0 0.0
        %7390 = vmatpush2.msra.mxu0 0.0
        %7391 = vmatprep.subr.mxu0 0.0
        %7392 = vmatpush2.msra.mxu0 0.0
        %7393 = vmatprep.subr.mxu0 0.0
        %7394 = vmatpush2.msra.mxu0 0.0
        %7395 = vmatprep.subr.mxu0 0.0
        %7396 = vmatpush2.msra.mxu0 0.0
        %7397 = vmatprep.subr.mxu0 0.0
        %7398 = vmatpush2.msra.mxu0 0.0
        %7399 = vmatprep.subr.mxu0 0.0
        %7400 = vmatpush2.msra.mxu0 0.0
        %7401 = vmatprep.subr.mxu0 0.0
        %7402 = vmatpush2.msra.mxu0 0.0
        %7403 = vmatprep.subr.mxu0 0.0
        %7404 = vmatpush2.msra.mxu0 0.0
        %7405 = vmatprep.mubr.f32.mxu0 0.0
        %7406 = vmatmul.mubr.f32.gmra.mxu0 %v2772
        %v7407 = vpop.f32.mrf.mxu0
        %v7408 = vadd.f32 0.0, %v7407
        %v7409 = vpop.f32.mrf.mxu0
        %7410 = vmatprep.mubr.f32.mxu0 0.0
        %7411 = vmatmul.mubr.f32.gmra.mxu0 %v2775
        %v7412 = vpop.f32.mrf.mxu0
        %v7413 = vadd.f32 0.0, %v7412
        %v7414 = vpop.f32.mrf.mxu0
        %7415 = vdwg.mxu0
        %v7416 = vld [vmem:[%s2852] sm:$0xff]
        %v7417 = vld [vmem:[%s2852 + $0x8] sm:$0xff]
        %v7418 = vld [vmem:[%s2852 + $0x10] sm:$0xff]
        %v7419 = vld [vmem:[%s2852 + $0x18] sm:$0xff]
        %v7420 = vld [vmem:[%s2852 + $0x20] sm:$0xff]
        %v7421 = vld [vmem:[%s2852 + $0x28] sm:$0xff]
        %v7423 = vsel %vm1437, %v7408, 0
        %v7426 = vsel %vm1437, %v7413, 0
        %7428 = vmatprep.subr.mxu0 0.0
        %7429 = vmatpush1.msra.mxu0 0.0
        %7430 = vmatprep.subr.mxu0 0.0
        %7431 = vmatpush1.msra.mxu0 0.0
        %7432 = vmatprep.subr.mxu0 0.0
        %7433 = vmatpush1.msra.mxu0 0.0
        %7434 = vmatprep.subr.mxu0 0.0
        %7435 = vmatpush1.msra.mxu0 0.0
        %7436 = vmatprep.subr.mxu0 0.0
        %7437 = vmatpush1.msra.mxu0 0.0
        %7438 = vmatprep.subr.mxu0 0.0
        %7439 = vmatpush1.msra.mxu0 0.0
        %7440 = vmatprep.subr.mxu0 0.0
        %7441 = vmatpush1.msra.mxu0 0.0
        %7442 = vmatprep.subr.mxu0 0.0
        %7443 = vmatpush1.msra.mxu0 0.0
        %7444 = vmatprep.subr.mxu0 0.0
        %7445 = vmatpush1.msra.mxu0 0.0
        %7446 = vmatprep.subr.mxu0 0.0
        %7447 = vmatpush1.msra.mxu0 0.0
        %7448 = vmatprep.subr.mxu0 0.0
        %7449 = vmatpush1.msra.mxu0 %v7421
        %7450 = vmatprep.subr.mxu0 0.0
        %7451 = vmatpush1.msra.mxu0 %v7420
        %7452 = vmatprep.subr.mxu0 0.0
        %7453 = vmatpush1.msra.mxu0 %v7419
        %7454 = vmatprep.subr.mxu0 0.0
        %7455 = vmatpush1.msra.mxu0 %v7418
        %7456 = vmatprep.subr.mxu0 0.0
        %7457 = vmatpush1.msra.mxu0 %v7417
        %7458 = vmatprep.subr.mxu0 0.0
        %7459 = vmatpush1.msra.mxu0 %v7416
        %7460 = vmatprep.subr.mxu0 0.0
        %7461 = vmatpush2.msra.mxu0 0.0
        %7462 = vmatprep.subr.mxu0 0.0
        %7463 = vmatpush2.msra.mxu0 0.0
        %7464 = vmatprep.subr.mxu0 0.0
        %7465 = vmatpush2.msra.mxu0 0.0
        %7466 = vmatprep.subr.mxu0 0.0
        %7467 = vmatpush2.msra.mxu0 0.0
        %7468 = vmatprep.subr.mxu0 0.0
        %7469 = vmatpush2.msra.mxu0 0.0
        %7470 = vmatprep.subr.mxu0 0.0
        %7471 = vmatpush2.msra.mxu0 0.0
        %7472 = vmatprep.subr.mxu0 0.0
        %7473 = vmatpush2.msra.mxu0 0.0
        %7474 = vmatprep.subr.mxu0 0.0
        %7475 = vmatpush2.msra.mxu0 0.0
        %7476 = vmatprep.subr.mxu0 0.0
        %7477 = vmatpush2.msra.mxu0 0.0
        %7478 = vmatprep.subr.mxu0 0.0
        %7479 = vmatpush2.msra.mxu0 0.0
        %7480 = vmatprep.subr.mxu0 0.0
        %7481 = vmatpush2.msra.mxu0 0.0
        %7482 = vmatprep.subr.mxu0 0.0
        %7483 = vmatpush2.msra.mxu0 0.0
        %7484 = vmatprep.subr.mxu0 0.0
        %7485 = vmatpush2.msra.mxu0 0.0
        %7486 = vmatprep.subr.mxu0 0.0
        %7487 = vmatpush2.msra.mxu0 0.0
        %7488 = vmatprep.subr.mxu0 0.0
        %7489 = vmatpush2.msra.mxu0 0.0
        %7490 = vmatprep.subr.mxu0 0.0
        %7491 = vmatpush2.msra.mxu0 0.0
        %7492 = vmatprep.mubr.f32.mxu0 0.0
        %7493 = vmatmul.mubr.f32.gmra.mxu0 %v7423
        %v7494 = vpop.f32.mrf.mxu0
        %v7495 = vadd.f32 0.0, %v7494
        %v7496 = vpop.f32.mrf.mxu0
        %7497 = vmatprep.mubr.f32.mxu0 0.0
        %7498 = vmatmul.mubr.f32.gmra.mxu0 %v7426
        %v7499 = vpop.f32.mrf.mxu0
        %v7500 = vadd.f32 0.0, %v7499
        %v7501 = vpop.f32.mrf.mxu0
        %7502 = vdwg.mxu0
        %v7504 = vsel %vm1437, %v7327, 0
        %v7507 = vsel %vm1437, %v7332, 0
        %7509 = vmatprep.subr.mxu0 0.0
        %7510 = vmatpush1.msra.mxu0 0.0
        %7511 = vmatprep.subr.mxu0 0.0
        %7512 = vmatpush1.msra.mxu0 0.0
        %7513 = vmatprep.subr.mxu0 0.0
        %7514 = vmatpush1.msra.mxu0 0.0
        %7515 = vmatprep.subr.mxu0 0.0
        %7516 = vmatpush1.msra.mxu0 0.0
        %7517 = vmatprep.subr.mxu0 0.0
        %7518 = vmatpush1.msra.mxu0 0.0
        %7519 = vmatprep.subr.mxu0 0.0
        %7520 = vmatpush1.msra.mxu0 0.0
        %7521 = vmatprep.subr.mxu0 0.0
        %7522 = vmatpush1.msra.mxu0 0.0
        %7523 = vmatprep.subr.mxu0 0.0
        %7524 = vmatpush1.msra.mxu0 0.0
        %7525 = vmatprep.subr.mxu0 0.0
        %7526 = vmatpush1.msra.mxu0 0.0
        %7527 = vmatprep.subr.mxu0 0.0
        %7528 = vmatpush1.msra.mxu0 0.0
        %7529 = vmatprep.subr.mxu0 0.0
        %7530 = vmatpush1.msra.mxu0 %v7340
        %7531 = vmatprep.subr.mxu0 0.0
        %7532 = vmatpush1.msra.mxu0 %v7339
        %7533 = vmatprep.subr.mxu0 0.0
        %7534 = vmatpush1.msra.mxu0 %v7338
        %7535 = vmatprep.subr.mxu0 0.0
        %7536 = vmatpush1.msra.mxu0 %v7337
        %7537 = vmatprep.subr.mxu0 0.0
        %7538 = vmatpush1.msra.mxu0 %v7336
        %7539 = vmatprep.subr.mxu0 0.0
        %7540 = vmatpush1.msra.mxu0 %v7335
        %7541 = vmatprep.subr.mxu0 0.0
        %7542 = vmatpush2.msra.mxu0 0.0
        %7543 = vmatprep.subr.mxu0 0.0
        %7544 = vmatpush2.msra.mxu0 0.0
        %7545 = vmatprep.subr.mxu0 0.0
        %7546 = vmatpush2.msra.mxu0 0.0
        %7547 = vmatprep.subr.mxu0 0.0
        %7548 = vmatpush2.msra.mxu0 0.0
        %7549 = vmatprep.subr.mxu0 0.0
        %7550 = vmatpush2.msra.mxu0 0.0
        %7551 = vmatprep.subr.mxu0 0.0
        %7552 = vmatpush2.msra.mxu0 0.0
        %7553 = vmatprep.subr.mxu0 0.0
        %7554 = vmatpush2.msra.mxu0 0.0
        %7555 = vmatprep.subr.mxu0 0.0
        %7556 = vmatpush2.msra.mxu0 0.0
        %7557 = vmatprep.subr.mxu0 0.0
        %7558 = vmatpush2.msra.mxu0 0.0
        %7559 = vmatprep.subr.mxu0 0.0
        %7560 = vmatpush2.msra.mxu0 0.0
        %7561 = vmatprep.subr.mxu0 0.0
        %7562 = vmatpush2.msra.mxu0 0.0
        %7563 = vmatprep.subr.mxu0 0.0
        %7564 = vmatpush2.msra.mxu0 0.0
        %7565 = vmatprep.subr.mxu0 0.0
        %7566 = vmatpush2.msra.mxu0 0.0
        %7567 = vmatprep.subr.mxu0 0.0
        %7568 = vmatpush2.msra.mxu0 0.0
        %7569 = vmatprep.subr.mxu0 0.0
        %7570 = vmatpush2.msra.mxu0 0.0
        %7571 = vmatprep.subr.mxu0 0.0
        %7572 = vmatpush2.msra.mxu0 0.0
        %7573 = vmatprep.mubr.f32.mxu0 0.0
        %7574 = vmatmul.mubr.f32.gmra.mxu0 %v7504
        %v7575 = vpop.f32.mrf.mxu0
        %v7576 = vadd.f32 %v7495, %v7575
        %v7577 = vpop.f32.mrf.mxu0
        %7578 = vmatprep.mubr.f32.mxu0 0.0
        %7579 = vmatmul.mubr.f32.gmra.mxu0 %v7507
        %v7580 = vpop.f32.mrf.mxu0
        %v7581 = vadd.f32 %v7500, %v7580
        %v7582 = vpop.f32.mrf.mxu0
        %7583 = vdwg.mxu0
        %7584 = vmatprep.subr.mxu0 0.0
        %7585 = vmatpush1.msra.mxu0 0.0
        %7586 = vmatprep.subr.mxu0 0.0
        %7587 = vmatpush1.msra.mxu0 0.0
        %7588 = vmatprep.subr.mxu0 0.0
        %7589 = vmatpush1.msra.mxu0 0.0
        %7590 = vmatprep.subr.mxu0 0.0
        %7591 = vmatpush1.msra.mxu0 0.0
        %7592 = vmatprep.subr.mxu0 0.0
        %7593 = vmatpush1.msra.mxu0 0.0
        %7594 = vmatprep.subr.mxu0 0.0
        %7595 = vmatpush1.msra.mxu0 0.0
        %7596 = vmatprep.subr.mxu0 0.0
        %7597 = vmatpush1.msra.mxu0 0.0
        %7598 = vmatprep.subr.mxu0 0.0
        %7599 = vmatpush1.msra.mxu0 0.0
        %7600 = vmatprep.subr.mxu0 0.0
        %7601 = vmatpush1.msra.mxu0 0.0
        %7602 = vmatprep.subr.mxu0 0.0
        %7603 = vmatpush1.msra.mxu0 0.0
        %7604 = vmatprep.subr.mxu0 0.0
        %7605 = vmatpush1.msra.mxu0 0.0
        %7606 = vmatprep.subr.mxu0 0.0
        %7607 = vmatpush1.msra.mxu0 0.0
        %7608 = vmatprep.subr.mxu0 0.0
        %7609 = vmatpush1.msra.mxu0 0.0
        %7610 = vmatprep.subr.mxu0 0.0
        %7611 = vmatpush1.msra.mxu0 0.0
        %7612 = vmatprep.subr.mxu0 0.0
        %7613 = vmatpush1.msra.mxu0 0.0
        %7614 = vmatprep.subr.mxu0 0.0
        %7615 = vmatpush1.msra.mxu0 %v7258
        %7616 = vmatprep.subr.mxu0 0.0
        %7617 = vmatpush2.msra.mxu0 0.0
        %7618 = vmatprep.subr.mxu0 0.0
        %7619 = vmatpush2.msra.mxu0 0.0
        %7620 = vmatprep.subr.mxu0 0.0
        %7621 = vmatpush2.msra.mxu0 0.0
        %7622 = vmatprep.subr.mxu0 0.0
        %7623 = vmatpush2.msra.mxu0 0.0
        %7624 = vmatprep.subr.mxu0 0.0
        %7625 = vmatpush2.msra.mxu0 0.0
        %7626 = vmatprep.subr.mxu0 0.0
        %7627 = vmatpush2.msra.mxu0 0.0
        %7628 = vmatprep.subr.mxu0 0.0
        %7629 = vmatpush2.msra.mxu0 0.0
        %7630 = vmatprep.subr.mxu0 0.0
        %7631 = vmatpush2.msra.mxu0 0.0
        %7632 = vmatprep.subr.mxu0 0.0
        %7633 = vmatpush2.msra.mxu0 0.0
        %7634 = vmatprep.subr.mxu0 0.0
        %7635 = vmatpush2.msra.mxu0 0.0
        %7636 = vmatprep.subr.mxu0 0.0
        %7637 = vmatpush2.msra.mxu0 0.0
        %7638 = vmatprep.subr.mxu0 0.0
        %7639 = vmatpush2.msra.mxu0 0.0
        %7640 = vmatprep.subr.mxu0 0.0
        %7641 = vmatpush2.msra.mxu0 0.0
        %7642 = vmatprep.subr.mxu0 0.0
        %7643 = vmatpush2.msra.mxu0 0.0
        %7644 = vmatprep.subr.mxu0 0.0
        %7645 = vmatpush2.msra.mxu0 0.0
        %7646 = vmatprep.subr.mxu0 0.0
        %7647 = vmatpush2.msra.mxu0 0.0
        %7648 = vmatprep.mubr.f32.mxu0 0.0
        %7649 = vmatmul.mubr.f32.gmra.mxu0 %v3022
        %v7650 = vpop.f32.mrf.mxu0
        %v7651 = vadd.f32 0.0, %v7650
        %v7652 = vpop.f32.mrf.mxu0
        %7653 = vmatprep.mubr.f32.mxu0 0.0
        %7654 = vmatmul.mubr.f32.gmra.mxu0 %v3025
        %v7655 = vpop.f32.mrf.mxu0
        %v7656 = vadd.f32 0.0, %v7655
        %v7657 = vpop.f32.mrf.mxu0
        %7658 = vdwg.mxu0
        %v7659 = vld [vmem:[%s3102] sm:$0xff]
        %v7660 = vld [vmem:[%s3102 + $0x8] sm:$0xff]
        %v7661 = vld [vmem:[%s3102 + $0x10] sm:$0xff]
        %v7662 = vld [vmem:[%s3102 + $0x18] sm:$0xff]
        %v7663 = vld [vmem:[%s3102 + $0x20] sm:$0xff]
        %v7664 = vld [vmem:[%s3102 + $0x28] sm:$0xff]
        %v7666 = vsel %vm1437, %v7651, 0
        %v7669 = vsel %vm1437, %v7656, 0
        %7671 = vmatprep.subr.mxu0 0.0
        %7672 = vmatpush1.msra.mxu0 0.0
        %7673 = vmatprep.subr.mxu0 0.0
        %7674 = vmatpush1.msra.mxu0 0.0
        %7675 = vmatprep.subr.mxu0 0.0
        %7676 = vmatpush1.msra.mxu0 0.0
        %7677 = vmatprep.subr.mxu0 0.0
        %7678 = vmatpush1.msra.mxu0 0.0
        %7679 = vmatprep.subr.mxu0 0.0
        %7680 = vmatpush1.msra.mxu0 0.0
        %7681 = vmatprep.subr.mxu0 0.0
        %7682 = vmatpush1.msra.mxu0 0.0
        %7683 = vmatprep.subr.mxu0 0.0
        %7684 = vmatpush1.msra.mxu0 0.0
        %7685 = vmatprep.subr.mxu0 0.0
        %7686 = vmatpush1.msra.mxu0 0.0
        %7687 = vmatprep.subr.mxu0 0.0
        %7688 = vmatpush1.msra.mxu0 0.0
        %7689 = vmatprep.subr.mxu0 0.0
        %7690 = vmatpush1.msra.mxu0 0.0
        %7691 = vmatprep.subr.mxu0 0.0
        %7692 = vmatpush1.msra.mxu0 %v7664
        %7693 = vmatprep.subr.mxu0 0.0
        %7694 = vmatpush1.msra.mxu0 %v7663
        %7695 = vmatprep.subr.mxu0 0.0
        %7696 = vmatpush1.msra.mxu0 %v7662
        %7697 = vmatprep.subr.mxu0 0.0
        %7698 = vmatpush1.msra.mxu0 %v7661
        %7699 = vmatprep.subr.mxu0 0.0
        %7700 = vmatpush1.msra.mxu0 %v7660
        %7701 = vmatprep.subr.mxu0 0.0
        %7702 = vmatpush1.msra.mxu0 %v7659
        %7703 = vmatprep.subr.mxu0 0.0
        %7704 = vmatpush2.msra.mxu0 0.0
        %7705 = vmatprep.subr.mxu0 0.0
        %7706 = vmatpush2.msra.mxu0 0.0
        %7707 = vmatprep.subr.mxu0 0.0
        %7708 = vmatpush2.msra.mxu0 0.0
        %7709 = vmatprep.subr.mxu0 0.0
        %7710 = vmatpush2.msra.mxu0 0.0
        %7711 = vmatprep.subr.mxu0 0.0
        %7712 = vmatpush2.msra.mxu0 0.0
        %7713 = vmatprep.subr.mxu0 0.0
        %7714 = vmatpush2.msra.mxu0 0.0
        %7715 = vmatprep.subr.mxu0 0.0
        %7716 = vmatpush2.msra.mxu0 0.0
        %7717 = vmatprep.subr.mxu0 0.0
        %7718 = vmatpush2.msra.mxu0 0.0
        %7719 = vmatprep.subr.mxu0 0.0
        %7720 = vmatpush2.msra.mxu0 0.0
        %7721 = vmatprep.subr.mxu0 0.0
        %7722 = vmatpush2.msra.mxu0 0.0
        %7723 = vmatprep.subr.mxu0 0.0
        %7724 = vmatpush2.msra.mxu0 0.0
        %7725 = vmatprep.subr.mxu0 0.0
        %7726 = vmatpush2.msra.mxu0 0.0
        %7727 = vmatprep.subr.mxu0 0.0
        %7728 = vmatpush2.msra.mxu0 0.0
        %7729 = vmatprep.subr.mxu0 0.0
        %7730 = vmatpush2.msra.mxu0 0.0
        %7731 = vmatprep.subr.mxu0 0.0
        %7732 = vmatpush2.msra.mxu0 0.0
        %7733 = vmatprep.subr.mxu0 0.0
        %7734 = vmatpush2.msra.mxu0 0.0
        %7735 = vmatprep.mubr.f32.mxu0 0.0
        %7736 = vmatmul.mubr.f32.gmra.mxu0 %v7666
        %v7737 = vpop.f32.mrf.mxu0
        %v7738 = vadd.f32 0.0, %v7737
        %v7739 = vpop.f32.mrf.mxu0
        %7740 = vmatprep.mubr.f32.mxu0 0.0
        %7741 = vmatmul.mubr.f32.gmra.mxu0 %v7669
        %v7742 = vpop.f32.mrf.mxu0
        %v7743 = vadd.f32 0.0, %v7742
        %v7744 = vpop.f32.mrf.mxu0
        %7745 = vdwg.mxu0
        %v7746 = vadd.f32 %v7576, %v7738
        %v7747 = vadd.f32 %v7581, %v7743
        %v7748 = vld [vmem:[%s723] sm:$0x1]
        %v7750 = vlaneseq
        %v7751 = vshrl.u32 %v7750, 7
        %v7752 = vsub.s32 0, %v7751
        %v7753 = vrot.slane %v7748, %v7752
        %v7755 = vadd.f32 %v7746, %v7753
        %v7756 = vadd.f32 %v7747, %v7753
        %v7757 = vmax.f32 %v7755, 0.0
        %v7758 = vmax.f32 %v7756, 0.0
        %v7760 = vsel %vm3213, %v7758, 0
        %7762 = vmatprep.subr.mxu0 0.0
        %7763 = vmatpush1.msra.mxu0 0.0
        %7764 = vmatprep.subr.mxu0 0.0
        %7765 = vmatpush1.msra.mxu0 0.0
        %7766 = vmatprep.subr.mxu0 0.0
        %7767 = vmatpush1.msra.mxu0 0.0
        %7768 = vmatprep.subr.mxu0 0.0
        %7769 = vmatpush1.msra.mxu0 0.0
        %7770 = vmatprep.subr.mxu0 0.0
        %7771 = vmatpush1.msra.mxu0 0.0
        %7772 = vmatprep.subr.mxu0 0.0
        %7773 = vmatpush1.msra.mxu0 0.0
        %7774 = vmatprep.subr.mxu0 0.0
        %7775 = vmatpush1.msra.mxu0 0.0
        %7776 = vmatprep.subr.mxu0 0.0
        %7777 = vmatpush1.msra.mxu0 0.0
        %7778 = vmatprep.subr.mxu0 0.0
        %7779 = vmatpush1.msra.mxu0 0.0
        %7780 = vmatprep.subr.mxu0 0.0
        %7781 = vmatpush1.msra.mxu0 0.0
        %7782 = vmatprep.subr.mxu0 0.0
        %7783 = vmatpush1.msra.mxu0 0.0
        %7784 = vmatprep.subr.mxu0 0.0
        %7785 = vmatpush1.msra.mxu0 0.0
        %7786 = vmatprep.subr.mxu0 0.0
        %7787 = vmatpush1.msra.mxu0 0.0
        %7788 = vmatprep.subr.mxu0 0.0
        %7789 = vmatpush1.msra.mxu0 0.0
        %7790 = vmatprep.subr.mxu0 0.0
        %7791 = vmatpush1.msra.mxu0 %v7760
        %7792 = vmatprep.subr.mxu0 0.0
        %7793 = vmatpush1.msra.mxu0 %v7757
        %7794 = vmatprep.subr.mxu0 0.0
        %7795 = vmatpush2.msra.mxu0 0.0
        %7796 = vmatprep.subr.mxu0 0.0
        %7797 = vmatpush2.msra.mxu0 0.0
        %7798 = vmatprep.subr.mxu0 0.0
        %7799 = vmatpush2.msra.mxu0 0.0
        %7800 = vmatprep.subr.mxu0 0.0
        %7801 = vmatpush2.msra.mxu0 0.0
        %7802 = vmatprep.subr.mxu0 0.0
        %7803 = vmatpush2.msra.mxu0 0.0
        %7804 = vmatprep.subr.mxu0 0.0
        %7805 = vmatpush2.msra.mxu0 0.0
        %7806 = vmatprep.subr.mxu0 0.0
        %7807 = vmatpush2.msra.mxu0 0.0
        %7808 = vmatprep.subr.mxu0 0.0
        %7809 = vmatpush2.msra.mxu0 0.0
        %7810 = vmatprep.subr.mxu0 0.0
        %7811 = vmatpush2.msra.mxu0 0.0
        %7812 = vmatprep.subr.mxu0 0.0
        %7813 = vmatpush2.msra.mxu0 0.0
        %7814 = vmatprep.subr.mxu0 0.0
        %7815 = vmatpush2.msra.mxu0 0.0
        %7816 = vmatprep.subr.mxu0 0.0
        %7817 = vmatpush2.msra.mxu0 0.0
        %7818 = vmatprep.subr.mxu0 0.0
        %7819 = vmatpush2.msra.mxu0 0.0
        %7820 = vmatprep.subr.mxu0 0.0
        %7821 = vmatpush2.msra.mxu0 0.0
        %7822 = vmatprep.subr.mxu0 0.0
        %7823 = vmatpush2.msra.mxu0 0.0
        %7824 = vmatprep.subr.mxu0 0.0
        %7825 = vmatpush2.msra.mxu0 0.0
        %7826 = vmatprep.mubr.f32.mxu0 0.0
        %7827 = vmatmul.mubr.f32.gmra.mxu0 %v3205
        %v7828 = vpop.f32.mrf.mxu0
        %v7829 = vadd.f32 0.0, %v7828
        %v7830 = vpop.f32.mrf.mxu0
        %7831 = vmatprep.mubr.f32.mxu0 0.0
        %7832 = vmatmul.mubr.f32.gmra.mxu0 %v3208
        %v7833 = vpop.f32.mrf.mxu0
        %v7834 = vadd.f32 0.0, %v7833
        %v7835 = vpop.f32.mrf.mxu0
        %7836 = vmatprep.mubr.f32.mxu0 0.0
        %7837 = vmatmul.mubr.f32.gmra.mxu0 %v3211
        %v7838 = vpop.f32.mrf.mxu0
        %v7839 = vadd.f32 0.0, %v7838
        %v7840 = vpop.f32.mrf.mxu0
        %7841 = vdwg.mxu0
        %v7842 = vld [vmem:[%s728] sm:$0xff]
        %v7843 = vld [vmem:[%s728 + $0x8] sm:$0xff]
        %v7844 = vld [vmem:[%s728 + $0x10] sm:$0xff]
        %v7845 = vld [vmem:[%s728 + $0x18] sm:$0xff]
        %v7846 = vld [vmem:[%s728 + $0x20] sm:$0xff]
        %v7847 = vld [vmem:[%s728 + $0x28] sm:$0xff]
        %v7848 = vld [vmem:[%s728 + $0x30] sm:$0xff]
        %v7849 = vld [vmem:[%s728 + $0x38] sm:$0xff]
        %v7850 = vld [vmem:[%s728 + $0x40] sm:$0xff]
        %v7851 = vld [vmem:[%s728 + $0x48] sm:$0xff]
        %v7852 = vld [vmem:[%s728 + $0x50] sm:$0xff]
        %v7853 = vld [vmem:[%s728 + $0x58] sm:$0xff]
        %v7854 = vld [vmem:[%s728 + $0x60] sm:$0xff]
        %v7855 = vld [vmem:[%s728 + $0x68] sm:$0xff]
        %v7856 = vld [vmem:[%s728 + $0x70] sm:$0xff]
        %v7857 = vld [vmem:[%s728 + $0x78] sm:$0xff]
        %v7858 = vld [vmem:[%s728 + $0x80] sm:$0xff]
        %v7859 = vld [vmem:[%s728 + $0x88] sm:$0xff]
        %v7860 = vld [vmem:[%s728 + $0x90] sm:$0xff]
        %v7861 = vld [vmem:[%s728 + $0x98] sm:$0xff]
        %v7862 = vld [vmem:[%s728 + $0xa0] sm:$0xff]
        %v7863 = vld [vmem:[%s728 + $0xa8] sm:$0xff]
        %v7864 = vld [vmem:[%s728 + $0xb0] sm:$0xff]
        %v7865 = vld [vmem:[%s728 + $0xb8] sm:$0xff]
        %v7866 = vld [vmem:[%s728 + $0xc0] sm:$0xff]
        %v7867 = vld [vmem:[%s728 + $0xc8] sm:$0xff]
        %v7868 = vld [vmem:[%s728 + $0xd0] sm:$0xff]
        %v7869 = vld [vmem:[%s728 + $0xd8] sm:$0xff]
        %v7870 = vld [vmem:[%s728 + $0xe0] sm:$0xff]
        %v7871 = vld [vmem:[%s728 + $0xe8] sm:$0xff]
        %7872 = vmatprep.subr.mxu0 0.0
        %7873 = vmatpush1.msra.mxu0 0.0
        %7874 = vmatprep.subr.mxu0 0.0
        %7875 = vmatpush1.msra.mxu0 0.0
        %7876 = vmatprep.subr.mxu0 0.0
        %7877 = vmatpush1.msra.mxu0 0.0
        %7878 = vmatprep.subr.mxu0 0.0
        %7879 = vmatpush1.msra.mxu0 0.0
        %7880 = vmatprep.subr.mxu0 0.0
        %7881 = vmatpush1.msra.mxu0 0.0
        %7882 = vmatprep.subr.mxu0 0.0
        %7883 = vmatpush1.msra.mxu0 0.0
        %7884 = vmatprep.subr.mxu0 0.0
        %7885 = vmatpush1.msra.mxu0 0.0
        %7886 = vmatprep.subr.mxu0 0.0
        %7887 = vmatpush1.msra.mxu0 0.0
        %7888 = vmatprep.subr.mxu0 0.0
        %7889 = vmatpush1.msra.mxu0 0.0
        %7890 = vmatprep.subr.mxu0 0.0
        %7891 = vmatpush1.msra.mxu0 0.0
        %7892 = vmatprep.subr.mxu0 0.0
        %7893 = vmatpush1.msra.mxu0 0.0
        %7894 = vmatprep.subr.mxu0 0.0
        %7895 = vmatpush1.msra.mxu0 0.0
        %7896 = vmatprep.subr.mxu0 0.0
        %7897 = vmatpush1.msra.mxu0 0.0
        %7898 = vmatprep.subr.mxu0 0.0
        %7899 = vmatpush1.msra.mxu0 0.0
        %7900 = vmatprep.subr.mxu0 0.0
        %7901 = vmatpush1.msra.mxu0 %v7760
        %7902 = vmatprep.subr.mxu0 0.0
        %7903 = vmatpush1.msra.mxu0 %v7757
        %7904 = vmatprep.subr.mxu0 0.0
        %7905 = vmatpush2.msra.mxu0 0.0
        %7906 = vmatprep.subr.mxu0 0.0
        %7907 = vmatpush2.msra.mxu0 0.0
        %7908 = vmatprep.subr.mxu0 0.0
        %7909 = vmatpush2.msra.mxu0 0.0
        %7910 = vmatprep.subr.mxu0 0.0
        %7911 = vmatpush2.msra.mxu0 0.0
        %7912 = vmatprep.subr.mxu0 0.0
        %7913 = vmatpush2.msra.mxu0 0.0
        %7914 = vmatprep.subr.mxu0 0.0
        %7915 = vmatpush2.msra.mxu0 0.0
        %7916 = vmatprep.subr.mxu0 0.0
        %7917 = vmatpush2.msra.mxu0 0.0
        %7918 = vmatprep.subr.mxu0 0.0
        %7919 = vmatpush2.msra.mxu0 0.0
        %7920 = vmatprep.subr.mxu0 0.0
        %7921 = vmatpush2.msra.mxu0 0.0
        %7922 = vmatprep.subr.mxu0 0.0
        %7923 = vmatpush2.msra.mxu0 0.0
        %7924 = vmatprep.subr.mxu0 0.0
        %7925 = vmatpush2.msra.mxu0 0.0
        %7926 = vmatprep.subr.mxu0 0.0
        %7927 = vmatpush2.msra.mxu0 0.0
        %7928 = vmatprep.subr.mxu0 0.0
        %7929 = vmatpush2.msra.mxu0 0.0
        %7930 = vmatprep.subr.mxu0 0.0
        %7931 = vmatpush2.msra.mxu0 0.0
        %7932 = vmatprep.subr.mxu0 0.0
        %7933 = vmatpush2.msra.mxu0 0.0
        %7934 = vmatprep.subr.mxu0 0.0
        %7935 = vmatpush2.msra.mxu0 0.0
        %7936 = vmatprep.mubr.f32.mxu0 0.0
        %7937 = vmatmul.mubr.f32.gmra.mxu0 %v3327
        %v7938 = vpop.f32.mrf.mxu0
        %v7939 = vadd.f32 0.0, %v7938
        %v7940 = vpop.f32.mrf.mxu0
        %7941 = vmatprep.mubr.f32.mxu0 0.0
        %7942 = vmatmul.mubr.f32.gmra.mxu0 %v3329
        %v7943 = vpop.f32.mrf.mxu0
        %v7944 = vadd.f32 0.0, %v7943
        %v7945 = vpop.f32.mrf.mxu0
        %7946 = vmatprep.mubr.f32.mxu0 0.0
        %7947 = vmatmul.mubr.f32.gmra.mxu0 %v3332
        %v7948 = vpop.f32.mrf.mxu0
        %v7949 = vadd.f32 0.0, %v7948
        %v7950 = vpop.f32.mrf.mxu0
        %7951 = vdwg.mxu0
        %v7952 = vld [vmem:[%s3414] sm:$0xff]
        %v7953 = vld [vmem:[%s3414 + $0x8] sm:$0xff]
        %v7954 = vld [vmem:[%s3414 + $0x10] sm:$0xff]
        %v7955 = vld [vmem:[%s3414 + $0x18] sm:$0xff]
        %v7956 = vld [vmem:[%s3414 + $0x20] sm:$0xff]
        %v7957 = vld [vmem:[%s3414 + $0x28] sm:$0xff]
        %v7958 = vld [vmem:[%s3414 + $0x30] sm:$0xff]
        %v7959 = vld [vmem:[%s3414 + $0x38] sm:$0xff]
        %v7960 = vld [vmem:[%s3414 + $0x40] sm:$0xff]
        %v7961 = vld [vmem:[%s3414 + $0x48] sm:$0xff]
        %v7962 = vld [vmem:[%s3414 + $0x50] sm:$0xff]
        %v7963 = vld [vmem:[%s3414 + $0x58] sm:$0xff]
        %v7964 = vld [vmem:[%s3414 + $0x60] sm:$0xff]
        %v7965 = vld [vmem:[%s3414 + $0x68] sm:$0xff]
        %v7966 = vld [vmem:[%s3414 + $0x70] sm:$0xff]
        %v7967 = vld [vmem:[%s3414 + $0x78] sm:$0xff]
        %v7968 = vld [vmem:[%s3414 + $0x80] sm:$0xff]
        %v7969 = vld [vmem:[%s3414 + $0x88] sm:$0xff]
        %v7970 = vld [vmem:[%s3414 + $0x90] sm:$0xff]
        %v7971 = vld [vmem:[%s3414 + $0x98] sm:$0xff]
        %v7972 = vld [vmem:[%s3414 + $0xa0] sm:$0xff]
        %v7973 = vld [vmem:[%s3414 + $0xa8] sm:$0xff]
        %v7974 = vld [vmem:[%s3414 + $0xb0] sm:$0xff]
        %v7975 = vld [vmem:[%s3414 + $0xb8] sm:$0xff]
        %v7976 = vld [vmem:[%s3414 + $0xc0] sm:$0xff]
        %v7977 = vld [vmem:[%s3414 + $0xc8] sm:$0xff]
        %v7978 = vld [vmem:[%s3414 + $0xd0] sm:$0xff]
        %v7979 = vld [vmem:[%s3414 + $0xd8] sm:$0xff]
        %v7980 = vld [vmem:[%s3414 + $0xe0] sm:$0xff]
        %v7981 = vld [vmem:[%s3414 + $0xe8] sm:$0xff]
        %v7983 = vsel %vm3445, %v7939, 0
        %v7986 = vsel %vm3445, %v7944, 0
        %v7989 = vsel %vm3445, %v7949, 0
        %7991 = vmatprep.subr.mxu0 0.0
        %7992 = vmatpush1.msra.mxu0 0.0
        %7993 = vmatprep.subr.mxu0 0.0
        %7994 = vmatpush1.msra.mxu0 0.0
        %7995 = vmatprep.subr.mxu0 0.0
        %7996 = vmatpush1.msra.mxu0 0.0
        %7997 = vmatprep.subr.mxu0 0.0
        %7998 = vmatpush1.msra.mxu0 0.0
        %7999 = vmatprep.subr.mxu0 0.0
        %8000 = vmatpush1.msra.mxu0 0.0
        %8001 = vmatprep.subr.mxu0 0.0
        %8002 = vmatpush1.msra.mxu0 0.0
        %8003 = vmatprep.subr.mxu0 %v7980
        %8004 = vmatpush1.msra.mxu0 %v7979
        %8005 = vmatprep.subr.mxu0 %v7977
        %8006 = vmatpush1.msra.mxu0 %v7976
        %8007 = vmatprep.subr.mxu0 %v7974
        %8008 = vmatpush1.msra.mxu0 %v7973
        %8009 = vmatprep.subr.mxu0 %v7971
        %8010 = vmatpush1.msra.mxu0 %v7970
        %8011 = vmatprep.subr.mxu0 %v7968
        %8012 = vmatpush1.msra.mxu0 %v7967
        %8013 = vmatprep.subr.mxu0 %v7965
        %8014 = vmatpush1.msra.mxu0 %v7964
        %8015 = vmatprep.subr.mxu0 %v7962
        %8016 = vmatpush1.msra.mxu0 %v7961
        %8017 = vmatprep.subr.mxu0 %v7959
        %8018 = vmatpush1.msra.mxu0 %v7958
        %8019 = vmatprep.subr.mxu0 %v7956
        %8020 = vmatpush1.msra.mxu0 %v7955
        %8021 = vmatprep.subr.mxu0 %v7953
        %8022 = vmatpush1.msra.mxu0 %v7952
        %8023 = vmatprep.subr.mxu0 0.0
        %8024 = vmatpush2.msra.mxu0 0.0
        %8025 = vmatprep.subr.mxu0 0.0
        %8026 = vmatpush2.msra.mxu0 0.0
        %8027 = vmatprep.subr.mxu0 0.0
        %8028 = vmatpush2.msra.mxu0 0.0
        %8029 = vmatprep.subr.mxu0 0.0
        %8030 = vmatpush2.msra.mxu0 0.0
        %8031 = vmatprep.subr.mxu0 0.0
        %8032 = vmatpush2.msra.mxu0 0.0
        %8033 = vmatprep.subr.mxu0 0.0
        %8034 = vmatpush2.msra.mxu0 0.0
        %8035 = vmatprep.subr.mxu0 0.0
        %8036 = vmatpush2.msra.mxu0 0.0
        %8037 = vmatprep.subr.mxu0 0.0
        %8038 = vmatpush2.msra.mxu0 0.0
        %8039 = vmatprep.subr.mxu0 0.0
        %8040 = vmatpush2.msra.mxu0 0.0
        %8041 = vmatprep.subr.mxu0 0.0
        %8042 = vmatpush2.msra.mxu0 0.0
        %8043 = vmatprep.subr.mxu0 0.0
        %8044 = vmatpush2.msra.mxu0 0.0
        %8045 = vmatprep.subr.mxu0 0.0
        %8046 = vmatpush2.msra.mxu0 0.0
        %8047 = vmatprep.subr.mxu0 0.0
        %8048 = vmatpush2.msra.mxu0 0.0
        %8049 = vmatprep.subr.mxu0 0.0
        %8050 = vmatpush2.msra.mxu0 0.0
        %8051 = vmatprep.subr.mxu0 0.0
        %8052 = vmatpush2.msra.mxu0 0.0
        %8053 = vmatprep.subr.mxu0 0.0
        %8054 = vmatpush2.msra.mxu0 0.0
        %8055 = vmatprep.mubr.f32.mxu0 0.0
        %8056 = vmatmul.mubr.f32.gmra.mxu0 %v7983
        %v8057 = vpop.f32.mrf.mxu0
        %v8058 = vadd.f32 0.0, %v8057
        %v8059 = vpop.f32.mrf.mxu0
        %v8060 = vadd.f32 0.0, %v8059
        %8061 = vmatprep.mubr.f32.mxu0 0.0
        %8062 = vmatmul.mubr.f32.gmra.mxu0 %v7986
        %v8063 = vpop.f32.mrf.mxu0
        %v8064 = vadd.f32 0.0, %v8063
        %v8065 = vpop.f32.mrf.mxu0
        %v8066 = vadd.f32 0.0, %v8065
        %8067 = vmatprep.mubr.f32.mxu0 0.0
        %8068 = vmatmul.mubr.f32.gmra.mxu0 %v7989
        %v8069 = vpop.f32.mrf.mxu0
        %v8070 = vadd.f32 0.0, %v8069
        %v8071 = vpop.f32.mrf.mxu0
        %v8072 = vadd.f32 0.0, %v8071
        %8073 = vdwg.mxu0
        %8074 = vmatprep.subr.mxu0 0.0
        %8075 = vmatpush1.msra.mxu0 0.0
        %8076 = vmatprep.subr.mxu0 0.0
        %8077 = vmatpush1.msra.mxu0 0.0
        %8078 = vmatprep.subr.mxu0 0.0
        %8079 = vmatpush1.msra.mxu0 0.0
        %8080 = vmatprep.subr.mxu0 0.0
        %8081 = vmatpush1.msra.mxu0 0.0
        %8082 = vmatprep.subr.mxu0 0.0
        %8083 = vmatpush1.msra.mxu0 0.0
        %8084 = vmatprep.subr.mxu0 0.0
        %8085 = vmatpush1.msra.mxu0 0.0
        %8086 = vmatprep.subr.mxu0 0.0
        %8087 = vmatpush1.msra.mxu0 %v7981
        %8088 = vmatprep.subr.mxu0 0.0
        %8089 = vmatpush1.msra.mxu0 %v7978
        %8090 = vmatprep.subr.mxu0 0.0
        %8091 = vmatpush1.msra.mxu0 %v7975
        %8092 = vmatprep.subr.mxu0 0.0
        %8093 = vmatpush1.msra.mxu0 %v7972
        %8094 = vmatprep.subr.mxu0 0.0
        %8095 = vmatpush1.msra.mxu0 %v7969
        %8096 = vmatprep.subr.mxu0 0.0
        %8097 = vmatpush1.msra.mxu0 %v7966
        %8098 = vmatprep.subr.mxu0 0.0
        %8099 = vmatpush1.msra.mxu0 %v7963
        %8100 = vmatprep.subr.mxu0 0.0
        %8101 = vmatpush1.msra.mxu0 %v7960
        %8102 = vmatprep.subr.mxu0 0.0
        %8103 = vmatpush1.msra.mxu0 %v7957
        %8104 = vmatprep.subr.mxu0 0.0
        %8105 = vmatpush1.msra.mxu0 %v7954
        %8106 = vmatprep.subr.mxu0 0.0
        %8107 = vmatpush2.msra.mxu0 0.0
        %8108 = vmatprep.subr.mxu0 0.0
        %8109 = vmatpush2.msra.mxu0 0.0
        %8110 = vmatprep.subr.mxu0 0.0
        %8111 = vmatpush2.msra.mxu0 0.0
        %8112 = vmatprep.subr.mxu0 0.0
        %8113 = vmatpush2.msra.mxu0 0.0
        %8114 = vmatprep.subr.mxu0 0.0
        %8115 = vmatpush2.msra.mxu0 0.0
        %8116 = vmatprep.subr.mxu0 0.0
        %8117 = vmatpush2.msra.mxu0 0.0
        %8118 = vmatprep.subr.mxu0 0.0
        %8119 = vmatpush2.msra.mxu0 0.0
        %8120 = vmatprep.subr.mxu0 0.0
        %8121 = vmatpush2.msra.mxu0 0.0
        %8122 = vmatprep.subr.mxu0 0.0
        %8123 = vmatpush2.msra.mxu0 0.0
        %8124 = vmatprep.subr.mxu0 0.0
        %8125 = vmatpush2.msra.mxu0 0.0
        %8126 = vmatprep.subr.mxu0 0.0
        %8127 = vmatpush2.msra.mxu0 0.0
        %8128 = vmatprep.subr.mxu0 0.0
        %8129 = vmatpush2.msra.mxu0 0.0
        %8130 = vmatprep.subr.mxu0 0.0
        %8131 = vmatpush2.msra.mxu0 0.0
        %8132 = vmatprep.subr.mxu0 0.0
        %8133 = vmatpush2.msra.mxu0 0.0
        %8134 = vmatprep.subr.mxu0 0.0
        %8135 = vmatpush2.msra.mxu0 0.0
        %8136 = vmatprep.subr.mxu0 0.0
        %8137 = vmatpush2.msra.mxu0 0.0
        %8138 = vmatprep.mubr.f32.mxu0 0.0
        %8139 = vmatmul.mubr.f32.gmra.mxu0 %v7983
        %v8140 = vpop.f32.mrf.mxu0
        %v8141 = vadd.f32 0.0, %v8140
        %v8142 = vpop.f32.mrf.mxu0
        %8143 = vmatprep.mubr.f32.mxu0 0.0
        %8144 = vmatmul.mubr.f32.gmra.mxu0 %v7986
        %v8145 = vpop.f32.mrf.mxu0
        %v8146 = vadd.f32 0.0, %v8145
        %v8147 = vpop.f32.mrf.mxu0
        %8148 = vmatprep.mubr.f32.mxu0 0.0
        %8149 = vmatmul.mubr.f32.gmra.mxu0 %v7989
        %v8150 = vpop.f32.mrf.mxu0
        %v8151 = vadd.f32 0.0, %v8150
        %v8152 = vpop.f32.mrf.mxu0
        %8153 = vdwg.mxu0
        %v8155 = vsel %vm3445, %v7829, 0
        %v8158 = vsel %vm3445, %v7834, 0
        %v8161 = vsel %vm3445, %v7839, 0
        %8163 = vmatprep.subr.mxu0 0.0
        %8164 = vmatpush1.msra.mxu0 0.0
        %8165 = vmatprep.subr.mxu0 0.0
        %8166 = vmatpush1.msra.mxu0 0.0
        %8167 = vmatprep.subr.mxu0 0.0
        %8168 = vmatpush1.msra.mxu0 0.0
        %8169 = vmatprep.subr.mxu0 0.0
        %8170 = vmatpush1.msra.mxu0 0.0
        %8171 = vmatprep.subr.mxu0 0.0
        %8172 = vmatpush1.msra.mxu0 0.0
        %8173 = vmatprep.subr.mxu0 0.0
        %8174 = vmatpush1.msra.mxu0 0.0
        %8175 = vmatprep.subr.mxu0 %v7870
        %8176 = vmatpush1.msra.mxu0 %v7869
        %8177 = vmatprep.subr.mxu0 %v7867
        %8178 = vmatpush1.msra.mxu0 %v7866
        %8179 = vmatprep.subr.mxu0 %v7864
        %8180 = vmatpush1.msra.mxu0 %v7863
        %8181 = vmatprep.subr.mxu0 %v7861
        %8182 = vmatpush1.msra.mxu0 %v7860
        %8183 = vmatprep.subr.mxu0 %v7858
        %8184 = vmatpush1.msra.mxu0 %v7857
        %8185 = vmatprep.subr.mxu0 %v7855
        %8186 = vmatpush1.msra.mxu0 %v7854
        %8187 = vmatprep.subr.mxu0 %v7852
        %8188 = vmatpush1.msra.mxu0 %v7851
        %8189 = vmatprep.subr.mxu0 %v7849
        %8190 = vmatpush1.msra.mxu0 %v7848
        %8191 = vmatprep.subr.mxu0 %v7846
        %8192 = vmatpush1.msra.mxu0 %v7845
        %8193 = vmatprep.subr.mxu0 %v7843
        %8194 = vmatpush1.msra.mxu0 %v7842
        %8195 = vmatprep.subr.mxu0 0.0
        %8196 = vmatpush2.msra.mxu0 0.0
        %8197 = vmatprep.subr.mxu0 0.0
        %8198 = vmatpush2.msra.mxu0 0.0
        %8199 = vmatprep.subr.mxu0 0.0
        %8200 = vmatpush2.msra.mxu0 0.0
        %8201 = vmatprep.subr.mxu0 0.0
        %8202 = vmatpush2.msra.mxu0 0.0
        %8203 = vmatprep.subr.mxu0 0.0
        %8204 = vmatpush2.msra.mxu0 0.0
        %8205 = vmatprep.subr.mxu0 0.0
        %8206 = vmatpush2.msra.mxu0 0.0
        %8207 = vmatprep.subr.mxu0 0.0
        %8208 = vmatpush2.msra.mxu0 0.0
        %8209 = vmatprep.subr.mxu0 0.0
        %8210 = vmatpush2.msra.mxu0 0.0
        %8211 = vmatprep.subr.mxu0 0.0
        %8212 = vmatpush2.msra.mxu0 0.0
        %8213 = vmatprep.subr.mxu0 0.0
        %8214 = vmatpush2.msra.mxu0 0.0
        %8215 = vmatprep.subr.mxu0 0.0
        %8216 = vmatpush2.msra.mxu0 0.0
        %8217 = vmatprep.subr.mxu0 0.0
        %8218 = vmatpush2.msra.mxu0 0.0
        %8219 = vmatprep.subr.mxu0 0.0
        %8220 = vmatpush2.msra.mxu0 0.0
        %8221 = vmatprep.subr.mxu0 0.0
        %8222 = vmatpush2.msra.mxu0 0.0
        %8223 = vmatprep.subr.mxu0 0.0
        %8224 = vmatpush2.msra.mxu0 0.0
        %8225 = vmatprep.subr.mxu0 0.0
        %8226 = vmatpush2.msra.mxu0 0.0
        %8227 = vmatprep.mubr.f32.mxu0 0.0
        %8228 = vmatmul.mubr.f32.gmra.mxu0 %v8155
        %v8229 = vpop.f32.mrf.mxu0
        %v8230 = vadd.f32 %v8058, %v8229
        %v8231 = vpop.f32.mrf.mxu0
        %v8232 = vadd.f32 %v8060, %v8231
        %8233 = vmatprep.mubr.f32.mxu0 0.0
        %8234 = vmatmul.mubr.f32.gmra.mxu0 %v8158
        %v8235 = vpop.f32.mrf.mxu0
        %v8236 = vadd.f32 %v8064, %v8235
        %v8237 = vpop.f32.mrf.mxu0
        %v8238 = vadd.f32 %v8066, %v8237
        %8239 = vmatprep.mubr.f32.mxu0 0.0
        %8240 = vmatmul.mubr.f32.gmra.mxu0 %v8161
        %v8241 = vpop.f32.mrf.mxu0
        %v8242 = vadd.f32 %v8070, %v8241
        %v8243 = vpop.f32.mrf.mxu0
        %v8244 = vadd.f32 %v8072, %v8243
        %8245 = vdwg.mxu0
        %8246 = vmatprep.subr.mxu0 0.0
        %8247 = vmatpush1.msra.mxu0 0.0
        %8248 = vmatprep.subr.mxu0 0.0
        %8249 = vmatpush1.msra.mxu0 0.0
        %8250 = vmatprep.subr.mxu0 0.0
        %8251 = vmatpush1.msra.mxu0 0.0
        %8252 = vmatprep.subr.mxu0 0.0
        %8253 = vmatpush1.msra.mxu0 0.0
        %8254 = vmatprep.subr.mxu0 0.0
        %8255 = vmatpush1.msra.mxu0 0.0
        %8256 = vmatprep.subr.mxu0 0.0
        %8257 = vmatpush1.msra.mxu0 0.0
        %8258 = vmatprep.subr.mxu0 0.0
        %8259 = vmatpush1.msra.mxu0 %v7871
        %8260 = vmatprep.subr.mxu0 0.0
        %8261 = vmatpush1.msra.mxu0 %v7868
        %8262 = vmatprep.subr.mxu0 0.0
        %8263 = vmatpush1.msra.mxu0 %v7865
        %8264 = vmatprep.subr.mxu0 0.0
        %8265 = vmatpush1.msra.mxu0 %v7862
        %8266 = vmatprep.subr.mxu0 0.0
        %8267 = vmatpush1.msra.mxu0 %v7859
        %8268 = vmatprep.subr.mxu0 0.0
        %8269 = vmatpush1.msra.mxu0 %v7856
        %8270 = vmatprep.subr.mxu0 0.0
        %8271 = vmatpush1.msra.mxu0 %v7853
        %8272 = vmatprep.subr.mxu0 0.0
        %8273 = vmatpush1.msra.mxu0 %v7850
        %8274 = vmatprep.subr.mxu0 0.0
        %8275 = vmatpush1.msra.mxu0 %v7847
        %8276 = vmatprep.subr.mxu0 0.0
        %8277 = vmatpush1.msra.mxu0 %v7844
        %8278 = vmatprep.subr.mxu0 0.0
        %8279 = vmatpush2.msra.mxu0 0.0
        %8280 = vmatprep.subr.mxu0 0.0
        %8281 = vmatpush2.msra.mxu0 0.0
        %8282 = vmatprep.subr.mxu0 0.0
        %8283 = vmatpush2.msra.mxu0 0.0
        %8284 = vmatprep.subr.mxu0 0.0
        %8285 = vmatpush2.msra.mxu0 0.0
        %8286 = vmatprep.subr.mxu0 0.0
        %8287 = vmatpush2.msra.mxu0 0.0
        %8288 = vmatprep.subr.mxu0 0.0
        %8289 = vmatpush2.msra.mxu0 0.0
        %8290 = vmatprep.subr.mxu0 0.0
        %8291 = vmatpush2.msra.mxu0 0.0
        %8292 = vmatprep.subr.mxu0 0.0
        %8293 = vmatpush2.msra.mxu0 0.0
        %8294 = vmatprep.subr.mxu0 0.0
        %8295 = vmatpush2.msra.mxu0 0.0
        %8296 = vmatprep.subr.mxu0 0.0
        %8297 = vmatpush2.msra.mxu0 0.0
        %8298 = vmatprep.subr.mxu0 0.0
        %8299 = vmatpush2.msra.mxu0 0.0
        %8300 = vmatprep.subr.mxu0 0.0
        %8301 = vmatpush2.msra.mxu0 0.0
        %8302 = vmatprep.subr.mxu0 0.0
        %8303 = vmatpush2.msra.mxu0 0.0
        %8304 = vmatprep.subr.mxu0 0.0
        %8305 = vmatpush2.msra.mxu0 0.0
        %8306 = vmatprep.subr.mxu0 0.0
        %8307 = vmatpush2.msra.mxu0 0.0
        %8308 = vmatprep.subr.mxu0 0.0
        %8309 = vmatpush2.msra.mxu0 0.0
        %8310 = vmatprep.mubr.f32.mxu0 0.0
        %8311 = vmatmul.mubr.f32.gmra.mxu0 %v8155
        %v8312 = vpop.f32.mrf.mxu0
        %v8313 = vadd.f32 %v8141, %v8312
        %v8314 = vpop.f32.mrf.mxu0
        %8315 = vmatprep.mubr.f32.mxu0 0.0
        %8316 = vmatmul.mubr.f32.gmra.mxu0 %v8158
        %v8317 = vpop.f32.mrf.mxu0
        %v8318 = vadd.f32 %v8146, %v8317
        %v8319 = vpop.f32.mrf.mxu0
        %8320 = vmatprep.mubr.f32.mxu0 0.0
        %8321 = vmatmul.mubr.f32.gmra.mxu0 %v8161
        %v8322 = vpop.f32.mrf.mxu0
        %v8323 = vadd.f32 %v8151, %v8322
        %v8324 = vpop.f32.mrf.mxu0
        %8325 = vdwg.mxu0
        %8326 = vmatprep.subr.mxu0 0.0
        %8327 = vmatpush1.msra.mxu0 0.0
        %8328 = vmatprep.subr.mxu0 0.0
        %8329 = vmatpush1.msra.mxu0 0.0
        %8330 = vmatprep.subr.mxu0 0.0
        %8331 = vmatpush1.msra.mxu0 0.0
        %8332 = vmatprep.subr.mxu0 0.0
        %8333 = vmatpush1.msra.mxu0 0.0
        %8334 = vmatprep.subr.mxu0 0.0
        %8335 = vmatpush1.msra.mxu0 0.0
        %8336 = vmatprep.subr.mxu0 0.0
        %8337 = vmatpush1.msra.mxu0 0.0
        %8338 = vmatprep.subr.mxu0 0.0
        %8339 = vmatpush1.msra.mxu0 0.0
        %8340 = vmatprep.subr.mxu0 0.0
        %8341 = vmatpush1.msra.mxu0 0.0
        %8342 = vmatprep.subr.mxu0 0.0
        %8343 = vmatpush1.msra.mxu0 0.0
        %8344 = vmatprep.subr.mxu0 0.0
        %8345 = vmatpush1.msra.mxu0 0.0
        %8346 = vmatprep.subr.mxu0 0.0
        %8347 = vmatpush1.msra.mxu0 0.0
        %8348 = vmatprep.subr.mxu0 0.0
        %8349 = vmatpush1.msra.mxu0 0.0
        %8350 = vmatprep.subr.mxu0 0.0
        %8351 = vmatpush1.msra.mxu0 0.0
        %8352 = vmatprep.subr.mxu0 0.0
        %8353 = vmatpush1.msra.mxu0 0.0
        %8354 = vmatprep.subr.mxu0 0.0
        %8355 = vmatpush1.msra.mxu0 %v7760
        %8356 = vmatprep.subr.mxu0 0.0
        %8357 = vmatpush1.msra.mxu0 %v7757
        %8358 = vmatprep.subr.mxu0 0.0
        %8359 = vmatpush2.msra.mxu0 0.0
        %8360 = vmatprep.subr.mxu0 0.0
        %8361 = vmatpush2.msra.mxu0 0.0
        %8362 = vmatprep.subr.mxu0 0.0
        %8363 = vmatpush2.msra.mxu0 0.0
        %8364 = vmatprep.subr.mxu0 0.0
        %8365 = vmatpush2.msra.mxu0 0.0
        %8366 = vmatprep.subr.mxu0 0.0
        %8367 = vmatpush2.msra.mxu0 0.0
        %8368 = vmatprep.subr.mxu0 0.0
        %8369 = vmatpush2.msra.mxu0 0.0
        %8370 = vmatprep.subr.mxu0 0.0
        %8371 = vmatpush2.msra.mxu0 0.0
        %8372 = vmatprep.subr.mxu0 0.0
        %8373 = vmatpush2.msra.mxu0 0.0
        %8374 = vmatprep.subr.mxu0 0.0
        %8375 = vmatpush2.msra.mxu0 0.0
        %8376 = vmatprep.subr.mxu0 0.0
        %8377 = vmatpush2.msra.mxu0 0.0
        %8378 = vmatprep.subr.mxu0 0.0
        %8379 = vmatpush2.msra.mxu0 0.0
        %8380 = vmatprep.subr.mxu0 0.0
        %8381 = vmatpush2.msra.mxu0 0.0
        %8382 = vmatprep.subr.mxu0 0.0
        %8383 = vmatpush2.msra.mxu0 0.0
        %8384 = vmatprep.subr.mxu0 0.0
        %8385 = vmatpush2.msra.mxu0 0.0
        %8386 = vmatprep.subr.mxu0 0.0
        %8387 = vmatpush2.msra.mxu0 0.0
        %8388 = vmatprep.subr.mxu0 0.0
        %8389 = vmatpush2.msra.mxu0 0.0
        %8390 = vmatprep.mubr.f32.mxu0 0.0
        %8391 = vmatmul.mubr.f32.gmra.mxu0 %v3790
        %v8392 = vpop.f32.mrf.mxu0
        %v8393 = vadd.f32 0.0, %v8392
        %v8394 = vpop.f32.mrf.mxu0
        %8395 = vmatprep.mubr.f32.mxu0 0.0
        %8396 = vmatmul.mubr.f32.gmra.mxu0 %v3792
        %v8397 = vpop.f32.mrf.mxu0
        %v8398 = vadd.f32 0.0, %v8397
        %v8399 = vpop.f32.mrf.mxu0
        %8400 = vmatprep.mubr.f32.mxu0 0.0
        %8401 = vmatmul.mubr.f32.gmra.mxu0 %v3795
        %v8402 = vpop.f32.mrf.mxu0
        %v8403 = vadd.f32 0.0, %v8402
        %v8404 = vpop.f32.mrf.mxu0
        %8405 = vdwg.mxu0
        %v8406 = vld [vmem:[%s3877] sm:$0xff]
        %v8407 = vld [vmem:[%s3877 + $0x8] sm:$0xff]
        %v8408 = vld [vmem:[%s3877 + $0x10] sm:$0xff]
        %v8409 = vld [vmem:[%s3877 + $0x18] sm:$0xff]
        %v8410 = vld [vmem:[%s3877 + $0x20] sm:$0xff]
        %v8411 = vld [vmem:[%s3877 + $0x28] sm:$0xff]
        %v8412 = vld [vmem:[%s3877 + $0x30] sm:$0xff]
        %v8413 = vld [vmem:[%s3877 + $0x38] sm:$0xff]
        %v8414 = vld [vmem:[%s3877 + $0x40] sm:$0xff]
        %v8415 = vld [vmem:[%s3877 + $0x48] sm:$0xff]
        %v8416 = vld [vmem:[%s3877 + $0x50] sm:$0xff]
        %v8417 = vld [vmem:[%s3877 + $0x58] sm:$0xff]
        %v8418 = vld [vmem:[%s3877 + $0x60] sm:$0xff]
        %v8419 = vld [vmem:[%s3877 + $0x68] sm:$0xff]
        %v8420 = vld [vmem:[%s3877 + $0x70] sm:$0xff]
        %v8421 = vld [vmem:[%s3877 + $0x78] sm:$0xff]
        %v8422 = vld [vmem:[%s3877 + $0x80] sm:$0xff]
        %v8423 = vld [vmem:[%s3877 + $0x88] sm:$0xff]
        %v8424 = vld [vmem:[%s3877 + $0x90] sm:$0xff]
        %v8425 = vld [vmem:[%s3877 + $0x98] sm:$0xff]
        %v8426 = vld [vmem:[%s3877 + $0xa0] sm:$0xff]
        %v8427 = vld [vmem:[%s3877 + $0xa8] sm:$0xff]
        %v8428 = vld [vmem:[%s3877 + $0xb0] sm:$0xff]
        %v8429 = vld [vmem:[%s3877 + $0xb8] sm:$0xff]
        %v8430 = vld [vmem:[%s3877 + $0xc0] sm:$0xff]
        %v8431 = vld [vmem:[%s3877 + $0xc8] sm:$0xff]
        %v8432 = vld [vmem:[%s3877 + $0xd0] sm:$0xff]
        %v8433 = vld [vmem:[%s3877 + $0xd8] sm:$0xff]
        %v8434 = vld [vmem:[%s3877 + $0xe0] sm:$0xff]
        %v8435 = vld [vmem:[%s3877 + $0xe8] sm:$0xff]
        %v8437 = vsel %vm3445, %v8393, 0
        %v8440 = vsel %vm3445, %v8398, 0
        %v8443 = vsel %vm3445, %v8403, 0
        %8445 = vmatprep.subr.mxu0 0.0
        %8446 = vmatpush1.msra.mxu0 0.0
        %8447 = vmatprep.subr.mxu0 0.0
        %8448 = vmatpush1.msra.mxu0 0.0
        %8449 = vmatprep.subr.mxu0 0.0
        %8450 = vmatpush1.msra.mxu0 0.0
        %8451 = vmatprep.subr.mxu0 0.0
        %8452 = vmatpush1.msra.mxu0 0.0
        %8453 = vmatprep.subr.mxu0 0.0
        %8454 = vmatpush1.msra.mxu0 0.0
        %8455 = vmatprep.subr.mxu0 0.0
        %8456 = vmatpush1.msra.mxu0 0.0
        %8457 = vmatprep.subr.mxu0 %v8434
        %8458 = vmatpush1.msra.mxu0 %v8433
        %8459 = vmatprep.subr.mxu0 %v8431
        %8460 = vmatpush1.msra.mxu0 %v8430
        %8461 = vmatprep.subr.mxu0 %v8428
        %8462 = vmatpush1.msra.mxu0 %v8427
        %8463 = vmatprep.subr.mxu0 %v8425
        %8464 = vmatpush1.msra.mxu0 %v8424
        %8465 = vmatprep.subr.mxu0 %v8422
        %8466 = vmatpush1.msra.mxu0 %v8421
        %8467 = vmatprep.subr.mxu0 %v8419
        %8468 = vmatpush1.msra.mxu0 %v8418
        %8469 = vmatprep.subr.mxu0 %v8416
        %8470 = vmatpush1.msra.mxu0 %v8415
        %8471 = vmatprep.subr.mxu0 %v8413
        %8472 = vmatpush1.msra.mxu0 %v8412
        %8473 = vmatprep.subr.mxu0 %v8410
        %8474 = vmatpush1.msra.mxu0 %v8409
        %8475 = vmatprep.subr.mxu0 %v8407
        %8476 = vmatpush1.msra.mxu0 %v8406
        %8477 = vmatprep.subr.mxu0 0.0
        %8478 = vmatpush2.msra.mxu0 0.0
        %8479 = vmatprep.subr.mxu0 0.0
        %8480 = vmatpush2.msra.mxu0 0.0
        %8481 = vmatprep.subr.mxu0 0.0
        %8482 = vmatpush2.msra.mxu0 0.0
        %8483 = vmatprep.subr.mxu0 0.0
        %8484 = vmatpush2.msra.mxu0 0.0
        %8485 = vmatprep.subr.mxu0 0.0
        %8486 = vmatpush2.msra.mxu0 0.0
        %8487 = vmatprep.subr.mxu0 0.0
        %8488 = vmatpush2.msra.mxu0 0.0
        %8489 = vmatprep.subr.mxu0 0.0
        %8490 = vmatpush2.msra.mxu0 0.0
        %8491 = vmatprep.subr.mxu0 0.0
        %8492 = vmatpush2.msra.mxu0 0.0
        %8493 = vmatprep.subr.mxu0 0.0
        %8494 = vmatpush2.msra.mxu0 0.0
        %8495 = vmatprep.subr.mxu0 0.0
        %8496 = vmatpush2.msra.mxu0 0.0
        %8497 = vmatprep.subr.mxu0 0.0
        %8498 = vmatpush2.msra.mxu0 0.0
        %8499 = vmatprep.subr.mxu0 0.0
        %8500 = vmatpush2.msra.mxu0 0.0
        %8501 = vmatprep.subr.mxu0 0.0
        %8502 = vmatpush2.msra.mxu0 0.0
        %8503 = vmatprep.subr.mxu0 0.0
        %8504 = vmatpush2.msra.mxu0 0.0
        %8505 = vmatprep.subr.mxu0 0.0
        %8506 = vmatpush2.msra.mxu0 0.0
        %8507 = vmatprep.subr.mxu0 0.0
        %8508 = vmatpush2.msra.mxu0 0.0
        %8509 = vmatprep.mubr.f32.mxu0 0.0
        %8510 = vmatmul.mubr.f32.gmra.mxu0 %v8437
        %v8511 = vpop.f32.mrf.mxu0
        %v8512 = vadd.f32 0.0, %v8511
        %v8513 = vpop.f32.mrf.mxu0
        %v8514 = vadd.f32 0.0, %v8513
        %8515 = vmatprep.mubr.f32.mxu0 0.0
        %8516 = vmatmul.mubr.f32.gmra.mxu0 %v8440
        %v8517 = vpop.f32.mrf.mxu0
        %v8518 = vadd.f32 0.0, %v8517
        %v8519 = vpop.f32.mrf.mxu0
        %v8520 = vadd.f32 0.0, %v8519
        %8521 = vmatprep.mubr.f32.mxu0 0.0
        %8522 = vmatmul.mubr.f32.gmra.mxu0 %v8443
        %v8523 = vpop.f32.mrf.mxu0
        %v8524 = vadd.f32 0.0, %v8523
        %v8525 = vpop.f32.mrf.mxu0
        %v8526 = vadd.f32 0.0, %v8525
        %8527 = vdwg.mxu0
        %8528 = vmatprep.subr.mxu0 0.0
        %8529 = vmatpush1.msra.mxu0 0.0
        %8530 = vmatprep.subr.mxu0 0.0
        %8531 = vmatpush1.msra.mxu0 0.0
        %8532 = vmatprep.subr.mxu0 0.0
        %8533 = vmatpush1.msra.mxu0 0.0
        %8534 = vmatprep.subr.mxu0 0.0
        %8535 = vmatpush1.msra.mxu0 0.0
        %8536 = vmatprep.subr.mxu0 0.0
        %8537 = vmatpush1.msra.mxu0 0.0
        %8538 = vmatprep.subr.mxu0 0.0
        %8539 = vmatpush1.msra.mxu0 0.0
        %8540 = vmatprep.subr.mxu0 0.0
        %8541 = vmatpush1.msra.mxu0 %v8435
        %8542 = vmatprep.subr.mxu0 0.0
        %8543 = vmatpush1.msra.mxu0 %v8432
        %8544 = vmatprep.subr.mxu0 0.0
        %8545 = vmatpush1.msra.mxu0 %v8429
        %8546 = vmatprep.subr.mxu0 0.0
        %8547 = vmatpush1.msra.mxu0 %v8426
        %8548 = vmatprep.subr.mxu0 0.0
        %8549 = vmatpush1.msra.mxu0 %v8423
        %8550 = vmatprep.subr.mxu0 0.0
        %8551 = vmatpush1.msra.mxu0 %v8420
        %8552 = vmatprep.subr.mxu0 0.0
        %8553 = vmatpush1.msra.mxu0 %v8417
        %8554 = vmatprep.subr.mxu0 0.0
        %8555 = vmatpush1.msra.mxu0 %v8414
        %8556 = vmatprep.subr.mxu0 0.0
        %8557 = vmatpush1.msra.mxu0 %v8411
        %8558 = vmatprep.subr.mxu0 0.0
        %8559 = vmatpush1.msra.mxu0 %v8408
        %8560 = vmatprep.subr.mxu0 0.0
        %8561 = vmatpush2.msra.mxu0 0.0
        %8562 = vmatprep.subr.mxu0 0.0
        %8563 = vmatpush2.msra.mxu0 0.0
        %8564 = vmatprep.subr.mxu0 0.0
        %8565 = vmatpush2.msra.mxu0 0.0
        %8566 = vmatprep.subr.mxu0 0.0
        %8567 = vmatpush2.msra.mxu0 0.0
        %8568 = vmatprep.subr.mxu0 0.0
        %8569 = vmatpush2.msra.mxu0 0.0
        %8570 = vmatprep.subr.mxu0 0.0
        %8571 = vmatpush2.msra.mxu0 0.0
        %8572 = vmatprep.subr.mxu0 0.0
        %8573 = vmatpush2.msra.mxu0 0.0
        %8574 = vmatprep.subr.mxu0 0.0
        %8575 = vmatpush2.msra.mxu0 0.0
        %8576 = vmatprep.subr.mxu0 0.0
        %8577 = vmatpush2.msra.mxu0 0.0
        %8578 = vmatprep.subr.mxu0 0.0
        %8579 = vmatpush2.msra.mxu0 0.0
        %8580 = vmatprep.subr.mxu0 0.0
        %8581 = vmatpush2.msra.mxu0 0.0
        %8582 = vmatprep.subr.mxu0 0.0
        %8583 = vmatpush2.msra.mxu0 0.0
        %8584 = vmatprep.subr.mxu0 0.0
        %8585 = vmatpush2.msra.mxu0 0.0
        %8586 = vmatprep.subr.mxu0 0.0
        %8587 = vmatpush2.msra.mxu0 0.0
        %8588 = vmatprep.subr.mxu0 0.0
        %8589 = vmatpush2.msra.mxu0 0.0
        %8590 = vmatprep.subr.mxu0 0.0
        %8591 = vmatpush2.msra.mxu0 0.0
        %8592 = vmatprep.mubr.f32.mxu0 0.0
        %8593 = vmatmul.mubr.f32.gmra.mxu0 %v8437
        %v8594 = vpop.f32.mrf.mxu0
        %v8595 = vadd.f32 0.0, %v8594
        %v8596 = vpop.f32.mrf.mxu0
        %8597 = vmatprep.mubr.f32.mxu0 0.0
        %8598 = vmatmul.mubr.f32.gmra.mxu0 %v8440
        %v8599 = vpop.f32.mrf.mxu0
        %v8600 = vadd.f32 0.0, %v8599
        %v8601 = vpop.f32.mrf.mxu0
        %8602 = vmatprep.mubr.f32.mxu0 0.0
        %8603 = vmatmul.mubr.f32.gmra.mxu0 %v8443
        %v8604 = vpop.f32.mrf.mxu0
        %v8605 = vadd.f32 0.0, %v8604
        %v8606 = vpop.f32.mrf.mxu0
        %8607 = vdwg.mxu0
        %v8608 = vadd.f32 %v8230, %v8512
        %v8609 = vadd.f32 %v8232, %v8514
        %v8610 = vadd.f32 %v8313, %v8595
        %v8611 = vadd.f32 %v8236, %v8518
        %v8612 = vadd.f32 %v8238, %v8520
        %v8613 = vadd.f32 %v8318, %v8600
        %v8614 = vadd.f32 %v8242, %v8524
        %v8615 = vadd.f32 %v8244, %v8526
        %v8616 = vadd.f32 %v8323, %v8605
        %8617 = vmatprep.subr.mxu0 0.0
        %8618 = vmatpush1.msra.mxu0 0.0
        %8619 = vmatprep.subr.mxu0 0.0
        %8620 = vmatpush1.msra.mxu0 0.0
        %8621 = vmatprep.subr.mxu0 0.0
        %8622 = vmatpush1.msra.mxu0 0.0
        %8623 = vmatprep.subr.mxu0 0.0
        %8624 = vmatpush1.msra.mxu0 0.0
        %8625 = vmatprep.subr.mxu0 0.0
        %8626 = vmatpush1.msra.mxu0 0.0
        %8627 = vmatprep.subr.mxu0 0.0
        %8628 = vmatpush1.msra.mxu0 0.0
        %8629 = vmatprep.subr.mxu0 0.0
        %8630 = vmatpush1.msra.mxu0 0.0
        %8631 = vmatprep.subr.mxu0 0.0
        %8632 = vmatpush1.msra.mxu0 0.0
        %8633 = vmatprep.subr.mxu0 0.0
        %8634 = vmatpush1.msra.mxu0 0.0
        %8635 = vmatprep.subr.mxu0 0.0
        %8636 = vmatpush1.msra.mxu0 0.0
        %8637 = vmatprep.subr.mxu0 0.0
        %8638 = vmatpush1.msra.mxu0 0.0
        %8639 = vmatprep.subr.mxu0 0.0
        %8640 = vmatpush1.msra.mxu0 0.0
        %8641 = vmatprep.subr.mxu0 0.0
        %8642 = vmatpush1.msra.mxu0 0.0
        %8643 = vmatprep.subr.mxu0 0.0
        %8644 = vmatpush1.msra.mxu0 0.0
        %8645 = vmatprep.subr.mxu0 0.0
        %8646 = vmatpush1.msra.mxu0 %v7760
        %8647 = vmatprep.subr.mxu0 0.0
        %8648 = vmatpush1.msra.mxu0 %v7757
        %8649 = vmatprep.subr.mxu0 0.0
        %8650 = vmatpush2.msra.mxu0 0.0
        %8651 = vmatprep.subr.mxu0 0.0
        %8652 = vmatpush2.msra.mxu0 0.0
        %8653 = vmatprep.subr.mxu0 0.0
        %8654 = vmatpush2.msra.mxu0 0.0
        %8655 = vmatprep.subr.mxu0 0.0
        %8656 = vmatpush2.msra.mxu0 0.0
        %8657 = vmatprep.subr.mxu0 0.0
        %8658 = vmatpush2.msra.mxu0 0.0
        %8659 = vmatprep.subr.mxu0 0.0
        %8660 = vmatpush2.msra.mxu0 0.0
        %8661 = vmatprep.subr.mxu0 0.0
        %8662 = vmatpush2.msra.mxu0 0.0
        %8663 = vmatprep.subr.mxu0 0.0
        %8664 = vmatpush2.msra.mxu0 0.0
        %8665 = vmatprep.subr.mxu0 0.0
        %8666 = vmatpush2.msra.mxu0 0.0
        %8667 = vmatprep.subr.mxu0 0.0
        %8668 = vmatpush2.msra.mxu0 0.0
        %8669 = vmatprep.subr.mxu0 0.0
        %8670 = vmatpush2.msra.mxu0 0.0
        %8671 = vmatprep.subr.mxu0 0.0
        %8672 = vmatpush2.msra.mxu0 0.0
        %8673 = vmatprep.subr.mxu0 0.0
        %8674 = vmatpush2.msra.mxu0 0.0
        %8675 = vmatprep.subr.mxu0 0.0
        %8676 = vmatpush2.msra.mxu0 0.0
        %8677 = vmatprep.subr.mxu0 0.0
        %8678 = vmatpush2.msra.mxu0 0.0
        %8679 = vmatprep.subr.mxu0 0.0
        %8680 = vmatpush2.msra.mxu0 0.0
        %8681 = vmatprep.mubr.f32.mxu0 0.0
        %8682 = vmatmul.mubr.f32.gmra.mxu0 %v4089
        %v8683 = vpop.f32.mrf.mxu0
        %v8684 = vadd.f32 0.0, %v8683
        %v8685 = vpop.f32.mrf.mxu0
        %8686 = vmatprep.mubr.f32.mxu0 0.0
        %8687 = vmatmul.mubr.f32.gmra.mxu0 %v4091
        %v8688 = vpop.f32.mrf.mxu0
        %v8689 = vadd.f32 0.0, %v8688
        %v8690 = vpop.f32.mrf.mxu0
        %8691 = vmatprep.mubr.f32.mxu0 0.0
        %8692 = vmatmul.mubr.f32.gmra.mxu0 %v4094
        %v8693 = vpop.f32.mrf.mxu0
        %v8694 = vadd.f32 0.0, %v8693
        %v8695 = vpop.f32.mrf.mxu0
        %8696 = vdwg.mxu0
        %v8697 = vld [vmem:[%s4176] sm:$0xff]
        %v8698 = vld [vmem:[%s4176 + $0x8] sm:$0xff]
        %v8699 = vld [vmem:[%s4176 + $0x10] sm:$0xff]
        %v8700 = vld [vmem:[%s4176 + $0x18] sm:$0xff]
        %v8701 = vld [vmem:[%s4176 + $0x20] sm:$0xff]
        %v8702 = vld [vmem:[%s4176 + $0x28] sm:$0xff]
        %v8703 = vld [vmem:[%s4176 + $0x30] sm:$0xff]
        %v8704 = vld [vmem:[%s4176 + $0x38] sm:$0xff]
        %v8705 = vld [vmem:[%s4176 + $0x40] sm:$0xff]
        %v8706 = vld [vmem:[%s4176 + $0x48] sm:$0xff]
        %v8707 = vld [vmem:[%s4176 + $0x50] sm:$0xff]
        %v8708 = vld [vmem:[%s4176 + $0x58] sm:$0xff]
        %v8709 = vld [vmem:[%s4176 + $0x60] sm:$0xff]
        %v8710 = vld [vmem:[%s4176 + $0x68] sm:$0xff]
        %v8711 = vld [vmem:[%s4176 + $0x70] sm:$0xff]
        %v8712 = vld [vmem:[%s4176 + $0x78] sm:$0xff]
        %v8713 = vld [vmem:[%s4176 + $0x80] sm:$0xff]
        %v8714 = vld [vmem:[%s4176 + $0x88] sm:$0xff]
        %v8715 = vld [vmem:[%s4176 + $0x90] sm:$0xff]
        %v8716 = vld [vmem:[%s4176 + $0x98] sm:$0xff]
        %v8717 = vld [vmem:[%s4176 + $0xa0] sm:$0xff]
        %v8718 = vld [vmem:[%s4176 + $0xa8] sm:$0xff]
        %v8719 = vld [vmem:[%s4176 + $0xb0] sm:$0xff]
        %v8720 = vld [vmem:[%s4176 + $0xb8] sm:$0xff]
        %v8721 = vld [vmem:[%s4176 + $0xc0] sm:$0xff]
        %v8722 = vld [vmem:[%s4176 + $0xc8] sm:$0xff]
        %v8723 = vld [vmem:[%s4176 + $0xd0] sm:$0xff]
        %v8724 = vld [vmem:[%s4176 + $0xd8] sm:$0xff]
        %v8725 = vld [vmem:[%s4176 + $0xe0] sm:$0xff]
        %v8726 = vld [vmem:[%s4176 + $0xe8] sm:$0xff]
        %v8728 = vsel %vm3445, %v8684, 0
        %v8731 = vsel %vm3445, %v8689, 0
        %v8734 = vsel %vm3445, %v8694, 0
        %8736 = vmatprep.subr.mxu0 0.0
        %8737 = vmatpush1.msra.mxu0 0.0
        %8738 = vmatprep.subr.mxu0 0.0
        %8739 = vmatpush1.msra.mxu0 0.0
        %8740 = vmatprep.subr.mxu0 0.0
        %8741 = vmatpush1.msra.mxu0 0.0
        %8742 = vmatprep.subr.mxu0 0.0
        %8743 = vmatpush1.msra.mxu0 0.0
        %8744 = vmatprep.subr.mxu0 0.0
        %8745 = vmatpush1.msra.mxu0 0.0
        %8746 = vmatprep.subr.mxu0 0.0
        %8747 = vmatpush1.msra.mxu0 0.0
        %8748 = vmatprep.subr.mxu0 %v8725
        %8749 = vmatpush1.msra.mxu0 %v8724
        %8750 = vmatprep.subr.mxu0 %v8722
        %8751 = vmatpush1.msra.mxu0 %v8721
        %8752 = vmatprep.subr.mxu0 %v8719
        %8753 = vmatpush1.msra.mxu0 %v8718
        %8754 = vmatprep.subr.mxu0 %v8716
        %8755 = vmatpush1.msra.mxu0 %v8715
        %8756 = vmatprep.subr.mxu0 %v8713
        %8757 = vmatpush1.msra.mxu0 %v8712
        %8758 = vmatprep.subr.mxu0 %v8710
        %8759 = vmatpush1.msra.mxu0 %v8709
        %8760 = vmatprep.subr.mxu0 %v8707
        %8761 = vmatpush1.msra.mxu0 %v8706
        %8762 = vmatprep.subr.mxu0 %v8704
        %8763 = vmatpush1.msra.mxu0 %v8703
        %8764 = vmatprep.subr.mxu0 %v8701
        %8765 = vmatpush1.msra.mxu0 %v8700
        %8766 = vmatprep.subr.mxu0 %v8698
        %8767 = vmatpush1.msra.mxu0 %v8697
        %8768 = vmatprep.subr.mxu0 0.0
        %8769 = vmatpush2.msra.mxu0 0.0
        %8770 = vmatprep.subr.mxu0 0.0
        %8771 = vmatpush2.msra.mxu0 0.0
        %8772 = vmatprep.subr.mxu0 0.0
        %8773 = vmatpush2.msra.mxu0 0.0
        %8774 = vmatprep.subr.mxu0 0.0
        %8775 = vmatpush2.msra.mxu0 0.0
        %8776 = vmatprep.subr.mxu0 0.0
        %8777 = vmatpush2.msra.mxu0 0.0
        %8778 = vmatprep.subr.mxu0 0.0
        %8779 = vmatpush2.msra.mxu0 0.0
        %8780 = vmatprep.subr.mxu0 0.0
        %8781 = vmatpush2.msra.mxu0 0.0
        %8782 = vmatprep.subr.mxu0 0.0
        %8783 = vmatpush2.msra.mxu0 0.0
        %8784 = vmatprep.subr.mxu0 0.0
        %8785 = vmatpush2.msra.mxu0 0.0
        %8786 = vmatprep.subr.mxu0 0.0
        %8787 = vmatpush2.msra.mxu0 0.0
        %8788 = vmatprep.subr.mxu0 0.0
        %8789 = vmatpush2.msra.mxu0 0.0
        %8790 = vmatprep.subr.mxu0 0.0
        %8791 = vmatpush2.msra.mxu0 0.0
        %8792 = vmatprep.subr.mxu0 0.0
        %8793 = vmatpush2.msra.mxu0 0.0
        %8794 = vmatprep.subr.mxu0 0.0
        %8795 = vmatpush2.msra.mxu0 0.0
        %8796 = vmatprep.subr.mxu0 0.0
        %8797 = vmatpush2.msra.mxu0 0.0
        %8798 = vmatprep.subr.mxu0 0.0
        %8799 = vmatpush2.msra.mxu0 0.0
        %8800 = vmatprep.mubr.f32.mxu0 0.0
        %8801 = vmatmul.mubr.f32.gmra.mxu0 %v8728
        %v8802 = vpop.f32.mrf.mxu0
        %v8803 = vadd.f32 0.0, %v8802
        %v8804 = vpop.f32.mrf.mxu0
        %v8805 = vadd.f32 0.0, %v8804
        %8806 = vmatprep.mubr.f32.mxu0 0.0
        %8807 = vmatmul.mubr.f32.gmra.mxu0 %v8731
        %v8808 = vpop.f32.mrf.mxu0
        %v8809 = vadd.f32 0.0, %v8808
        %v8810 = vpop.f32.mrf.mxu0
        %v8811 = vadd.f32 0.0, %v8810
        %8812 = vmatprep.mubr.f32.mxu0 0.0
        %8813 = vmatmul.mubr.f32.gmra.mxu0 %v8734
        %v8814 = vpop.f32.mrf.mxu0
        %v8815 = vadd.f32 0.0, %v8814
        %v8816 = vpop.f32.mrf.mxu0
        %v8817 = vadd.f32 0.0, %v8816
        %8818 = vdwg.mxu0
        %8819 = vmatprep.subr.mxu0 0.0
        %8820 = vmatpush1.msra.mxu0 0.0
        %8821 = vmatprep.subr.mxu0 0.0
        %8822 = vmatpush1.msra.mxu0 0.0
        %8823 = vmatprep.subr.mxu0 0.0
        %8824 = vmatpush1.msra.mxu0 0.0
        %8825 = vmatprep.subr.mxu0 0.0
        %8826 = vmatpush1.msra.mxu0 0.0
        %8827 = vmatprep.subr.mxu0 0.0
        %8828 = vmatpush1.msra.mxu0 0.0
        %8829 = vmatprep.subr.mxu0 0.0
        %8830 = vmatpush1.msra.mxu0 0.0
        %8831 = vmatprep.subr.mxu0 0.0
        %8832 = vmatpush1.msra.mxu0 %v8726
        %8833 = vmatprep.subr.mxu0 0.0
        %8834 = vmatpush1.msra.mxu0 %v8723
        %8835 = vmatprep.subr.mxu0 0.0
        %8836 = vmatpush1.msra.mxu0 %v8720
        %8837 = vmatprep.subr.mxu0 0.0
        %8838 = vmatpush1.msra.mxu0 %v8717
        %8839 = vmatprep.subr.mxu0 0.0
        %8840 = vmatpush1.msra.mxu0 %v8714
        %8841 = vmatprep.subr.mxu0 0.0
        %8842 = vmatpush1.msra.mxu0 %v8711
        %8843 = vmatprep.subr.mxu0 0.0
        %8844 = vmatpush1.msra.mxu0 %v8708
        %8845 = vmatprep.subr.mxu0 0.0
        %8846 = vmatpush1.msra.mxu0 %v8705
        %8847 = vmatprep.subr.mxu0 0.0
        %8848 = vmatpush1.msra.mxu0 %v8702
        %8849 = vmatprep.subr.mxu0 0.0
        %8850 = vmatpush1.msra.mxu0 %v8699
        %8851 = vmatprep.subr.mxu0 0.0
        %8852 = vmatpush2.msra.mxu0 0.0
        %8853 = vmatprep.subr.mxu0 0.0
        %8854 = vmatpush2.msra.mxu0 0.0
        %8855 = vmatprep.subr.mxu0 0.0
        %8856 = vmatpush2.msra.mxu0 0.0
        %8857 = vmatprep.subr.mxu0 0.0
        %8858 = vmatpush2.msra.mxu0 0.0
        %8859 = vmatprep.subr.mxu0 0.0
        %8860 = vmatpush2.msra.mxu0 0.0
        %8861 = vmatprep.subr.mxu0 0.0
        %8862 = vmatpush2.msra.mxu0 0.0
        %8863 = vmatprep.subr.mxu0 0.0
        %8864 = vmatpush2.msra.mxu0 0.0
        %8865 = vmatprep.subr.mxu0 0.0
        %8866 = vmatpush2.msra.mxu0 0.0
        %8867 = vmatprep.subr.mxu0 0.0
        %8868 = vmatpush2.msra.mxu0 0.0
        %8869 = vmatprep.subr.mxu0 0.0
        %8870 = vmatpush2.msra.mxu0 0.0
        %8871 = vmatprep.subr.mxu0 0.0
        %8872 = vmatpush2.msra.mxu0 0.0
        %8873 = vmatprep.subr.mxu0 0.0
        %8874 = vmatpush2.msra.mxu0 0.0
        %8875 = vmatprep.subr.mxu0 0.0
        %8876 = vmatpush2.msra.mxu0 0.0
        %8877 = vmatprep.subr.mxu0 0.0
        %8878 = vmatpush2.msra.mxu0 0.0
        %8879 = vmatprep.subr.mxu0 0.0
        %8880 = vmatpush2.msra.mxu0 0.0
        %8881 = vmatprep.subr.mxu0 0.0
        %8882 = vmatpush2.msra.mxu0 0.0
        %8883 = vmatprep.mubr.f32.mxu0 0.0
        %8884 = vmatmul.mubr.f32.gmra.mxu0 %v8728
        %v8885 = vpop.f32.mrf.mxu0
        %v8886 = vadd.f32 0.0, %v8885
        %v8887 = vpop.f32.mrf.mxu0
        %8888 = vmatprep.mubr.f32.mxu0 0.0
        %8889 = vmatmul.mubr.f32.gmra.mxu0 %v8731
        %v8890 = vpop.f32.mrf.mxu0
        %v8891 = vadd.f32 0.0, %v8890
        %v8892 = vpop.f32.mrf.mxu0
        %8893 = vmatprep.mubr.f32.mxu0 0.0
        %8894 = vmatmul.mubr.f32.gmra.mxu0 %v8734
        %v8895 = vpop.f32.mrf.mxu0
        %v8896 = vadd.f32 0.0, %v8895
        %v8897 = vpop.f32.mrf.mxu0
        %8898 = vdwg.mxu0
        %v8899 = vadd.f32 %v8608, %v8803
        %v8900 = vadd.f32 %v8609, %v8805
        %v8901 = vadd.f32 %v8610, %v8886
        %v8902 = vadd.f32 %v8611, %v8809
        %v8903 = vadd.f32 %v8612, %v8811
        %v8904 = vadd.f32 %v8613, %v8891
        %v8905 = vadd.f32 %v8614, %v8815
        %v8906 = vadd.f32 %v8615, %v8817
        %v8907 = vadd.f32 %v8616, %v8896
        %8908 = vmatprep.subr.mxu0 0.0
        %8909 = vmatpush1.msra.mxu0 0.0
        %8910 = vmatprep.subr.mxu0 0.0
        %8911 = vmatpush1.msra.mxu0 0.0
        %8912 = vmatprep.subr.mxu0 0.0
        %8913 = vmatpush1.msra.mxu0 0.0
        %8914 = vmatprep.subr.mxu0 0.0
        %8915 = vmatpush1.msra.mxu0 0.0
        %8916 = vmatprep.subr.mxu0 0.0
        %8917 = vmatpush1.msra.mxu0 0.0
        %8918 = vmatprep.subr.mxu0 0.0
        %8919 = vmatpush1.msra.mxu0 0.0
        %8920 = vmatprep.subr.mxu0 0.0
        %8921 = vmatpush1.msra.mxu0 0.0
        %8922 = vmatprep.subr.mxu0 0.0
        %8923 = vmatpush1.msra.mxu0 0.0
        %8924 = vmatprep.subr.mxu0 0.0
        %8925 = vmatpush1.msra.mxu0 0.0
        %8926 = vmatprep.subr.mxu0 0.0
        %8927 = vmatpush1.msra.mxu0 0.0
        %8928 = vmatprep.subr.mxu0 0.0
        %8929 = vmatpush1.msra.mxu0 0.0
        %8930 = vmatprep.subr.mxu0 0.0
        %8931 = vmatpush1.msra.mxu0 0.0
        %8932 = vmatprep.subr.mxu0 0.0
        %8933 = vmatpush1.msra.mxu0 0.0
        %8934 = vmatprep.subr.mxu0 0.0
        %8935 = vmatpush1.msra.mxu0 0.0
        %8936 = vmatprep.subr.mxu0 0.0
        %8937 = vmatpush1.msra.mxu0 %v7760
        %8938 = vmatprep.subr.mxu0 0.0
        %8939 = vmatpush1.msra.mxu0 %v7757
        %8940 = vmatprep.subr.mxu0 0.0
        %8941 = vmatpush2.msra.mxu0 0.0
        %8942 = vmatprep.subr.mxu0 0.0
        %8943 = vmatpush2.msra.mxu0 0.0
        %8944 = vmatprep.subr.mxu0 0.0
        %8945 = vmatpush2.msra.mxu0 0.0
        %8946 = vmatprep.subr.mxu0 0.0
        %8947 = vmatpush2.msra.mxu0 0.0
        %8948 = vmatprep.subr.mxu0 0.0
        %8949 = vmatpush2.msra.mxu0 0.0
        %8950 = vmatprep.subr.mxu0 0.0
        %8951 = vmatpush2.msra.mxu0 0.0
        %8952 = vmatprep.subr.mxu0 0.0
        %8953 = vmatpush2.msra.mxu0 0.0
        %8954 = vmatprep.subr.mxu0 0.0
        %8955 = vmatpush2.msra.mxu0 0.0
        %8956 = vmatprep.subr.mxu0 0.0
        %8957 = vmatpush2.msra.mxu0 0.0
        %8958 = vmatprep.subr.mxu0 0.0
        %8959 = vmatpush2.msra.mxu0 0.0
        %8960 = vmatprep.subr.mxu0 0.0
        %8961 = vmatpush2.msra.mxu0 0.0
        %8962 = vmatprep.subr.mxu0 0.0
        %8963 = vmatpush2.msra.mxu0 0.0
        %8964 = vmatprep.subr.mxu0 0.0
        %8965 = vmatpush2.msra.mxu0 0.0
        %8966 = vmatprep.subr.mxu0 0.0
        %8967 = vmatpush2.msra.mxu0 0.0
        %8968 = vmatprep.subr.mxu0 0.0
        %8969 = vmatpush2.msra.mxu0 0.0
        %8970 = vmatprep.subr.mxu0 0.0
        %8971 = vmatpush2.msra.mxu0 0.0
        %8972 = vmatprep.mubr.f32.mxu0 0.0
        %8973 = vmatmul.mubr.f32.gmra.mxu0 %v4389
        %v8974 = vpop.f32.mrf.mxu0
        %v8975 = vadd.f32 0.0, %v8974
        %v8976 = vpop.f32.mrf.mxu0
        %8977 = vmatprep.mubr.f32.mxu0 0.0
        %8978 = vmatmul.mubr.f32.gmra.mxu0 %v4392
        %v8979 = vpop.f32.mrf.mxu0
        %v8980 = vadd.f32 0.0, %v8979
        %v8981 = vpop.f32.mrf.mxu0
        %8982 = vmatprep.mubr.f32.mxu0 0.0
        %8983 = vmatmul.mubr.f32.gmra.mxu0 %v4395
        %v8984 = vpop.f32.mrf.mxu0
        %v8985 = vadd.f32 0.0, %v8984
        %v8986 = vpop.f32.mrf.mxu0
        %8987 = vdwg.mxu0
        %v8988 = vld [vmem:[%s4477] sm:$0xff]
        %v8989 = vld [vmem:[%s4477 + $0x8] sm:$0xff]
        %v8990 = vld [vmem:[%s4477 + $0x10] sm:$0xff]
        %v8991 = vld [vmem:[%s4477 + $0x18] sm:$0xff]
        %v8992 = vld [vmem:[%s4477 + $0x20] sm:$0xff]
        %v8993 = vld [vmem:[%s4477 + $0x28] sm:$0xff]
        %v8994 = vld [vmem:[%s4477 + $0x30] sm:$0xff]
        %v8995 = vld [vmem:[%s4477 + $0x38] sm:$0xff]
        %v8996 = vld [vmem:[%s4477 + $0x40] sm:$0xff]
        %v8997 = vld [vmem:[%s4477 + $0x48] sm:$0xff]
        %v8998 = vld [vmem:[%s4477 + $0x50] sm:$0xff]
        %v8999 = vld [vmem:[%s4477 + $0x58] sm:$0xff]
        %v9000 = vld [vmem:[%s4477 + $0x60] sm:$0xff]
        %v9001 = vld [vmem:[%s4477 + $0x68] sm:$0xff]
        %v9002 = vld [vmem:[%s4477 + $0x70] sm:$0xff]
        %v9003 = vld [vmem:[%s4477 + $0x78] sm:$0xff]
        %v9004 = vld [vmem:[%s4477 + $0x80] sm:$0xff]
        %v9005 = vld [vmem:[%s4477 + $0x88] sm:$0xff]
        %v9006 = vld [vmem:[%s4477 + $0x90] sm:$0xff]
        %v9007 = vld [vmem:[%s4477 + $0x98] sm:$0xff]
        %v9008 = vld [vmem:[%s4477 + $0xa0] sm:$0xff]
        %v9009 = vld [vmem:[%s4477 + $0xa8] sm:$0xff]
        %v9010 = vld [vmem:[%s4477 + $0xb0] sm:$0xff]
        %v9011 = vld [vmem:[%s4477 + $0xb8] sm:$0xff]
        %v9012 = vld [vmem:[%s4477 + $0xc0] sm:$0xff]
        %v9013 = vld [vmem:[%s4477 + $0xc8] sm:$0xff]
        %v9014 = vld [vmem:[%s4477 + $0xd0] sm:$0xff]
        %v9015 = vld [vmem:[%s4477 + $0xd8] sm:$0xff]
        %v9016 = vld [vmem:[%s4477 + $0xe0] sm:$0xff]
        %v9017 = vld [vmem:[%s4477 + $0xe8] sm:$0xff]
        %v9019 = vsel %vm3445, %v8975, 0
        %v9022 = vsel %vm3445, %v8980, 0
        %v9025 = vsel %vm3445, %v8985, 0
        %9027 = vmatprep.subr.mxu0 0.0
        %9028 = vmatpush1.msra.mxu0 0.0
        %9029 = vmatprep.subr.mxu0 0.0
        %9030 = vmatpush1.msra.mxu0 0.0
        %9031 = vmatprep.subr.mxu0 0.0
        %9032 = vmatpush1.msra.mxu0 0.0
        %9033 = vmatprep.subr.mxu0 0.0
        %9034 = vmatpush1.msra.mxu0 0.0
        %9035 = vmatprep.subr.mxu0 0.0
        %9036 = vmatpush1.msra.mxu0 0.0
        %9037 = vmatprep.subr.mxu0 0.0
        %9038 = vmatpush1.msra.mxu0 0.0
        %9039 = vmatprep.subr.mxu0 %v9016
        %9040 = vmatpush1.msra.mxu0 %v9015
        %9041 = vmatprep.subr.mxu0 %v9013
        %9042 = vmatpush1.msra.mxu0 %v9012
        %9043 = vmatprep.subr.mxu0 %v9010
        %9044 = vmatpush1.msra.mxu0 %v9009
        %9045 = vmatprep.subr.mxu0 %v9007
        %9046 = vmatpush1.msra.mxu0 %v9006
        %9047 = vmatprep.subr.mxu0 %v9004
        %9048 = vmatpush1.msra.mxu0 %v9003
        %9049 = vmatprep.subr.mxu0 %v9001
        %9050 = vmatpush1.msra.mxu0 %v9000
        %9051 = vmatprep.subr.mxu0 %v8998
        %9052 = vmatpush1.msra.mxu0 %v8997
        %9053 = vmatprep.subr.mxu0 %v8995
        %9054 = vmatpush1.msra.mxu0 %v8994
        %9055 = vmatprep.subr.mxu0 %v8992
        %9056 = vmatpush1.msra.mxu0 %v8991
        %9057 = vmatprep.subr.mxu0 %v8989
        %9058 = vmatpush1.msra.mxu0 %v8988
        %9059 = vmatprep.subr.mxu0 0.0
        %9060 = vmatpush2.msra.mxu0 0.0
        %9061 = vmatprep.subr.mxu0 0.0
        %9062 = vmatpush2.msra.mxu0 0.0
        %9063 = vmatprep.subr.mxu0 0.0
        %9064 = vmatpush2.msra.mxu0 0.0
        %9065 = vmatprep.subr.mxu0 0.0
        %9066 = vmatpush2.msra.mxu0 0.0
        %9067 = vmatprep.subr.mxu0 0.0
        %9068 = vmatpush2.msra.mxu0 0.0
        %9069 = vmatprep.subr.mxu0 0.0
        %9070 = vmatpush2.msra.mxu0 0.0
        %9071 = vmatprep.subr.mxu0 0.0
        %9072 = vmatpush2.msra.mxu0 0.0
        %9073 = vmatprep.subr.mxu0 0.0
        %9074 = vmatpush2.msra.mxu0 0.0
        %9075 = vmatprep.subr.mxu0 0.0
        %9076 = vmatpush2.msra.mxu0 0.0
        %9077 = vmatprep.subr.mxu0 0.0
        %9078 = vmatpush2.msra.mxu0 0.0
        %9079 = vmatprep.subr.mxu0 0.0
        %9080 = vmatpush2.msra.mxu0 0.0
        %9081 = vmatprep.subr.mxu0 0.0
        %9082 = vmatpush2.msra.mxu0 0.0
        %9083 = vmatprep.subr.mxu0 0.0
        %9084 = vmatpush2.msra.mxu0 0.0
        %9085 = vmatprep.subr.mxu0 0.0
        %9086 = vmatpush2.msra.mxu0 0.0
        %9087 = vmatprep.subr.mxu0 0.0
        %9088 = vmatpush2.msra.mxu0 0.0
        %9089 = vmatprep.subr.mxu0 0.0
        %9090 = vmatpush2.msra.mxu0 0.0
        %9091 = vmatprep.mubr.f32.mxu0 0.0
        %9092 = vmatmul.mubr.f32.gmra.mxu0 %v9019
        %v9093 = vpop.f32.mrf.mxu0
        %v9094 = vadd.f32 0.0, %v9093
        %v9095 = vpop.f32.mrf.mxu0
        %v9096 = vadd.f32 0.0, %v9095
        %9097 = vmatprep.mubr.f32.mxu0 0.0
        %9098 = vmatmul.mubr.f32.gmra.mxu0 %v9022
        %v9099 = vpop.f32.mrf.mxu0
        %v9100 = vadd.f32 0.0, %v9099
        %v9101 = vpop.f32.mrf.mxu0
        %v9102 = vadd.f32 0.0, %v9101
        %9103 = vmatprep.mubr.f32.mxu0 0.0
        %9104 = vmatmul.mubr.f32.gmra.mxu0 %v9025
        %v9105 = vpop.f32.mrf.mxu0
        %v9106 = vadd.f32 0.0, %v9105
        %v9107 = vpop.f32.mrf.mxu0
        %v9108 = vadd.f32 0.0, %v9107
        %9109 = vdwg.mxu0
        %9110 = vmatprep.subr.mxu0 0.0
        %9111 = vmatpush1.msra.mxu0 0.0
        %9112 = vmatprep.subr.mxu0 0.0
        %9113 = vmatpush1.msra.mxu0 0.0
        %9114 = vmatprep.subr.mxu0 0.0
        %9115 = vmatpush1.msra.mxu0 0.0
        %9116 = vmatprep.subr.mxu0 0.0
        %9117 = vmatpush1.msra.mxu0 0.0
        %9118 = vmatprep.subr.mxu0 0.0
        %9119 = vmatpush1.msra.mxu0 0.0
        %9120 = vmatprep.subr.mxu0 0.0
        %9121 = vmatpush1.msra.mxu0 0.0
        %9122 = vmatprep.subr.mxu0 0.0
        %9123 = vmatpush1.msra.mxu0 %v9017
        %9124 = vmatprep.subr.mxu0 0.0
        %9125 = vmatpush1.msra.mxu0 %v9014
        %9126 = vmatprep.subr.mxu0 0.0
        %9127 = vmatpush1.msra.mxu0 %v9011
        %9128 = vmatprep.subr.mxu0 0.0
        %9129 = vmatpush1.msra.mxu0 %v9008
        %9130 = vmatprep.subr.mxu0 0.0
        %9131 = vmatpush1.msra.mxu0 %v9005
        %9132 = vmatprep.subr.mxu0 0.0
        %9133 = vmatpush1.msra.mxu0 %v9002
        %9134 = vmatprep.subr.mxu0 0.0
        %9135 = vmatpush1.msra.mxu0 %v8999
        %9136 = vmatprep.subr.mxu0 0.0
        %9137 = vmatpush1.msra.mxu0 %v8996
        %9138 = vmatprep.subr.mxu0 0.0
        %9139 = vmatpush1.msra.mxu0 %v8993
        %9140 = vmatprep.subr.mxu0 0.0
        %9141 = vmatpush1.msra.mxu0 %v8990
        %9142 = vmatprep.subr.mxu0 0.0
        %9143 = vmatpush2.msra.mxu0 0.0
        %9144 = vmatprep.subr.mxu0 0.0
        %9145 = vmatpush2.msra.mxu0 0.0
        %9146 = vmatprep.subr.mxu0 0.0
        %9147 = vmatpush2.msra.mxu0 0.0
        %9148 = vmatprep.subr.mxu0 0.0
        %9149 = vmatpush2.msra.mxu0 0.0
        %9150 = vmatprep.subr.mxu0 0.0
        %9151 = vmatpush2.msra.mxu0 0.0
        %9152 = vmatprep.subr.mxu0 0.0
        %9153 = vmatpush2.msra.mxu0 0.0
        %9154 = vmatprep.subr.mxu0 0.0
        %9155 = vmatpush2.msra.mxu0 0.0
        %9156 = vmatprep.subr.mxu0 0.0
        %9157 = vmatpush2.msra.mxu0 0.0
        %9158 = vmatprep.subr.mxu0 0.0
        %9159 = vmatpush2.msra.mxu0 0.0
        %9160 = vmatprep.subr.mxu0 0.0
        %9161 = vmatpush2.msra.mxu0 0.0
        %9162 = vmatprep.subr.mxu0 0.0
        %9163 = vmatpush2.msra.mxu0 0.0
        %9164 = vmatprep.subr.mxu0 0.0
        %9165 = vmatpush2.msra.mxu0 0.0
        %9166 = vmatprep.subr.mxu0 0.0
        %9167 = vmatpush2.msra.mxu0 0.0
        %9168 = vmatprep.subr.mxu0 0.0
        %9169 = vmatpush2.msra.mxu0 0.0
        %9170 = vmatprep.subr.mxu0 0.0
        %9171 = vmatpush2.msra.mxu0 0.0
        %9172 = vmatprep.subr.mxu0 0.0
        %9173 = vmatpush2.msra.mxu0 0.0
        %9174 = vmatprep.mubr.f32.mxu0 0.0
        %9175 = vmatmul.mubr.f32.gmra.mxu0 %v9019
        %v9176 = vpop.f32.mrf.mxu0
        %v9177 = vadd.f32 0.0, %v9176
        %v9178 = vpop.f32.mrf.mxu0
        %9179 = vmatprep.mubr.f32.mxu0 0.0
        %9180 = vmatmul.mubr.f32.gmra.mxu0 %v9022
        %v9181 = vpop.f32.mrf.mxu0
        %v9182 = vadd.f32 0.0, %v9181
        %v9183 = vpop.f32.mrf.mxu0
        %9184 = vmatprep.mubr.f32.mxu0 0.0
        %9185 = vmatmul.mubr.f32.gmra.mxu0 %v9025
        %v9186 = vpop.f32.mrf.mxu0
        %v9187 = vadd.f32 0.0, %v9186
        %v9188 = vpop.f32.mrf.mxu0
        %9189 = vdwg.mxu0
        %v9190 = vadd.f32 %v8899, %v9094
        %v9191 = vadd.f32 %v8900, %v9096
        %v9192 = vadd.f32 %v8901, %v9177
        %v9193 = vadd.f32 %v8902, %v9100
        %v9194 = vadd.f32 %v8903, %v9102
        %v9195 = vadd.f32 %v8904, %v9182
        %v9196 = vadd.f32 %v8905, %v9106
        %v9197 = vadd.f32 %v8906, %v9108
        %v9198 = vadd.f32 %v8907, %v9187
        %v9199 = vld [vmem:[%s732] sm:$0x7]
        %v9201 = vlaneseq
        %v9202 = vshrl.u32 %v9201, 7
        %v9203 = vsub.s32 0, %v9202
        %v9204 = vrot.slane %v9199, %v9203
        %v9205 = vlaneseq
        %v9206 = vshrl.u32 %v9205, 7
        %v9207 = vsub.s32 1, %v9206
        %v9208 = vrot.slane %v9199, %v9207
        %v9209 = vlaneseq
        %v9210 = vshrl.u32 %v9209, 7
        %v9211 = vsub.s32 2, %v9210
        %v9212 = vrot.slane %v9199, %v9211
        %v9216 = vadd.f32 %v9190, %v9204
        %v9217 = vadd.f32 %v9191, %v9208
        %v9218 = vadd.f32 %v9192, %v9212
        %v9219 = vadd.f32 %v9193, %v9204
        %v9220 = vadd.f32 %v9194, %v9208
        %v9221 = vadd.f32 %v9195, %v9212
        %v9222 = vadd.f32 %v9196, %v9204
        %v9223 = vadd.f32 %v9197, %v9208
        %v9224 = vadd.f32 %v9198, %v9212
        %v9225 = vmax.f32 %v9216, 0.0
        %v9226 = vmax.f32 %v9217, 0.0
        %v9227 = vmax.f32 %v9218, 0.0
        %v9228 = vmax.f32 %v9219, 0.0
        %v9229 = vmax.f32 %v9220, 0.0
        %v9230 = vmax.f32 %v9221, 0.0
        %v9231 = vmax.f32 %v9222, 0.0
        %v9232 = vmax.f32 %v9223, 0.0
        %v9233 = vmax.f32 %v9224, 0.0
        %v9235 = vsel %vm3213, %v9231, 0
        %v9238 = vsel %vm3213, %v9232, 0
        %v9241 = vsel %vm3213, %v9233, 0
        %9243 = vmatprep.subr.mxu0 0.0
        %9244 = vmatpush1.msra.mxu0 0.0
        %9245 = vmatprep.subr.mxu0 0.0
        %9246 = vmatpush1.msra.mxu0 0.0
        %9247 = vmatprep.subr.mxu0 0.0
        %9248 = vmatpush1.msra.mxu0 0.0
        %9249 = vmatprep.subr.mxu0 0.0
        %9250 = vmatpush1.msra.mxu0 0.0
        %9251 = vmatprep.subr.mxu0 0.0
        %9252 = vmatpush1.msra.mxu0 0.0
        %9253 = vmatprep.subr.mxu0 0.0
        %9254 = vmatpush1.msra.mxu0 0.0
        %9255 = vmatprep.subr.mxu0 0.0
        %9256 = vmatpush1.msra.mxu0 0.0
        %9257 = vmatprep.subr.mxu0 0.0
        %9258 = vmatpush1.msra.mxu0 0.0
        %9259 = vmatprep.subr.mxu0 0.0
        %9260 = vmatpush1.msra.mxu0 0.0
        %9261 = vmatprep.subr.mxu0 0.0
        %9262 = vmatpush1.msra.mxu0 0.0
        %9263 = vmatprep.subr.mxu0 0.0
        %9264 = vmatpush1.msra.mxu0 0.0
        %9265 = vmatprep.subr.mxu0 0.0
        %9266 = vmatpush1.msra.mxu0 0.0
        %9267 = vmatprep.subr.mxu0 0.0
        %9268 = vmatpush1.msra.mxu0 0.0
        %9269 = vmatprep.subr.mxu0 %v9238
        %9270 = vmatpush1.msra.mxu0 %v9235
        %9271 = vmatprep.subr.mxu0 %v9229
        %9272 = vmatpush1.msra.mxu0 %v9228
        %9273 = vmatprep.subr.mxu0 %v9226
        %9274 = vmatpush1.msra.mxu0 %v9225
        %9275 = vmatprep.subr.mxu0 0.0
        %9276 = vmatpush2.msra.mxu0 0.0
        %9277 = vmatprep.subr.mxu0 0.0
        %9278 = vmatpush2.msra.mxu0 0.0
        %9279 = vmatprep.subr.mxu0 0.0
        %9280 = vmatpush2.msra.mxu0 0.0
        %9281 = vmatprep.subr.mxu0 0.0
        %9282 = vmatpush2.msra.mxu0 0.0
        %9283 = vmatprep.subr.mxu0 0.0
        %9284 = vmatpush2.msra.mxu0 0.0
        %9285 = vmatprep.subr.mxu0 0.0
        %9286 = vmatpush2.msra.mxu0 0.0
        %9287 = vmatprep.subr.mxu0 0.0
        %9288 = vmatpush2.msra.mxu0 0.0
        %9289 = vmatprep.subr.mxu0 0.0
        %9290 = vmatpush2.msra.mxu0 0.0
        %9291 = vmatprep.subr.mxu0 0.0
        %9292 = vmatpush2.msra.mxu0 0.0
        %9293 = vmatprep.subr.mxu0 0.0
        %9294 = vmatpush2.msra.mxu0 0.0
        %9295 = vmatprep.subr.mxu0 0.0
        %9296 = vmatpush2.msra.mxu0 0.0
        %9297 = vmatprep.subr.mxu0 0.0
        %9298 = vmatpush2.msra.mxu0 0.0
        %9299 = vmatprep.subr.mxu0 0.0
        %9300 = vmatpush2.msra.mxu0 0.0
        %9301 = vmatprep.subr.mxu0 0.0
        %9302 = vmatpush2.msra.mxu0 0.0
        %9303 = vmatprep.subr.mxu0 0.0
        %9304 = vmatpush2.msra.mxu0 0.0
        %9305 = vmatprep.subr.mxu0 0.0
        %9306 = vmatpush2.msra.mxu0 0.0
        %9307 = vmatprep.mubr.f32.mxu0 0.0
        %9308 = vmatmul.mubr.f32.gmra.mxu0 %v4726
        %v9309 = vpop.f32.mrf.mxu0
        %v9310 = vadd.f32 0.0, %v9309
        %v9311 = vpop.f32.mrf.mxu0
        %v9312 = vadd.f32 0.0, %v9311
        %9313 = vmatprep.mubr.f32.mxu0 0.0
        %9314 = vmatmul.mubr.f32.gmra.mxu0 %v4729
        %v9315 = vpop.f32.mrf.mxu0
        %v9316 = vadd.f32 0.0, %v9315
        %v9317 = vpop.f32.mrf.mxu0
        %v9318 = vadd.f32 0.0, %v9317
        %9319 = vmatprep.mubr.f32.mxu0 0.0
        %9320 = vmatmul.mubr.f32.gmra.mxu0 %v4732
        %v9321 = vpop.f32.mrf.mxu0
        %v9322 = vadd.f32 0.0, %v9321
        %v9323 = vpop.f32.mrf.mxu0
        %v9324 = vadd.f32 0.0, %v9323
        %9325 = vdwg.mxu0
        %9326 = vmatprep.subr.mxu0 0.0
        %9327 = vmatpush1.msra.mxu0 0.0
        %9328 = vmatprep.subr.mxu0 0.0
        %9329 = vmatpush1.msra.mxu0 0.0
        %9330 = vmatprep.subr.mxu0 0.0
        %9331 = vmatpush1.msra.mxu0 0.0
        %9332 = vmatprep.subr.mxu0 0.0
        %9333 = vmatpush1.msra.mxu0 0.0
        %9334 = vmatprep.subr.mxu0 0.0
        %9335 = vmatpush1.msra.mxu0 0.0
        %9336 = vmatprep.subr.mxu0 0.0
        %9337 = vmatpush1.msra.mxu0 0.0
        %9338 = vmatprep.subr.mxu0 0.0
        %9339 = vmatpush1.msra.mxu0 0.0
        %9340 = vmatprep.subr.mxu0 0.0
        %9341 = vmatpush1.msra.mxu0 0.0
        %9342 = vmatprep.subr.mxu0 0.0
        %9343 = vmatpush1.msra.mxu0 0.0
        %9344 = vmatprep.subr.mxu0 0.0
        %9345 = vmatpush1.msra.mxu0 0.0
        %9346 = vmatprep.subr.mxu0 0.0
        %9347 = vmatpush1.msra.mxu0 0.0
        %9348 = vmatprep.subr.mxu0 0.0
        %9349 = vmatpush1.msra.mxu0 0.0
        %9350 = vmatprep.subr.mxu0 0.0
        %9351 = vmatpush1.msra.mxu0 0.0
        %9352 = vmatprep.subr.mxu0 0.0
        %9353 = vmatpush1.msra.mxu0 %v9241
        %9354 = vmatprep.subr.mxu0 0.0
        %9355 = vmatpush1.msra.mxu0 %v9230
        %9356 = vmatprep.subr.mxu0 0.0
        %9357 = vmatpush1.msra.mxu0 %v9227
        %9358 = vmatprep.subr.mxu0 0.0
        %9359 = vmatpush2.msra.mxu0 0.0
        %9360 = vmatprep.subr.mxu0 0.0
        %9361 = vmatpush2.msra.mxu0 0.0
        %9362 = vmatprep.subr.mxu0 0.0
        %9363 = vmatpush2.msra.mxu0 0.0
        %9364 = vmatprep.subr.mxu0 0.0
        %9365 = vmatpush2.msra.mxu0 0.0
        %9366 = vmatprep.subr.mxu0 0.0
        %9367 = vmatpush2.msra.mxu0 0.0
        %9368 = vmatprep.subr.mxu0 0.0
        %9369 = vmatpush2.msra.mxu0 0.0
        %9370 = vmatprep.subr.mxu0 0.0
        %9371 = vmatpush2.msra.mxu0 0.0
        %9372 = vmatprep.subr.mxu0 0.0
        %9373 = vmatpush2.msra.mxu0 0.0
        %9374 = vmatprep.subr.mxu0 0.0
        %9375 = vmatpush2.msra.mxu0 0.0
        %9376 = vmatprep.subr.mxu0 0.0
        %9377 = vmatpush2.msra.mxu0 0.0
        %9378 = vmatprep.subr.mxu0 0.0
        %9379 = vmatpush2.msra.mxu0 0.0
        %9380 = vmatprep.subr.mxu0 0.0
        %9381 = vmatpush2.msra.mxu0 0.0
        %9382 = vmatprep.subr.mxu0 0.0
        %9383 = vmatpush2.msra.mxu0 0.0
        %9384 = vmatprep.subr.mxu0 0.0
        %9385 = vmatpush2.msra.mxu0 0.0
        %9386 = vmatprep.subr.mxu0 0.0
        %9387 = vmatpush2.msra.mxu0 0.0
        %9388 = vmatprep.subr.mxu0 0.0
        %9389 = vmatpush2.msra.mxu0 0.0
        %9390 = vmatprep.mubr.f32.mxu0 0.0
        %9391 = vmatmul.mubr.f32.gmra.mxu0 %v4726
        %v9392 = vpop.f32.mrf.mxu0
        %v9393 = vadd.f32 0.0, %v9392
        %v9394 = vpop.f32.mrf.mxu0
        %9395 = vmatprep.mubr.f32.mxu0 0.0
        %9396 = vmatmul.mubr.f32.gmra.mxu0 %v4729
        %v9397 = vpop.f32.mrf.mxu0
        %v9398 = vadd.f32 0.0, %v9397
        %v9399 = vpop.f32.mrf.mxu0
        %9400 = vmatprep.mubr.f32.mxu0 0.0
        %9401 = vmatmul.mubr.f32.gmra.mxu0 %v4732
        %v9402 = vpop.f32.mrf.mxu0
        %v9403 = vadd.f32 0.0, %v9402
        %v9404 = vpop.f32.mrf.mxu0
        %9405 = vdwg.mxu0
        %v9406 = vld [vmem:[%s737] sm:$0xff]
        %v9407 = vld [vmem:[%s737 + $0x8] sm:$0xff]
        %v9408 = vld [vmem:[%s737 + $0x10] sm:$0xff]
        %v9409 = vld [vmem:[%s737 + $0x18] sm:$0xff]
        %v9410 = vld [vmem:[%s737 + $0x20] sm:$0xff]
        %v9411 = vld [vmem:[%s737 + $0x28] sm:$0xff]
        %v9412 = vld [vmem:[%s737 + $0x30] sm:$0xff]
        %v9413 = vld [vmem:[%s737 + $0x38] sm:$0xff]
        %v9414 = vld [vmem:[%s737 + $0x40] sm:$0xff]
        %v9415 = vld [vmem:[%s737 + $0x48] sm:$0xff]
        %v9416 = vld [vmem:[%s737 + $0x50] sm:$0xff]
        %v9417 = vld [vmem:[%s737 + $0x58] sm:$0xff]
        %v9418 = vld [vmem:[%s737 + $0x60] sm:$0xff]
        %v9419 = vld [vmem:[%s737 + $0x68] sm:$0xff]
        %v9420 = vld [vmem:[%s737 + $0x70] sm:$0xff]
        %v9421 = vld [vmem:[%s737 + $0x78] sm:$0xff]
        %v9422 = vld [vmem:[%s737 + $0x80] sm:$0xff]
        %v9423 = vld [vmem:[%s737 + $0x88] sm:$0xff]
        %v9424 = vld [vmem:[%s737 + $0x90] sm:$0xff]
        %v9425 = vld [vmem:[%s737 + $0x98] sm:$0xff]
        %v9426 = vld [vmem:[%s737 + $0xa0] sm:$0xff]
        %v9427 = vld [vmem:[%s737 + $0xa8] sm:$0xff]
        %v9428 = vld [vmem:[%s737 + $0xb0] sm:$0xff]
        %v9429 = vld [vmem:[%s737 + $0xb8] sm:$0xff]
        %v9430 = vld [vmem:[%s737 + $0xc0] sm:$0xff]
        %v9431 = vld [vmem:[%s737 + $0xc8] sm:$0xff]
        %v9432 = vld [vmem:[%s737 + $0xd0] sm:$0xff]
        %v9433 = vld [vmem:[%s737 + $0xd8] sm:$0xff]
        %v9434 = vld [vmem:[%s737 + $0xe0] sm:$0xff]
        %v9435 = vld [vmem:[%s737 + $0xe8] sm:$0xff]
        %v9436 = vld [vmem:[%s737 + $0xf0] sm:$0xff]
        %v9437 = vld [vmem:[%s737 + $0xf8] sm:$0xff]
        %v9438 = vld [vmem:[%s737 + $0x100] sm:$0xff]
        %v9439 = vld [vmem:[%s737 + $0x108] sm:$0xff]
        %v9440 = vld [vmem:[%s737 + $0x110] sm:$0xff]
        %v9441 = vld [vmem:[%s737 + $0x118] sm:$0xff]
        %9442 = vmatprep.subr.mxu0 0.0
        %9443 = vmatpush1.msra.mxu0 0.0
        %9444 = vmatprep.subr.mxu0 0.0
        %9445 = vmatpush1.msra.mxu0 0.0
        %9446 = vmatprep.subr.mxu0 0.0
        %9447 = vmatpush1.msra.mxu0 0.0
        %9448 = vmatprep.subr.mxu0 0.0
        %9449 = vmatpush1.msra.mxu0 0.0
        %9450 = vmatprep.subr.mxu0 0.0
        %9451 = vmatpush1.msra.mxu0 0.0
        %9452 = vmatprep.subr.mxu0 0.0
        %9453 = vmatpush1.msra.mxu0 0.0
        %9454 = vmatprep.subr.mxu0 0.0
        %9455 = vmatpush1.msra.mxu0 0.0
        %9456 = vmatprep.subr.mxu0 0.0
        %9457 = vmatpush1.msra.mxu0 0.0
        %9458 = vmatprep.subr.mxu0 0.0
        %9459 = vmatpush1.msra.mxu0 0.0
        %9460 = vmatprep.subr.mxu0 0.0
        %9461 = vmatpush1.msra.mxu0 0.0
        %9462 = vmatprep.subr.mxu0 0.0
        %9463 = vmatpush1.msra.mxu0 0.0
        %9464 = vmatprep.subr.mxu0 0.0
        %9465 = vmatpush1.msra.mxu0 0.0
        %9466 = vmatprep.subr.mxu0 0.0
        %9467 = vmatpush1.msra.mxu0 0.0
        %9468 = vmatprep.subr.mxu0 %v9238
        %9469 = vmatpush1.msra.mxu0 %v9235
        %9470 = vmatprep.subr.mxu0 %v9229
        %9471 = vmatpush1.msra.mxu0 %v9228
        %9472 = vmatprep.subr.mxu0 %v9226
        %9473 = vmatpush1.msra.mxu0 %v9225
        %9474 = vmatprep.subr.mxu0 0.0
        %9475 = vmatpush2.msra.mxu0 0.0
        %9476 = vmatprep.subr.mxu0 0.0
        %9477 = vmatpush2.msra.mxu0 0.0
        %9478 = vmatprep.subr.mxu0 0.0
        %9479 = vmatpush2.msra.mxu0 0.0
        %9480 = vmatprep.subr.mxu0 0.0
        %9481 = vmatpush2.msra.mxu0 0.0
        %9482 = vmatprep.subr.mxu0 0.0
        %9483 = vmatpush2.msra.mxu0 0.0
        %9484 = vmatprep.subr.mxu0 0.0
        %9485 = vmatpush2.msra.mxu0 0.0
        %9486 = vmatprep.subr.mxu0 0.0
        %9487 = vmatpush2.msra.mxu0 0.0
        %9488 = vmatprep.subr.mxu0 0.0
        %9489 = vmatpush2.msra.mxu0 0.0
        %9490 = vmatprep.subr.mxu0 0.0
        %9491 = vmatpush2.msra.mxu0 0.0
        %9492 = vmatprep.subr.mxu0 0.0
        %9493 = vmatpush2.msra.mxu0 0.0
        %9494 = vmatprep.subr.mxu0 0.0
        %9495 = vmatpush2.msra.mxu0 0.0
        %9496 = vmatprep.subr.mxu0 0.0
        %9497 = vmatpush2.msra.mxu0 0.0
        %9498 = vmatprep.subr.mxu0 0.0
        %9499 = vmatpush2.msra.mxu0 0.0
        %9500 = vmatprep.subr.mxu0 0.0
        %9501 = vmatpush2.msra.mxu0 0.0
        %9502 = vmatprep.subr.mxu0 0.0
        %9503 = vmatpush2.msra.mxu0 0.0
        %9504 = vmatprep.subr.mxu0 0.0
        %9505 = vmatpush2.msra.mxu0 0.0
        %9506 = vmatprep.mubr.f32.mxu0 0.0
        %9507 = vmatmul.mubr.f32.gmra.mxu0 %v4943
        %v9508 = vpop.f32.mrf.mxu0
        %v9509 = vadd.f32 0.0, %v9508
        %v9510 = vpop.f32.mrf.mxu0
        %v9511 = vadd.f32 0.0, %v9510
        %9512 = vmatprep.mubr.f32.mxu0 0.0
        %9513 = vmatmul.mubr.f32.gmra.mxu0 %v4946
        %v9514 = vpop.f32.mrf.mxu0
        %v9515 = vadd.f32 0.0, %v9514
        %v9516 = vpop.f32.mrf.mxu0
        %v9517 = vadd.f32 0.0, %v9516
        %9518 = vmatprep.mubr.f32.mxu0 0.0
        %9519 = vmatmul.mubr.f32.gmra.mxu0 %v4949
        %v9520 = vpop.f32.mrf.mxu0
        %v9521 = vadd.f32 0.0, %v9520
        %v9522 = vpop.f32.mrf.mxu0
        %v9523 = vadd.f32 0.0, %v9522
        %9524 = vdwg.mxu0
        %9525 = vmatprep.subr.mxu0 0.0
        %9526 = vmatpush1.msra.mxu0 0.0
        %9527 = vmatprep.subr.mxu0 0.0
        %9528 = vmatpush1.msra.mxu0 0.0
        %9529 = vmatprep.subr.mxu0 0.0
        %9530 = vmatpush1.msra.mxu0 0.0
        %9531 = vmatprep.subr.mxu0 0.0
        %9532 = vmatpush1.msra.mxu0 0.0
        %9533 = vmatprep.subr.mxu0 0.0
        %9534 = vmatpush1.msra.mxu0 0.0
        %9535 = vmatprep.subr.mxu0 0.0
        %9536 = vmatpush1.msra.mxu0 0.0
        %9537 = vmatprep.subr.mxu0 0.0
        %9538 = vmatpush1.msra.mxu0 0.0
        %9539 = vmatprep.subr.mxu0 0.0
        %9540 = vmatpush1.msra.mxu0 0.0
        %9541 = vmatprep.subr.mxu0 0.0
        %9542 = vmatpush1.msra.mxu0 0.0
        %9543 = vmatprep.subr.mxu0 0.0
        %9544 = vmatpush1.msra.mxu0 0.0
        %9545 = vmatprep.subr.mxu0 0.0
        %9546 = vmatpush1.msra.mxu0 0.0
        %9547 = vmatprep.subr.mxu0 0.0
        %9548 = vmatpush1.msra.mxu0 0.0
        %9549 = vmatprep.subr.mxu0 0.0
        %9550 = vmatpush1.msra.mxu0 0.0
        %9551 = vmatprep.subr.mxu0 0.0
        %9552 = vmatpush1.msra.mxu0 %v9241
        %9553 = vmatprep.subr.mxu0 0.0
        %9554 = vmatpush1.msra.mxu0 %v9230
        %9555 = vmatprep.subr.mxu0 0.0
        %9556 = vmatpush1.msra.mxu0 %v9227
        %9557 = vmatprep.subr.mxu0 0.0
        %9558 = vmatpush2.msra.mxu0 0.0
        %9559 = vmatprep.subr.mxu0 0.0
        %9560 = vmatpush2.msra.mxu0 0.0
        %9561 = vmatprep.subr.mxu0 0.0
        %9562 = vmatpush2.msra.mxu0 0.0
        %9563 = vmatprep.subr.mxu0 0.0
        %9564 = vmatpush2.msra.mxu0 0.0
        %9565 = vmatprep.subr.mxu0 0.0
        %9566 = vmatpush2.msra.mxu0 0.0
        %9567 = vmatprep.subr.mxu0 0.0
        %9568 = vmatpush2.msra.mxu0 0.0
        %9569 = vmatprep.subr.mxu0 0.0
        %9570 = vmatpush2.msra.mxu0 0.0
        %9571 = vmatprep.subr.mxu0 0.0
        %9572 = vmatpush2.msra.mxu0 0.0
        %9573 = vmatprep.subr.mxu0 0.0
        %9574 = vmatpush2.msra.mxu0 0.0
        %9575 = vmatprep.subr.mxu0 0.0
        %9576 = vmatpush2.msra.mxu0 0.0
        %9577 = vmatprep.subr.mxu0 0.0
        %9578 = vmatpush2.msra.mxu0 0.0
        %9579 = vmatprep.subr.mxu0 0.0
        %9580 = vmatpush2.msra.mxu0 0.0
        %9581 = vmatprep.subr.mxu0 0.0
        %9582 = vmatpush2.msra.mxu0 0.0
        %9583 = vmatprep.subr.mxu0 0.0
        %9584 = vmatpush2.msra.mxu0 0.0
        %9585 = vmatprep.subr.mxu0 0.0
        %9586 = vmatpush2.msra.mxu0 0.0
        %9587 = vmatprep.subr.mxu0 0.0
        %9588 = vmatpush2.msra.mxu0 0.0
        %9589 = vmatprep.mubr.f32.mxu0 0.0
        %9590 = vmatmul.mubr.f32.gmra.mxu0 %v4943
        %v9591 = vpop.f32.mrf.mxu0
        %v9592 = vadd.f32 0.0, %v9591
        %v9593 = vpop.f32.mrf.mxu0
        %9594 = vmatprep.mubr.f32.mxu0 0.0
        %9595 = vmatmul.mubr.f32.gmra.mxu0 %v4946
        %v9596 = vpop.f32.mrf.mxu0
        %v9597 = vadd.f32 0.0, %v9596
        %v9598 = vpop.f32.mrf.mxu0
        %9599 = vmatprep.mubr.f32.mxu0 0.0
        %9600 = vmatmul.mubr.f32.gmra.mxu0 %v4949
        %v9601 = vpop.f32.mrf.mxu0
        %v9602 = vadd.f32 0.0, %v9601
        %v9603 = vpop.f32.mrf.mxu0
        %9604 = vdwg.mxu0
        %v9605 = vld [vmem:[%s5114] sm:$0xff]
        %v9606 = vld [vmem:[%s5114 + $0x8] sm:$0xff]
        %v9607 = vld [vmem:[%s5114 + $0x10] sm:$0xff]
        %v9608 = vld [vmem:[%s5114 + $0x18] sm:$0xff]
        %v9609 = vld [vmem:[%s5114 + $0x20] sm:$0xff]
        %v9610 = vld [vmem:[%s5114 + $0x28] sm:$0xff]
        %v9611 = vld [vmem:[%s5114 + $0x30] sm:$0xff]
        %v9612 = vld [vmem:[%s5114 + $0x38] sm:$0xff]
        %v9613 = vld [vmem:[%s5114 + $0x40] sm:$0xff]
        %v9614 = vld [vmem:[%s5114 + $0x48] sm:$0xff]
        %v9615 = vld [vmem:[%s5114 + $0x50] sm:$0xff]
        %v9616 = vld [vmem:[%s5114 + $0x58] sm:$0xff]
        %v9617 = vld [vmem:[%s5114 + $0x60] sm:$0xff]
        %v9618 = vld [vmem:[%s5114 + $0x68] sm:$0xff]
        %v9619 = vld [vmem:[%s5114 + $0x70] sm:$0xff]
        %v9620 = vld [vmem:[%s5114 + $0x78] sm:$0xff]
        %v9621 = vld [vmem:[%s5114 + $0x80] sm:$0xff]
        %v9622 = vld [vmem:[%s5114 + $0x88] sm:$0xff]
        %v9623 = vld [vmem:[%s5114 + $0x90] sm:$0xff]
        %v9624 = vld [vmem:[%s5114 + $0x98] sm:$0xff]
        %v9625 = vld [vmem:[%s5114 + $0xa0] sm:$0xff]
        %v9626 = vld [vmem:[%s5114 + $0xa8] sm:$0xff]
        %v9627 = vld [vmem:[%s5114 + $0xb0] sm:$0xff]
        %v9628 = vld [vmem:[%s5114 + $0xb8] sm:$0xff]
        %v9629 = vld [vmem:[%s5114 + $0xc0] sm:$0xff]
        %v9630 = vld [vmem:[%s5114 + $0xc8] sm:$0xff]
        %v9631 = vld [vmem:[%s5114 + $0xd0] sm:$0xff]
        %v9632 = vld [vmem:[%s5114 + $0xd8] sm:$0xff]
        %v9633 = vld [vmem:[%s5114 + $0xe0] sm:$0xff]
        %v9634 = vld [vmem:[%s5114 + $0xe8] sm:$0xff]
        %v9635 = vld [vmem:[%s5114 + $0xf0] sm:$0xff]
        %v9636 = vld [vmem:[%s5114 + $0xf8] sm:$0xff]
        %v9637 = vld [vmem:[%s5114 + $0x100] sm:$0xff]
        %v9638 = vld [vmem:[%s5114 + $0x108] sm:$0xff]
        %v9639 = vld [vmem:[%s5114 + $0x110] sm:$0xff]
        %v9640 = vld [vmem:[%s5114 + $0x118] sm:$0xff]
        %v9642 = vsel %vm1247, %v9592, 0
        %v9645 = vsel %vm1247, %v9597, 0
        %v9648 = vsel %vm1247, %v9602, 0
        %9650 = vmatprep.subr.mxu0 0.0
        %9651 = vmatpush1.msra.mxu0 %v9620
        %9652 = vmatprep.subr.mxu0 0.0
        %9653 = vmatpush1.msra.mxu0 %v9619
        %9654 = vmatprep.subr.mxu0 0.0
        %9655 = vmatpush1.msra.mxu0 %v9618
        %9656 = vmatprep.subr.mxu0 0.0
        %9657 = vmatpush1.msra.mxu0 %v9617
        %9658 = vmatprep.subr.mxu0 0.0
        %9659 = vmatpush1.msra.mxu0 %v9616
        %9660 = vmatprep.subr.mxu0 0.0
        %9661 = vmatpush1.msra.mxu0 %v9615
        %9662 = vmatprep.subr.mxu0 0.0
        %9663 = vmatpush1.msra.mxu0 %v9614
        %9664 = vmatprep.subr.mxu0 0.0
        %9665 = vmatpush1.msra.mxu0 %v9613
        %9666 = vmatprep.subr.mxu0 0.0
        %9667 = vmatpush1.msra.mxu0 %v9612
        %9668 = vmatprep.subr.mxu0 0.0
        %9669 = vmatpush1.msra.mxu0 %v9611
        %9670 = vmatprep.subr.mxu0 0.0
        %9671 = vmatpush1.msra.mxu0 %v9610
        %9672 = vmatprep.subr.mxu0 0.0
        %9673 = vmatpush1.msra.mxu0 %v9609
        %9674 = vmatprep.subr.mxu0 0.0
        %9675 = vmatpush1.msra.mxu0 %v9608
        %9676 = vmatprep.subr.mxu0 0.0
        %9677 = vmatpush1.msra.mxu0 %v9607
        %9678 = vmatprep.subr.mxu0 0.0
        %9679 = vmatpush1.msra.mxu0 %v9606
        %9680 = vmatprep.subr.mxu0 0.0
        %9681 = vmatpush1.msra.mxu0 %v9605
        %9682 = vmatprep.subr.mxu0 0.0
        %9683 = vmatpush2.msra.mxu0 %v9636
        %9684 = vmatprep.subr.mxu0 0.0
        %9685 = vmatpush2.msra.mxu0 %v9635
        %9686 = vmatprep.subr.mxu0 0.0
        %9687 = vmatpush2.msra.mxu0 %v9634
        %9688 = vmatprep.subr.mxu0 0.0
        %9689 = vmatpush2.msra.mxu0 %v9633
        %9690 = vmatprep.subr.mxu0 0.0
        %9691 = vmatpush2.msra.mxu0 %v9632
        %9692 = vmatprep.subr.mxu0 0.0
        %9693 = vmatpush2.msra.mxu0 %v9631
        %9694 = vmatprep.subr.mxu0 0.0
        %9695 = vmatpush2.msra.mxu0 %v9630
        %9696 = vmatprep.subr.mxu0 0.0
        %9697 = vmatpush2.msra.mxu0 %v9629
        %9698 = vmatprep.subr.mxu0 0.0
        %9699 = vmatpush2.msra.mxu0 %v9628
        %9700 = vmatprep.subr.mxu0 0.0
        %9701 = vmatpush2.msra.mxu0 %v9627
        %9702 = vmatprep.subr.mxu0 0.0
        %9703 = vmatpush2.msra.mxu0 %v9626
        %9704 = vmatprep.subr.mxu0 0.0
        %9705 = vmatpush2.msra.mxu0 %v9625
        %9706 = vmatprep.subr.mxu0 0.0
        %9707 = vmatpush2.msra.mxu0 %v9624
        %9708 = vmatprep.subr.mxu0 0.0
        %9709 = vmatpush2.msra.mxu0 %v9623
        %9710 = vmatprep.subr.mxu0 0.0
        %9711 = vmatpush2.msra.mxu0 %v9622
        %9712 = vmatprep.subr.mxu0 0.0
        %9713 = vmatpush2.msra.mxu0 %v9621
        %9714 = vmatprep.mubr.f32.mxu0 %v9511
        %9715 = vmatmul.mubr.f32.gmra.mxu0 %v9509
        %v9716 = vpop.f32.mrf.mxu0
        %v9717 = vadd.f32 0.0, %v9716
        %v9718 = vpop.f32.mrf.mxu0
        %9719 = vmatprep.mubr.f32.mxu0 %v9517
        %9720 = vmatmul.mubr.f32.gmra.mxu0 %v9515
        %v9721 = vpop.f32.mrf.mxu0
        %v9722 = vadd.f32 0.0, %v9721
        %v9723 = vpop.f32.mrf.mxu0
        %9724 = vmatprep.mubr.f32.mxu0 %v9523
        %9725 = vmatmul.mubr.f32.gmra.mxu0 %v9521
        %v9726 = vpop.f32.mrf.mxu0
        %v9727 = vadd.f32 0.0, %v9726
        %v9728 = vpop.f32.mrf.mxu0
        %9729 = vdwg.mxu0
        %9730 = vmatprep.subr.mxu0 0.0
        %9731 = vmatpush1.msra.mxu0 0.0
        %9732 = vmatprep.subr.mxu0 0.0
        %9733 = vmatpush1.msra.mxu0 0.0
        %9734 = vmatprep.subr.mxu0 0.0
        %9735 = vmatpush1.msra.mxu0 0.0
        %9736 = vmatprep.subr.mxu0 0.0
        %9737 = vmatpush1.msra.mxu0 0.0
        %9738 = vmatprep.subr.mxu0 0.0
        %9739 = vmatpush1.msra.mxu0 0.0
        %9740 = vmatprep.subr.mxu0 0.0
        %9741 = vmatpush1.msra.mxu0 0.0
        %9742 = vmatprep.subr.mxu0 0.0
        %9743 = vmatpush1.msra.mxu0 0.0
        %9744 = vmatprep.subr.mxu0 0.0
        %9745 = vmatpush1.msra.mxu0 0.0
        %9746 = vmatprep.subr.mxu0 0.0
        %9747 = vmatpush1.msra.mxu0 0.0
        %9748 = vmatprep.subr.mxu0 0.0
        %9749 = vmatpush1.msra.mxu0 0.0
        %9750 = vmatprep.subr.mxu0 0.0
        %9751 = vmatpush1.msra.mxu0 0.0
        %9752 = vmatprep.subr.mxu0 0.0
        %9753 = vmatpush1.msra.mxu0 0.0
        %9754 = vmatprep.subr.mxu0 0.0
        %9755 = vmatpush1.msra.mxu0 %v9640
        %9756 = vmatprep.subr.mxu0 0.0
        %9757 = vmatpush1.msra.mxu0 %v9639
        %9758 = vmatprep.subr.mxu0 0.0
        %9759 = vmatpush1.msra.mxu0 %v9638
        %9760 = vmatprep.subr.mxu0 0.0
        %9761 = vmatpush1.msra.mxu0 %v9637
        %9762 = vmatprep.subr.mxu0 0.0
        %9763 = vmatpush2.msra.mxu0 0.0
        %9764 = vmatprep.subr.mxu0 0.0
        %9765 = vmatpush2.msra.mxu0 0.0
        %9766 = vmatprep.subr.mxu0 0.0
        %9767 = vmatpush2.msra.mxu0 0.0
        %9768 = vmatprep.subr.mxu0 0.0
        %9769 = vmatpush2.msra.mxu0 0.0
        %9770 = vmatprep.subr.mxu0 0.0
        %9771 = vmatpush2.msra.mxu0 0.0
        %9772 = vmatprep.subr.mxu0 0.0
        %9773 = vmatpush2.msra.mxu0 0.0
        %9774 = vmatprep.subr.mxu0 0.0
        %9775 = vmatpush2.msra.mxu0 0.0
        %9776 = vmatprep.subr.mxu0 0.0
        %9777 = vmatpush2.msra.mxu0 0.0
        %9778 = vmatprep.subr.mxu0 0.0
        %9779 = vmatpush2.msra.mxu0 0.0
        %9780 = vmatprep.subr.mxu0 0.0
        %9781 = vmatpush2.msra.mxu0 0.0
        %9782 = vmatprep.subr.mxu0 0.0
        %9783 = vmatpush2.msra.mxu0 0.0
        %9784 = vmatprep.subr.mxu0 0.0
        %9785 = vmatpush2.msra.mxu0 0.0
        %9786 = vmatprep.subr.mxu0 0.0
        %9787 = vmatpush2.msra.mxu0 0.0
        %9788 = vmatprep.subr.mxu0 0.0
        %9789 = vmatpush2.msra.mxu0 0.0
        %9790 = vmatprep.subr.mxu0 0.0
        %9791 = vmatpush2.msra.mxu0 0.0
        %9792 = vmatprep.subr.mxu0 0.0
        %9793 = vmatpush2.msra.mxu0 0.0
        %9794 = vmatprep.mubr.f32.mxu0 0.0
        %9795 = vmatmul.mubr.f32.gmra.mxu0 %v9642
        %v9796 = vpop.f32.mrf.mxu0
        %v9797 = vadd.f32 %v9717, %v9796
        %v9798 = vpop.f32.mrf.mxu0
        %9799 = vmatprep.mubr.f32.mxu0 0.0
        %9800 = vmatmul.mubr.f32.gmra.mxu0 %v9645
        %v9801 = vpop.f32.mrf.mxu0
        %v9802 = vadd.f32 %v9722, %v9801
        %v9803 = vpop.f32.mrf.mxu0
        %9804 = vmatprep.mubr.f32.mxu0 0.0
        %9805 = vmatmul.mubr.f32.gmra.mxu0 %v9648
        %v9806 = vpop.f32.mrf.mxu0
        %v9807 = vadd.f32 %v9727, %v9806
        %v9808 = vpop.f32.mrf.mxu0
        %9809 = vdwg.mxu0
        %v9811 = vsel %vm1247, %v9393, 0
        %v9814 = vsel %vm1247, %v9398, 0
        %v9817 = vsel %vm1247, %v9403, 0
        %9819 = vmatprep.subr.mxu0 0.0
        %9820 = vmatpush1.msra.mxu0 %v9421
        %9821 = vmatprep.subr.mxu0 0.0
        %9822 = vmatpush1.msra.mxu0 %v9420
        %9823 = vmatprep.subr.mxu0 0.0
        %9824 = vmatpush1.msra.mxu0 %v9419
        %9825 = vmatprep.subr.mxu0 0.0
        %9826 = vmatpush1.msra.mxu0 %v9418
        %9827 = vmatprep.subr.mxu0 0.0
        %9828 = vmatpush1.msra.mxu0 %v9417
        %9829 = vmatprep.subr.mxu0 0.0
        %9830 = vmatpush1.msra.mxu0 %v9416
        %9831 = vmatprep.subr.mxu0 0.0
        %9832 = vmatpush1.msra.mxu0 %v9415
        %9833 = vmatprep.subr.mxu0 0.0
        %9834 = vmatpush1.msra.mxu0 %v9414
        %9835 = vmatprep.subr.mxu0 0.0
        %9836 = vmatpush1.msra.mxu0 %v9413
        %9837 = vmatprep.subr.mxu0 0.0
        %9838 = vmatpush1.msra.mxu0 %v9412
        %9839 = vmatprep.subr.mxu0 0.0
        %9840 = vmatpush1.msra.mxu0 %v9411
        %9841 = vmatprep.subr.mxu0 0.0
        %9842 = vmatpush1.msra.mxu0 %v9410
        %9843 = vmatprep.subr.mxu0 0.0
        %9844 = vmatpush1.msra.mxu0 %v9409
        %9845 = vmatprep.subr.mxu0 0.0
        %9846 = vmatpush1.msra.mxu0 %v9408
        %9847 = vmatprep.subr.mxu0 0.0
        %9848 = vmatpush1.msra.mxu0 %v9407
        %9849 = vmatprep.subr.mxu0 0.0
        %9850 = vmatpush1.msra.mxu0 %v9406
        %9851 = vmatprep.subr.mxu0 0.0
        %9852 = vmatpush2.msra.mxu0 %v9437
        %9853 = vmatprep.subr.mxu0 0.0
        %9854 = vmatpush2.msra.mxu0 %v9436
        %9855 = vmatprep.subr.mxu0 0.0
        %9856 = vmatpush2.msra.mxu0 %v9435
        %9857 = vmatprep.subr.mxu0 0.0
        %9858 = vmatpush2.msra.mxu0 %v9434
        %9859 = vmatprep.subr.mxu0 0.0
        %9860 = vmatpush2.msra.mxu0 %v9433
        %9861 = vmatprep.subr.mxu0 0.0
        %9862 = vmatpush2.msra.mxu0 %v9432
        %9863 = vmatprep.subr.mxu0 0.0
        %9864 = vmatpush2.msra.mxu0 %v9431
        %9865 = vmatprep.subr.mxu0 0.0
        %9866 = vmatpush2.msra.mxu0 %v9430
        %9867 = vmatprep.subr.mxu0 0.0
        %9868 = vmatpush2.msra.mxu0 %v9429
        %9869 = vmatprep.subr.mxu0 0.0
        %9870 = vmatpush2.msra.mxu0 %v9428
        %9871 = vmatprep.subr.mxu0 0.0
        %9872 = vmatpush2.msra.mxu0 %v9427
        %9873 = vmatprep.subr.mxu0 0.0
        %9874 = vmatpush2.msra.mxu0 %v9426
        %9875 = vmatprep.subr.mxu0 0.0
        %9876 = vmatpush2.msra.mxu0 %v9425
        %9877 = vmatprep.subr.mxu0 0.0
        %9878 = vmatpush2.msra.mxu0 %v9424
        %9879 = vmatprep.subr.mxu0 0.0
        %9880 = vmatpush2.msra.mxu0 %v9423
        %9881 = vmatprep.subr.mxu0 0.0
        %9882 = vmatpush2.msra.mxu0 %v9422
        %9883 = vmatprep.mubr.f32.mxu0 %v9312
        %9884 = vmatmul.mubr.f32.gmra.mxu0 %v9310
        %v9885 = vpop.f32.mrf.mxu0
        %v9886 = vadd.f32 %v9797, %v9885
        %v9887 = vpop.f32.mrf.mxu0
        %9888 = vmatprep.mubr.f32.mxu0 %v9318
        %9889 = vmatmul.mubr.f32.gmra.mxu0 %v9316
        %v9890 = vpop.f32.mrf.mxu0
        %v9891 = vadd.f32 %v9802, %v9890
        %v9892 = vpop.f32.mrf.mxu0
        %9893 = vmatprep.mubr.f32.mxu0 %v9324
        %9894 = vmatmul.mubr.f32.gmra.mxu0 %v9322
        %v9895 = vpop.f32.mrf.mxu0
        %v9896 = vadd.f32 %v9807, %v9895
        %v9897 = vpop.f32.mrf.mxu0
        %9898 = vdwg.mxu0
        %9899 = vmatprep.subr.mxu0 0.0
        %9900 = vmatpush1.msra.mxu0 0.0
        %9901 = vmatprep.subr.mxu0 0.0
        %9902 = vmatpush1.msra.mxu0 0.0
        %9903 = vmatprep.subr.mxu0 0.0
        %9904 = vmatpush1.msra.mxu0 0.0
        %9905 = vmatprep.subr.mxu0 0.0
        %9906 = vmatpush1.msra.mxu0 0.0
        %9907 = vmatprep.subr.mxu0 0.0
        %9908 = vmatpush1.msra.mxu0 0.0
        %9909 = vmatprep.subr.mxu0 0.0
        %9910 = vmatpush1.msra.mxu0 0.0
        %9911 = vmatprep.subr.mxu0 0.0
        %9912 = vmatpush1.msra.mxu0 0.0
        %9913 = vmatprep.subr.mxu0 0.0
        %9914 = vmatpush1.msra.mxu0 0.0
        %9915 = vmatprep.subr.mxu0 0.0
        %9916 = vmatpush1.msra.mxu0 0.0
        %9917 = vmatprep.subr.mxu0 0.0
        %9918 = vmatpush1.msra.mxu0 0.0
        %9919 = vmatprep.subr.mxu0 0.0
        %9920 = vmatpush1.msra.mxu0 0.0
        %9921 = vmatprep.subr.mxu0 0.0
        %9922 = vmatpush1.msra.mxu0 0.0
        %9923 = vmatprep.subr.mxu0 0.0
        %9924 = vmatpush1.msra.mxu0 %v9441
        %9925 = vmatprep.subr.mxu0 0.0
        %9926 = vmatpush1.msra.mxu0 %v9440
        %9927 = vmatprep.subr.mxu0 0.0
        %9928 = vmatpush1.msra.mxu0 %v9439
        %9929 = vmatprep.subr.mxu0 0.0
        %9930 = vmatpush1.msra.mxu0 %v9438
        %9931 = vmatprep.subr.mxu0 0.0
        %9932 = vmatpush2.msra.mxu0 0.0
        %9933 = vmatprep.subr.mxu0 0.0
        %9934 = vmatpush2.msra.mxu0 0.0
        %9935 = vmatprep.subr.mxu0 0.0
        %9936 = vmatpush2.msra.mxu0 0.0
        %9937 = vmatprep.subr.mxu0 0.0
        %9938 = vmatpush2.msra.mxu0 0.0
        %9939 = vmatprep.subr.mxu0 0.0
        %9940 = vmatpush2.msra.mxu0 0.0
        %9941 = vmatprep.subr.mxu0 0.0
        %9942 = vmatpush2.msra.mxu0 0.0
        %9943 = vmatprep.subr.mxu0 0.0
        %9944 = vmatpush2.msra.mxu0 0.0
        %9945 = vmatprep.subr.mxu0 0.0
        %9946 = vmatpush2.msra.mxu0 0.0
        %9947 = vmatprep.subr.mxu0 0.0
        %9948 = vmatpush2.msra.mxu0 0.0
        %9949 = vmatprep.subr.mxu0 0.0
        %9950 = vmatpush2.msra.mxu0 0.0
        %9951 = vmatprep.subr.mxu0 0.0
        %9952 = vmatpush2.msra.mxu0 0.0
        %9953 = vmatprep.subr.mxu0 0.0
        %9954 = vmatpush2.msra.mxu0 0.0
        %9955 = vmatprep.subr.mxu0 0.0
        %9956 = vmatpush2.msra.mxu0 0.0
        %9957 = vmatprep.subr.mxu0 0.0
        %9958 = vmatpush2.msra.mxu0 0.0
        %9959 = vmatprep.subr.mxu0 0.0
        %9960 = vmatpush2.msra.mxu0 0.0
        %9961 = vmatprep.subr.mxu0 0.0
        %9962 = vmatpush2.msra.mxu0 0.0
        %9963 = vmatprep.mubr.f32.mxu0 0.0
        %9964 = vmatmul.mubr.f32.gmra.mxu0 %v9811
        %v9965 = vpop.f32.mrf.mxu0
        %v9966 = vadd.f32 %v9886, %v9965
        %v9967 = vpop.f32.mrf.mxu0
        %9968 = vmatprep.mubr.f32.mxu0 0.0
        %9969 = vmatmul.mubr.f32.gmra.mxu0 %v9814
        %v9970 = vpop.f32.mrf.mxu0
        %v9971 = vadd.f32 %v9891, %v9970
        %v9972 = vpop.f32.mrf.mxu0
        %9973 = vmatprep.mubr.f32.mxu0 0.0
        %9974 = vmatmul.mubr.f32.gmra.mxu0 %v9817
        %v9975 = vpop.f32.mrf.mxu0
        %v9976 = vadd.f32 %v9896, %v9975
        %v9977 = vpop.f32.mrf.mxu0
        %9978 = vdwg.mxu0
        %v9979 = vld [vmem:[%s740] sm:$0x1]
        %v9981 = vlaneseq
        %v9982 = vshrl.u32 %v9981, 7
        %v9983 = vsub.s32 0, %v9982
        %v9984 = vrot.slane %v9979, %v9983
        %v9986 = vadd.f32 %v9966, %v9984
        %v9987 = vadd.f32 %v9971, %v9984
        %v9988 = vadd.f32 %v9976, %v9984
        %s9989 = scalar_lea.vmem %s745, 24
        %9990 = vst.msk [vmem:[%s9989] sm:$0xff] %vm5499, %v9986
        %9991 = vst.msk [vmem:[%s9989 + $0x8] sm:$0xff] %vm5499, %v9987
        %9992 = vst.msk [vmem:[%s9989 + $0x10] sm:$0x1] %vm5502, %v9988
        %p9993 = scmp.lt.s32.totalorder %s31, 1
        %s9994 = scalar_select %p9993, %s31, 1
        %s9995 = smul.addr %s9994, 6
        %s9996 = smul.addr %s9995, 8
        %s9997 = scalar_lea.vmem %s15, %s9996
        %p9998 = scmp.lt.s32.totalorder %s31, 1
        %s9999 = scalar_select %p9998, %s31, 1
        %s10000 = smul.addr %s9999, 4
        %s10001 = smul.addr %s10000, 8
        %s10002 = scalar_lea.vmem %s16, %s10001
        // Predicated region
        $region85: #{ggcnn_asgnet_forward.1} parent=79 // pred_check
          %p10003 = pneg %p424
        $region86: #{ggcnn_asgnet_forward.1} parent=79 // pred_check_branch
          %10005 = sbr.rel (%p10003) target = $region88
        $region87: #{ggcnn_asgnet_forward.1} parent=79 // pred_region
          _
        $region88: #{ggcnn_asgnet_forward.1} parent=79 // pred_fallthru
          _
        // Predicated region
        $region89: #{ggcnn_asgnet_forward.1} parent=79 // pred_check
          %p10006 = pneg %p450
        $region90: #{ggcnn_asgnet_forward.1} parent=79 // pred_check_branch
          %10008 = sbr.rel (%p10006) target = $region92
        $region91: #{ggcnn_asgnet_forward.1} parent=79 // pred_region
          _
        $region92: #{ggcnn_asgnet_forward.1} parent=79 // pred_fallthru
          _
      $region80: #{ggcnn_asgnet_forward.1} parent=5 // pred_fallthru
        _
      %p10009 = scmp.le.s32.totalorder 2, %s26
      // Predicated region
      $region93: #{ggcnn_asgnet_forward.1} parent=5 // pred_check
        %p10010 = pneg %p10009
      $region94: #{ggcnn_asgnet_forward.1} parent=5 // pred_check_branch
        %10012 = sbr.rel (%p10010) target = $region96
      $region95: #{ggcnn_asgnet_forward.1} parent=5 // pred_region
        %s10013 = ssub.s32 %s26, 2
        // Predicated region
        $region97: #{ggcnn_asgnet_forward.1} parent=95 // pred_check
          %p10014 = pneg %p430
        $region98: #{ggcnn_asgnet_forward.1} parent=95 // pred_check_branch
          %10016 = sbr.rel (%p10014) target = $region100
        $region99: #{ggcnn_asgnet_forward.1} parent=95 // pred_region
          %p10017 = scmp.lt.s32.totalorder %s32, 1
          %s10018 = scalar_select %p10017, %s32, 1
          %s10019 = smul.addr %s10018, 6
          %s10020 = smul.addr %s10019, 8
          %s10021 = scalar_lea.vmem %s15, %s10020
        $region100: #{ggcnn_asgnet_forward.1} parent=95 // pred_fallthru
          _
        // Predicated region
        $region101: #{ggcnn_asgnet_forward.1} parent=95 // pred_check
          %p10022 = pneg %p456
        $region102: #{ggcnn_asgnet_forward.1} parent=95 // pred_check_branch
          %10024 = sbr.rel (%p10022) target = $region104
        $region103: #{ggcnn_asgnet_forward.1} parent=95 // pred_region
          %p10025 = scmp.lt.s32.totalorder %s32, 1
          %s10026 = scalar_select %p10025, %s32, 1
          %s10027 = smul.addr %s10026, 4
          %s10028 = smul.addr %s10027, 8
          %s10029 = scalar_lea.vmem %s16, %s10028
        $region104: #{ggcnn_asgnet_forward.1} parent=95 // pred_fallthru
          _
      $region96: #{ggcnn_asgnet_forward.1} parent=5 // pred_fallthru
        _
    $region6: #{ggcnn_asgnet_forward.1} parent=1 // loop_footer
      %s30 = sadd.s32 1, %s26
    $region7: #{ggcnn_asgnet_forward.1} parent=1 // loop_footer_branch
      %25 = sbr.rel target = $region3
    $region8: #{ggcnn_asgnet_forward.1} parent=1 // loop_exit
      _
    %10030 = vsyncpa [#allocation3], 1
    %s10031 = scalar_lea.sflag [#allocation3], 1
    %10032 = vsyncpa %s10031, 1

</llo_original>
